<compile_context>
chip_gen: v6e
topology: v6e:2x2x1
jax: 0.10.0
libtpu: 0.0.40
codegen_flags: <defaults>
</compile_context>

<pallas_src>
import functools

import jax
import jax.numpy as jnp
from jax import lax
from jax.experimental import pallas as pl

LN_EPS = 1e-5
LANES = 128


# ----------------------------------------------------------------------------
# Static layout of the single packed parameter slab (row starts are 8-aligned,
# lane widths <= 128, everything f32; bf16 casts happen once inside the kernel).
# ----------------------------------------------------------------------------
def make_layout(F, H):
    H1, H2, H3 = H // 2, H // 4, H // 8
    layout = {}
    row = 0

    def add(name, nrows, ncols):
        nonlocal row
        layout[name] = (row, nrows, ncols)
        row += ((nrows + 7) // 8) * 8          # keep every block 8-sublane aligned

    add("emb_wT", F, H)
    add("emb_b", 1, H)
    add("ln1_g", 1, H)
    add("ln1_b", 1, H)
    for i, (din, hl) in enumerate(((H, H1), (2 * H1, H2), (2 * H2, H3)), start=1):
        add(f"l{i}_wihT", din, 8 * hl)         # [fwd gates | rev gates], order i,f,o,g
        add(f"l{i}_b", 1, 8 * hl)
        add(f"l{i}_whhT", hl, 8 * hl)          # [whh_fT | whh_rT]
    add("hln_g", 1, 2 * H3)
    add("hln_b", 1, 2 * H3)
    add("hw", 1, 2 * H3)                       # head weight as a row (VPU reduce, no MXU)
    add("hb", 1, 1)
    return layout, row


def _reorder_gates(w, H):
    """PyTorch gate order (i,f,g,o) -> (i,f,o,g) so the cell needs one fused sigmoid."""
    return jnp.concatenate([w[: 2 * H], w[3 * H:], w[2 * H: 3 * H]], axis=0)


def pack_params(params):
    """Pre-transpose / pre-reorder / pre-concatenate ONCE into a single (R, 128) f32 slab."""
    H, F = params["emb_w"].shape
    H1, H2, H3 = H // 2, H // 4, H // 8
    layout, nrows = make_layout(F, H)
    slab = jnp.zeros((nrows, LANES), jnp.float32)

    def put(name, val):
        nonlocal slab
        r, nr, nc = layout[name]
        assert val.shape == (nr, nc), (name, val.shape, (nr, nc))
        slab = slab.at[r:r + nr, :nc].set(val.astype(jnp.float32))

    put("emb_wT", params["emb_w"].T)
    put("emb_b", params["emb_b"].reshape(1, -1))
    put("ln1_g", params["ln1_g"].reshape(1, -1))
    put("ln1_b", params["ln1_b"].reshape(1, -1))

    for i, (name, hl) in enumerate((("lstm1", H1), ("lstm2", H2), ("lstm3", H3)), start=1):
        lp = params[name]
        wih = jnp.concatenate([_reorder_gates(lp["w_ih_f"], hl).T,
                               _reorder_gates(lp["w_ih_r"], hl).T], axis=1)   # (Din, 8H)
        whh = jnp.concatenate([_reorder_gates(lp["w_hh_f"], hl).T,
                               _reorder_gates(lp["w_hh_r"], hl).T], axis=1)   # (H, 8H)
        b = jnp.concatenate([_reorder_gates(lp["b_f"], hl),
                             _reorder_gates(lp["b_r"], hl)]).reshape(1, -1)   # (1, 8H)
        put(f"l{i}_wihT", wih)
        put(f"l{i}_b", b)
        put(f"l{i}_whhT", whh)

    put("hln_g", params["head_ln_g"].reshape(1, -1))
    put("hln_b", params["head_ln_b"].reshape(1, -1))
    put("hw", params["head_w"].reshape(1, -1))
    put("hb", params["head_b"].reshape(1, 1))
    return slab, layout


# ----------------------------------------------------------------------------
# In-kernel bidirectional LSTM layer (fully unrolled, interleaved chains, values only).
# ----------------------------------------------------------------------------
def _bilstm_layer(gates_x, whhT, T, Bp, H):
    """gates_x: (T*Bp, 8H) f32 precomputed input gates (+bias), cols [:4H]=fwd, [4H:]=rev.
    whhT: (H, 8H) f32, cols [:4H]=whh_fT, [4H:]=whh_rT. Gate order i,f,o,g.
    Returns (out_f, out_r): (T*Bp, H) f32 each, in time order."""
    bf16 = jnp.bfloat16
    f32 = jnp.float32
    # hoist the lane split / bf16 cast out of the serial loop
    gxf = gates_x[:, : 4 * H]
    gxr = gates_x[:, 4 * H:]
    wf = whhT[:, : 4 * H].astype(bf16)
    wr = whhT[:, 4 * H:].astype(bf16)

    def cell(gx, w, h, c):
        gates = gx + jnp.dot(h.astype(bf16), w, preferred_element_type=f32)   # (Bp, 4H)
        sig = jax.nn.sigmoid(gates[:, : 3 * H])                               # i | f | o
        g = jnp.tanh(gates[:, 3 * H:])
        c = sig[:, H: 2 * H] * c + sig[:, : H] * g
        h = sig[:, 2 * H: 3 * H] * jnp.tanh(c)
        return h, c

    zero = jnp.zeros((Bp, H), f32)
    h_f, c_f, h_r, c_r = zero, zero, zero, zero
    f_steps, r_steps = [], []
    for s in range(T):
        tf, tr = s, T - 1 - s
        # two independent chains per iteration -> scheduler overlaps their MXU/EUP work
        h_f, c_f = cell(gxf[tf * Bp:(tf + 1) * Bp], wf, h_f, c_f)
        h_r, c_r = cell(gxr[tr * Bp:(tr + 1) * Bp], wr, h_r, c_r)
        f_steps.append(h_f)
        r_steps.append(h_r)

    out_f = jnp.concatenate(f_steps, axis=0)          # (T*Bp, H), time order
    out_r = jnp.concatenate(r_steps[::-1], axis=0)    # (T*Bp, H), time order
    return out_f, out_r


# ----------------------------------------------------------------------------
# The fused model kernel (2 inputs: activation slab + parameter slab).
# ----------------------------------------------------------------------------
def fused_model_kernel(x_ref, w_ref, y_ref, *, T, Bp, H, layout):
    f32 = jnp.float32
    bf16 = jnp.bfloat16
    H1, H2, H3 = H // 2, H // 4, H // 8

    def W(name):
        r, nr, nc = layout[name]
        return w_ref[r:r + nr, :nc]                   # static, 8-row-aligned slice

    # ---- seq_emb: Linear -> LayerNorm -> GELU (Dropout = identity in eval) ----
    x = x_ref[...]                                                        # (N, F)
    e = jnp.dot(x.astype(bf16), W("emb_wT").astype(bf16),
                preferred_element_type=f32) + W("emb_b")
    m = jnp.mean(e, axis=-1, keepdims=True)
    v = jnp.mean((e - m) ** 2, axis=-1, keepdims=True)
    e = (e - m) * lax.rsqrt(v + LN_EPS) * W("ln1_g") + W("ln1_b")
    e = jax.nn.gelu(e, approximate=True)                                  # (N, H)

    # ---- BiLSTM layer 1 (hoisted input projection covers both directions) ----
    gx = jnp.dot(e.astype(bf16), W("l1_wihT").astype(bf16),
                 preferred_element_type=f32) + W("l1_b")
    of, orv = _bilstm_layer(gx, W("l1_whhT"), T, Bp, H1)

    # ---- BiLSTM layers 2, 3 (row-split projection weights -> no lane concat) ----
    for i, hp, hl in ((2, H1, H2), (3, H2, H3)):
        wih = W(f"l{i}_wihT")                                             # (2*hp, 8*hl)
        gx = (jnp.dot(of.astype(bf16), wih[:hp].astype(bf16), preferred_element_type=f32)
              + jnp.dot(orv.astype(bf16), wih[hp:].astype(bf16), preferred_element_type=f32)
              + W(f"l{i}_b"))
        of, orv = _bilstm_layer(gx, W(f"l{i}_whhT"), T, Bp, hl)

    # ---- head: LayerNorm(concat(fwd, rev)) -> GELU -> row-weight VPU reduce ----
    x0, x1 = of, orv                                                      # (N, H3) each
    D = 2 * H3
    mh = (jnp.sum(x0, axis=-1, keepdims=True)
          + jnp.sum(x1, axis=-1, keepdims=True)) / D
    vh = (jnp.sum((x0 - mh) ** 2, axis=-1, keepdims=True)
          + jnp.sum((x1 - mh) ** 2, axis=-1, keepdims=True)) / D
    inv = lax.rsqrt(vh + LN_EPS)
    g = W("hln_g")
    be = W("hln_b")
    hw = W("hw")
    a0 = jax.nn.gelu((x0 - mh) * inv * g[:, :H3] + be[:, :H3], approximate=True)
    a1 = jax.nn.gelu((x1 - mh) * inv * g[:, H3:] + be[:, H3:], approximate=True)
    y_ref[...] = (jnp.sum(a0 * hw[:, :H3], axis=-1, keepdims=True)
                  + jnp.sum(a1 * hw[:, H3:], axis=-1, keepdims=True)
                  + W("hb"))


def _cost_estimate(T, Bp, F, H, slab_rows):
    H1, H2, H3 = H // 2, H // 4, H // 8
    N = T * Bp
    flops = 2 * N * F * H + 2 * N * (2 * H3)
    trans = N * H + N * 2 * H3
    for din, hl in ((H, H1), (2 * H1, H2), (2 * H2, H3)):
        flops += 2 * N * din * 8 * hl          # hoisted input projection (both directions)
        flops += 2 * 2 * N * hl * 4 * hl       # recurrent matmuls over all steps
        trans += 2 * N * 5 * hl                # gate sigmoids/tanh + tanh(c)
    bytes_accessed = 4 * (N * F + N + slab_rows * LANES)
    return pl.CostEstimate(flops=int(flops), transcendentals=int(trans),
                           bytes_accessed=int(bytes_accessed))


# ----------------------------------------------------------------------------
# Full model forward (single Pallas kernel) + pure-JAX reference.
# ----------------------------------------------------------------------------
def model_forward(x, slab, layout):
    B, T, F = x.shape
    H = layout["emb_wT"][2]
    Bp = ((B + 7) // 8) * 8                      # pad batch to a sublane tile
    N = T * Bp

    # tiny layout plumbing: (B,T,F) -> time-major (T*Bp, F)
    x_tm = jnp.transpose(x, (1, 0, 2))
    if Bp != B:
        x_tm = jnp.pad(x_tm, ((0, 0), (0, Bp - B), (0, 0)))
    x2d = x_tm.reshape(N, F)

    kernel = functools.partial(fused_model_kernel, T=T, Bp=Bp, H=H, layout=layout)

    y2d = pl.pallas_call(
        kernel,
        out_shape=jax.ShapeDtypeStruct((N, 1), jnp.float32),
        cost_estimate=_cost_estimate(T, Bp, F, H, slab.shape[0]),
    )(x2d, slab)

    y = y2d.reshape(T, Bp, 1)[:, :B, :]          # drop batch padding
    return jnp.transpose(y, (1, 0, 2))           # (B, T, 1)


def _ln_ref(x, g, b):
    m = jnp.mean(x, axis=-1, keepdims=True)
    v = jnp.mean((x - m) ** 2, axis=-1, keepdims=True)
    return (x - m) * lax.rsqrt(v + LN_EPS) * g + b


def _lstm_dir_ref(x_btd, w_ih, w_hh, bias, reverse):
    H = w_hh.shape[1]
    xs = jnp.flip(x_btd, axis=1) if reverse else x_btd
    B = x_btd.shape[0]

    def step(carry, x_t):
        h, c = carry
        gates = x_t @ w_ih.T + h @ w_hh.T + bias
        i = jax.nn.sigmoid(gates[:, 0:H])
        f = jax.nn.sigmoid(gates[:, H:2 * H])
        g = jnp.tanh(gates[:, 2 * H:3 * H])
        o = jax.nn.sigmoid(gates[:, 3 * H:4 * H])
        c = f * c + i * g
        h = o * jnp.tanh(c)
        return (h, c), h

    init = (jnp.zeros((B, H), jnp.float32), jnp.zeros((B, H), jnp.float32))
    _, ys = lax.scan(step, init, jnp.swapaxes(xs, 0, 1))
    ys = jnp.swapaxes(ys, 0, 1)
    return jnp.flip(ys, axis=1) if reverse else ys


def model_forward_ref(x, params):
    e = jax.nn.gelu(
        _ln_ref(x @ params["emb_w"].T + params["emb_b"], params["ln1_g"], params["ln1_b"]),
        approximate=False)
    h = e
    for name in ("lstm1", "lstm2", "lstm3"):
        p = params[name]
        fwd = _lstm_dir_ref(h, p["w_ih_f"], p["w_hh_f"], p["b_f"], False)
        rev = _lstm_dir_ref(h, p["w_ih_r"], p["w_hh_r"], p["b_r"], True)
        h = jnp.concatenate([fwd, rev], axis=-1)
    a = jax.nn.gelu(_ln_ref(h, params["head_ln_g"], params["head_ln_b"]), approximate=False)
    return a @ params["head_w"].T + params["head_b"]


# ----------------------------------------------------------------------------
# Deterministic synthetic parameters (shapes match the PyTorch module; b_ih+b_hh folded).
# ----------------------------------------------------------------------------
def init_params(key, n_cont, hidden):
    ks = iter(jax.random.split(key, 64))

    def nrm(shape, scale=0.1):
        return (scale * jax.random.normal(next(ks), shape)).astype(jnp.float32)

    def lstm_params(d_in, h):
        return {
            "w_ih_f": nrm((4 * h, d_in)), "w_hh_f": nrm((4 * h, h)), "b_f": nrm((4 * h,)),
            "w_ih_r": nrm((4 * h, d_in)), "w_hh_r": nrm((4 * h, h)), "b_r": nrm((4 * h,)),
        }

    H = hidden
    return {
        "emb_w": nrm((H, n_cont)), "emb_b": nrm((H,)),
        "ln1_g": jnp.ones((H,), jnp.float32), "ln1_b": jnp.zeros((H,), jnp.float32),
        "lstm1": lstm_params(H, H // 2),          # out 2*(H/2) = H
        "lstm2": lstm_params(H, H // 4),          # out H/2
        "lstm3": lstm_params(H // 2, H // 8),     # out H/4
        "head_ln_g": jnp.ones((H // 4,), jnp.float32),
        "head_ln_b": jnp.zeros((H // 4,), jnp.float32),
        "head_w": nrm((1, H // 4)), "head_b": nrm((1,)),
    }


if __name__ == "__main__":
    B, T, N_CONT, HIDDEN = 4, 8, 6, 32            # hidden != 1024/2048 -> no lstm4/lstm5

    key = jax.random.PRNGKey(0)
    k_x, k_p = jax.random.split(key)
    x = jax.random.normal(k_x, (B, T, N_CONT), dtype=jnp.float32)
    params = init_params(k_p, N_CONT, HIDDEN)
    slab, layout = pack_params(params)

    fwd = jax.jit(functools.partial(model_forward, layout=layout))
    out = jax.block_until_ready(fwd(x, slab))
    ref = jax.block_until_ready(model_forward_ref(x, params))

    assert out.shape == (B, T, 1), out.shape
    assert bool(jnp.all(jnp.isfinite(out)))
    assert jnp.allclose(out, ref, rtol=2e-2, atol=2e-2), float(jnp.max(jnp.abs(out - ref)))

    print("KERNEL_OK")
</pallas_src>

<mosaic_0001>
module attributes {stable_mosaic.version = 11 : i64} {
  func.func @fused_model_kernel(%arg0: memref<64x6xf32, #tpu.memory_space<vmem>>, %arg1: memref<200x128xf32, #tpu.memory_space<vmem>>, %arg2: memref<64x1xf32, #tpu.memory_space<vmem>>) attributes {dimension_semantics = [], scalar_prefetch = 0 : i64, scratch_operands = 0 : i64, tpu.core_type = #tpu.core_type<tc>} {
    %c0 = arith.constant 0 : index
    %c0_0 = arith.constant 0 : index
    %0 = vector.load %arg0[%c0, %c0_0] : memref<64x6xf32, #tpu.memory_space<vmem>>, vector<64x6xf32>
    %1 = arith.truncf %0 : vector<64x6xf32> to vector<64x6xbf16>
    %c0_1 = arith.constant 0 : index
    %c0_2 = arith.constant 0 : index
    %2 = vector.load %arg1[%c0_1, %c0_2] : memref<200x128xf32, #tpu.memory_space<vmem>>, vector<6x32xf32>
    %3 = arith.truncf %2 : vector<6x32xf32> to vector<6x32xbf16>
    %cst = arith.constant dense<0.000000e+00> : vector<64x32xf32>
    %4 = tpu.matmul %1, %3, %cst {dimension_numbers = #tpu.dot_dimension_numbers<[1], [0], [0], [1], [0, 0, 1, 1], [], []>} : vector<64x6xbf16>, vector<6x32xbf16>, vector<64x32xf32> -> vector<64x32xf32>
    %c8 = arith.constant 8 : index
    %c0_3 = arith.constant 0 : index
    %5 = vector.load %arg1[%c8, %c0_3] : memref<200x128xf32, #tpu.memory_space<vmem>>, vector<1x32xf32>
    %6 = vector.broadcast %5 : vector<1x32xf32> to vector<64x32xf32>
    %7 = arith.addf %4, %6 : vector<64x32xf32>
    %cst_4 = arith.constant dense<0.000000e+00> : vector<64xf32>
    %8 = vector.multi_reduction <add>, %7, %cst_4 [1] : vector<64x32xf32> to vector<64xf32>
    %9 = vector.shape_cast %8 : vector<64xf32> to vector<64x1xf32>
    %cst_5 = arith.constant 3.200000e+01 : f32
    %10 = vector.broadcast %cst_5 : f32 to vector<64x1xf32>
    %11 = arith.divf %9, %10 : vector<64x1xf32>
    %12 = vector.broadcast %11 : vector<64x1xf32> to vector<64x32xf32>
    %13 = arith.subf %7, %12 : vector<64x32xf32>
    %14 = arith.mulf %13, %13 : vector<64x32xf32>
    %cst_6 = arith.constant dense<0.000000e+00> : vector<64xf32>
    %15 = vector.multi_reduction <add>, %14, %cst_6 [1] : vector<64x32xf32> to vector<64xf32>
    %16 = vector.shape_cast %15 : vector<64xf32> to vector<64x1xf32>
    %cst_7 = arith.constant 3.200000e+01 : f32
    %17 = vector.broadcast %cst_7 : f32 to vector<64x1xf32>
    %18 = arith.divf %16, %17 : vector<64x1xf32>
    %19 = vector.broadcast %11 : vector<64x1xf32> to vector<64x32xf32>
    %20 = arith.subf %7, %19 : vector<64x32xf32>
    %cst_8 = arith.constant 9.99999974E-6 : f32
    %21 = vector.broadcast %cst_8 : f32 to vector<64x1xf32>
    %22 = arith.addf %18, %21 : vector<64x1xf32>
    %23 = math.rsqrt %22 : vector<64x1xf32>
    %24 = vector.broadcast %23 : vector<64x1xf32> to vector<64x32xf32>
    %25 = arith.mulf %20, %24 : vector<64x32xf32>
    %c16 = arith.constant 16 : index
    %c0_9 = arith.constant 0 : index
    %26 = vector.load %arg1[%c16, %c0_9] : memref<200x128xf32, #tpu.memory_space<vmem>>, vector<1x32xf32>
    %27 = vector.broadcast %26 : vector<1x32xf32> to vector<64x32xf32>
    %28 = arith.mulf %25, %27 : vector<64x32xf32>
    %c24 = arith.constant 24 : index
    %c0_10 = arith.constant 0 : index
    %29 = vector.load %arg1[%c24, %c0_10] : memref<200x128xf32, #tpu.memory_space<vmem>>, vector<1x32xf32>
    %30 = vector.broadcast %29 : vector<1x32xf32> to vector<64x32xf32>
    %31 = arith.addf %28, %30 : vector<64x32xf32>
    %32 = arith.mulf %31, %31 : vector<64x32xf32>
    %33 = arith.mulf %31, %32 : vector<64x32xf32>
    %cst_11 = arith.constant 4.471500e-02 : f32
    %34 = vector.broadcast %cst_11 : f32 to vector<64x32xf32>
    %35 = arith.mulf %34, %33 : vector<64x32xf32>
    %36 = arith.addf %31, %35 : vector<64x32xf32>
    %cst_12 = arith.constant 0.797884583 : f32
    %37 = vector.broadcast %cst_12 : f32 to vector<64x32xf32>
    %38 = arith.mulf %37, %36 : vector<64x32xf32>
    %39 = math.tanh %38 : vector<64x32xf32>
    %cst_13 = arith.constant 1.000000e+00 : f32
    %40 = vector.broadcast %cst_13 : f32 to vector<64x32xf32>
    %41 = arith.addf %40, %39 : vector<64x32xf32>
    %cst_14 = arith.constant 5.000000e-01 : f32
    %42 = vector.broadcast %cst_14 : f32 to vector<64x32xf32>
    %43 = arith.mulf %42, %41 : vector<64x32xf32>
    %44 = arith.mulf %31, %43 : vector<64x32xf32>
    %45 = arith.truncf %44 : vector<64x32xf32> to vector<64x32xbf16>
    %c32 = arith.constant 32 : index
    %c0_15 = arith.constant 0 : index
    %46 = vector.load %arg1[%c32, %c0_15] : memref<200x128xf32, #tpu.memory_space<vmem>>, vector<32x128xf32>
    %47 = arith.truncf %46 : vector<32x128xf32> to vector<32x128xbf16>
    %cst_16 = arith.constant dense<0.000000e+00> : vector<64x128xf32>
    %48 = tpu.matmul %45, %47, %cst_16 {dimension_numbers = #tpu.dot_dimension_numbers<[1], [0], [0], [1], [0, 0, 1, 1], [], []>} : vector<64x32xbf16>, vector<32x128xbf16>, vector<64x128xf32> -> vector<64x128xf32>
    %c64 = arith.constant 64 : index
    %c0_17 = arith.constant 0 : index
    %49 = vector.load %arg1[%c64, %c0_17] : memref<200x128xf32, #tpu.memory_space<vmem>>, vector<1x128xf32>
    %50 = vector.broadcast %49 : vector<1x128xf32> to vector<64x128xf32>
    %51 = arith.addf %48, %50 : vector<64x128xf32>
    %c72 = arith.constant 72 : index
    %c0_18 = arith.constant 0 : index
    %52 = vector.load %arg1[%c72, %c0_18] : memref<200x128xf32, #tpu.memory_space<vmem>>, vector<16x128xf32>
    %53 = vector.extract_strided_slice %51 {offsets = [0, 0], sizes = [64, 64], strides = [1, 1]} : vector<64x128xf32> to vector<64x64xf32>
    %54 = vector.extract_strided_slice %51 {offsets = [0, 64], sizes = [64, 64], strides = [1, 1]} : vector<64x128xf32> to vector<64x64xf32>
    %55 = vector.extract_strided_slice %52 {offsets = [0, 0], sizes = [16, 64], strides = [1, 1]} : vector<16x128xf32> to vector<16x64xf32>
    %56 = arith.truncf %55 : vector<16x64xf32> to vector<16x64xbf16>
    %57 = vector.extract_strided_slice %52 {offsets = [0, 64], sizes = [16, 64], strides = [1, 1]} : vector<16x128xf32> to vector<16x64xf32>
    %58 = arith.truncf %57 : vector<16x64xf32> to vector<16x64xbf16>
    %cst_19 = arith.constant 0.000000e+00 : f32
    %59 = vector.broadcast %cst_19 : f32 to vector<8x16xf32>
    %60 = vector.extract_strided_slice %53 {offsets = [0, 0], sizes = [8, 64], strides = [1, 1]} : vector<64x64xf32> to vector<8x64xf32>
    %61 = arith.truncf %59 : vector<8x16xf32> to vector<8x16xbf16>
    %cst_20 = arith.constant dense<0.000000e+00> : vector<8x64xf32>
    %62 = tpu.matmul %61, %56, %cst_20 {dimension_numbers = #tpu.dot_dimension_numbers<[1], [0], [0], [1], [0, 0, 1, 1], [], []>} : vector<8x16xbf16>, vector<16x64xbf16>, vector<8x64xf32> -> vector<8x64xf32>
    %63 = arith.addf %60, %62 : vector<8x64xf32>
    %64 = vector.extract_strided_slice %63 {offsets = [0, 0], sizes = [8, 48], strides = [1, 1]} : vector<8x64xf32> to vector<8x48xf32>
    %65 = arith.negf %64 : vector<8x48xf32>
    %66 = math.exp %65 : vector<8x48xf32>
    %cst_21 = arith.constant 1.000000e+00 : f32
    %67 = vector.broadcast %cst_21 : f32 to vector<8x48xf32>
    %68 = arith.addf %67, %66 : vector<8x48xf32>
    %69 = arith.divf %67, %68 : vector<8x48xf32>
    %70 = vector.extract_strided_slice %63 {offsets = [0, 48], sizes = [8, 16], strides = [1, 1]} : vector<8x64xf32> to vector<8x16xf32>
    %71 = math.tanh %70 : vector<8x16xf32>
    %72 = vector.extract_strided_slice %69 {offsets = [0, 16], sizes = [8, 16], strides = [1, 1]} : vector<8x48xf32> to vector<8x16xf32>
    %73 = arith.mulf %72, %59 : vector<8x16xf32>
    %74 = vector.extract_strided_slice %69 {offsets = [0, 0], sizes = [8, 16], strides = [1, 1]} : vector<8x48xf32> to vector<8x16xf32>
    %75 = arith.mulf %74, %71 : vector<8x16xf32>
    %76 = arith.addf %73, %75 : vector<8x16xf32>
    %77 = vector.extract_strided_slice %69 {offsets = [0, 32], sizes = [8, 16], strides = [1, 1]} : vector<8x48xf32> to vector<8x16xf32>
    %78 = math.tanh %76 : vector<8x16xf32>
    %79 = arith.mulf %77, %78 : vector<8x16xf32>
    %80 = vector.extract_strided_slice %54 {offsets = [56, 0], sizes = [8, 64], strides = [1, 1]} : vector<64x64xf32> to vector<8x64xf32>
    %81 = arith.truncf %59 : vector<8x16xf32> to vector<8x16xbf16>
    %cst_22 = arith.constant dense<0.000000e+00> : vector<8x64xf32>
    %82 = tpu.matmul %81, %58, %cst_22 {dimension_numbers = #tpu.dot_dimension_numbers<[1], [0], [0], [1], [0, 0, 1, 1], [], []>} : vector<8x16xbf16>, vector<16x64xbf16>, vector<8x64xf32> -> vector<8x64xf32>
    %83 = arith.addf %80, %82 : vector<8x64xf32>
    %84 = vector.extract_strided_slice %83 {offsets = [0, 0], sizes = [8, 48], strides = [1, 1]} : vector<8x64xf32> to vector<8x48xf32>
    %85 = arith.negf %84 : vector<8x48xf32>
    %86 = math.exp %85 : vector<8x48xf32>
    %cst_23 = arith.constant 1.000000e+00 : f32
    %87 = vector.broadcast %cst_23 : f32 to vector<8x48xf32>
    %88 = arith.addf %87, %86 : vector<8x48xf32>
    %89 = arith.divf %87, %88 : vector<8x48xf32>
    %90 = vector.extract_strided_slice %83 {offsets = [0, 48], sizes = [8, 16], strides = [1, 1]} : vector<8x64xf32> to vector<8x16xf32>
    %91 = math.tanh %90 : vector<8x16xf32>
    %92 = vector.extract_strided_slice %89 {offsets = [0, 16], sizes = [8, 16], strides = [1, 1]} : vector<8x48xf32> to vector<8x16xf32>
    %93 = arith.mulf %92, %59 : vector<8x16xf32>
    %94 = vector.extract_strided_slice %89 {offsets = [0, 0], sizes = [8, 16], strides = [1, 1]} : vector<8x48xf32> to vector<8x16xf32>
    %95 = arith.mulf %94, %91 : vector<8x16xf32>
    %96 = arith.addf %93, %95 : vector<8x16xf32>
    %97 = vector.extract_strided_slice %89 {offsets = [0, 32], sizes = [8, 16], strides = [1, 1]} : vector<8x48xf32> to vector<8x16xf32>
    %98 = math.tanh %96 : vector<8x16xf32>
    %99 = arith.mulf %97, %98 : vector<8x16xf32>
    %100 = vector.extract_strided_slice %53 {offsets = [8, 0], sizes = [8, 64], strides = [1, 1]} : vector<64x64xf32> to vector<8x64xf32>
    %101 = arith.truncf %79 : vector<8x16xf32> to vector<8x16xbf16>
    %cst_24 = arith.constant dense<0.000000e+00> : vector<8x64xf32>
    %102 = tpu.matmul %101, %56, %cst_24 {dimension_numbers = #tpu.dot_dimension_numbers<[1], [0], [0], [1], [0, 0, 1, 1], [], []>} : vector<8x16xbf16>, vector<16x64xbf16>, vector<8x64xf32> -> vector<8x64xf32>
    %103 = arith.addf %100, %102 : vector<8x64xf32>
    %104 = vector.extract_strided_slice %103 {offsets = [0, 0], sizes = [8, 48], strides = [1, 1]} : vector<8x64xf32> to vector<8x48xf32>
    %105 = arith.negf %104 : vector<8x48xf32>
    %106 = math.exp %105 : vector<8x48xf32>
    %cst_25 = arith.constant 1.000000e+00 : f32
    %107 = vector.broadcast %cst_25 : f32 to vector<8x48xf32>
    %108 = arith.addf %107, %106 : vector<8x48xf32>
    %109 = arith.divf %107, %108 : vector<8x48xf32>
    %110 = vector.extract_strided_slice %103 {offsets = [0, 48], sizes = [8, 16], strides = [1, 1]} : vector<8x64xf32> to vector<8x16xf32>
    %111 = math.tanh %110 : vector<8x16xf32>
    %112 = vector.extract_strided_slice %109 {offsets = [0, 16], sizes = [8, 16], strides = [1, 1]} : vector<8x48xf32> to vector<8x16xf32>
    %113 = arith.mulf %112, %76 : vector<8x16xf32>
    %114 = vector.extract_strided_slice %109 {offsets = [0, 0], sizes = [8, 16], strides = [1, 1]} : vector<8x48xf32> to vector<8x16xf32>
    %115 = arith.mulf %114, %111 : vector<8x16xf32>
    %116 = arith.addf %113, %115 : vector<8x16xf32>
    %117 = vector.extract_strided_slice %109 {offsets = [0, 32], sizes = [8, 16], strides = [1, 1]} : vector<8x48xf32> to vector<8x16xf32>
    %118 = math.tanh %116 : vector<8x16xf32>
    %119 = arith.mulf %117, %118 : vector<8x16xf32>
    %120 = vector.extract_strided_slice %54 {offsets = [48, 0], sizes = [8, 64], strides = [1, 1]} : vector<64x64xf32> to vector<8x64xf32>
    %121 = arith.truncf %99 : vector<8x16xf32> to vector<8x16xbf16>
    %cst_26 = arith.constant dense<0.000000e+00> : vector<8x64xf32>
    %122 = tpu.matmul %121, %58, %cst_26 {dimension_numbers = #tpu.dot_dimension_numbers<[1], [0], [0], [1], [0, 0, 1, 1], [], []>} : vector<8x16xbf16>, vector<16x64xbf16>, vector<8x64xf32> -> vector<8x64xf32>
    %123 = arith.addf %120, %122 : vector<8x64xf32>
    %124 = vector.extract_strided_slice %123 {offsets = [0, 0], sizes = [8, 48], strides = [1, 1]} : vector<8x64xf32> to vector<8x48xf32>
    %125 = arith.negf %124 : vector<8x48xf32>
    %126 = math.exp %125 : vector<8x48xf32>
    %cst_27 = arith.constant 1.000000e+00 : f32
    %127 = vector.broadcast %cst_27 : f32 to vector<8x48xf32>
    %128 = arith.addf %127, %126 : vector<8x48xf32>
    %129 = arith.divf %127, %128 : vector<8x48xf32>
    %130 = vector.extract_strided_slice %123 {offsets = [0, 48], sizes = [8, 16], strides = [1, 1]} : vector<8x64xf32> to vector<8x16xf32>
    %131 = math.tanh %130 : vector<8x16xf32>
    %132 = vector.extract_strided_slice %129 {offsets = [0, 16], sizes = [8, 16], strides = [1, 1]} : vector<8x48xf32> to vector<8x16xf32>
    %133 = arith.mulf %132, %96 : vector<8x16xf32>
    %134 = vector.extract_strided_slice %129 {offsets = [0, 0], sizes = [8, 16], strides = [1, 1]} : vector<8x48xf32> to vector<8x16xf32>
    %135 = arith.mulf %134, %131 : vector<8x16xf32>
    %136 = arith.addf %133, %135 : vector<8x16xf32>
    %137 = vector.extract_strided_slice %129 {offsets = [0, 32], sizes = [8, 16], strides = [1, 1]} : vector<8x48xf32> to vector<8x16xf32>
    %138 = math.tanh %136 : vector<8x16xf32>
    %139 = arith.mulf %137, %138 : vector<8x16xf32>
    %140 = vector.extract_strided_slice %53 {offsets = [16, 0], sizes = [8, 64], strides = [1, 1]} : vector<64x64xf32> to vector<8x64xf32>
    %141 = arith.truncf %119 : vector<8x16xf32> to vector<8x16xbf16>
    %cst_28 = arith.constant dense<0.000000e+00> : vector<8x64xf32>
    %142 = tpu.matmul %141, %56, %cst_28 {dimension_numbers = #tpu.dot_dimension_numbers<[1], [0], [0], [1], [0, 0, 1, 1], [], []>} : vector<8x16xbf16>, vector<16x64xbf16>, vector<8x64xf32> -> vector<8x64xf32>
    %143 = arith.addf %140, %142 : vector<8x64xf32>
    %144 = vector.extract_strided_slice %143 {offsets = [0, 0], sizes = [8, 48], strides = [1, 1]} : vector<8x64xf32> to vector<8x48xf32>
    %145 = arith.negf %144 : vector<8x48xf32>
    %146 = math.exp %145 : vector<8x48xf32>
    %cst_29 = arith.constant 1.000000e+00 : f32
    %147 = vector.broadcast %cst_29 : f32 to vector<8x48xf32>
    %148 = arith.addf %147, %146 : vector<8x48xf32>
    %149 = arith.divf %147, %148 : vector<8x48xf32>
    %150 = vector.extract_strided_slice %143 {offsets = [0, 48], sizes = [8, 16], strides = [1, 1]} : vector<8x64xf32> to vector<8x16xf32>
    %151 = math.tanh %150 : vector<8x16xf32>
    %152 = vector.extract_strided_slice %149 {offsets = [0, 16], sizes = [8, 16], strides = [1, 1]} : vector<8x48xf32> to vector<8x16xf32>
    %153 = arith.mulf %152, %116 : vector<8x16xf32>
    %154 = vector.extract_strided_slice %149 {offsets = [0, 0], sizes = [8, 16], strides = [1, 1]} : vector<8x48xf32> to vector<8x16xf32>
    %155 = arith.mulf %154, %151 : vector<8x16xf32>
    %156 = arith.addf %153, %155 : vector<8x16xf32>
    %157 = vector.extract_strided_slice %149 {offsets = [0, 32], sizes = [8, 16], strides = [1, 1]} : vector<8x48xf32> to vector<8x16xf32>
    %158 = math.tanh %156 : vector<8x16xf32>
    %159 = arith.mulf %157, %158 : vector<8x16xf32>
    %160 = vector.extract_strided_slice %54 {offsets = [40, 0], sizes = [8, 64], strides = [1, 1]} : vector<64x64xf32> to vector<8x64xf32>
    %161 = arith.truncf %139 : vector<8x16xf32> to vector<8x16xbf16>
    %cst_30 = arith.constant dense<0.000000e+00> : vector<8x64xf32>
    %162 = tpu.matmul %161, %58, %cst_30 {dimension_numbers = #tpu.dot_dimension_numbers<[1], [0], [0], [1], [0, 0, 1, 1], [], []>} : vector<8x16xbf16>, vector<16x64xbf16>, vector<8x64xf32> -> vector<8x64xf32>
    %163 = arith.addf %160, %162 : vector<8x64xf32>
    %164 = vector.extract_strided_slice %163 {offsets = [0, 0], sizes = [8, 48], strides = [1, 1]} : vector<8x64xf32> to vector<8x48xf32>
    %165 = arith.negf %164 : vector<8x48xf32>
    %166 = math.exp %165 : vector<8x48xf32>
    %cst_31 = arith.constant 1.000000e+00 : f32
    %167 = vector.broadcast %cst_31 : f32 to vector<8x48xf32>
    %168 = arith.addf %167, %166 : vector<8x48xf32>
    %169 = arith.divf %167, %168 : vector<8x48xf32>
    %170 = vector.extract_strided_slice %163 {offsets = [0, 48], sizes = [8, 16], strides = [1, 1]} : vector<8x64xf32> to vector<8x16xf32>
    %171 = math.tanh %170 : vector<8x16xf32>
    %172 = vector.extract_strided_slice %169 {offsets = [0, 16], sizes = [8, 16], strides = [1, 1]} : vector<8x48xf32> to vector<8x16xf32>
    %173 = arith.mulf %172, %136 : vector<8x16xf32>
    %174 = vector.extract_strided_slice %169 {offsets = [0, 0], sizes = [8, 16], strides = [1, 1]} : vector<8x48xf32> to vector<8x16xf32>
    %175 = arith.mulf %174, %171 : vector<8x16xf32>
    %176 = arith.addf %173, %175 : vector<8x16xf32>
    %177 = vector.extract_strided_slice %169 {offsets = [0, 32], sizes = [8, 16], strides = [1, 1]} : vector<8x48xf32> to vector<8x16xf32>
    %178 = math.tanh %176 : vector<8x16xf32>
    %179 = arith.mulf %177, %178 : vector<8x16xf32>
    %180 = vector.extract_strided_slice %53 {offsets = [24, 0], sizes = [8, 64], strides = [1, 1]} : vector<64x64xf32> to vector<8x64xf32>
    %181 = arith.truncf %159 : vector<8x16xf32> to vector<8x16xbf16>
    %cst_32 = arith.constant dense<0.000000e+00> : vector<8x64xf32>
    %182 = tpu.matmul %181, %56, %cst_32 {dimension_numbers = #tpu.dot_dimension_numbers<[1], [0], [0], [1], [0, 0, 1, 1], [], []>} : vector<8x16xbf16>, vector<16x64xbf16>, vector<8x64xf32> -> vector<8x64xf32>
    %183 = arith.addf %180, %182 : vector<8x64xf32>
    %184 = vector.extract_strided_slice %183 {offsets = [0, 0], sizes = [8, 48], strides = [1, 1]} : vector<8x64xf32> to vector<8x48xf32>
    %185 = arith.negf %184 : vector<8x48xf32>
    %186 = math.exp %185 : vector<8x48xf32>
    %cst_33 = arith.constant 1.000000e+00 : f32
    %187 = vector.broadcast %cst_33 : f32 to vector<8x48xf32>
    %188 = arith.addf %187, %186 : vector<8x48xf32>
    %189 = arith.divf %187, %188 : vector<8x48xf32>
    %190 = vector.extract_strided_slice %183 {offsets = [0, 48], sizes = [8, 16], strides = [1, 1]} : vector<8x64xf32> to vector<8x16xf32>
    %191 = math.tanh %190 : vector<8x16xf32>
    %192 = vector.extract_strided_slice %189 {offsets = [0, 16], sizes = [8, 16], strides = [1, 1]} : vector<8x48xf32> to vector<8x16xf32>
    %193 = arith.mulf %192, %156 : vector<8x16xf32>
    %194 = vector.extract_strided_slice %189 {offsets = [0, 0], sizes = [8, 16], strides = [1, 1]} : vector<8x48xf32> to vector<8x16xf32>
    %195 = arith.mulf %194, %191 : vector<8x16xf32>
    %196 = arith.addf %193, %195 : vector<8x16xf32>
    %197 = vector.extract_strided_slice %189 {offsets = [0, 32], sizes = [8, 16], strides = [1, 1]} : vector<8x48xf32> to vector<8x16xf32>
    %198 = math.tanh %196 : vector<8x16xf32>
    %199 = arith.mulf %197, %198 : vector<8x16xf32>
    %200 = vector.extract_strided_slice %54 {offsets = [32, 0], sizes = [8, 64], strides = [1, 1]} : vector<64x64xf32> to vector<8x64xf32>
    %201 = arith.truncf %179 : vector<8x16xf32> to vector<8x16xbf16>
    %cst_34 = arith.constant dense<0.000000e+00> : vector<8x64xf32>
    %202 = tpu.matmul %201, %58, %cst_34 {dimension_numbers = #tpu.dot_dimension_numbers<[1], [0], [0], [1], [0, 0, 1, 1], [], []>} : vector<8x16xbf16>, vector<16x64xbf16>, vector<8x64xf32> -> vector<8x64xf32>
    %203 = arith.addf %200, %202 : vector<8x64xf32>
    %204 = vector.extract_strided_slice %203 {offsets = [0, 0], sizes = [8, 48], strides = [1, 1]} : vector<8x64xf32> to vector<8x48xf32>
    %205 = arith.negf %204 : vector<8x48xf32>
    %206 = math.exp %205 : vector<8x48xf32>
    %cst_35 = arith.constant 1.000000e+00 : f32
    %207 = vector.broadcast %cst_35 : f32 to vector<8x48xf32>
    %208 = arith.addf %207, %206 : vector<8x48xf32>
    %209 = arith.divf %207, %208 : vector<8x48xf32>
    %210 = vector.extract_strided_slice %203 {offsets = [0, 48], sizes = [8, 16], strides = [1, 1]} : vector<8x64xf32> to vector<8x16xf32>
    %211 = math.tanh %210 : vector<8x16xf32>
    %212 = vector.extract_strided_slice %209 {offsets = [0, 16], sizes = [8, 16], strides = [1, 1]} : vector<8x48xf32> to vector<8x16xf32>
    %213 = arith.mulf %212, %176 : vector<8x16xf32>
    %214 = vector.extract_strided_slice %209 {offsets = [0, 0], sizes = [8, 16], strides = [1, 1]} : vector<8x48xf32> to vector<8x16xf32>
    %215 = arith.mulf %214, %211 : vector<8x16xf32>
    %216 = arith.addf %213, %215 : vector<8x16xf32>
    %217 = vector.extract_strided_slice %209 {offsets = [0, 32], sizes = [8, 16], strides = [1, 1]} : vector<8x48xf32> to vector<8x16xf32>
    %218 = math.tanh %216 : vector<8x16xf32>
    %219 = arith.mulf %217, %218 : vector<8x16xf32>
    %220 = vector.extract_strided_slice %53 {offsets = [32, 0], sizes = [8, 64], strides = [1, 1]} : vector<64x64xf32> to vector<8x64xf32>
    %221 = arith.truncf %199 : vector<8x16xf32> to vector<8x16xbf16>
    %cst_36 = arith.constant dense<0.000000e+00> : vector<8x64xf32>
    %222 = tpu.matmul %221, %56, %cst_36 {dimension_numbers = #tpu.dot_dimension_numbers<[1], [0], [0], [1], [0, 0, 1, 1], [], []>} : vector<8x16xbf16>, vector<16x64xbf16>, vector<8x64xf32> -> vector<8x64xf32>
    %223 = arith.addf %220, %222 : vector<8x64xf32>
    %224 = vector.extract_strided_slice %223 {offsets = [0, 0], sizes = [8, 48], strides = [1, 1]} : vector<8x64xf32> to vector<8x48xf32>
    %225 = arith.negf %224 : vector<8x48xf32>
    %226 = math.exp %225 : vector<8x48xf32>
    %cst_37 = arith.constant 1.000000e+00 : f32
    %227 = vector.broadcast %cst_37 : f32 to vector<8x48xf32>
    %228 = arith.addf %227, %226 : vector<8x48xf32>
    %229 = arith.divf %227, %228 : vector<8x48xf32>
    %230 = vector.extract_strided_slice %223 {offsets = [0, 48], sizes = [8, 16], strides = [1, 1]} : vector<8x64xf32> to vector<8x16xf32>
    %231 = math.tanh %230 : vector<8x16xf32>
    %232 = vector.extract_strided_slice %229 {offsets = [0, 16], sizes = [8, 16], strides = [1, 1]} : vector<8x48xf32> to vector<8x16xf32>
    %233 = arith.mulf %232, %196 : vector<8x16xf32>
    %234 = vector.extract_strided_slice %229 {offsets = [0, 0], sizes = [8, 16], strides = [1, 1]} : vector<8x48xf32> to vector<8x16xf32>
    %235 = arith.mulf %234, %231 : vector<8x16xf32>
    %236 = arith.addf %233, %235 : vector<8x16xf32>
    %237 = vector.extract_strided_slice %229 {offsets = [0, 32], sizes = [8, 16], strides = [1, 1]} : vector<8x48xf32> to vector<8x16xf32>
    %238 = math.tanh %236 : vector<8x16xf32>
    %239 = arith.mulf %237, %238 : vector<8x16xf32>
    %240 = vector.extract_strided_slice %54 {offsets = [24, 0], sizes = [8, 64], strides = [1, 1]} : vector<64x64xf32> to vector<8x64xf32>
    %241 = arith.truncf %219 : vector<8x16xf32> to vector<8x16xbf16>
    %cst_38 = arith.constant dense<0.000000e+00> : vector<8x64xf32>
    %242 = tpu.matmul %241, %58, %cst_38 {dimension_numbers = #tpu.dot_dimension_numbers<[1], [0], [0], [1], [0, 0, 1, 1], [], []>} : vector<8x16xbf16>, vector<16x64xbf16>, vector<8x64xf32> -> vector<8x64xf32>
    %243 = arith.addf %240, %242 : vector<8x64xf32>
    %244 = vector.extract_strided_slice %243 {offsets = [0, 0], sizes = [8, 48], strides = [1, 1]} : vector<8x64xf32> to vector<8x48xf32>
    %245 = arith.negf %244 : vector<8x48xf32>
    %246 = math.exp %245 : vector<8x48xf32>
    %cst_39 = arith.constant 1.000000e+00 : f32
    %247 = vector.broadcast %cst_39 : f32 to vector<8x48xf32>
    %248 = arith.addf %247, %246 : vector<8x48xf32>
    %249 = arith.divf %247, %248 : vector<8x48xf32>
    %250 = vector.extract_strided_slice %243 {offsets = [0, 48], sizes = [8, 16], strides = [1, 1]} : vector<8x64xf32> to vector<8x16xf32>
    %251 = math.tanh %250 : vector<8x16xf32>
    %252 = vector.extract_strided_slice %249 {offsets = [0, 16], sizes = [8, 16], strides = [1, 1]} : vector<8x48xf32> to vector<8x16xf32>
    %253 = arith.mulf %252, %216 : vector<8x16xf32>
    %254 = vector.extract_strided_slice %249 {offsets = [0, 0], sizes = [8, 16], strides = [1, 1]} : vector<8x48xf32> to vector<8x16xf32>
    %255 = arith.mulf %254, %251 : vector<8x16xf32>
    %256 = arith.addf %253, %255 : vector<8x16xf32>
    %257 = vector.extract_strided_slice %249 {offsets = [0, 32], sizes = [8, 16], strides = [1, 1]} : vector<8x48xf32> to vector<8x16xf32>
    %258 = math.tanh %256 : vector<8x16xf32>
    %259 = arith.mulf %257, %258 : vector<8x16xf32>
    %260 = vector.extract_strided_slice %53 {offsets = [40, 0], sizes = [8, 64], strides = [1, 1]} : vector<64x64xf32> to vector<8x64xf32>
    %261 = arith.truncf %239 : vector<8x16xf32> to vector<8x16xbf16>
    %cst_40 = arith.constant dense<0.000000e+00> : vector<8x64xf32>
    %262 = tpu.matmul %261, %56, %cst_40 {dimension_numbers = #tpu.dot_dimension_numbers<[1], [0], [0], [1], [0, 0, 1, 1], [], []>} : vector<8x16xbf16>, vector<16x64xbf16>, vector<8x64xf32> -> vector<8x64xf32>
    %263 = arith.addf %260, %262 : vector<8x64xf32>
    %264 = vector.extract_strided_slice %263 {offsets = [0, 0], sizes = [8, 48], strides = [1, 1]} : vector<8x64xf32> to vector<8x48xf32>
    %265 = arith.negf %264 : vector<8x48xf32>
    %266 = math.exp %265 : vector<8x48xf32>
    %cst_41 = arith.constant 1.000000e+00 : f32
    %267 = vector.broadcast %cst_41 : f32 to vector<8x48xf32>
    %268 = arith.addf %267, %266 : vector<8x48xf32>
    %269 = arith.divf %267, %268 : vector<8x48xf32>
    %270 = vector.extract_strided_slice %263 {offsets = [0, 48], sizes = [8, 16], strides = [1, 1]} : vector<8x64xf32> to vector<8x16xf32>
    %271 = math.tanh %270 : vector<8x16xf32>
    %272 = vector.extract_strided_slice %269 {offsets = [0, 16], sizes = [8, 16], strides = [1, 1]} : vector<8x48xf32> to vector<8x16xf32>
    %273 = arith.mulf %272, %236 : vector<8x16xf32>
    %274 = vector.extract_strided_slice %269 {offsets = [0, 0], sizes = [8, 16], strides = [1, 1]} : vector<8x48xf32> to vector<8x16xf32>
    %275 = arith.mulf %274, %271 : vector<8x16xf32>
    %276 = arith.addf %273, %275 : vector<8x16xf32>
    %277 = vector.extract_strided_slice %269 {offsets = [0, 32], sizes = [8, 16], strides = [1, 1]} : vector<8x48xf32> to vector<8x16xf32>
    %278 = math.tanh %276 : vector<8x16xf32>
    %279 = arith.mulf %277, %278 : vector<8x16xf32>
    %280 = vector.extract_strided_slice %54 {offsets = [16, 0], sizes = [8, 64], strides = [1, 1]} : vector<64x64xf32> to vector<8x64xf32>
    %281 = arith.truncf %259 : vector<8x16xf32> to vector<8x16xbf16>
    %cst_42 = arith.constant dense<0.000000e+00> : vector<8x64xf32>
    %282 = tpu.matmul %281, %58, %cst_42 {dimension_numbers = #tpu.dot_dimension_numbers<[1], [0], [0], [1], [0, 0, 1, 1], [], []>} : vector<8x16xbf16>, vector<16x64xbf16>, vector<8x64xf32> -> vector<8x64xf32>
    %283 = arith.addf %280, %282 : vector<8x64xf32>
    %284 = vector.extract_strided_slice %283 {offsets = [0, 0], sizes = [8, 48], strides = [1, 1]} : vector<8x64xf32> to vector<8x48xf32>
    %285 = arith.negf %284 : vector<8x48xf32>
    %286 = math.exp %285 : vector<8x48xf32>
    %cst_43 = arith.constant 1.000000e+00 : f32
    %287 = vector.broadcast %cst_43 : f32 to vector<8x48xf32>
    %288 = arith.addf %287, %286 : vector<8x48xf32>
    %289 = arith.divf %287, %288 : vector<8x48xf32>
    %290 = vector.extract_strided_slice %283 {offsets = [0, 48], sizes = [8, 16], strides = [1, 1]} : vector<8x64xf32> to vector<8x16xf32>
    %291 = math.tanh %290 : vector<8x16xf32>
    %292 = vector.extract_strided_slice %289 {offsets = [0, 16], sizes = [8, 16], strides = [1, 1]} : vector<8x48xf32> to vector<8x16xf32>
    %293 = arith.mulf %292, %256 : vector<8x16xf32>
    %294 = vector.extract_strided_slice %289 {offsets = [0, 0], sizes = [8, 16], strides = [1, 1]} : vector<8x48xf32> to vector<8x16xf32>
    %295 = arith.mulf %294, %291 : vector<8x16xf32>
    %296 = arith.addf %293, %295 : vector<8x16xf32>
    %297 = vector.extract_strided_slice %289 {offsets = [0, 32], sizes = [8, 16], strides = [1, 1]} : vector<8x48xf32> to vector<8x16xf32>
    %298 = math.tanh %296 : vector<8x16xf32>
    %299 = arith.mulf %297, %298 : vector<8x16xf32>
    %300 = vector.extract_strided_slice %53 {offsets = [48, 0], sizes = [8, 64], strides = [1, 1]} : vector<64x64xf32> to vector<8x64xf32>
    %301 = arith.truncf %279 : vector<8x16xf32> to vector<8x16xbf16>
    %cst_44 = arith.constant dense<0.000000e+00> : vector<8x64xf32>
    %302 = tpu.matmul %301, %56, %cst_44 {dimension_numbers = #tpu.dot_dimension_numbers<[1], [0], [0], [1], [0, 0, 1, 1], [], []>} : vector<8x16xbf16>, vector<16x64xbf16>, vector<8x64xf32> -> vector<8x64xf32>
    %303 = arith.addf %300, %302 : vector<8x64xf32>
    %304 = vector.extract_strided_slice %303 {offsets = [0, 0], sizes = [8, 48], strides = [1, 1]} : vector<8x64xf32> to vector<8x48xf32>
    %305 = arith.negf %304 : vector<8x48xf32>
    %306 = math.exp %305 : vector<8x48xf32>
    %cst_45 = arith.constant 1.000000e+00 : f32
    %307 = vector.broadcast %cst_45 : f32 to vector<8x48xf32>
    %308 = arith.addf %307, %306 : vector<8x48xf32>
    %309 = arith.divf %307, %308 : vector<8x48xf32>
    %310 = vector.extract_strided_slice %303 {offsets = [0, 48], sizes = [8, 16], strides = [1, 1]} : vector<8x64xf32> to vector<8x16xf32>
    %311 = math.tanh %310 : vector<8x16xf32>
    %312 = vector.extract_strided_slice %309 {offsets = [0, 16], sizes = [8, 16], strides = [1, 1]} : vector<8x48xf32> to vector<8x16xf32>
    %313 = arith.mulf %312, %276 : vector<8x16xf32>
    %314 = vector.extract_strided_slice %309 {offsets = [0, 0], sizes = [8, 16], strides = [1, 1]} : vector<8x48xf32> to vector<8x16xf32>
    %315 = arith.mulf %314, %311 : vector<8x16xf32>
    %316 = arith.addf %313, %315 : vector<8x16xf32>
    %317 = vector.extract_strided_slice %309 {offsets = [0, 32], sizes = [8, 16], strides = [1, 1]} : vector<8x48xf32> to vector<8x16xf32>
    %318 = math.tanh %316 : vector<8x16xf32>
    %319 = arith.mulf %317, %318 : vector<8x16xf32>
    %320 = vector.extract_strided_slice %54 {offsets = [8, 0], sizes = [8, 64], strides = [1, 1]} : vector<64x64xf32> to vector<8x64xf32>
    %321 = arith.truncf %299 : vector<8x16xf32> to vector<8x16xbf16>
    %cst_46 = arith.constant dense<0.000000e+00> : vector<8x64xf32>
    %322 = tpu.matmul %321, %58, %cst_46 {dimension_numbers = #tpu.dot_dimension_numbers<[1], [0], [0], [1], [0, 0, 1, 1], [], []>} : vector<8x16xbf16>, vector<16x64xbf16>, vector<8x64xf32> -> vector<8x64xf32>
    %323 = arith.addf %320, %322 : vector<8x64xf32>
    %324 = vector.extract_strided_slice %323 {offsets = [0, 0], sizes = [8, 48], strides = [1, 1]} : vector<8x64xf32> to vector<8x48xf32>
    %325 = arith.negf %324 : vector<8x48xf32>
    %326 = math.exp %325 : vector<8x48xf32>
    %cst_47 = arith.constant 1.000000e+00 : f32
    %327 = vector.broadcast %cst_47 : f32 to vector<8x48xf32>
    %328 = arith.addf %327, %326 : vector<8x48xf32>
    %329 = arith.divf %327, %328 : vector<8x48xf32>
    %330 = vector.extract_strided_slice %323 {offsets = [0, 48], sizes = [8, 16], strides = [1, 1]} : vector<8x64xf32> to vector<8x16xf32>
    %331 = math.tanh %330 : vector<8x16xf32>
    %332 = vector.extract_strided_slice %329 {offsets = [0, 16], sizes = [8, 16], strides = [1, 1]} : vector<8x48xf32> to vector<8x16xf32>
    %333 = arith.mulf %332, %296 : vector<8x16xf32>
    %334 = vector.extract_strided_slice %329 {offsets = [0, 0], sizes = [8, 16], strides = [1, 1]} : vector<8x48xf32> to vector<8x16xf32>
    %335 = arith.mulf %334, %331 : vector<8x16xf32>
    %336 = arith.addf %333, %335 : vector<8x16xf32>
    %337 = vector.extract_strided_slice %329 {offsets = [0, 32], sizes = [8, 16], strides = [1, 1]} : vector<8x48xf32> to vector<8x16xf32>
    %338 = math.tanh %336 : vector<8x16xf32>
    %339 = arith.mulf %337, %338 : vector<8x16xf32>
    %340 = vector.extract_strided_slice %53 {offsets = [56, 0], sizes = [8, 64], strides = [1, 1]} : vector<64x64xf32> to vector<8x64xf32>
    %341 = arith.truncf %319 : vector<8x16xf32> to vector<8x16xbf16>
    %cst_48 = arith.constant dense<0.000000e+00> : vector<8x64xf32>
    %342 = tpu.matmul %341, %56, %cst_48 {dimension_numbers = #tpu.dot_dimension_numbers<[1], [0], [0], [1], [0, 0, 1, 1], [], []>} : vector<8x16xbf16>, vector<16x64xbf16>, vector<8x64xf32> -> vector<8x64xf32>
    %343 = arith.addf %340, %342 : vector<8x64xf32>
    %344 = vector.extract_strided_slice %343 {offsets = [0, 0], sizes = [8, 48], strides = [1, 1]} : vector<8x64xf32> to vector<8x48xf32>
    %345 = arith.negf %344 : vector<8x48xf32>
    %346 = math.exp %345 : vector<8x48xf32>
    %cst_49 = arith.constant 1.000000e+00 : f32
    %347 = vector.broadcast %cst_49 : f32 to vector<8x48xf32>
    %348 = arith.addf %347, %346 : vector<8x48xf32>
    %349 = arith.divf %347, %348 : vector<8x48xf32>
    %350 = vector.extract_strided_slice %343 {offsets = [0, 48], sizes = [8, 16], strides = [1, 1]} : vector<8x64xf32> to vector<8x16xf32>
    %351 = math.tanh %350 : vector<8x16xf32>
    %352 = vector.extract_strided_slice %349 {offsets = [0, 16], sizes = [8, 16], strides = [1, 1]} : vector<8x48xf32> to vector<8x16xf32>
    %353 = arith.mulf %352, %316 : vector<8x16xf32>
    %354 = vector.extract_strided_slice %349 {offsets = [0, 0], sizes = [8, 16], strides = [1, 1]} : vector<8x48xf32> to vector<8x16xf32>
    %355 = arith.mulf %354, %351 : vector<8x16xf32>
    %356 = arith.addf %353, %355 : vector<8x16xf32>
    %357 = vector.extract_strided_slice %349 {offsets = [0, 32], sizes = [8, 16], strides = [1, 1]} : vector<8x48xf32> to vector<8x16xf32>
    %358 = math.tanh %356 : vector<8x16xf32>
    %359 = arith.mulf %357, %358 : vector<8x16xf32>
    %360 = vector.extract_strided_slice %54 {offsets = [0, 0], sizes = [8, 64], strides = [1, 1]} : vector<64x64xf32> to vector<8x64xf32>
    %361 = arith.truncf %339 : vector<8x16xf32> to vector<8x16xbf16>
    %cst_50 = arith.constant dense<0.000000e+00> : vector<8x64xf32>
    %362 = tpu.matmul %361, %58, %cst_50 {dimension_numbers = #tpu.dot_dimension_numbers<[1], [0], [0], [1], [0, 0, 1, 1], [], []>} : vector<8x16xbf16>, vector<16x64xbf16>, vector<8x64xf32> -> vector<8x64xf32>
    %363 = arith.addf %360, %362 : vector<8x64xf32>
    %364 = vector.extract_strided_slice %363 {offsets = [0, 0], sizes = [8, 48], strides = [1, 1]} : vector<8x64xf32> to vector<8x48xf32>
    %365 = arith.negf %364 : vector<8x48xf32>
    %366 = math.exp %365 : vector<8x48xf32>
    %cst_51 = arith.constant 1.000000e+00 : f32
    %367 = vector.broadcast %cst_51 : f32 to vector<8x48xf32>
    %368 = arith.addf %367, %366 : vector<8x48xf32>
    %369 = arith.divf %367, %368 : vector<8x48xf32>
    %370 = vector.extract_strided_slice %363 {offsets = [0, 48], sizes = [8, 16], strides = [1, 1]} : vector<8x64xf32> to vector<8x16xf32>
    %371 = math.tanh %370 : vector<8x16xf32>
    %372 = vector.extract_strided_slice %369 {offsets = [0, 16], sizes = [8, 16], strides = [1, 1]} : vector<8x48xf32> to vector<8x16xf32>
    %373 = arith.mulf %372, %336 : vector<8x16xf32>
    %374 = vector.extract_strided_slice %369 {offsets = [0, 0], sizes = [8, 16], strides = [1, 1]} : vector<8x48xf32> to vector<8x16xf32>
    %375 = arith.mulf %374, %371 : vector<8x16xf32>
    %376 = arith.addf %373, %375 : vector<8x16xf32>
    %377 = vector.extract_strided_slice %369 {offsets = [0, 32], sizes = [8, 16], strides = [1, 1]} : vector<8x48xf32> to vector<8x16xf32>
    %378 = math.tanh %376 : vector<8x16xf32>
    %379 = arith.mulf %377, %378 : vector<8x16xf32>
    %380 = tpu.concatenate %79, %119, %159, %199, %239, %279, %319, %359 in 0 : vector<8x16xf32>, vector<8x16xf32>, vector<8x16xf32>, vector<8x16xf32>, vector<8x16xf32>, vector<8x16xf32>, vector<8x16xf32>, vector<8x16xf32> -> vector<64x16xf32>
    %381 = tpu.concatenate %379, %339, %299, %259, %219, %179, %139, %99 in 0 : vector<8x16xf32>, vector<8x16xf32>, vector<8x16xf32>, vector<8x16xf32>, vector<8x16xf32>, vector<8x16xf32>, vector<8x16xf32>, vector<8x16xf32> -> vector<64x16xf32>
    %c88 = arith.constant 88 : index
    %c0_52 = arith.constant 0 : index
    %382 = vector.load %arg1[%c88, %c0_52] : memref<200x128xf32, #tpu.memory_space<vmem>>, vector<32x64xf32>
    %383 = arith.truncf %380 : vector<64x16xf32> to vector<64x16xbf16>
    %384 = vector.extract_strided_slice %382 {offsets = [0, 0], sizes = [16, 64], strides = [1, 1]} : vector<32x64xf32> to vector<16x64xf32>
    %385 = arith.truncf %384 : vector<16x64xf32> to vector<16x64xbf16>
    %cst_53 = arith.constant dense<0.000000e+00> : vector<64x64xf32>
    %386 = tpu.matmul %383, %385, %cst_53 {dimension_numbers = #tpu.dot_dimension_numbers<[1], [0], [0], [1], [0, 0, 1, 1], [], []>} : vector<64x16xbf16>, vector<16x64xbf16>, vector<64x64xf32> -> vector<64x64xf32>
    %387 = arith.truncf %381 : vector<64x16xf32> to vector<64x16xbf16>
    %388 = vector.extract_strided_slice %382 {offsets = [16, 0], sizes = [16, 64], strides = [1, 1]} : vector<32x64xf32> to vector<16x64xf32>
    %389 = arith.truncf %388 : vector<16x64xf32> to vector<16x64xbf16>
    %cst_54 = arith.constant dense<0.000000e+00> : vector<64x64xf32>
    %390 = tpu.matmul %387, %389, %cst_54 {dimension_numbers = #tpu.dot_dimension_numbers<[1], [0], [0], [1], [0, 0, 1, 1], [], []>} : vector<64x16xbf16>, vector<16x64xbf16>, vector<64x64xf32> -> vector<64x64xf32>
    %391 = arith.addf %386, %390 : vector<64x64xf32>
    %c120 = arith.constant 120 : index
    %c0_55 = arith.constant 0 : index
    %392 = vector.load %arg1[%c120, %c0_55] : memref<200x128xf32, #tpu.memory_space<vmem>>, vector<1x64xf32>
    %393 = vector.broadcast %392 : vector<1x64xf32> to vector<64x64xf32>
    %394 = arith.addf %391, %393 : vector<64x64xf32>
    %c128 = arith.constant 128 : index
    %c0_56 = arith.constant 0 : index
    %395 = vector.load %arg1[%c128, %c0_56] : memref<200x128xf32, #tpu.memory_space<vmem>>, vector<8x64xf32>
    %396 = vector.extract_strided_slice %394 {offsets = [0, 0], sizes = [64, 32], strides = [1, 1]} : vector<64x64xf32> to vector<64x32xf32>
    %397 = vector.extract_strided_slice %394 {offsets = [0, 32], sizes = [64, 32], strides = [1, 1]} : vector<64x64xf32> to vector<64x32xf32>
    %398 = vector.extract_strided_slice %395 {offsets = [0, 0], sizes = [8, 32], strides = [1, 1]} : vector<8x64xf32> to vector<8x32xf32>
    %399 = arith.truncf %398 : vector<8x32xf32> to vector<8x32xbf16>
    %400 = vector.extract_strided_slice %395 {offsets = [0, 32], sizes = [8, 32], strides = [1, 1]} : vector<8x64xf32> to vector<8x32xf32>
    %401 = arith.truncf %400 : vector<8x32xf32> to vector<8x32xbf16>
    %cst_57 = arith.constant 0.000000e+00 : f32
    %402 = vector.broadcast %cst_57 : f32 to vector<8x8xf32>
    %403 = vector.extract_strided_slice %396 {offsets = [0, 0], sizes = [8, 32], strides = [1, 1]} : vector<64x32xf32> to vector<8x32xf32>
    %404 = arith.truncf %402 : vector<8x8xf32> to vector<8x8xbf16>
    %cst_58 = arith.constant dense<0.000000e+00> : vector<8x32xf32>
    %405 = tpu.matmul %404, %399, %cst_58 {dimension_numbers = #tpu.dot_dimension_numbers<[1], [0], [0], [1], [0, 0, 1, 1], [], []>} : vector<8x8xbf16>, vector<8x32xbf16>, vector<8x32xf32> -> vector<8x32xf32>
    %406 = arith.addf %403, %405 : vector<8x32xf32>
    %407 = vector.extract_strided_slice %406 {offsets = [0, 0], sizes = [8, 24], strides = [1, 1]} : vector<8x32xf32> to vector<8x24xf32>
    %408 = arith.negf %407 : vector<8x24xf32>
    %409 = math.exp %408 : vector<8x24xf32>
    %cst_59 = arith.constant 1.000000e+00 : f32
    %410 = vector.broadcast %cst_59 : f32 to vector<8x24xf32>
    %411 = arith.addf %410, %409 : vector<8x24xf32>
    %412 = arith.divf %410, %411 : vector<8x24xf32>
    %413 = vector.extract_strided_slice %406 {offsets = [0, 24], sizes = [8, 8], strides = [1, 1]} : vector<8x32xf32> to vector<8x8xf32>
    %414 = math.tanh %413 : vector<8x8xf32>
    %415 = vector.extract_strided_slice %412 {offsets = [0, 8], sizes = [8, 8], strides = [1, 1]} : vector<8x24xf32> to vector<8x8xf32>
    %416 = arith.mulf %415, %402 : vector<8x8xf32>
    %417 = vector.extract_strided_slice %412 {offsets = [0, 0], sizes = [8, 8], strides = [1, 1]} : vector<8x24xf32> to vector<8x8xf32>
    %418 = arith.mulf %417, %414 : vector<8x8xf32>
    %419 = arith.addf %416, %418 : vector<8x8xf32>
    %420 = vector.extract_strided_slice %412 {offsets = [0, 16], sizes = [8, 8], strides = [1, 1]} : vector<8x24xf32> to vector<8x8xf32>
    %421 = math.tanh %419 : vector<8x8xf32>
    %422 = arith.mulf %420, %421 : vector<8x8xf32>
    %423 = vector.extract_strided_slice %397 {offsets = [56, 0], sizes = [8, 32], strides = [1, 1]} : vector<64x32xf32> to vector<8x32xf32>
    %424 = arith.truncf %402 : vector<8x8xf32> to vector<8x8xbf16>
    %cst_60 = arith.constant dense<0.000000e+00> : vector<8x32xf32>
    %425 = tpu.matmul %424, %401, %cst_60 {dimension_numbers = #tpu.dot_dimension_numbers<[1], [0], [0], [1], [0, 0, 1, 1], [], []>} : vector<8x8xbf16>, vector<8x32xbf16>, vector<8x32xf32> -> vector<8x32xf32>
    %426 = arith.addf %423, %425 : vector<8x32xf32>
    %427 = vector.extract_strided_slice %426 {offsets = [0, 0], sizes = [8, 24], strides = [1, 1]} : vector<8x32xf32> to vector<8x24xf32>
    %428 = arith.negf %427 : vector<8x24xf32>
    %429 = math.exp %428 : vector<8x24xf32>
    %cst_61 = arith.constant 1.000000e+00 : f32
    %430 = vector.broadcast %cst_61 : f32 to vector<8x24xf32>
    %431 = arith.addf %430, %429 : vector<8x24xf32>
    %432 = arith.divf %430, %431 : vector<8x24xf32>
    %433 = vector.extract_strided_slice %426 {offsets = [0, 24], sizes = [8, 8], strides = [1, 1]} : vector<8x32xf32> to vector<8x8xf32>
    %434 = math.tanh %433 : vector<8x8xf32>
    %435 = vector.extract_strided_slice %432 {offsets = [0, 8], sizes = [8, 8], strides = [1, 1]} : vector<8x24xf32> to vector<8x8xf32>
    %436 = arith.mulf %435, %402 : vector<8x8xf32>
    %437 = vector.extract_strided_slice %432 {offsets = [0, 0], sizes = [8, 8], strides = [1, 1]} : vector<8x24xf32> to vector<8x8xf32>
    %438 = arith.mulf %437, %434 : vector<8x8xf32>
    %439 = arith.addf %436, %438 : vector<8x8xf32>
    %440 = vector.extract_strided_slice %432 {offsets = [0, 16], sizes = [8, 8], strides = [1, 1]} : vector<8x24xf32> to vector<8x8xf32>
    %441 = math.tanh %439 : vector<8x8xf32>
    %442 = arith.mulf %440, %441 : vector<8x8xf32>
    %443 = vector.extract_strided_slice %396 {offsets = [8, 0], sizes = [8, 32], strides = [1, 1]} : vector<64x32xf32> to vector<8x32xf32>
    %444 = arith.truncf %422 : vector<8x8xf32> to vector<8x8xbf16>
    %cst_62 = arith.constant dense<0.000000e+00> : vector<8x32xf32>
    %445 = tpu.matmul %444, %399, %cst_62 {dimension_numbers = #tpu.dot_dimension_numbers<[1], [0], [0], [1], [0, 0, 1, 1], [], []>} : vector<8x8xbf16>, vector<8x32xbf16>, vector<8x32xf32> -> vector<8x32xf32>
    %446 = arith.addf %443, %445 : vector<8x32xf32>
    %447 = vector.extract_strided_slice %446 {offsets = [0, 0], sizes = [8, 24], strides = [1, 1]} : vector<8x32xf32> to vector<8x24xf32>
    %448 = arith.negf %447 : vector<8x24xf32>
    %449 = math.exp %448 : vector<8x24xf32>
    %cst_63 = arith.constant 1.000000e+00 : f32
    %450 = vector.broadcast %cst_63 : f32 to vector<8x24xf32>
    %451 = arith.addf %450, %449 : vector<8x24xf32>
    %452 = arith.divf %450, %451 : vector<8x24xf32>
    %453 = vector.extract_strided_slice %446 {offsets = [0, 24], sizes = [8, 8], strides = [1, 1]} : vector<8x32xf32> to vector<8x8xf32>
    %454 = math.tanh %453 : vector<8x8xf32>
    %455 = vector.extract_strided_slice %452 {offsets = [0, 8], sizes = [8, 8], strides = [1, 1]} : vector<8x24xf32> to vector<8x8xf32>
    %456 = arith.mulf %455, %419 : vector<8x8xf32>
    %457 = vector.extract_strided_slice %452 {offsets = [0, 0], sizes = [8, 8], strides = [1, 1]} : vector<8x24xf32> to vector<8x8xf32>
    %458 = arith.mulf %457, %454 : vector<8x8xf32>
    %459 = arith.addf %456, %458 : vector<8x8xf32>
    %460 = vector.extract_strided_slice %452 {offsets = [0, 16], sizes = [8, 8], strides = [1, 1]} : vector<8x24xf32> to vector<8x8xf32>
    %461 = math.tanh %459 : vector<8x8xf32>
    %462 = arith.mulf %460, %461 : vector<8x8xf32>
    %463 = vector.extract_strided_slice %397 {offsets = [48, 0], sizes = [8, 32], strides = [1, 1]} : vector<64x32xf32> to vector<8x32xf32>
    %464 = arith.truncf %442 : vector<8x8xf32> to vector<8x8xbf16>
    %cst_64 = arith.constant dense<0.000000e+00> : vector<8x32xf32>
    %465 = tpu.matmul %464, %401, %cst_64 {dimension_numbers = #tpu.dot_dimension_numbers<[1], [0], [0], [1], [0, 0, 1, 1], [], []>} : vector<8x8xbf16>, vector<8x32xbf16>, vector<8x32xf32> -> vector<8x32xf32>
    %466 = arith.addf %463, %465 : vector<8x32xf32>
    %467 = vector.extract_strided_slice %466 {offsets = [0, 0], sizes = [8, 24], strides = [1, 1]} : vector<8x32xf32> to vector<8x24xf32>
    %468 = arith.negf %467 : vector<8x24xf32>
    %469 = math.exp %468 : vector<8x24xf32>
    %cst_65 = arith.constant 1.000000e+00 : f32
    %470 = vector.broadcast %cst_65 : f32 to vector<8x24xf32>
    %471 = arith.addf %470, %469 : vector<8x24xf32>
    %472 = arith.divf %470, %471 : vector<8x24xf32>
    %473 = vector.extract_strided_slice %466 {offsets = [0, 24], sizes = [8, 8], strides = [1, 1]} : vector<8x32xf32> to vector<8x8xf32>
    %474 = math.tanh %473 : vector<8x8xf32>
    %475 = vector.extract_strided_slice %472 {offsets = [0, 8], sizes = [8, 8], strides = [1, 1]} : vector<8x24xf32> to vector<8x8xf32>
    %476 = arith.mulf %475, %439 : vector<8x8xf32>
    %477 = vector.extract_strided_slice %472 {offsets = [0, 0], sizes = [8, 8], strides = [1, 1]} : vector<8x24xf32> to vector<8x8xf32>
    %478 = arith.mulf %477, %474 : vector<8x8xf32>
    %479 = arith.addf %476, %478 : vector<8x8xf32>
    %480 = vector.extract_strided_slice %472 {offsets = [0, 16], sizes = [8, 8], strides = [1, 1]} : vector<8x24xf32> to vector<8x8xf32>
    %481 = math.tanh %479 : vector<8x8xf32>
    %482 = arith.mulf %480, %481 : vector<8x8xf32>
    %483 = vector.extract_strided_slice %396 {offsets = [16, 0], sizes = [8, 32], strides = [1, 1]} : vector<64x32xf32> to vector<8x32xf32>
    %484 = arith.truncf %462 : vector<8x8xf32> to vector<8x8xbf16>
    %cst_66 = arith.constant dense<0.000000e+00> : vector<8x32xf32>
    %485 = tpu.matmul %484, %399, %cst_66 {dimension_numbers = #tpu.dot_dimension_numbers<[1], [0], [0], [1], [0, 0, 1, 1], [], []>} : vector<8x8xbf16>, vector<8x32xbf16>, vector<8x32xf32> -> vector<8x32xf32>
    %486 = arith.addf %483, %485 : vector<8x32xf32>
    %487 = vector.extract_strided_slice %486 {offsets = [0, 0], sizes = [8, 24], strides = [1, 1]} : vector<8x32xf32> to vector<8x24xf32>
    %488 = arith.negf %487 : vector<8x24xf32>
    %489 = math.exp %488 : vector<8x24xf32>
    %cst_67 = arith.constant 1.000000e+00 : f32
    %490 = vector.broadcast %cst_67 : f32 to vector<8x24xf32>
    %491 = arith.addf %490, %489 : vector<8x24xf32>
    %492 = arith.divf %490, %491 : vector<8x24xf32>
    %493 = vector.extract_strided_slice %486 {offsets = [0, 24], sizes = [8, 8], strides = [1, 1]} : vector<8x32xf32> to vector<8x8xf32>
    %494 = math.tanh %493 : vector<8x8xf32>
    %495 = vector.extract_strided_slice %492 {offsets = [0, 8], sizes = [8, 8], strides = [1, 1]} : vector<8x24xf32> to vector<8x8xf32>
    %496 = arith.mulf %495, %459 : vector<8x8xf32>
    %497 = vector.extract_strided_slice %492 {offsets = [0, 0], sizes = [8, 8], strides = [1, 1]} : vector<8x24xf32> to vector<8x8xf32>
    %498 = arith.mulf %497, %494 : vector<8x8xf32>
    %499 = arith.addf %496, %498 : vector<8x8xf32>
    %500 = vector.extract_strided_slice %492 {offsets = [0, 16], sizes = [8, 8], strides = [1, 1]} : vector<8x24xf32> to vector<8x8xf32>
    %501 = math.tanh %499 : vector<8x8xf32>
    %502 = arith.mulf %500, %501 : vector<8x8xf32>
    %503 = vector.extract_strided_slice %397 {offsets = [40, 0], sizes = [8, 32], strides = [1, 1]} : vector<64x32xf32> to vector<8x32xf32>
    %504 = arith.truncf %482 : vector<8x8xf32> to vector<8x8xbf16>
    %cst_68 = arith.constant dense<0.000000e+00> : vector<8x32xf32>
    %505 = tpu.matmul %504, %401, %cst_68 {dimension_numbers = #tpu.dot_dimension_numbers<[1], [0], [0], [1], [0, 0, 1, 1], [], []>} : vector<8x8xbf16>, vector<8x32xbf16>, vector<8x32xf32> -> vector<8x32xf32>
    %506 = arith.addf %503, %505 : vector<8x32xf32>
    %507 = vector.extract_strided_slice %506 {offsets = [0, 0], sizes = [8, 24], strides = [1, 1]} : vector<8x32xf32> to vector<8x24xf32>
    %508 = arith.negf %507 : vector<8x24xf32>
    %509 = math.exp %508 : vector<8x24xf32>
    %cst_69 = arith.constant 1.000000e+00 : f32
    %510 = vector.broadcast %cst_69 : f32 to vector<8x24xf32>
    %511 = arith.addf %510, %509 : vector<8x24xf32>
    %512 = arith.divf %510, %511 : vector<8x24xf32>
    %513 = vector.extract_strided_slice %506 {offsets = [0, 24], sizes = [8, 8], strides = [1, 1]} : vector<8x32xf32> to vector<8x8xf32>
    %514 = math.tanh %513 : vector<8x8xf32>
    %515 = vector.extract_strided_slice %512 {offsets = [0, 8], sizes = [8, 8], strides = [1, 1]} : vector<8x24xf32> to vector<8x8xf32>
    %516 = arith.mulf %515, %479 : vector<8x8xf32>
    %517 = vector.extract_strided_slice %512 {offsets = [0, 0], sizes = [8, 8], strides = [1, 1]} : vector<8x24xf32> to vector<8x8xf32>
    %518 = arith.mulf %517, %514 : vector<8x8xf32>
    %519 = arith.addf %516, %518 : vector<8x8xf32>
    %520 = vector.extract_strided_slice %512 {offsets = [0, 16], sizes = [8, 8], strides = [1, 1]} : vector<8x24xf32> to vector<8x8xf32>
    %521 = math.tanh %519 : vector<8x8xf32>
    %522 = arith.mulf %520, %521 : vector<8x8xf32>
    %523 = vector.extract_strided_slice %396 {offsets = [24, 0], sizes = [8, 32], strides = [1, 1]} : vector<64x32xf32> to vector<8x32xf32>
    %524 = arith.truncf %502 : vector<8x8xf32> to vector<8x8xbf16>
    %cst_70 = arith.constant dense<0.000000e+00> : vector<8x32xf32>
    %525 = tpu.matmul %524, %399, %cst_70 {dimension_numbers = #tpu.dot_dimension_numbers<[1], [0], [0], [1], [0, 0, 1, 1], [], []>} : vector<8x8xbf16>, vector<8x32xbf16>, vector<8x32xf32> -> vector<8x32xf32>
    %526 = arith.addf %523, %525 : vector<8x32xf32>
    %527 = vector.extract_strided_slice %526 {offsets = [0, 0], sizes = [8, 24], strides = [1, 1]} : vector<8x32xf32> to vector<8x24xf32>
    %528 = arith.negf %527 : vector<8x24xf32>
    %529 = math.exp %528 : vector<8x24xf32>
    %cst_71 = arith.constant 1.000000e+00 : f32
    %530 = vector.broadcast %cst_71 : f32 to vector<8x24xf32>
    %531 = arith.addf %530, %529 : vector<8x24xf32>
    %532 = arith.divf %530, %531 : vector<8x24xf32>
    %533 = vector.extract_strided_slice %526 {offsets = [0, 24], sizes = [8, 8], strides = [1, 1]} : vector<8x32xf32> to vector<8x8xf32>
    %534 = math.tanh %533 : vector<8x8xf32>
    %535 = vector.extract_strided_slice %532 {offsets = [0, 8], sizes = [8, 8], strides = [1, 1]} : vector<8x24xf32> to vector<8x8xf32>
    %536 = arith.mulf %535, %499 : vector<8x8xf32>
    %537 = vector.extract_strided_slice %532 {offsets = [0, 0], sizes = [8, 8], strides = [1, 1]} : vector<8x24xf32> to vector<8x8xf32>
    %538 = arith.mulf %537, %534 : vector<8x8xf32>
    %539 = arith.addf %536, %538 : vector<8x8xf32>
    %540 = vector.extract_strided_slice %532 {offsets = [0, 16], sizes = [8, 8], strides = [1, 1]} : vector<8x24xf32> to vector<8x8xf32>
    %541 = math.tanh %539 : vector<8x8xf32>
    %542 = arith.mulf %540, %541 : vector<8x8xf32>
    %543 = vector.extract_strided_slice %397 {offsets = [32, 0], sizes = [8, 32], strides = [1, 1]} : vector<64x32xf32> to vector<8x32xf32>
    %544 = arith.truncf %522 : vector<8x8xf32> to vector<8x8xbf16>
    %cst_72 = arith.constant dense<0.000000e+00> : vector<8x32xf32>
    %545 = tpu.matmul %544, %401, %cst_72 {dimension_numbers = #tpu.dot_dimension_numbers<[1], [0], [0], [1], [0, 0, 1, 1], [], []>} : vector<8x8xbf16>, vector<8x32xbf16>, vector<8x32xf32> -> vector<8x32xf32>
    %546 = arith.addf %543, %545 : vector<8x32xf32>
    %547 = vector.extract_strided_slice %546 {offsets = [0, 0], sizes = [8, 24], strides = [1, 1]} : vector<8x32xf32> to vector<8x24xf32>
    %548 = arith.negf %547 : vector<8x24xf32>
    %549 = math.exp %548 : vector<8x24xf32>
    %cst_73 = arith.constant 1.000000e+00 : f32
    %550 = vector.broadcast %cst_73 : f32 to vector<8x24xf32>
    %551 = arith.addf %550, %549 : vector<8x24xf32>
    %552 = arith.divf %550, %551 : vector<8x24xf32>
    %553 = vector.extract_strided_slice %546 {offsets = [0, 24], sizes = [8, 8], strides = [1, 1]} : vector<8x32xf32> to vector<8x8xf32>
    %554 = math.tanh %553 : vector<8x8xf32>
    %555 = vector.extract_strided_slice %552 {offsets = [0, 8], sizes = [8, 8], strides = [1, 1]} : vector<8x24xf32> to vector<8x8xf32>
    %556 = arith.mulf %555, %519 : vector<8x8xf32>
    %557 = vector.extract_strided_slice %552 {offsets = [0, 0], sizes = [8, 8], strides = [1, 1]} : vector<8x24xf32> to vector<8x8xf32>
    %558 = arith.mulf %557, %554 : vector<8x8xf32>
    %559 = arith.addf %556, %558 : vector<8x8xf32>
    %560 = vector.extract_strided_slice %552 {offsets = [0, 16], sizes = [8, 8], strides = [1, 1]} : vector<8x24xf32> to vector<8x8xf32>
    %561 = math.tanh %559 : vector<8x8xf32>
    %562 = arith.mulf %560, %561 : vector<8x8xf32>
    %563 = vector.extract_strided_slice %396 {offsets = [32, 0], sizes = [8, 32], strides = [1, 1]} : vector<64x32xf32> to vector<8x32xf32>
    %564 = arith.truncf %542 : vector<8x8xf32> to vector<8x8xbf16>
    %cst_74 = arith.constant dense<0.000000e+00> : vector<8x32xf32>
    %565 = tpu.matmul %564, %399, %cst_74 {dimension_numbers = #tpu.dot_dimension_numbers<[1], [0], [0], [1], [0, 0, 1, 1], [], []>} : vector<8x8xbf16>, vector<8x32xbf16>, vector<8x32xf32> -> vector<8x32xf32>
    %566 = arith.addf %563, %565 : vector<8x32xf32>
    %567 = vector.extract_strided_slice %566 {offsets = [0, 0], sizes = [8, 24], strides = [1, 1]} : vector<8x32xf32> to vector<8x24xf32>
    %568 = arith.negf %567 : vector<8x24xf32>
    %569 = math.exp %568 : vector<8x24xf32>
    %cst_75 = arith.constant 1.000000e+00 : f32
    %570 = vector.broadcast %cst_75 : f32 to vector<8x24xf32>
    %571 = arith.addf %570, %569 : vector<8x24xf32>
    %572 = arith.divf %570, %571 : vector<8x24xf32>
    %573 = vector.extract_strided_slice %566 {offsets = [0, 24], sizes = [8, 8], strides = [1, 1]} : vector<8x32xf32> to vector<8x8xf32>
    %574 = math.tanh %573 : vector<8x8xf32>
    %575 = vector.extract_strided_slice %572 {offsets = [0, 8], sizes = [8, 8], strides = [1, 1]} : vector<8x24xf32> to vector<8x8xf32>
    %576 = arith.mulf %575, %539 : vector<8x8xf32>
    %577 = vector.extract_strided_slice %572 {offsets = [0, 0], sizes = [8, 8], strides = [1, 1]} : vector<8x24xf32> to vector<8x8xf32>
    %578 = arith.mulf %577, %574 : vector<8x8xf32>
    %579 = arith.addf %576, %578 : vector<8x8xf32>
    %580 = vector.extract_strided_slice %572 {offsets = [0, 16], sizes = [8, 8], strides = [1, 1]} : vector<8x24xf32> to vector<8x8xf32>
    %581 = math.tanh %579 : vector<8x8xf32>
    %582 = arith.mulf %580, %581 : vector<8x8xf32>
    %583 = vector.extract_strided_slice %397 {offsets = [24, 0], sizes = [8, 32], strides = [1, 1]} : vector<64x32xf32> to vector<8x32xf32>
    %584 = arith.truncf %562 : vector<8x8xf32> to vector<8x8xbf16>
    %cst_76 = arith.constant dense<0.000000e+00> : vector<8x32xf32>
    %585 = tpu.matmul %584, %401, %cst_76 {dimension_numbers = #tpu.dot_dimension_numbers<[1], [0], [0], [1], [0, 0, 1, 1], [], []>} : vector<8x8xbf16>, vector<8x32xbf16>, vector<8x32xf32> -> vector<8x32xf32>
    %586 = arith.addf %583, %585 : vector<8x32xf32>
    %587 = vector.extract_strided_slice %586 {offsets = [0, 0], sizes = [8, 24], strides = [1, 1]} : vector<8x32xf32> to vector<8x24xf32>
    %588 = arith.negf %587 : vector<8x24xf32>
    %589 = math.exp %588 : vector<8x24xf32>
    %cst_77 = arith.constant 1.000000e+00 : f32
    %590 = vector.broadcast %cst_77 : f32 to vector<8x24xf32>
    %591 = arith.addf %590, %589 : vector<8x24xf32>
    %592 = arith.divf %590, %591 : vector<8x24xf32>
    %593 = vector.extract_strided_slice %586 {offsets = [0, 24], sizes = [8, 8], strides = [1, 1]} : vector<8x32xf32> to vector<8x8xf32>
    %594 = math.tanh %593 : vector<8x8xf32>
    %595 = vector.extract_strided_slice %592 {offsets = [0, 8], sizes = [8, 8], strides = [1, 1]} : vector<8x24xf32> to vector<8x8xf32>
    %596 = arith.mulf %595, %559 : vector<8x8xf32>
    %597 = vector.extract_strided_slice %592 {offsets = [0, 0], sizes = [8, 8], strides = [1, 1]} : vector<8x24xf32> to vector<8x8xf32>
    %598 = arith.mulf %597, %594 : vector<8x8xf32>
    %599 = arith.addf %596, %598 : vector<8x8xf32>
    %600 = vector.extract_strided_slice %592 {offsets = [0, 16], sizes = [8, 8], strides = [1, 1]} : vector<8x24xf32> to vector<8x8xf32>
    %601 = math.tanh %599 : vector<8x8xf32>
    %602 = arith.mulf %600, %601 : vector<8x8xf32>
    %603 = vector.extract_strided_slice %396 {offsets = [40, 0], sizes = [8, 32], strides = [1, 1]} : vector<64x32xf32> to vector<8x32xf32>
    %604 = arith.truncf %582 : vector<8x8xf32> to vector<8x8xbf16>
    %cst_78 = arith.constant dense<0.000000e+00> : vector<8x32xf32>
    %605 = tpu.matmul %604, %399, %cst_78 {dimension_numbers = #tpu.dot_dimension_numbers<[1], [0], [0], [1], [0, 0, 1, 1], [], []>} : vector<8x8xbf16>, vector<8x32xbf16>, vector<8x32xf32> -> vector<8x32xf32>
    %606 = arith.addf %603, %605 : vector<8x32xf32>
    %607 = vector.extract_strided_slice %606 {offsets = [0, 0], sizes = [8, 24], strides = [1, 1]} : vector<8x32xf32> to vector<8x24xf32>
    %608 = arith.negf %607 : vector<8x24xf32>
    %609 = math.exp %608 : vector<8x24xf32>
    %cst_79 = arith.constant 1.000000e+00 : f32
    %610 = vector.broadcast %cst_79 : f32 to vector<8x24xf32>
    %611 = arith.addf %610, %609 : vector<8x24xf32>
    %612 = arith.divf %610, %611 : vector<8x24xf32>
    %613 = vector.extract_strided_slice %606 {offsets = [0, 24], sizes = [8, 8], strides = [1, 1]} : vector<8x32xf32> to vector<8x8xf32>
    %614 = math.tanh %613 : vector<8x8xf32>
    %615 = vector.extract_strided_slice %612 {offsets = [0, 8], sizes = [8, 8], strides = [1, 1]} : vector<8x24xf32> to vector<8x8xf32>
    %616 = arith.mulf %615, %579 : vector<8x8xf32>
    %617 = vector.extract_strided_slice %612 {offsets = [0, 0], sizes = [8, 8], strides = [1, 1]} : vector<8x24xf32> to vector<8x8xf32>
    %618 = arith.mulf %617, %614 : vector<8x8xf32>
    %619 = arith.addf %616, %618 : vector<8x8xf32>
    %620 = vector.extract_strided_slice %612 {offsets = [0, 16], sizes = [8, 8], strides = [1, 1]} : vector<8x24xf32> to vector<8x8xf32>
    %621 = math.tanh %619 : vector<8x8xf32>
    %622 = arith.mulf %620, %621 : vector<8x8xf32>
    %623 = vector.extract_strided_slice %397 {offsets = [16, 0], sizes = [8, 32], strides = [1, 1]} : vector<64x32xf32> to vector<8x32xf32>
    %624 = arith.truncf %602 : vector<8x8xf32> to vector<8x8xbf16>
    %cst_80 = arith.constant dense<0.000000e+00> : vector<8x32xf32>
    %625 = tpu.matmul %624, %401, %cst_80 {dimension_numbers = #tpu.dot_dimension_numbers<[1], [0], [0], [1], [0, 0, 1, 1], [], []>} : vector<8x8xbf16>, vector<8x32xbf16>, vector<8x32xf32> -> vector<8x32xf32>
    %626 = arith.addf %623, %625 : vector<8x32xf32>
    %627 = vector.extract_strided_slice %626 {offsets = [0, 0], sizes = [8, 24], strides = [1, 1]} : vector<8x32xf32> to vector<8x24xf32>
    %628 = arith.negf %627 : vector<8x24xf32>
    %629 = math.exp %628 : vector<8x24xf32>
    %cst_81 = arith.constant 1.000000e+00 : f32
    %630 = vector.broadcast %cst_81 : f32 to vector<8x24xf32>
    %631 = arith.addf %630, %629 : vector<8x24xf32>
    %632 = arith.divf %630, %631 : vector<8x24xf32>
    %633 = vector.extract_strided_slice %626 {offsets = [0, 24], sizes = [8, 8], strides = [1, 1]} : vector<8x32xf32> to vector<8x8xf32>
    %634 = math.tanh %633 : vector<8x8xf32>
    %635 = vector.extract_strided_slice %632 {offsets = [0, 8], sizes = [8, 8], strides = [1, 1]} : vector<8x24xf32> to vector<8x8xf32>
    %636 = arith.mulf %635, %599 : vector<8x8xf32>
    %637 = vector.extract_strided_slice %632 {offsets = [0, 0], sizes = [8, 8], strides = [1, 1]} : vector<8x24xf32> to vector<8x8xf32>
    %638 = arith.mulf %637, %634 : vector<8x8xf32>
    %639 = arith.addf %636, %638 : vector<8x8xf32>
    %640 = vector.extract_strided_slice %632 {offsets = [0, 16], sizes = [8, 8], strides = [1, 1]} : vector<8x24xf32> to vector<8x8xf32>
    %641 = math.tanh %639 : vector<8x8xf32>
    %642 = arith.mulf %640, %641 : vector<8x8xf32>
    %643 = vector.extract_strided_slice %396 {offsets = [48, 0], sizes = [8, 32], strides = [1, 1]} : vector<64x32xf32> to vector<8x32xf32>
    %644 = arith.truncf %622 : vector<8x8xf32> to vector<8x8xbf16>
    %cst_82 = arith.constant dense<0.000000e+00> : vector<8x32xf32>
    %645 = tpu.matmul %644, %399, %cst_82 {dimension_numbers = #tpu.dot_dimension_numbers<[1], [0], [0], [1], [0, 0, 1, 1], [], []>} : vector<8x8xbf16>, vector<8x32xbf16>, vector<8x32xf32> -> vector<8x32xf32>
    %646 = arith.addf %643, %645 : vector<8x32xf32>
    %647 = vector.extract_strided_slice %646 {offsets = [0, 0], sizes = [8, 24], strides = [1, 1]} : vector<8x32xf32> to vector<8x24xf32>
    %648 = arith.negf %647 : vector<8x24xf32>
    %649 = math.exp %648 : vector<8x24xf32>
    %cst_83 = arith.constant 1.000000e+00 : f32
    %650 = vector.broadcast %cst_83 : f32 to vector<8x24xf32>
    %651 = arith.addf %650, %649 : vector<8x24xf32>
    %652 = arith.divf %650, %651 : vector<8x24xf32>
    %653 = vector.extract_strided_slice %646 {offsets = [0, 24], sizes = [8, 8], strides = [1, 1]} : vector<8x32xf32> to vector<8x8xf32>
    %654 = math.tanh %653 : vector<8x8xf32>
    %655 = vector.extract_strided_slice %652 {offsets = [0, 8], sizes = [8, 8], strides = [1, 1]} : vector<8x24xf32> to vector<8x8xf32>
    %656 = arith.mulf %655, %619 : vector<8x8xf32>
    %657 = vector.extract_strided_slice %652 {offsets = [0, 0], sizes = [8, 8], strides = [1, 1]} : vector<8x24xf32> to vector<8x8xf32>
    %658 = arith.mulf %657, %654 : vector<8x8xf32>
    %659 = arith.addf %656, %658 : vector<8x8xf32>
    %660 = vector.extract_strided_slice %652 {offsets = [0, 16], sizes = [8, 8], strides = [1, 1]} : vector<8x24xf32> to vector<8x8xf32>
    %661 = math.tanh %659 : vector<8x8xf32>
    %662 = arith.mulf %660, %661 : vector<8x8xf32>
    %663 = vector.extract_strided_slice %397 {offsets = [8, 0], sizes = [8, 32], strides = [1, 1]} : vector<64x32xf32> to vector<8x32xf32>
    %664 = arith.truncf %642 : vector<8x8xf32> to vector<8x8xbf16>
    %cst_84 = arith.constant dense<0.000000e+00> : vector<8x32xf32>
    %665 = tpu.matmul %664, %401, %cst_84 {dimension_numbers = #tpu.dot_dimension_numbers<[1], [0], [0], [1], [0, 0, 1, 1], [], []>} : vector<8x8xbf16>, vector<8x32xbf16>, vector<8x32xf32> -> vector<8x32xf32>
    %666 = arith.addf %663, %665 : vector<8x32xf32>
    %667 = vector.extract_strided_slice %666 {offsets = [0, 0], sizes = [8, 24], strides = [1, 1]} : vector<8x32xf32> to vector<8x24xf32>
    %668 = arith.negf %667 : vector<8x24xf32>
    %669 = math.exp %668 : vector<8x24xf32>
    %cst_85 = arith.constant 1.000000e+00 : f32
    %670 = vector.broadcast %cst_85 : f32 to vector<8x24xf32>
    %671 = arith.addf %670, %669 : vector<8x24xf32>
    %672 = arith.divf %670, %671 : vector<8x24xf32>
    %673 = vector.extract_strided_slice %666 {offsets = [0, 24], sizes = [8, 8], strides = [1, 1]} : vector<8x32xf32> to vector<8x8xf32>
    %674 = math.tanh %673 : vector<8x8xf32>
    %675 = vector.extract_strided_slice %672 {offsets = [0, 8], sizes = [8, 8], strides = [1, 1]} : vector<8x24xf32> to vector<8x8xf32>
    %676 = arith.mulf %675, %639 : vector<8x8xf32>
    %677 = vector.extract_strided_slice %672 {offsets = [0, 0], sizes = [8, 8], strides = [1, 1]} : vector<8x24xf32> to vector<8x8xf32>
    %678 = arith.mulf %677, %674 : vector<8x8xf32>
    %679 = arith.addf %676, %678 : vector<8x8xf32>
    %680 = vector.extract_strided_slice %672 {offsets = [0, 16], sizes = [8, 8], strides = [1, 1]} : vector<8x24xf32> to vector<8x8xf32>
    %681 = math.tanh %679 : vector<8x8xf32>
    %682 = arith.mulf %680, %681 : vector<8x8xf32>
    %683 = vector.extract_strided_slice %396 {offsets = [56, 0], sizes = [8, 32], strides = [1, 1]} : vector<64x32xf32> to vector<8x32xf32>
    %684 = arith.truncf %662 : vector<8x8xf32> to vector<8x8xbf16>
    %cst_86 = arith.constant dense<0.000000e+00> : vector<8x32xf32>
    %685 = tpu.matmul %684, %399, %cst_86 {dimension_numbers = #tpu.dot_dimension_numbers<[1], [0], [0], [1], [0, 0, 1, 1], [], []>} : vector<8x8xbf16>, vector<8x32xbf16>, vector<8x32xf32> -> vector<8x32xf32>
    %686 = arith.addf %683, %685 : vector<8x32xf32>
    %687 = vector.extract_strided_slice %686 {offsets = [0, 0], sizes = [8, 24], strides = [1, 1]} : vector<8x32xf32> to vector<8x24xf32>
    %688 = arith.negf %687 : vector<8x24xf32>
    %689 = math.exp %688 : vector<8x24xf32>
    %cst_87 = arith.constant 1.000000e+00 : f32
    %690 = vector.broadcast %cst_87 : f32 to vector<8x24xf32>
    %691 = arith.addf %690, %689 : vector<8x24xf32>
    %692 = arith.divf %690, %691 : vector<8x24xf32>
    %693 = vector.extract_strided_slice %686 {offsets = [0, 24], sizes = [8, 8], strides = [1, 1]} : vector<8x32xf32> to vector<8x8xf32>
    %694 = math.tanh %693 : vector<8x8xf32>
    %695 = vector.extract_strided_slice %692 {offsets = [0, 8], sizes = [8, 8], strides = [1, 1]} : vector<8x24xf32> to vector<8x8xf32>
    %696 = arith.mulf %695, %659 : vector<8x8xf32>
    %697 = vector.extract_strided_slice %692 {offsets = [0, 0], sizes = [8, 8], strides = [1, 1]} : vector<8x24xf32> to vector<8x8xf32>
    %698 = arith.mulf %697, %694 : vector<8x8xf32>
    %699 = arith.addf %696, %698 : vector<8x8xf32>
    %700 = vector.extract_strided_slice %692 {offsets = [0, 16], sizes = [8, 8], strides = [1, 1]} : vector<8x24xf32> to vector<8x8xf32>
    %701 = math.tanh %699 : vector<8x8xf32>
    %702 = arith.mulf %700, %701 : vector<8x8xf32>
    %703 = vector.extract_strided_slice %397 {offsets = [0, 0], sizes = [8, 32], strides = [1, 1]} : vector<64x32xf32> to vector<8x32xf32>
    %704 = arith.truncf %682 : vector<8x8xf32> to vector<8x8xbf16>
    %cst_88 = arith.constant dense<0.000000e+00> : vector<8x32xf32>
    %705 = tpu.matmul %704, %401, %cst_88 {dimension_numbers = #tpu.dot_dimension_numbers<[1], [0], [0], [1], [0, 0, 1, 1], [], []>} : vector<8x8xbf16>, vector<8x32xbf16>, vector<8x32xf32> -> vector<8x32xf32>
    %706 = arith.addf %703, %705 : vector<8x32xf32>
    %707 = vector.extract_strided_slice %706 {offsets = [0, 0], sizes = [8, 24], strides = [1, 1]} : vector<8x32xf32> to vector<8x24xf32>
    %708 = arith.negf %707 : vector<8x24xf32>
    %709 = math.exp %708 : vector<8x24xf32>
    %cst_89 = arith.constant 1.000000e+00 : f32
    %710 = vector.broadcast %cst_89 : f32 to vector<8x24xf32>
    %711 = arith.addf %710, %709 : vector<8x24xf32>
    %712 = arith.divf %710, %711 : vector<8x24xf32>
    %713 = vector.extract_strided_slice %706 {offsets = [0, 24], sizes = [8, 8], strides = [1, 1]} : vector<8x32xf32> to vector<8x8xf32>
    %714 = math.tanh %713 : vector<8x8xf32>
    %715 = vector.extract_strided_slice %712 {offsets = [0, 8], sizes = [8, 8], strides = [1, 1]} : vector<8x24xf32> to vector<8x8xf32>
    %716 = arith.mulf %715, %679 : vector<8x8xf32>
    %717 = vector.extract_strided_slice %712 {offsets = [0, 0], sizes = [8, 8], strides = [1, 1]} : vector<8x24xf32> to vector<8x8xf32>
    %718 = arith.mulf %717, %714 : vector<8x8xf32>
    %719 = arith.addf %716, %718 : vector<8x8xf32>
    %720 = vector.extract_strided_slice %712 {offsets = [0, 16], sizes = [8, 8], strides = [1, 1]} : vector<8x24xf32> to vector<8x8xf32>
    %721 = math.tanh %719 : vector<8x8xf32>
    %722 = arith.mulf %720, %721 : vector<8x8xf32>
    %723 = tpu.concatenate %422, %462, %502, %542, %582, %622, %662, %702 in 0 : vector<8x8xf32>, vector<8x8xf32>, vector<8x8xf32>, vector<8x8xf32>, vector<8x8xf32>, vector<8x8xf32>, vector<8x8xf32>, vector<8x8xf32> -> vector<64x8xf32>
    %724 = tpu.concatenate %722, %682, %642, %602, %562, %522, %482, %442 in 0 : vector<8x8xf32>, vector<8x8xf32>, vector<8x8xf32>, vector<8x8xf32>, vector<8x8xf32>, vector<8x8xf32>, vector<8x8xf32>, vector<8x8xf32> -> vector<64x8xf32>
    %c136 = arith.constant 136 : index
    %c0_90 = arith.constant 0 : index
    %725 = vector.load %arg1[%c136, %c0_90] : memref<200x128xf32, #tpu.memory_space<vmem>>, vector<16x32xf32>
    %726 = arith.truncf %723 : vector<64x8xf32> to vector<64x8xbf16>
    %727 = vector.extract_strided_slice %725 {offsets = [0, 0], sizes = [8, 32], strides = [1, 1]} : vector<16x32xf32> to vector<8x32xf32>
    %728 = arith.truncf %727 : vector<8x32xf32> to vector<8x32xbf16>
    %cst_91 = arith.constant dense<0.000000e+00> : vector<64x32xf32>
    %729 = tpu.matmul %726, %728, %cst_91 {dimension_numbers = #tpu.dot_dimension_numbers<[1], [0], [0], [1], [0, 0, 1, 1], [], []>} : vector<64x8xbf16>, vector<8x32xbf16>, vector<64x32xf32> -> vector<64x32xf32>
    %730 = arith.truncf %724 : vector<64x8xf32> to vector<64x8xbf16>
    %731 = vector.extract_strided_slice %725 {offsets = [8, 0], sizes = [8, 32], strides = [1, 1]} : vector<16x32xf32> to vector<8x32xf32>
    %732 = arith.truncf %731 : vector<8x32xf32> to vector<8x32xbf16>
    %cst_92 = arith.constant dense<0.000000e+00> : vector<64x32xf32>
    %733 = tpu.matmul %730, %732, %cst_92 {dimension_numbers = #tpu.dot_dimension_numbers<[1], [0], [0], [1], [0, 0, 1, 1], [], []>} : vector<64x8xbf16>, vector<8x32xbf16>, vector<64x32xf32> -> vector<64x32xf32>
    %734 = arith.addf %729, %733 : vector<64x32xf32>
    %c152 = arith.constant 152 : index
    %c0_93 = arith.constant 0 : index
    %735 = vector.load %arg1[%c152, %c0_93] : memref<200x128xf32, #tpu.memory_space<vmem>>, vector<1x32xf32>
    %736 = vector.broadcast %735 : vector<1x32xf32> to vector<64x32xf32>
    %737 = arith.addf %734, %736 : vector<64x32xf32>
    %c160 = arith.constant 160 : index
    %c0_94 = arith.constant 0 : index
    %738 = vector.load %arg1[%c160, %c0_94] : memref<200x128xf32, #tpu.memory_space<vmem>>, vector<4x32xf32>
    %739 = vector.extract_strided_slice %737 {offsets = [0, 0], sizes = [64, 16], strides = [1, 1]} : vector<64x32xf32> to vector<64x16xf32>
    %740 = vector.extract_strided_slice %737 {offsets = [0, 16], sizes = [64, 16], strides = [1, 1]} : vector<64x32xf32> to vector<64x16xf32>
    %741 = vector.extract_strided_slice %738 {offsets = [0, 0], sizes = [4, 16], strides = [1, 1]} : vector<4x32xf32> to vector<4x16xf32>
    %742 = arith.truncf %741 : vector<4x16xf32> to vector<4x16xbf16>
    %743 = vector.extract_strided_slice %738 {offsets = [0, 16], sizes = [4, 16], strides = [1, 1]} : vector<4x32xf32> to vector<4x16xf32>
    %744 = arith.truncf %743 : vector<4x16xf32> to vector<4x16xbf16>
    %cst_95 = arith.constant 0.000000e+00 : f32
    %745 = vector.broadcast %cst_95 : f32 to vector<8x4xf32>
    %746 = vector.extract_strided_slice %739 {offsets = [0, 0], sizes = [8, 16], strides = [1, 1]} : vector<64x16xf32> to vector<8x16xf32>
    %747 = arith.truncf %745 : vector<8x4xf32> to vector<8x4xbf16>
    %cst_96 = arith.constant dense<0.000000e+00> : vector<8x16xf32>
    %748 = tpu.matmul %747, %742, %cst_96 {dimension_numbers = #tpu.dot_dimension_numbers<[1], [0], [0], [1], [0, 0, 1, 1], [], []>} : vector<8x4xbf16>, vector<4x16xbf16>, vector<8x16xf32> -> vector<8x16xf32>
    %749 = arith.addf %746, %748 : vector<8x16xf32>
    %750 = vector.extract_strided_slice %749 {offsets = [0, 0], sizes = [8, 12], strides = [1, 1]} : vector<8x16xf32> to vector<8x12xf32>
    %751 = arith.negf %750 : vector<8x12xf32>
    %752 = math.exp %751 : vector<8x12xf32>
    %cst_97 = arith.constant 1.000000e+00 : f32
    %753 = vector.broadcast %cst_97 : f32 to vector<8x12xf32>
    %754 = arith.addf %753, %752 : vector<8x12xf32>
    %755 = arith.divf %753, %754 : vector<8x12xf32>
    %756 = vector.extract_strided_slice %749 {offsets = [0, 12], sizes = [8, 4], strides = [1, 1]} : vector<8x16xf32> to vector<8x4xf32>
    %757 = math.tanh %756 : vector<8x4xf32>
    %758 = vector.extract_strided_slice %755 {offsets = [0, 4], sizes = [8, 4], strides = [1, 1]} : vector<8x12xf32> to vector<8x4xf32>
    %759 = arith.mulf %758, %745 : vector<8x4xf32>
    %760 = vector.extract_strided_slice %755 {offsets = [0, 0], sizes = [8, 4], strides = [1, 1]} : vector<8x12xf32> to vector<8x4xf32>
    %761 = arith.mulf %760, %757 : vector<8x4xf32>
    %762 = arith.addf %759, %761 : vector<8x4xf32>
    %763 = vector.extract_strided_slice %755 {offsets = [0, 8], sizes = [8, 4], strides = [1, 1]} : vector<8x12xf32> to vector<8x4xf32>
    %764 = math.tanh %762 : vector<8x4xf32>
    %765 = arith.mulf %763, %764 : vector<8x4xf32>
    %766 = vector.extract_strided_slice %740 {offsets = [56, 0], sizes = [8, 16], strides = [1, 1]} : vector<64x16xf32> to vector<8x16xf32>
    %767 = arith.truncf %745 : vector<8x4xf32> to vector<8x4xbf16>
    %cst_98 = arith.constant dense<0.000000e+00> : vector<8x16xf32>
    %768 = tpu.matmul %767, %744, %cst_98 {dimension_numbers = #tpu.dot_dimension_numbers<[1], [0], [0], [1], [0, 0, 1, 1], [], []>} : vector<8x4xbf16>, vector<4x16xbf16>, vector<8x16xf32> -> vector<8x16xf32>
    %769 = arith.addf %766, %768 : vector<8x16xf32>
    %770 = vector.extract_strided_slice %769 {offsets = [0, 0], sizes = [8, 12], strides = [1, 1]} : vector<8x16xf32> to vector<8x12xf32>
    %771 = arith.negf %770 : vector<8x12xf32>
    %772 = math.exp %771 : vector<8x12xf32>
    %cst_99 = arith.constant 1.000000e+00 : f32
    %773 = vector.broadcast %cst_99 : f32 to vector<8x12xf32>
    %774 = arith.addf %773, %772 : vector<8x12xf32>
    %775 = arith.divf %773, %774 : vector<8x12xf32>
    %776 = vector.extract_strided_slice %769 {offsets = [0, 12], sizes = [8, 4], strides = [1, 1]} : vector<8x16xf32> to vector<8x4xf32>
    %777 = math.tanh %776 : vector<8x4xf32>
    %778 = vector.extract_strided_slice %775 {offsets = [0, 4], sizes = [8, 4], strides = [1, 1]} : vector<8x12xf32> to vector<8x4xf32>
    %779 = arith.mulf %778, %745 : vector<8x4xf32>
    %780 = vector.extract_strided_slice %775 {offsets = [0, 0], sizes = [8, 4], strides = [1, 1]} : vector<8x12xf32> to vector<8x4xf32>
    %781 = arith.mulf %780, %777 : vector<8x4xf32>
    %782 = arith.addf %779, %781 : vector<8x4xf32>
    %783 = vector.extract_strided_slice %775 {offsets = [0, 8], sizes = [8, 4], strides = [1, 1]} : vector<8x12xf32> to vector<8x4xf32>
    %784 = math.tanh %782 : vector<8x4xf32>
    %785 = arith.mulf %783, %784 : vector<8x4xf32>
    %786 = vector.extract_strided_slice %739 {offsets = [8, 0], sizes = [8, 16], strides = [1, 1]} : vector<64x16xf32> to vector<8x16xf32>
    %787 = arith.truncf %765 : vector<8x4xf32> to vector<8x4xbf16>
    %cst_100 = arith.constant dense<0.000000e+00> : vector<8x16xf32>
    %788 = tpu.matmul %787, %742, %cst_100 {dimension_numbers = #tpu.dot_dimension_numbers<[1], [0], [0], [1], [0, 0, 1, 1], [], []>} : vector<8x4xbf16>, vector<4x16xbf16>, vector<8x16xf32> -> vector<8x16xf32>
    %789 = arith.addf %786, %788 : vector<8x16xf32>
    %790 = vector.extract_strided_slice %789 {offsets = [0, 0], sizes = [8, 12], strides = [1, 1]} : vector<8x16xf32> to vector<8x12xf32>
    %791 = arith.negf %790 : vector<8x12xf32>
    %792 = math.exp %791 : vector<8x12xf32>
    %cst_101 = arith.constant 1.000000e+00 : f32
    %793 = vector.broadcast %cst_101 : f32 to vector<8x12xf32>
    %794 = arith.addf %793, %792 : vector<8x12xf32>
    %795 = arith.divf %793, %794 : vector<8x12xf32>
    %796 = vector.extract_strided_slice %789 {offsets = [0, 12], sizes = [8, 4], strides = [1, 1]} : vector<8x16xf32> to vector<8x4xf32>
    %797 = math.tanh %796 : vector<8x4xf32>
    %798 = vector.extract_strided_slice %795 {offsets = [0, 4], sizes = [8, 4], strides = [1, 1]} : vector<8x12xf32> to vector<8x4xf32>
    %799 = arith.mulf %798, %762 : vector<8x4xf32>
    %800 = vector.extract_strided_slice %795 {offsets = [0, 0], sizes = [8, 4], strides = [1, 1]} : vector<8x12xf32> to vector<8x4xf32>
    %801 = arith.mulf %800, %797 : vector<8x4xf32>
    %802 = arith.addf %799, %801 : vector<8x4xf32>
    %803 = vector.extract_strided_slice %795 {offsets = [0, 8], sizes = [8, 4], strides = [1, 1]} : vector<8x12xf32> to vector<8x4xf32>
    %804 = math.tanh %802 : vector<8x4xf32>
    %805 = arith.mulf %803, %804 : vector<8x4xf32>
    %806 = vector.extract_strided_slice %740 {offsets = [48, 0], sizes = [8, 16], strides = [1, 1]} : vector<64x16xf32> to vector<8x16xf32>
    %807 = arith.truncf %785 : vector<8x4xf32> to vector<8x4xbf16>
    %cst_102 = arith.constant dense<0.000000e+00> : vector<8x16xf32>
    %808 = tpu.matmul %807, %744, %cst_102 {dimension_numbers = #tpu.dot_dimension_numbers<[1], [0], [0], [1], [0, 0, 1, 1], [], []>} : vector<8x4xbf16>, vector<4x16xbf16>, vector<8x16xf32> -> vector<8x16xf32>
    %809 = arith.addf %806, %808 : vector<8x16xf32>
    %810 = vector.extract_strided_slice %809 {offsets = [0, 0], sizes = [8, 12], strides = [1, 1]} : vector<8x16xf32> to vector<8x12xf32>
    %811 = arith.negf %810 : vector<8x12xf32>
    %812 = math.exp %811 : vector<8x12xf32>
    %cst_103 = arith.constant 1.000000e+00 : f32
    %813 = vector.broadcast %cst_103 : f32 to vector<8x12xf32>
    %814 = arith.addf %813, %812 : vector<8x12xf32>
    %815 = arith.divf %813, %814 : vector<8x12xf32>
    %816 = vector.extract_strided_slice %809 {offsets = [0, 12], sizes = [8, 4], strides = [1, 1]} : vector<8x16xf32> to vector<8x4xf32>
    %817 = math.tanh %816 : vector<8x4xf32>
    %818 = vector.extract_strided_slice %815 {offsets = [0, 4], sizes = [8, 4], strides = [1, 1]} : vector<8x12xf32> to vector<8x4xf32>
    %819 = arith.mulf %818, %782 : vector<8x4xf32>
    %820 = vector.extract_strided_slice %815 {offsets = [0, 0], sizes = [8, 4], strides = [1, 1]} : vector<8x12xf32> to vector<8x4xf32>
    %821 = arith.mulf %820, %817 : vector<8x4xf32>
    %822 = arith.addf %819, %821 : vector<8x4xf32>
    %823 = vector.extract_strided_slice %815 {offsets = [0, 8], sizes = [8, 4], strides = [1, 1]} : vector<8x12xf32> to vector<8x4xf32>
    %824 = math.tanh %822 : vector<8x4xf32>
    %825 = arith.mulf %823, %824 : vector<8x4xf32>
    %826 = vector.extract_strided_slice %739 {offsets = [16, 0], sizes = [8, 16], strides = [1, 1]} : vector<64x16xf32> to vector<8x16xf32>
    %827 = arith.truncf %805 : vector<8x4xf32> to vector<8x4xbf16>
    %cst_104 = arith.constant dense<0.000000e+00> : vector<8x16xf32>
    %828 = tpu.matmul %827, %742, %cst_104 {dimension_numbers = #tpu.dot_dimension_numbers<[1], [0], [0], [1], [0, 0, 1, 1], [], []>} : vector<8x4xbf16>, vector<4x16xbf16>, vector<8x16xf32> -> vector<8x16xf32>
    %829 = arith.addf %826, %828 : vector<8x16xf32>
    %830 = vector.extract_strided_slice %829 {offsets = [0, 0], sizes = [8, 12], strides = [1, 1]} : vector<8x16xf32> to vector<8x12xf32>
    %831 = arith.negf %830 : vector<8x12xf32>
    %832 = math.exp %831 : vector<8x12xf32>
    %cst_105 = arith.constant 1.000000e+00 : f32
    %833 = vector.broadcast %cst_105 : f32 to vector<8x12xf32>
    %834 = arith.addf %833, %832 : vector<8x12xf32>
    %835 = arith.divf %833, %834 : vector<8x12xf32>
    %836 = vector.extract_strided_slice %829 {offsets = [0, 12], sizes = [8, 4], strides = [1, 1]} : vector<8x16xf32> to vector<8x4xf32>
    %837 = math.tanh %836 : vector<8x4xf32>
    %838 = vector.extract_strided_slice %835 {offsets = [0, 4], sizes = [8, 4], strides = [1, 1]} : vector<8x12xf32> to vector<8x4xf32>
    %839 = arith.mulf %838, %802 : vector<8x4xf32>
    %840 = vector.extract_strided_slice %835 {offsets = [0, 0], sizes = [8, 4], strides = [1, 1]} : vector<8x12xf32> to vector<8x4xf32>
    %841 = arith.mulf %840, %837 : vector<8x4xf32>
    %842 = arith.addf %839, %841 : vector<8x4xf32>
    %843 = vector.extract_strided_slice %835 {offsets = [0, 8], sizes = [8, 4], strides = [1, 1]} : vector<8x12xf32> to vector<8x4xf32>
    %844 = math.tanh %842 : vector<8x4xf32>
    %845 = arith.mulf %843, %844 : vector<8x4xf32>
    %846 = vector.extract_strided_slice %740 {offsets = [40, 0], sizes = [8, 16], strides = [1, 1]} : vector<64x16xf32> to vector<8x16xf32>
    %847 = arith.truncf %825 : vector<8x4xf32> to vector<8x4xbf16>
    %cst_106 = arith.constant dense<0.000000e+00> : vector<8x16xf32>
    %848 = tpu.matmul %847, %744, %cst_106 {dimension_numbers = #tpu.dot_dimension_numbers<[1], [0], [0], [1], [0, 0, 1, 1], [], []>} : vector<8x4xbf16>, vector<4x16xbf16>, vector<8x16xf32> -> vector<8x16xf32>
    %849 = arith.addf %846, %848 : vector<8x16xf32>
    %850 = vector.extract_strided_slice %849 {offsets = [0, 0], sizes = [8, 12], strides = [1, 1]} : vector<8x16xf32> to vector<8x12xf32>
    %851 = arith.negf %850 : vector<8x12xf32>
    %852 = math.exp %851 : vector<8x12xf32>
    %cst_107 = arith.constant 1.000000e+00 : f32
    %853 = vector.broadcast %cst_107 : f32 to vector<8x12xf32>
    %854 = arith.addf %853, %852 : vector<8x12xf32>
    %855 = arith.divf %853, %854 : vector<8x12xf32>
    %856 = vector.extract_strided_slice %849 {offsets = [0, 12], sizes = [8, 4], strides = [1, 1]} : vector<8x16xf32> to vector<8x4xf32>
    %857 = math.tanh %856 : vector<8x4xf32>
    %858 = vector.extract_strided_slice %855 {offsets = [0, 4], sizes = [8, 4], strides = [1, 1]} : vector<8x12xf32> to vector<8x4xf32>
    %859 = arith.mulf %858, %822 : vector<8x4xf32>
    %860 = vector.extract_strided_slice %855 {offsets = [0, 0], sizes = [8, 4], strides = [1, 1]} : vector<8x12xf32> to vector<8x4xf32>
    %861 = arith.mulf %860, %857 : vector<8x4xf32>
    %862 = arith.addf %859, %861 : vector<8x4xf32>
    %863 = vector.extract_strided_slice %855 {offsets = [0, 8], sizes = [8, 4], strides = [1, 1]} : vector<8x12xf32> to vector<8x4xf32>
    %864 = math.tanh %862 : vector<8x4xf32>
    %865 = arith.mulf %863, %864 : vector<8x4xf32>
    %866 = vector.extract_strided_slice %739 {offsets = [24, 0], sizes = [8, 16], strides = [1, 1]} : vector<64x16xf32> to vector<8x16xf32>
    %867 = arith.truncf %845 : vector<8x4xf32> to vector<8x4xbf16>
    %cst_108 = arith.constant dense<0.000000e+00> : vector<8x16xf32>
    %868 = tpu.matmul %867, %742, %cst_108 {dimension_numbers = #tpu.dot_dimension_numbers<[1], [0], [0], [1], [0, 0, 1, 1], [], []>} : vector<8x4xbf16>, vector<4x16xbf16>, vector<8x16xf32> -> vector<8x16xf32>
    %869 = arith.addf %866, %868 : vector<8x16xf32>
    %870 = vector.extract_strided_slice %869 {offsets = [0, 0], sizes = [8, 12], strides = [1, 1]} : vector<8x16xf32> to vector<8x12xf32>
    %871 = arith.negf %870 : vector<8x12xf32>
    %872 = math.exp %871 : vector<8x12xf32>
    %cst_109 = arith.constant 1.000000e+00 : f32
    %873 = vector.broadcast %cst_109 : f32 to vector<8x12xf32>
    %874 = arith.addf %873, %872 : vector<8x12xf32>
    %875 = arith.divf %873, %874 : vector<8x12xf32>
    %876 = vector.extract_strided_slice %869 {offsets = [0, 12], sizes = [8, 4], strides = [1, 1]} : vector<8x16xf32> to vector<8x4xf32>
    %877 = math.tanh %876 : vector<8x4xf32>
    %878 = vector.extract_strided_slice %875 {offsets = [0, 4], sizes = [8, 4], strides = [1, 1]} : vector<8x12xf32> to vector<8x4xf32>
    %879 = arith.mulf %878, %842 : vector<8x4xf32>
    %880 = vector.extract_strided_slice %875 {offsets = [0, 0], sizes = [8, 4], strides = [1, 1]} : vector<8x12xf32> to vector<8x4xf32>
    %881 = arith.mulf %880, %877 : vector<8x4xf32>
    %882 = arith.addf %879, %881 : vector<8x4xf32>
    %883 = vector.extract_strided_slice %875 {offsets = [0, 8], sizes = [8, 4], strides = [1, 1]} : vector<8x12xf32> to vector<8x4xf32>
    %884 = math.tanh %882 : vector<8x4xf32>
    %885 = arith.mulf %883, %884 : vector<8x4xf32>
    %886 = vector.extract_strided_slice %740 {offsets = [32, 0], sizes = [8, 16], strides = [1, 1]} : vector<64x16xf32> to vector<8x16xf32>
    %887 = arith.truncf %865 : vector<8x4xf32> to vector<8x4xbf16>
    %cst_110 = arith.constant dense<0.000000e+00> : vector<8x16xf32>
    %888 = tpu.matmul %887, %744, %cst_110 {dimension_numbers = #tpu.dot_dimension_numbers<[1], [0], [0], [1], [0, 0, 1, 1], [], []>} : vector<8x4xbf16>, vector<4x16xbf16>, vector<8x16xf32> -> vector<8x16xf32>
    %889 = arith.addf %886, %888 : vector<8x16xf32>
    %890 = vector.extract_strided_slice %889 {offsets = [0, 0], sizes = [8, 12], strides = [1, 1]} : vector<8x16xf32> to vector<8x12xf32>
    %891 = arith.negf %890 : vector<8x12xf32>
    %892 = math.exp %891 : vector<8x12xf32>
    %cst_111 = arith.constant 1.000000e+00 : f32
    %893 = vector.broadcast %cst_111 : f32 to vector<8x12xf32>
    %894 = arith.addf %893, %892 : vector<8x12xf32>
    %895 = arith.divf %893, %894 : vector<8x12xf32>
    %896 = vector.extract_strided_slice %889 {offsets = [0, 12], sizes = [8, 4], strides = [1, 1]} : vector<8x16xf32> to vector<8x4xf32>
    %897 = math.tanh %896 : vector<8x4xf32>
    %898 = vector.extract_strided_slice %895 {offsets = [0, 4], sizes = [8, 4], strides = [1, 1]} : vector<8x12xf32> to vector<8x4xf32>
    %899 = arith.mulf %898, %862 : vector<8x4xf32>
    %900 = vector.extract_strided_slice %895 {offsets = [0, 0], sizes = [8, 4], strides = [1, 1]} : vector<8x12xf32> to vector<8x4xf32>
    %901 = arith.mulf %900, %897 : vector<8x4xf32>
    %902 = arith.addf %899, %901 : vector<8x4xf32>
    %903 = vector.extract_strided_slice %895 {offsets = [0, 8], sizes = [8, 4], strides = [1, 1]} : vector<8x12xf32> to vector<8x4xf32>
    %904 = math.tanh %902 : vector<8x4xf32>
    %905 = arith.mulf %903, %904 : vector<8x4xf32>
    %906 = vector.extract_strided_slice %739 {offsets = [32, 0], sizes = [8, 16], strides = [1, 1]} : vector<64x16xf32> to vector<8x16xf32>
    %907 = arith.truncf %885 : vector<8x4xf32> to vector<8x4xbf16>
    %cst_112 = arith.constant dense<0.000000e+00> : vector<8x16xf32>
    %908 = tpu.matmul %907, %742, %cst_112 {dimension_numbers = #tpu.dot_dimension_numbers<[1], [0], [0], [1], [0, 0, 1, 1], [], []>} : vector<8x4xbf16>, vector<4x16xbf16>, vector<8x16xf32> -> vector<8x16xf32>
    %909 = arith.addf %906, %908 : vector<8x16xf32>
    %910 = vector.extract_strided_slice %909 {offsets = [0, 0], sizes = [8, 12], strides = [1, 1]} : vector<8x16xf32> to vector<8x12xf32>
    %911 = arith.negf %910 : vector<8x12xf32>
    %912 = math.exp %911 : vector<8x12xf32>
    %cst_113 = arith.constant 1.000000e+00 : f32
    %913 = vector.broadcast %cst_113 : f32 to vector<8x12xf32>
    %914 = arith.addf %913, %912 : vector<8x12xf32>
    %915 = arith.divf %913, %914 : vector<8x12xf32>
    %916 = vector.extract_strided_slice %909 {offsets = [0, 12], sizes = [8, 4], strides = [1, 1]} : vector<8x16xf32> to vector<8x4xf32>
    %917 = math.tanh %916 : vector<8x4xf32>
    %918 = vector.extract_strided_slice %915 {offsets = [0, 4], sizes = [8, 4], strides = [1, 1]} : vector<8x12xf32> to vector<8x4xf32>
    %919 = arith.mulf %918, %882 : vector<8x4xf32>
    %920 = vector.extract_strided_slice %915 {offsets = [0, 0], sizes = [8, 4], strides = [1, 1]} : vector<8x12xf32> to vector<8x4xf32>
    %921 = arith.mulf %920, %917 : vector<8x4xf32>
    %922 = arith.addf %919, %921 : vector<8x4xf32>
    %923 = vector.extract_strided_slice %915 {offsets = [0, 8], sizes = [8, 4], strides = [1, 1]} : vector<8x12xf32> to vector<8x4xf32>
    %924 = math.tanh %922 : vector<8x4xf32>
    %925 = arith.mulf %923, %924 : vector<8x4xf32>
    %926 = vector.extract_strided_slice %740 {offsets = [24, 0], sizes = [8, 16], strides = [1, 1]} : vector<64x16xf32> to vector<8x16xf32>
    %927 = arith.truncf %905 : vector<8x4xf32> to vector<8x4xbf16>
    %cst_114 = arith.constant dense<0.000000e+00> : vector<8x16xf32>
    %928 = tpu.matmul %927, %744, %cst_114 {dimension_numbers = #tpu.dot_dimension_numbers<[1], [0], [0], [1], [0, 0, 1, 1], [], []>} : vector<8x4xbf16>, vector<4x16xbf16>, vector<8x16xf32> -> vector<8x16xf32>
    %929 = arith.addf %926, %928 : vector<8x16xf32>
    %930 = vector.extract_strided_slice %929 {offsets = [0, 0], sizes = [8, 12], strides = [1, 1]} : vector<8x16xf32> to vector<8x12xf32>
    %931 = arith.negf %930 : vector<8x12xf32>
    %932 = math.exp %931 : vector<8x12xf32>
    %cst_115 = arith.constant 1.000000e+00 : f32
    %933 = vector.broadcast %cst_115 : f32 to vector<8x12xf32>
    %934 = arith.addf %933, %932 : vector<8x12xf32>
    %935 = arith.divf %933, %934 : vector<8x12xf32>
    %936 = vector.extract_strided_slice %929 {offsets = [0, 12], sizes = [8, 4], strides = [1, 1]} : vector<8x16xf32> to vector<8x4xf32>
    %937 = math.tanh %936 : vector<8x4xf32>
    %938 = vector.extract_strided_slice %935 {offsets = [0, 4], sizes = [8, 4], strides = [1, 1]} : vector<8x12xf32> to vector<8x4xf32>
    %939 = arith.mulf %938, %902 : vector<8x4xf32>
    %940 = vector.extract_strided_slice %935 {offsets = [0, 0], sizes = [8, 4], strides = [1, 1]} : vector<8x12xf32> to vector<8x4xf32>
    %941 = arith.mulf %940, %937 : vector<8x4xf32>
    %942 = arith.addf %939, %941 : vector<8x4xf32>
    %943 = vector.extract_strided_slice %935 {offsets = [0, 8], sizes = [8, 4], strides = [1, 1]} : vector<8x12xf32> to vector<8x4xf32>
    %944 = math.tanh %942 : vector<8x4xf32>
    %945 = arith.mulf %943, %944 : vector<8x4xf32>
    %946 = vector.extract_strided_slice %739 {offsets = [40, 0], sizes = [8, 16], strides = [1, 1]} : vector<64x16xf32> to vector<8x16xf32>
    %947 = arith.truncf %925 : vector<8x4xf32> to vector<8x4xbf16>
    %cst_116 = arith.constant dense<0.000000e+00> : vector<8x16xf32>
    %948 = tpu.matmul %947, %742, %cst_116 {dimension_numbers = #tpu.dot_dimension_numbers<[1], [0], [0], [1], [0, 0, 1, 1], [], []>} : vector<8x4xbf16>, vector<4x16xbf16>, vector<8x16xf32> -> vector<8x16xf32>
    %949 = arith.addf %946, %948 : vector<8x16xf32>
    %950 = vector.extract_strided_slice %949 {offsets = [0, 0], sizes = [8, 12], strides = [1, 1]} : vector<8x16xf32> to vector<8x12xf32>
    %951 = arith.negf %950 : vector<8x12xf32>
    %952 = math.exp %951 : vector<8x12xf32>
    %cst_117 = arith.constant 1.000000e+00 : f32
    %953 = vector.broadcast %cst_117 : f32 to vector<8x12xf32>
    %954 = arith.addf %953, %952 : vector<8x12xf32>
    %955 = arith.divf %953, %954 : vector<8x12xf32>
    %956 = vector.extract_strided_slice %949 {offsets = [0, 12], sizes = [8, 4], strides = [1, 1]} : vector<8x16xf32> to vector<8x4xf32>
    %957 = math.tanh %956 : vector<8x4xf32>
    %958 = vector.extract_strided_slice %955 {offsets = [0, 4], sizes = [8, 4], strides = [1, 1]} : vector<8x12xf32> to vector<8x4xf32>
    %959 = arith.mulf %958, %922 : vector<8x4xf32>
    %960 = vector.extract_strided_slice %955 {offsets = [0, 0], sizes = [8, 4], strides = [1, 1]} : vector<8x12xf32> to vector<8x4xf32>
    %961 = arith.mulf %960, %957 : vector<8x4xf32>
    %962 = arith.addf %959, %961 : vector<8x4xf32>
    %963 = vector.extract_strided_slice %955 {offsets = [0, 8], sizes = [8, 4], strides = [1, 1]} : vector<8x12xf32> to vector<8x4xf32>
    %964 = math.tanh %962 : vector<8x4xf32>
    %965 = arith.mulf %963, %964 : vector<8x4xf32>
    %966 = vector.extract_strided_slice %740 {offsets = [16, 0], sizes = [8, 16], strides = [1, 1]} : vector<64x16xf32> to vector<8x16xf32>
    %967 = arith.truncf %945 : vector<8x4xf32> to vector<8x4xbf16>
    %cst_118 = arith.constant dense<0.000000e+00> : vector<8x16xf32>
    %968 = tpu.matmul %967, %744, %cst_118 {dimension_numbers = #tpu.dot_dimension_numbers<[1], [0], [0], [1], [0, 0, 1, 1], [], []>} : vector<8x4xbf16>, vector<4x16xbf16>, vector<8x16xf32> -> vector<8x16xf32>
    %969 = arith.addf %966, %968 : vector<8x16xf32>
    %970 = vector.extract_strided_slice %969 {offsets = [0, 0], sizes = [8, 12], strides = [1, 1]} : vector<8x16xf32> to vector<8x12xf32>
    %971 = arith.negf %970 : vector<8x12xf32>
    %972 = math.exp %971 : vector<8x12xf32>
    %cst_119 = arith.constant 1.000000e+00 : f32
    %973 = vector.broadcast %cst_119 : f32 to vector<8x12xf32>
    %974 = arith.addf %973, %972 : vector<8x12xf32>
    %975 = arith.divf %973, %974 : vector<8x12xf32>
    %976 = vector.extract_strided_slice %969 {offsets = [0, 12], sizes = [8, 4], strides = [1, 1]} : vector<8x16xf32> to vector<8x4xf32>
    %977 = math.tanh %976 : vector<8x4xf32>
    %978 = vector.extract_strided_slice %975 {offsets = [0, 4], sizes = [8, 4], strides = [1, 1]} : vector<8x12xf32> to vector<8x4xf32>
    %979 = arith.mulf %978, %942 : vector<8x4xf32>
    %980 = vector.extract_strided_slice %975 {offsets = [0, 0], sizes = [8, 4], strides = [1, 1]} : vector<8x12xf32> to vector<8x4xf32>
    %981 = arith.mulf %980, %977 : vector<8x4xf32>
    %982 = arith.addf %979, %981 : vector<8x4xf32>
    %983 = vector.extract_strided_slice %975 {offsets = [0, 8], sizes = [8, 4], strides = [1, 1]} : vector<8x12xf32> to vector<8x4xf32>
    %984 = math.tanh %982 : vector<8x4xf32>
    %985 = arith.mulf %983, %984 : vector<8x4xf32>
    %986 = vector.extract_strided_slice %739 {offsets = [48, 0], sizes = [8, 16], strides = [1, 1]} : vector<64x16xf32> to vector<8x16xf32>
    %987 = arith.truncf %965 : vector<8x4xf32> to vector<8x4xbf16>
    %cst_120 = arith.constant dense<0.000000e+00> : vector<8x16xf32>
    %988 = tpu.matmul %987, %742, %cst_120 {dimension_numbers = #tpu.dot_dimension_numbers<[1], [0], [0], [1], [0, 0, 1, 1], [], []>} : vector<8x4xbf16>, vector<4x16xbf16>, vector<8x16xf32> -> vector<8x16xf32>
    %989 = arith.addf %986, %988 : vector<8x16xf32>
    %990 = vector.extract_strided_slice %989 {offsets = [0, 0], sizes = [8, 12], strides = [1, 1]} : vector<8x16xf32> to vector<8x12xf32>
    %991 = arith.negf %990 : vector<8x12xf32>
    %992 = math.exp %991 : vector<8x12xf32>
    %cst_121 = arith.constant 1.000000e+00 : f32
    %993 = vector.broadcast %cst_121 : f32 to vector<8x12xf32>
    %994 = arith.addf %993, %992 : vector<8x12xf32>
    %995 = arith.divf %993, %994 : vector<8x12xf32>
    %996 = vector.extract_strided_slice %989 {offsets = [0, 12], sizes = [8, 4], strides = [1, 1]} : vector<8x16xf32> to vector<8x4xf32>
    %997 = math.tanh %996 : vector<8x4xf32>
    %998 = vector.extract_strided_slice %995 {offsets = [0, 4], sizes = [8, 4], strides = [1, 1]} : vector<8x12xf32> to vector<8x4xf32>
    %999 = arith.mulf %998, %962 : vector<8x4xf32>
    %1000 = vector.extract_strided_slice %995 {offsets = [0, 0], sizes = [8, 4], strides = [1, 1]} : vector<8x12xf32> to vector<8x4xf32>
    %1001 = arith.mulf %1000, %997 : vector<8x4xf32>
    %1002 = arith.addf %999, %1001 : vector<8x4xf32>
    %1003 = vector.extract_strided_slice %995 {offsets = [0, 8], sizes = [8, 4], strides = [1, 1]} : vector<8x12xf32> to vector<8x4xf32>
    %1004 = math.tanh %1002 : vector<8x4xf32>
    %1005 = arith.mulf %1003, %1004 : vector<8x4xf32>
    %1006 = vector.extract_strided_slice %740 {offsets = [8, 0], sizes = [8, 16], strides = [1, 1]} : vector<64x16xf32> to vector<8x16xf32>
    %1007 = arith.truncf %985 : vector<8x4xf32> to vector<8x4xbf16>
    %cst_122 = arith.constant dense<0.000000e+00> : vector<8x16xf32>
    %1008 = tpu.matmul %1007, %744, %cst_122 {dimension_numbers = #tpu.dot_dimension_numbers<[1], [0], [0], [1], [0, 0, 1, 1], [], []>} : vector<8x4xbf16>, vector<4x16xbf16>, vector<8x16xf32> -> vector<8x16xf32>
    %1009 = arith.addf %1006, %1008 : vector<8x16xf32>
    %1010 = vector.extract_strided_slice %1009 {offsets = [0, 0], sizes = [8, 12], strides = [1, 1]} : vector<8x16xf32> to vector<8x12xf32>
    %1011 = arith.negf %1010 : vector<8x12xf32>
    %1012 = math.exp %1011 : vector<8x12xf32>
    %cst_123 = arith.constant 1.000000e+00 : f32
    %1013 = vector.broadcast %cst_123 : f32 to vector<8x12xf32>
    %1014 = arith.addf %1013, %1012 : vector<8x12xf32>
    %1015 = arith.divf %1013, %1014 : vector<8x12xf32>
    %1016 = vector.extract_strided_slice %1009 {offsets = [0, 12], sizes = [8, 4], strides = [1, 1]} : vector<8x16xf32> to vector<8x4xf32>
    %1017 = math.tanh %1016 : vector<8x4xf32>
    %1018 = vector.extract_strided_slice %1015 {offsets = [0, 4], sizes = [8, 4], strides = [1, 1]} : vector<8x12xf32> to vector<8x4xf32>
    %1019 = arith.mulf %1018, %982 : vector<8x4xf32>
    %1020 = vector.extract_strided_slice %1015 {offsets = [0, 0], sizes = [8, 4], strides = [1, 1]} : vector<8x12xf32> to vector<8x4xf32>
    %1021 = arith.mulf %1020, %1017 : vector<8x4xf32>
    %1022 = arith.addf %1019, %1021 : vector<8x4xf32>
    %1023 = vector.extract_strided_slice %1015 {offsets = [0, 8], sizes = [8, 4], strides = [1, 1]} : vector<8x12xf32> to vector<8x4xf32>
    %1024 = math.tanh %1022 : vector<8x4xf32>
    %1025 = arith.mulf %1023, %1024 : vector<8x4xf32>
    %1026 = vector.extract_strided_slice %739 {offsets = [56, 0], sizes = [8, 16], strides = [1, 1]} : vector<64x16xf32> to vector<8x16xf32>
    %1027 = arith.truncf %1005 : vector<8x4xf32> to vector<8x4xbf16>
    %cst_124 = arith.constant dense<0.000000e+00> : vector<8x16xf32>
    %1028 = tpu.matmul %1027, %742, %cst_124 {dimension_numbers = #tpu.dot_dimension_numbers<[1], [0], [0], [1], [0, 0, 1, 1], [], []>} : vector<8x4xbf16>, vector<4x16xbf16>, vector<8x16xf32> -> vector<8x16xf32>
    %1029 = arith.addf %1026, %1028 : vector<8x16xf32>
    %1030 = vector.extract_strided_slice %1029 {offsets = [0, 0], sizes = [8, 12], strides = [1, 1]} : vector<8x16xf32> to vector<8x12xf32>
    %1031 = arith.negf %1030 : vector<8x12xf32>
    %1032 = math.exp %1031 : vector<8x12xf32>
    %cst_125 = arith.constant 1.000000e+00 : f32
    %1033 = vector.broadcast %cst_125 : f32 to vector<8x12xf32>
    %1034 = arith.addf %1033, %1032 : vector<8x12xf32>
    %1035 = arith.divf %1033, %1034 : vector<8x12xf32>
    %1036 = vector.extract_strided_slice %1029 {offsets = [0, 12], sizes = [8, 4], strides = [1, 1]} : vector<8x16xf32> to vector<8x4xf32>
    %1037 = math.tanh %1036 : vector<8x4xf32>
    %1038 = vector.extract_strided_slice %1035 {offsets = [0, 4], sizes = [8, 4], strides = [1, 1]} : vector<8x12xf32> to vector<8x4xf32>
    %1039 = arith.mulf %1038, %1002 : vector<8x4xf32>
    %1040 = vector.extract_strided_slice %1035 {offsets = [0, 0], sizes = [8, 4], strides = [1, 1]} : vector<8x12xf32> to vector<8x4xf32>
    %1041 = arith.mulf %1040, %1037 : vector<8x4xf32>
    %1042 = arith.addf %1039, %1041 : vector<8x4xf32>
    %1043 = vector.extract_strided_slice %1035 {offsets = [0, 8], sizes = [8, 4], strides = [1, 1]} : vector<8x12xf32> to vector<8x4xf32>
    %1044 = math.tanh %1042 : vector<8x4xf32>
    %1045 = arith.mulf %1043, %1044 : vector<8x4xf32>
    %1046 = vector.extract_strided_slice %740 {offsets = [0, 0], sizes = [8, 16], strides = [1, 1]} : vector<64x16xf32> to vector<8x16xf32>
    %1047 = arith.truncf %1025 : vector<8x4xf32> to vector<8x4xbf16>
    %cst_126 = arith.constant dense<0.000000e+00> : vector<8x16xf32>
    %1048 = tpu.matmul %1047, %744, %cst_126 {dimension_numbers = #tpu.dot_dimension_numbers<[1], [0], [0], [1], [0, 0, 1, 1], [], []>} : vector<8x4xbf16>, vector<4x16xbf16>, vector<8x16xf32> -> vector<8x16xf32>
    %1049 = arith.addf %1046, %1048 : vector<8x16xf32>
    %1050 = vector.extract_strided_slice %1049 {offsets = [0, 0], sizes = [8, 12], strides = [1, 1]} : vector<8x16xf32> to vector<8x12xf32>
    %1051 = arith.negf %1050 : vector<8x12xf32>
    %1052 = math.exp %1051 : vector<8x12xf32>
    %cst_127 = arith.constant 1.000000e+00 : f32
    %1053 = vector.broadcast %cst_127 : f32 to vector<8x12xf32>
    %1054 = arith.addf %1053, %1052 : vector<8x12xf32>
    %1055 = arith.divf %1053, %1054 : vector<8x12xf32>
    %1056 = vector.extract_strided_slice %1049 {offsets = [0, 12], sizes = [8, 4], strides = [1, 1]} : vector<8x16xf32> to vector<8x4xf32>
    %1057 = math.tanh %1056 : vector<8x4xf32>
    %1058 = vector.extract_strided_slice %1055 {offsets = [0, 4], sizes = [8, 4], strides = [1, 1]} : vector<8x12xf32> to vector<8x4xf32>
    %1059 = arith.mulf %1058, %1022 : vector<8x4xf32>
    %1060 = vector.extract_strided_slice %1055 {offsets = [0, 0], sizes = [8, 4], strides = [1, 1]} : vector<8x12xf32> to vector<8x4xf32>
    %1061 = arith.mulf %1060, %1057 : vector<8x4xf32>
    %1062 = arith.addf %1059, %1061 : vector<8x4xf32>
    %1063 = vector.extract_strided_slice %1055 {offsets = [0, 8], sizes = [8, 4], strides = [1, 1]} : vector<8x12xf32> to vector<8x4xf32>
    %1064 = math.tanh %1062 : vector<8x4xf32>
    %1065 = arith.mulf %1063, %1064 : vector<8x4xf32>
    %1066 = tpu.concatenate %765, %805, %845, %885, %925, %965, %1005, %1045 in 0 : vector<8x4xf32>, vector<8x4xf32>, vector<8x4xf32>, vector<8x4xf32>, vector<8x4xf32>, vector<8x4xf32>, vector<8x4xf32>, vector<8x4xf32> -> vector<64x4xf32>
    %1067 = tpu.concatenate %1065, %1025, %985, %945, %905, %865, %825, %785 in 0 : vector<8x4xf32>, vector<8x4xf32>, vector<8x4xf32>, vector<8x4xf32>, vector<8x4xf32>, vector<8x4xf32>, vector<8x4xf32>, vector<8x4xf32> -> vector<64x4xf32>
    %cst_128 = arith.constant dense<0.000000e+00> : vector<64xf32>
    %1068 = vector.multi_reduction <add>, %1066, %cst_128 [1] : vector<64x4xf32> to vector<64xf32>
    %1069 = vector.shape_cast %1068 : vector<64xf32> to vector<64x1xf32>
    %cst_129 = arith.constant dense<0.000000e+00> : vector<64xf32>
    %1070 = vector.multi_reduction <add>, %1067, %cst_129 [1] : vector<64x4xf32> to vector<64xf32>
    %1071 = vector.shape_cast %1070 : vector<64xf32> to vector<64x1xf32>
    %1072 = arith.addf %1069, %1071 : vector<64x1xf32>
    %cst_130 = arith.constant 8.000000e+00 : f32
    %1073 = vector.broadcast %cst_130 : f32 to vector<64x1xf32>
    %1074 = arith.divf %1072, %1073 : vector<64x1xf32>
    %1075 = vector.broadcast %1074 : vector<64x1xf32> to vector<64x4xf32>
    %1076 = arith.subf %1066, %1075 : vector<64x4xf32>
    %1077 = arith.mulf %1076, %1076 : vector<64x4xf32>
    %cst_131 = arith.constant dense<0.000000e+00> : vector<64xf32>
    %1078 = vector.multi_reduction <add>, %1077, %cst_131 [1] : vector<64x4xf32> to vector<64xf32>
    %1079 = vector.shape_cast %1078 : vector<64xf32> to vector<64x1xf32>
    %1080 = vector.broadcast %1074 : vector<64x1xf32> to vector<64x4xf32>
    %1081 = arith.subf %1067, %1080 : vector<64x4xf32>
    %1082 = arith.mulf %1081, %1081 : vector<64x4xf32>
    %cst_132 = arith.constant dense<0.000000e+00> : vector<64xf32>
    %1083 = vector.multi_reduction <add>, %1082, %cst_132 [1] : vector<64x4xf32> to vector<64xf32>
    %1084 = vector.shape_cast %1083 : vector<64xf32> to vector<64x1xf32>
    %1085 = arith.addf %1079, %1084 : vector<64x1xf32>
    %cst_133 = arith.constant 8.000000e+00 : f32
    %1086 = vector.broadcast %cst_133 : f32 to vector<64x1xf32>
    %1087 = arith.divf %1085, %1086 : vector<64x1xf32>
    %cst_134 = arith.constant 9.99999974E-6 : f32
    %1088 = vector.broadcast %cst_134 : f32 to vector<64x1xf32>
    %1089 = arith.addf %1087, %1088 : vector<64x1xf32>
    %1090 = math.rsqrt %1089 : vector<64x1xf32>
    %c168 = arith.constant 168 : index
    %c0_135 = arith.constant 0 : index
    %1091 = vector.load %arg1[%c168, %c0_135] : memref<200x128xf32, #tpu.memory_space<vmem>>, vector<1x8xf32>
    %c176 = arith.constant 176 : index
    %c0_136 = arith.constant 0 : index
    %1092 = vector.load %arg1[%c176, %c0_136] : memref<200x128xf32, #tpu.memory_space<vmem>>, vector<1x8xf32>
    %c184 = arith.constant 184 : index
    %c0_137 = arith.constant 0 : index
    %1093 = vector.load %arg1[%c184, %c0_137] : memref<200x128xf32, #tpu.memory_space<vmem>>, vector<1x8xf32>
    %1094 = vector.broadcast %1074 : vector<64x1xf32> to vector<64x4xf32>
    %1095 = arith.subf %1066, %1094 : vector<64x4xf32>
    %1096 = vector.broadcast %1090 : vector<64x1xf32> to vector<64x4xf32>
    %1097 = arith.mulf %1095, %1096 : vector<64x4xf32>
    %1098 = vector.extract_strided_slice %1091 {offsets = [0, 0], sizes = [1, 4], strides = [1, 1]} : vector<1x8xf32> to vector<1x4xf32>
    %1099 = vector.broadcast %1098 : vector<1x4xf32> to vector<64x4xf32>
    %1100 = arith.mulf %1097, %1099 : vector<64x4xf32>
    %1101 = vector.extract_strided_slice %1092 {offsets = [0, 0], sizes = [1, 4], strides = [1, 1]} : vector<1x8xf32> to vector<1x4xf32>
    %1102 = vector.broadcast %1101 : vector<1x4xf32> to vector<64x4xf32>
    %1103 = arith.addf %1100, %1102 : vector<64x4xf32>
    %1104 = arith.mulf %1103, %1103 : vector<64x4xf32>
    %1105 = arith.mulf %1103, %1104 : vector<64x4xf32>
    %cst_138 = arith.constant 4.471500e-02 : f32
    %1106 = vector.broadcast %cst_138 : f32 to vector<64x4xf32>
    %1107 = arith.mulf %1106, %1105 : vector<64x4xf32>
    %1108 = arith.addf %1103, %1107 : vector<64x4xf32>
    %cst_139 = arith.constant 0.797884583 : f32
    %1109 = vector.broadcast %cst_139 : f32 to vector<64x4xf32>
    %1110 = arith.mulf %1109, %1108 : vector<64x4xf32>
    %1111 = math.tanh %1110 : vector<64x4xf32>
    %cst_140 = arith.constant 1.000000e+00 : f32
    %1112 = vector.broadcast %cst_140 : f32 to vector<64x4xf32>
    %1113 = arith.addf %1112, %1111 : vector<64x4xf32>
    %cst_141 = arith.constant 5.000000e-01 : f32
    %1114 = vector.broadcast %cst_141 : f32 to vector<64x4xf32>
    %1115 = arith.mulf %1114, %1113 : vector<64x4xf32>
    %1116 = arith.mulf %1103, %1115 : vector<64x4xf32>
    %1117 = vector.broadcast %1074 : vector<64x1xf32> to vector<64x4xf32>
    %1118 = arith.subf %1067, %1117 : vector<64x4xf32>
    %1119 = vector.broadcast %1090 : vector<64x1xf32> to vector<64x4xf32>
    %1120 = arith.mulf %1118, %1119 : vector<64x4xf32>
    %1121 = vector.extract_strided_slice %1091 {offsets = [0, 4], sizes = [1, 4], strides = [1, 1]} : vector<1x8xf32> to vector<1x4xf32>
    %1122 = vector.broadcast %1121 : vector<1x4xf32> to vector<64x4xf32>
    %1123 = arith.mulf %1120, %1122 : vector<64x4xf32>
    %1124 = vector.extract_strided_slice %1092 {offsets = [0, 4], sizes = [1, 4], strides = [1, 1]} : vector<1x8xf32> to vector<1x4xf32>
    %1125 = vector.broadcast %1124 : vector<1x4xf32> to vector<64x4xf32>
    %1126 = arith.addf %1123, %1125 : vector<64x4xf32>
    %1127 = arith.mulf %1126, %1126 : vector<64x4xf32>
    %1128 = arith.mulf %1126, %1127 : vector<64x4xf32>
    %cst_142 = arith.constant 4.471500e-02 : f32
    %1129 = vector.broadcast %cst_142 : f32 to vector<64x4xf32>
    %1130 = arith.mulf %1129, %1128 : vector<64x4xf32>
    %1131 = arith.addf %1126, %1130 : vector<64x4xf32>
    %cst_143 = arith.constant 0.797884583 : f32
    %1132 = vector.broadcast %cst_143 : f32 to vector<64x4xf32>
    %1133 = arith.mulf %1132, %1131 : vector<64x4xf32>
    %1134 = math.tanh %1133 : vector<64x4xf32>
    %cst_144 = arith.constant 1.000000e+00 : f32
    %1135 = vector.broadcast %cst_144 : f32 to vector<64x4xf32>
    %1136 = arith.addf %1135, %1134 : vector<64x4xf32>
    %cst_145 = arith.constant 5.000000e-01 : f32
    %1137 = vector.broadcast %cst_145 : f32 to vector<64x4xf32>
    %1138 = arith.mulf %1137, %1136 : vector<64x4xf32>
    %1139 = arith.mulf %1126, %1138 : vector<64x4xf32>
    %1140 = vector.extract_strided_slice %1093 {offsets = [0, 0], sizes = [1, 4], strides = [1, 1]} : vector<1x8xf32> to vector<1x4xf32>
    %1141 = vector.broadcast %1140 : vector<1x4xf32> to vector<64x4xf32>
    %1142 = arith.mulf %1116, %1141 : vector<64x4xf32>
    %cst_146 = arith.constant dense<0.000000e+00> : vector<64xf32>
    %1143 = vector.multi_reduction <add>, %1142, %cst_146 [1] : vector<64x4xf32> to vector<64xf32>
    %1144 = vector.shape_cast %1143 : vector<64xf32> to vector<64x1xf32>
    %1145 = vector.extract_strided_slice %1093 {offsets = [0, 4], sizes = [1, 4], strides = [1, 1]} : vector<1x8xf32> to vector<1x4xf32>
    %1146 = vector.broadcast %1145 : vector<1x4xf32> to vector<64x4xf32>
    %1147 = arith.mulf %1139, %1146 : vector<64x4xf32>
    %cst_147 = arith.constant dense<0.000000e+00> : vector<64xf32>
    %1148 = vector.multi_reduction <add>, %1147, %cst_147 [1] : vector<64x4xf32> to vector<64xf32>
    %1149 = vector.shape_cast %1148 : vector<64xf32> to vector<64x1xf32>
    %1150 = arith.addf %1144, %1149 : vector<64x1xf32>
    %c192 = arith.constant 192 : index
    %c0_148 = arith.constant 0 : index
    %1151 = vector.load %arg1[%c192, %c0_148] : memref<200x128xf32, #tpu.memory_space<vmem>>, vector<1x1xf32>
    %1152 = vector.broadcast %1151 : vector<1x1xf32> to vector<64x1xf32>
    %1153 = arith.addf %1150, %1152 : vector<64x1xf32>
    %c0_149 = arith.constant 0 : index
    %c0_150 = arith.constant 0 : index
    %1154 = vector.load %arg2[%c0_149, %c0_150] : memref<64x1xf32, #tpu.memory_space<vmem>>, vector<64x1xf32>
    tpu.vector_store %arg2[%c0_149, %c0_150], %1153 {strides = array<i32>} : memref<64x1xf32, #tpu.memory_space<vmem>>, vector<64x1xf32>,
    return
  }
}

</mosaic_0001>

<llo_original>
// kernel: model_forward.1
$region0: #{model_forward.1}
  #allocation0 [shape = 'u32[]', space=smem, size = 0x4, offset = 0x4, fixed_abs, tag = 'smem constant byte address 0x4 - core index']
  #allocation1 [shape = 'u32[144,128]{1,0:T(1,128)}', space=vmem, size = 0x12000, scoped, tag = 'internal scratch']
  %s0 = inlined_call_operand.vmem [shape: f32[64,6], index: 0, kind: input, shape index: {}]
  %s1 = inlined_call_operand.hbm [shape: f32[200,128], index: 1, kind: input, shape index: {}]
  %s2 = inlined_call_operand.vmem [shape: f32[64,1], index: 2, kind: output, shape index: {}]
  %s3 = sld [smem:[#allocation0]]
  $region22: #{model_forward.1} parent=0
    _
  %s5 = ssub.s32 1, %s3
  %s6 = scalar_select 0, %s5, %s3
  $region1: #{model_forward.1} parent=0
    #allocation2 [shape = 'u8[102400]{0}', space=vmem, size = 0x19000, scoped, tag = 'input window, operand 1, single buffered']
    #allocation3 [shape = 's32[1]{0}', space=sflag, size = 0x4, scoped, tag = 'scoped memory for model_forward.1']
    %7 = vsyncpa [#allocation3], 0
    // Predicated region
    $region2: #{model_forward.1} parent=1 // pred_check
      _
    $region3: #{model_forward.1} parent=1 // pred_check_branch
      %9 = sbr.rel (0) target = $region5
    $region4: #{model_forward.1} parent=1 // pred_region
      _
    $region5: #{model_forward.1} parent=1 // pred_fallthru
      _
    // Predicated region
    $region6: #{model_forward.1} parent=1 // pred_check
      _
    $region7: #{model_forward.1} parent=1 // pred_check_branch
      %11 = sbr.rel (0) target = $region9
    $region8: #{model_forward.1} parent=1 // pred_region
      %s13 = ssub.s32 3200, 3200
      %14 = vsyncadd [#allocation3], %s13
      %s15 = sshll.u32 [#allocation2], 4
      %s16 = int_to_ptr.vmem [resolvable:$true] %s15
      %21 = dma.hbm_to_vmem [thread:$0]  %s1, 3200, %s16, [#allocation3], 128, 128, 8
    $region9: #{model_forward.1} parent=1 // pred_fallthru
      _
    // Predicated region
    $region10: #{model_forward.1} parent=1 // pred_check
      _
    $region11: #{model_forward.1} parent=1 // pred_check_branch
      %23 = sbr.rel (0) target = $region13
    $region12: #{model_forward.1} parent=1 // pred_region
      %24 = dma.done [#allocation3], 3200
    $region13: #{model_forward.1} parent=1 // pred_fallthru
      _
    %v26 = vld [vmem:[%s0] sm:$0xff]
    %v27 = vld [vmem:[%s0 + $0x8] sm:$0xff]
    %v28 = vld [vmem:[%s0 + $0x10] sm:$0xff]
    %v29 = vld [vmem:[%s0 + $0x18] sm:$0xff]
    %v30 = vld [vmem:[%s0 + $0x20] sm:$0xff]
    %v31 = vld [vmem:[%s0 + $0x28] sm:$0xff]
    %v32 = vld [vmem:[%s0 + $0x30] sm:$0xff]
    %v33 = vld [vmem:[%s0 + $0x38] sm:$0xff]
    %v34 = vpack.c.bf16 %v27, %v26
    %v35 = vpack.c.bf16 %v29, %v28
    %v36 = vpack.c.bf16 %v31, %v30
    %v37 = vpack.c.bf16 %v33, %v32
    %v38 = vld [vmem:[#allocation2] sm:$0x3f]
    %v39 = vpack.c.bf16 %v38, %v38
    %v40 = vld [vmem:[#allocation2 + $0x8] sm:$0x1]
    %v41 = vlaneseq
    %v42 = vshrl.u32 %v41, 7
    %v43 = vsub.s32 0, %v42
    %v44 = vrot.slane %v40, %v43
    %vm45 = vcmask 48128
    %v47 = vsel %vm45, %v34, 0
    %v50 = vsel %vm45, %v35, 0
    %v53 = vsel %vm45, %v36, 0
    %v56 = vsel %vm45, %v37, 0
    %vm58 = vcmask 1042432
    %v60 = vsel %vm58, %v39, 0
    %62 = vmatprep.subr.bf16.mxu0 0
    %63 = vmatpush1.bf16.msra.mxu0 0
    %64 = vmatprep.subr.bf16.mxu0 0
    %65 = vmatpush1.bf16.msra.mxu0 0
    %66 = vmatprep.subr.bf16.mxu0 0
    %67 = vmatpush1.bf16.msra.mxu0 0
    %68 = vmatprep.subr.bf16.mxu0 0
    %69 = vmatpush1.bf16.msra.mxu0 0
    %70 = vmatprep.subr.bf16.mxu0 0
    %71 = vmatpush1.bf16.msra.mxu0 0
    %72 = vmatprep.subr.bf16.mxu0 0
    %73 = vmatpush1.bf16.msra.mxu0 0
    %74 = vmatprep.subr.bf16.mxu0 0
    %75 = vmatpush1.bf16.msra.mxu0 0
    %76 = vmatprep.subr.bf16.mxu0 0
    %77 = vmatpush1.bf16.msra.mxu0 %v60
    %78 = vmatprep.subr.bf16.mxu0 0
    %79 = vmatpush2.bf16.msra.mxu0 0
    %80 = vmatprep.subr.bf16.mxu0 0
    %81 = vmatpush2.bf16.msra.mxu0 0
    %82 = vmatprep.subr.bf16.mxu0 0
    %83 = vmatpush2.bf16.msra.mxu0 0
    %84 = vmatprep.subr.bf16.mxu0 0
    %85 = vmatpush2.bf16.msra.mxu0 0
    %86 = vmatprep.subr.bf16.mxu0 0
    %87 = vmatpush2.bf16.msra.mxu0 0
    %88 = vmatprep.subr.bf16.mxu0 0
    %89 = vmatpush2.bf16.msra.mxu0 0
    %90 = vmatprep.subr.bf16.mxu0 0
    %91 = vmatpush2.bf16.msra.mxu0 0
    %92 = vmatprep.subr.bf16.mxu0 0
    %93 = vmatpush2.bf16.msra.mxu0 0
    %94 = vmatprep.mubr.bf16.mxu0 0
    %95 = vmatmul.mubr.bf16.gmra.mxu0 %v47
    %v96 = vpop.f32.mrf.mxu0
    %v97 = vadd.f32 %v44, %v96
    %v98 = vpop.f32.mrf.mxu0
    %v99 = vpop.f32.mrf.mxu0
    %v100 = vadd.f32 %v44, %v99
    %v101 = vpop.f32.mrf.mxu0
    %102 = vmatprep.mubr.bf16.mxu0 0
    %103 = vmatmul.mubr.bf16.gmra.mxu0 %v50
    %v104 = vpop.f32.mrf.mxu0
    %v105 = vadd.f32 %v44, %v104
    %v106 = vpop.f32.mrf.mxu0
    %v107 = vpop.f32.mrf.mxu0
    %v108 = vadd.f32 %v44, %v107
    %v109 = vpop.f32.mrf.mxu0
    %110 = vmatprep.mubr.bf16.mxu0 0
    %111 = vmatmul.mubr.bf16.gmra.mxu0 %v53
    %v112 = vpop.f32.mrf.mxu0
    %v113 = vadd.f32 %v44, %v112
    %v114 = vpop.f32.mrf.mxu0
    %v115 = vpop.f32.mrf.mxu0
    %v116 = vadd.f32 %v44, %v115
    %v117 = vpop.f32.mrf.mxu0
    %118 = vmatprep.mubr.bf16.mxu0 0
    %119 = vmatmul.mubr.bf16.gmra.mxu0 %v56
    %v120 = vpop.f32.mrf.mxu0
    %v121 = vadd.f32 %v44, %v120
    %v122 = vpop.f32.mrf.mxu0
    %v123 = vpop.f32.mrf.mxu0
    %v124 = vadd.f32 %v44, %v123
    %v125 = vpop.f32.mrf.mxu0
    %126 = vdwg.mxu0
    %vm127 = vcmask 261120
    %v128 = vsel %vm127, %v97, 0.0
    %129 = vadd.xlane.f32.xlu0 %v128
    %v130 = vpop.xlane.xlu0 %129
    %v131 = vsel %vm127, %v100, 0.0
    %132 = vadd.xlane.f32.xlu0 %v131
    %v133 = vpop.xlane.xlu0 %132
    %v134 = vsel %vm127, %v105, 0.0
    %135 = vadd.xlane.f32.xlu0 %v134
    %v136 = vpop.xlane.xlu0 %135
    %v137 = vsel %vm127, %v108, 0.0
    %138 = vadd.xlane.f32.xlu0 %v137
    %v139 = vpop.xlane.xlu0 %138
    %v140 = vsel %vm127, %v113, 0.0
    %141 = vadd.xlane.f32.xlu0 %v140
    %v142 = vpop.xlane.xlu0 %141
    %v143 = vsel %vm127, %v116, 0.0
    %144 = vadd.xlane.f32.xlu0 %v143
    %v145 = vpop.xlane.xlu0 %144
    %v146 = vsel %vm127, %v121, 0.0
    %147 = vadd.xlane.f32.xlu0 %v146
    %v148 = vpop.xlane.xlu0 %147
    %v149 = vsel %vm127, %v124, 0.0
    %150 = vadd.xlane.f32.xlu0 %v149
    %v151 = vpop.xlane.xlu0 %150
    %v152 = vrcp.pop 32.0
    %v153 = vmul.f32 %v130, %v152
    %v154 = vmul.f32 %v133, %v152
    %v155 = vmul.f32 %v136, %v152
    %v156 = vmul.f32 %v139, %v152
    %v157 = vmul.f32 %v142, %v152
    %v158 = vmul.f32 %v145, %v152
    %v159 = vmul.f32 %v148, %v152
    %v160 = vmul.f32 %v151, %v152
    %v161 = vsub.f32 %v97, %v153
    %v162 = vsub.f32 %v100, %v154
    %v163 = vsub.f32 %v105, %v155
    %v164 = vsub.f32 %v108, %v156
    %v165 = vsub.f32 %v113, %v157
    %v166 = vsub.f32 %v116, %v158
    %v167 = vsub.f32 %v121, %v159
    %v168 = vsub.f32 %v124, %v160
    %v169 = vmul.f32 %v161, %v161
    %v170 = vmul.f32 %v162, %v162
    %v171 = vmul.f32 %v163, %v163
    %v172 = vmul.f32 %v164, %v164
    %v173 = vmul.f32 %v165, %v165
    %v174 = vmul.f32 %v166, %v166
    %v175 = vmul.f32 %v167, %v167
    %v176 = vmul.f32 %v168, %v168
    %v177 = vsel %vm127, %v169, 0.0
    %178 = vadd.xlane.f32.xlu0 %v177
    %v179 = vpop.xlane.xlu0 %178
    %v180 = vsel %vm127, %v170, 0.0
    %181 = vadd.xlane.f32.xlu0 %v180
    %v182 = vpop.xlane.xlu0 %181
    %v183 = vsel %vm127, %v171, 0.0
    %184 = vadd.xlane.f32.xlu0 %v183
    %v185 = vpop.xlane.xlu0 %184
    %v186 = vsel %vm127, %v172, 0.0
    %187 = vadd.xlane.f32.xlu0 %v186
    %v188 = vpop.xlane.xlu0 %187
    %v189 = vsel %vm127, %v173, 0.0
    %190 = vadd.xlane.f32.xlu0 %v189
    %v191 = vpop.xlane.xlu0 %190
    %v192 = vsel %vm127, %v174, 0.0
    %193 = vadd.xlane.f32.xlu0 %v192
    %v194 = vpop.xlane.xlu0 %193
    %v195 = vsel %vm127, %v175, 0.0
    %196 = vadd.xlane.f32.xlu0 %v195
    %v197 = vpop.xlane.xlu0 %196
    %v198 = vsel %vm127, %v176, 0.0
    %199 = vadd.xlane.f32.xlu0 %v198
    %v200 = vpop.xlane.xlu0 %199
    %v201 = vmul.f32 %v179, %v152
    %v202 = vmul.f32 %v182, %v152
    %v203 = vmul.f32 %v185, %v152
    %v204 = vmul.f32 %v188, %v152
    %v205 = vmul.f32 %v191, %v152
    %v206 = vmul.f32 %v194, %v152
    %v207 = vmul.f32 %v197, %v152
    %v208 = vmul.f32 %v200, %v152
    %v209 = vadd.f32 %v201, 1e-05
    %v210 = vadd.f32 %v202, 1e-05
    %v211 = vadd.f32 %v203, 1e-05
    %v212 = vadd.f32 %v204, 1e-05
    %v213 = vadd.f32 %v205, 1e-05
    %v214 = vadd.f32 %v206, 1e-05
    %v215 = vadd.f32 %v207, 1e-05
    %v216 = vadd.f32 %v208, 1e-05
    %v217 = vrsqrt.pop %v209
    %v218 = vrsqrt.pop %v210
    %v219 = vrsqrt.pop %v211
    %v220 = vrsqrt.pop %v212
    %v221 = vrsqrt.pop %v213
    %v222 = vrsqrt.pop %v214
    %v223 = vrsqrt.pop %v215
    %v224 = vrsqrt.pop %v216
    %v225 = vmul.f32 %v161, %v217
    %v226 = vmul.f32 %v162, %v218
    %v227 = vmul.f32 %v163, %v219
    %v228 = vmul.f32 %v164, %v220
    %v229 = vmul.f32 %v165, %v221
    %v230 = vmul.f32 %v166, %v222
    %v231 = vmul.f32 %v167, %v223
    %v232 = vmul.f32 %v168, %v224
    %v233 = vld [vmem:[#allocation2 + $0x10] sm:$0x1]
    %v234 = vlaneseq
    %v235 = vshrl.u32 %v234, 7
    %v236 = vsub.s32 0, %v235
    %v237 = vrot.slane %v233, %v236
    %v238 = vmul.f32 %v225, %v237
    %v239 = vmul.f32 %v226, %v237
    %v240 = vmul.f32 %v227, %v237
    %v241 = vmul.f32 %v228, %v237
    %v242 = vmul.f32 %v229, %v237
    %v243 = vmul.f32 %v230, %v237
    %v244 = vmul.f32 %v231, %v237
    %v245 = vmul.f32 %v232, %v237
    %v246 = vld [vmem:[#allocation2 + $0x18] sm:$0x1]
    %v247 = vlaneseq
    %v248 = vshrl.u32 %v247, 7
    %v249 = vsub.s32 0, %v248
    %v250 = vrot.slane %v246, %v249
    %v251 = vadd.f32 %v238, %v250
    %v252 = vadd.f32 %v239, %v250
    %v253 = vadd.f32 %v240, %v250
    %v254 = vadd.f32 %v241, %v250
    %v255 = vadd.f32 %v242, %v250
    %v256 = vadd.f32 %v243, %v250
    %v257 = vadd.f32 %v244, %v250
    %v258 = vadd.f32 %v245, %v250
    %v259 = vmul.f32 %v251, %v251
    %v260 = vmul.f32 %v252, %v252
    %v261 = vmul.f32 %v253, %v253
    %v262 = vmul.f32 %v254, %v254
    %v263 = vmul.f32 %v255, %v255
    %v264 = vmul.f32 %v256, %v256
    %v265 = vmul.f32 %v257, %v257
    %v266 = vmul.f32 %v258, %v258
    %v267 = vmul.f32 %v251, %v259
    %v268 = vmul.f32 %v252, %v260
    %v269 = vmul.f32 %v253, %v261
    %v270 = vmul.f32 %v254, %v262
    %v271 = vmul.f32 %v255, %v263
    %v272 = vmul.f32 %v256, %v264
    %v273 = vmul.f32 %v257, %v265
    %v274 = vmul.f32 %v258, %v266
    %v275 = vmul.f32 %v267, 0.044715
    %v276 = vmul.f32 %v268, 0.044715
    %v277 = vmul.f32 %v269, 0.044715
    %v278 = vmul.f32 %v270, 0.044715
    %v279 = vmul.f32 %v271, 0.044715
    %v280 = vmul.f32 %v272, 0.044715
    %v281 = vmul.f32 %v273, 0.044715
    %v282 = vmul.f32 %v274, 0.044715
    %v283 = vadd.f32 %v251, %v275
    %v284 = vadd.f32 %v252, %v276
    %v285 = vadd.f32 %v253, %v277
    %v286 = vadd.f32 %v254, %v278
    %v287 = vadd.f32 %v255, %v279
    %v288 = vadd.f32 %v256, %v280
    %v289 = vadd.f32 %v257, %v281
    %v290 = vadd.f32 %v258, %v282
    %v291 = vmul.f32 %v283, 0.7978846
    %v292 = vmul.f32 %v284, 0.7978846
    %v293 = vmul.f32 %v285, 0.7978846
    %v294 = vmul.f32 %v286, 0.7978846
    %v295 = vmul.f32 %v287, 0.7978846
    %v296 = vmul.f32 %v288, 0.7978846
    %v297 = vmul.f32 %v289, 0.7978846
    %v298 = vmul.f32 %v290, 0.7978846
    %v299 = vtanh.pop %v291
    %v300 = vtanh.pop %v292
    %v301 = vtanh.pop %v293
    %v302 = vtanh.pop %v294
    %v303 = vtanh.pop %v295
    %v304 = vtanh.pop %v296
    %v305 = vtanh.pop %v297
    %v306 = vtanh.pop %v298
    %v307 = vadd.f32 %v299, 1.0
    %v308 = vadd.f32 %v300, 1.0
    %v309 = vadd.f32 %v301, 1.0
    %v310 = vadd.f32 %v302, 1.0
    %v311 = vadd.f32 %v303, 1.0
    %v312 = vadd.f32 %v304, 1.0
    %v313 = vadd.f32 %v305, 1.0
    %v314 = vadd.f32 %v306, 1.0
    %v315 = vmul.f32 %v307, 0.5
    %v316 = vmul.f32 %v308, 0.5
    %v317 = vmul.f32 %v309, 0.5
    %v318 = vmul.f32 %v310, 0.5
    %v319 = vmul.f32 %v311, 0.5
    %v320 = vmul.f32 %v312, 0.5
    %v321 = vmul.f32 %v313, 0.5
    %v322 = vmul.f32 %v314, 0.5
    %v323 = vmul.f32 %v251, %v315
    %v324 = vmul.f32 %v252, %v316
    %v325 = vmul.f32 %v253, %v317
    %v326 = vmul.f32 %v254, %v318
    %v327 = vmul.f32 %v255, %v319
    %v328 = vmul.f32 %v256, %v320
    %v329 = vmul.f32 %v257, %v321
    %v330 = vmul.f32 %v258, %v322
    %v331 = vpack.c.bf16 %v324, %v323
    %v332 = vpack.c.bf16 %v326, %v325
    %v333 = vpack.c.bf16 %v328, %v327
    %v334 = vpack.c.bf16 %v330, %v329
    %v335 = vld [vmem:[#allocation2 + $0x20] sm:$0xff]
    %v336 = vld [vmem:[#allocation2 + $0x28] sm:$0xff]
    %v337 = vld [vmem:[#allocation2 + $0x30] sm:$0xff]
    %v338 = vld [vmem:[#allocation2 + $0x38] sm:$0xff]
    %v339 = vpack.c.bf16 %v336, %v335
    %v340 = vpack.c.bf16 %v338, %v337
    %v341 = vld [vmem:[#allocation2 + $0x40] sm:$0x1]
    %v342 = vlaneseq
    %v343 = vshrl.u32 %v342, 7
    %v344 = vsub.s32 0, %v343
    %v345 = vrot.slane %v341, %v344
    %v347 = vsel %vm127, %v331, 0
    %v350 = vsel %vm127, %v332, 0
    %v353 = vsel %vm127, %v333, 0
    %v356 = vsel %vm127, %v334, 0
    %358 = vmatprep.subr.bf16.mxu0 0
    %359 = vmatpush1.bf16.msra.mxu0 0
    %360 = vmatprep.subr.bf16.mxu0 0
    %361 = vmatpush1.bf16.msra.mxu0 0
    %362 = vmatprep.subr.bf16.mxu0 0
    %363 = vmatpush1.bf16.msra.mxu0 0
    %364 = vmatprep.subr.bf16.mxu0 0
    %365 = vmatpush1.bf16.msra.mxu0 0
    %366 = vmatprep.subr.bf16.mxu0 0
    %367 = vmatpush1.bf16.msra.mxu0 0
    %368 = vmatprep.subr.bf16.mxu0 0
    %369 = vmatpush1.bf16.msra.mxu0 0
    %370 = vmatprep.subr.bf16.mxu0 0
    %371 = vmatpush1.bf16.msra.mxu0 %v340
    %372 = vmatprep.subr.bf16.mxu0 0
    %373 = vmatpush1.bf16.msra.mxu0 %v339
    %374 = vmatprep.subr.bf16.mxu0 0
    %375 = vmatpush2.bf16.msra.mxu0 0
    %376 = vmatprep.subr.bf16.mxu0 0
    %377 = vmatpush2.bf16.msra.mxu0 0
    %378 = vmatprep.subr.bf16.mxu0 0
    %379 = vmatpush2.bf16.msra.mxu0 0
    %380 = vmatprep.subr.bf16.mxu0 0
    %381 = vmatpush2.bf16.msra.mxu0 0
    %382 = vmatprep.subr.bf16.mxu0 0
    %383 = vmatpush2.bf16.msra.mxu0 0
    %384 = vmatprep.subr.bf16.mxu0 0
    %385 = vmatpush2.bf16.msra.mxu0 0
    %386 = vmatprep.subr.bf16.mxu0 0
    %387 = vmatpush2.bf16.msra.mxu0 0
    %388 = vmatprep.subr.bf16.mxu0 0
    %389 = vmatpush2.bf16.msra.mxu0 0
    %390 = vmatprep.mubr.bf16.mxu0 0
    %391 = vmatmul.mubr.bf16.gmra.mxu0 %v347
    %v392 = vpop.f32.mrf.mxu0
    %v393 = vadd.f32 %v345, %v392
    %v394 = vpop.f32.mrf.mxu0
    %v395 = vpop.f32.mrf.mxu0
    %v396 = vadd.f32 %v345, %v395
    %v397 = vpop.f32.mrf.mxu0
    %398 = vmatprep.mubr.bf16.mxu0 0
    %399 = vmatmul.mubr.bf16.gmra.mxu0 %v350
    %v400 = vpop.f32.mrf.mxu0
    %v401 = vadd.f32 %v345, %v400
    %v402 = vpop.f32.mrf.mxu0
    %v403 = vpop.f32.mrf.mxu0
    %v404 = vadd.f32 %v345, %v403
    %v405 = vpop.f32.mrf.mxu0
    %406 = vmatprep.mubr.bf16.mxu0 0
    %407 = vmatmul.mubr.bf16.gmra.mxu0 %v353
    %v408 = vpop.f32.mrf.mxu0
    %v409 = vadd.f32 %v345, %v408
    %v410 = vpop.f32.mrf.mxu0
    %v411 = vpop.f32.mrf.mxu0
    %v412 = vadd.f32 %v345, %v411
    %v413 = vpop.f32.mrf.mxu0
    %414 = vmatprep.mubr.bf16.mxu0 0
    %415 = vmatmul.mubr.bf16.gmra.mxu0 %v356
    %v416 = vpop.f32.mrf.mxu0
    %v417 = vadd.f32 %v345, %v416
    %v418 = vpop.f32.mrf.mxu0
    %v419 = vpop.f32.mrf.mxu0
    %v420 = vadd.f32 %v345, %v419
    %v421 = vpop.f32.mrf.mxu0
    %422 = vdwg.mxu0
    %v423 = vld [vmem:[#allocation2 + $0x48] sm:$0xff]
    %v424 = vld [vmem:[#allocation2 + $0x50] sm:$0xff]
    %v425 = vpack.c.bf16 %v424, %v423
    %vm426 = vcmask 130048
    %v428 = vsel %vm426, 0, 0
    %430 = vmatprep.subr.bf16.mxu0 0
    %431 = vmatpush1.bf16.msra.mxu0 0
    %432 = vmatprep.subr.bf16.mxu0 0
    %433 = vmatpush1.bf16.msra.mxu0 0
    %434 = vmatprep.subr.bf16.mxu0 0
    %435 = vmatpush1.bf16.msra.mxu0 0
    %436 = vmatprep.subr.bf16.mxu0 0
    %437 = vmatpush1.bf16.msra.mxu0 0
    %438 = vmatprep.subr.bf16.mxu0 0
    %439 = vmatpush1.bf16.msra.mxu0 0
    %440 = vmatprep.subr.bf16.mxu0 0
    %441 = vmatpush1.bf16.msra.mxu0 0
    %442 = vmatprep.subr.bf16.mxu0 0
    %443 = vmatpush1.bf16.msra.mxu0 0
    %444 = vmatprep.subr.bf16.mxu0 0
    %445 = vmatpush1.bf16.msra.mxu0 %v425
    %446 = vmatprep.subr.bf16.mxu0 0
    %447 = vmatpush2.bf16.msra.mxu0 0
    %448 = vmatprep.subr.bf16.mxu0 0
    %449 = vmatpush2.bf16.msra.mxu0 0
    %450 = vmatprep.subr.bf16.mxu0 0
    %451 = vmatpush2.bf16.msra.mxu0 0
    %452 = vmatprep.subr.bf16.mxu0 0
    %453 = vmatpush2.bf16.msra.mxu0 0
    %454 = vmatprep.subr.bf16.mxu0 0
    %455 = vmatpush2.bf16.msra.mxu0 0
    %456 = vmatprep.subr.bf16.mxu0 0
    %457 = vmatpush2.bf16.msra.mxu0 0
    %458 = vmatprep.subr.bf16.mxu0 0
    %459 = vmatpush2.bf16.msra.mxu0 0
    %460 = vmatprep.subr.bf16.mxu0 0
    %461 = vmatpush2.bf16.msra.mxu0 0
    %462 = vmatprep.mubr.bf16.mxu0 0
    %463 = vmatmul.mubr.bf16.gmra.mxu0 %v428
    %v464 = vpop.f32.mrf.mxu0
    %v465 = vadd.f32 0.0, %v464
    %v466 = vpop.f32.mrf.mxu0
    %v467 = vpop.f32.mrf.mxu0
    %v468 = vpop.f32.mrf.mxu0
    %469 = vdwg.mxu0
    %v470 = vadd.f32 %v393, %v465
    %v471 = vxor.u32 %v470, 2147483648
    %v472 = vmul.f32 %v471, 1.442695
    %v473 = vpow.pop %v472
    %v474 = vadd.f32 %v473, 1.0
    %v475 = vrcp.pop %v474
    %v476 = vmul.f32 1.0, %v475
    %v477 = vtanh.pop %v470
    %v478 = vmul.f32 %v476, 0.0
    %480 = vrot.lane.b32.xlu0 %v477, 80
    %v481 = vpop.permute.xlu0 %480
    %v483 = vmul.f32 %v476, %v481
    %485 = vrot.lane.b32.xlu0 %v483, 16
    %v486 = vpop.permute.xlu0 %485
    %v488 = vadd.f32 %v478, %v486
    %v489 = vtanh.pop %v488
    %491 = vrot.lane.b32.xlu0 %v489, 16
    %v492 = vpop.permute.xlu0 %491
    %v494 = vmul.f32 %v476, %v492
    %496 = vrot.lane.b32.xlu0 %v425, 64
    %v497 = vpop.permute.xlu0 %496
    %499 = vmatprep.subr.bf16.mxu0 0
    %500 = vmatpush1.bf16.msra.mxu0 0
    %501 = vmatprep.subr.bf16.mxu0 0
    %502 = vmatpush1.bf16.msra.mxu0 0
    %503 = vmatprep.subr.bf16.mxu0 0
    %504 = vmatpush1.bf16.msra.mxu0 0
    %505 = vmatprep.subr.bf16.mxu0 0
    %506 = vmatpush1.bf16.msra.mxu0 0
    %507 = vmatprep.subr.bf16.mxu0 0
    %508 = vmatpush1.bf16.msra.mxu0 0
    %509 = vmatprep.subr.bf16.mxu0 0
    %510 = vmatpush1.bf16.msra.mxu0 0
    %511 = vmatprep.subr.bf16.mxu0 0
    %512 = vmatpush1.bf16.msra.mxu0 0
    %513 = vmatprep.subr.bf16.mxu0 0
    %514 = vmatpush1.bf16.msra.mxu0 %v497
    %515 = vmatprep.subr.bf16.mxu0 0
    %516 = vmatpush2.bf16.msra.mxu0 0
    %517 = vmatprep.subr.bf16.mxu0 0
    %518 = vmatpush2.bf16.msra.mxu0 0
    %519 = vmatprep.subr.bf16.mxu0 0
    %520 = vmatpush2.bf16.msra.mxu0 0
    %521 = vmatprep.subr.bf16.mxu0 0
    %522 = vmatpush2.bf16.msra.mxu0 0
    %523 = vmatprep.subr.bf16.mxu0 0
    %524 = vmatpush2.bf16.msra.mxu0 0
    %525 = vmatprep.subr.bf16.mxu0 0
    %526 = vmatpush2.bf16.msra.mxu0 0
    %527 = vmatprep.subr.bf16.mxu0 0
    %528 = vmatpush2.bf16.msra.mxu0 0
    %529 = vmatprep.subr.bf16.mxu0 0
    %530 = vmatpush2.bf16.msra.mxu0 0
    %531 = vmatprep.mubr.bf16.mxu0 0
    %532 = vmatmul.mubr.bf16.gmra.mxu0 %v428
    %v533 = vpop.f32.mrf.mxu0
    %v534 = vadd.f32 0.0, %v533
    %v535 = vpop.f32.mrf.mxu0
    %v536 = vpop.f32.mrf.mxu0
    %v537 = vpop.f32.mrf.mxu0
    %538 = vdwg.mxu0
    %540 = vrot.lane.b32.xlu0 %v534, 64
    %v541 = vpop.permute.xlu0 %540
    %v543 = vadd.f32 %v420, %v541
    %v544 = vxor.u32 %v543, 2147483648
    %v545 = vmul.f32 %v544, 1.442695
    %v546 = vpow.pop %v545
    %v547 = vadd.f32 %v546, 1.0
    %v548 = vrcp.pop %v547
    %v549 = vmul.f32 1.0, %v548
    %v550 = vtanh.pop %v543
    %v551 = vmul.f32 %v549, 0.0
    %553 = vrot.lane.b32.xlu0 %v550, 80
    %v554 = vpop.permute.xlu0 %553
    %v556 = vmul.f32 %v549, %v554
    %558 = vrot.lane.b32.xlu0 %v556, 16
    %v559 = vpop.permute.xlu0 %558
    %v561 = vadd.f32 %v551, %v559
    %v562 = vtanh.pop %v561
    %564 = vrot.lane.b32.xlu0 %v562, 16
    %v565 = vpop.permute.xlu0 %564
    %v567 = vmul.f32 %v549, %v565
    %v568 = vpack.c.bf16 %v494, %v494
    %570 = vrot.lane.b32.xlu0 %v568, 96
    %v571 = vpop.permute.xlu0 %570
    %v573 = vsel %vm426, %v571, 0
    %575 = vmatprep.subr.bf16.mxu0 0
    %576 = vmatpush1.bf16.msra.mxu0 0
    %577 = vmatprep.subr.bf16.mxu0 0
    %578 = vmatpush1.bf16.msra.mxu0 0
    %579 = vmatprep.subr.bf16.mxu0 0
    %580 = vmatpush1.bf16.msra.mxu0 0
    %581 = vmatprep.subr.bf16.mxu0 0
    %582 = vmatpush1.bf16.msra.mxu0 0
    %583 = vmatprep.subr.bf16.mxu0 0
    %584 = vmatpush1.bf16.msra.mxu0 0
    %585 = vmatprep.subr.bf16.mxu0 0
    %586 = vmatpush1.bf16.msra.mxu0 0
    %587 = vmatprep.subr.bf16.mxu0 0
    %588 = vmatpush1.bf16.msra.mxu0 0
    %589 = vmatprep.subr.bf16.mxu0 0
    %590 = vmatpush1.bf16.msra.mxu0 %v425
    %591 = vmatprep.subr.bf16.mxu0 0
    %592 = vmatpush2.bf16.msra.mxu0 0
    %593 = vmatprep.subr.bf16.mxu0 0
    %594 = vmatpush2.bf16.msra.mxu0 0
    %595 = vmatprep.subr.bf16.mxu0 0
    %596 = vmatpush2.bf16.msra.mxu0 0
    %597 = vmatprep.subr.bf16.mxu0 0
    %598 = vmatpush2.bf16.msra.mxu0 0
    %599 = vmatprep.subr.bf16.mxu0 0
    %600 = vmatpush2.bf16.msra.mxu0 0
    %601 = vmatprep.subr.bf16.mxu0 0
    %602 = vmatpush2.bf16.msra.mxu0 0
    %603 = vmatprep.subr.bf16.mxu0 0
    %604 = vmatpush2.bf16.msra.mxu0 0
    %605 = vmatprep.subr.bf16.mxu0 0
    %606 = vmatpush2.bf16.msra.mxu0 0
    %607 = vmatprep.mubr.bf16.mxu0 0
    %608 = vmatmul.mubr.bf16.gmra.mxu0 %v573
    %v609 = vpop.f32.mrf.mxu0
    %v610 = vadd.f32 0.0, %v609
    %v611 = vpop.f32.mrf.mxu0
    %v612 = vpop.f32.mrf.mxu0
    %v613 = vpop.f32.mrf.mxu0
    %614 = vdwg.mxu0
    %v615 = vadd.f32 %v396, %v610
    %v616 = vxor.u32 %v615, 2147483648
    %v617 = vmul.f32 %v616, 1.442695
    %v618 = vpow.pop %v617
    %v619 = vadd.f32 %v618, 1.0
    %v620 = vrcp.pop %v619
    %v621 = vmul.f32 1.0, %v620
    %v622 = vtanh.pop %v615
    %v623 = vmul.f32 %v621, %v488
    %625 = vrot.lane.b32.xlu0 %v622, 80
    %v626 = vpop.permute.xlu0 %625
    %v628 = vmul.f32 %v621, %v626
    %630 = vrot.lane.b32.xlu0 %v628, 16
    %v631 = vpop.permute.xlu0 %630
    %v633 = vadd.f32 %v623, %v631
    %v634 = vtanh.pop %v633
    %636 = vrot.lane.b32.xlu0 %v634, 16
    %v637 = vpop.permute.xlu0 %636
    %v639 = vmul.f32 %v621, %v637
    %v640 = vpack.c.bf16 %v567, %v567
    %642 = vrot.lane.b32.xlu0 %v640, 32
    %v643 = vpop.permute.xlu0 %642
    %v645 = vsel %vm426, %v643, 0
    %647 = vmatprep.subr.bf16.mxu0 0
    %648 = vmatpush1.bf16.msra.mxu0 0
    %649 = vmatprep.subr.bf16.mxu0 0
    %650 = vmatpush1.bf16.msra.mxu0 0
    %651 = vmatprep.subr.bf16.mxu0 0
    %652 = vmatpush1.bf16.msra.mxu0 0
    %653 = vmatprep.subr.bf16.mxu0 0
    %654 = vmatpush1.bf16.msra.mxu0 0
    %655 = vmatprep.subr.bf16.mxu0 0
    %656 = vmatpush1.bf16.msra.mxu0 0
    %657 = vmatprep.subr.bf16.mxu0 0
    %658 = vmatpush1.bf16.msra.mxu0 0
    %659 = vmatprep.subr.bf16.mxu0 0
    %660 = vmatpush1.bf16.msra.mxu0 0
    %661 = vmatprep.subr.bf16.mxu0 0
    %662 = vmatpush1.bf16.msra.mxu0 %v497
    %663 = vmatprep.subr.bf16.mxu0 0
    %664 = vmatpush2.bf16.msra.mxu0 0
    %665 = vmatprep.subr.bf16.mxu0 0
    %666 = vmatpush2.bf16.msra.mxu0 0
    %667 = vmatprep.subr.bf16.mxu0 0
    %668 = vmatpush2.bf16.msra.mxu0 0
    %669 = vmatprep.subr.bf16.mxu0 0
    %670 = vmatpush2.bf16.msra.mxu0 0
    %671 = vmatprep.subr.bf16.mxu0 0
    %672 = vmatpush2.bf16.msra.mxu0 0
    %673 = vmatprep.subr.bf16.mxu0 0
    %674 = vmatpush2.bf16.msra.mxu0 0
    %675 = vmatprep.subr.bf16.mxu0 0
    %676 = vmatpush2.bf16.msra.mxu0 0
    %677 = vmatprep.subr.bf16.mxu0 0
    %678 = vmatpush2.bf16.msra.mxu0 0
    %679 = vmatprep.mubr.bf16.mxu0 0
    %680 = vmatmul.mubr.bf16.gmra.mxu0 %v645
    %v681 = vpop.f32.mrf.mxu0
    %v682 = vadd.f32 0.0, %v681
    %v683 = vpop.f32.mrf.mxu0
    %v684 = vpop.f32.mrf.mxu0
    %v685 = vpop.f32.mrf.mxu0
    %686 = vdwg.mxu0
    %688 = vrot.lane.b32.xlu0 %v682, 64
    %v689 = vpop.permute.xlu0 %688
    %v691 = vadd.f32 %v417, %v689
    %v692 = vxor.u32 %v691, 2147483648
    %v693 = vmul.f32 %v692, 1.442695
    %v694 = vpow.pop %v693
    %v695 = vadd.f32 %v694, 1.0
    %v696 = vrcp.pop %v695
    %v697 = vmul.f32 1.0, %v696
    %v698 = vtanh.pop %v691
    %v699 = vmul.f32 %v697, %v561
    %701 = vrot.lane.b32.xlu0 %v698, 80
    %v702 = vpop.permute.xlu0 %701
    %v704 = vmul.f32 %v697, %v702
    %706 = vrot.lane.b32.xlu0 %v704, 16
    %v707 = vpop.permute.xlu0 %706
    %v709 = vadd.f32 %v699, %v707
    %v710 = vtanh.pop %v709
    %712 = vrot.lane.b32.xlu0 %v710, 16
    %v713 = vpop.permute.xlu0 %712
    %v715 = vmul.f32 %v697, %v713
    %v716 = vpack.c.bf16 %v639, %v639
    %718 = vrot.lane.b32.xlu0 %v716, 96
    %v719 = vpop.permute.xlu0 %718
    %v721 = vsel %vm426, %v719, 0
    %723 = vmatprep.subr.bf16.mxu0 0
    %724 = vmatpush1.bf16.msra.mxu0 0
    %725 = vmatprep.subr.bf16.mxu0 0
    %726 = vmatpush1.bf16.msra.mxu0 0
    %727 = vmatprep.subr.bf16.mxu0 0
    %728 = vmatpush1.bf16.msra.mxu0 0
    %729 = vmatprep.subr.bf16.mxu0 0
    %730 = vmatpush1.bf16.msra.mxu0 0
    %731 = vmatprep.subr.bf16.mxu0 0
    %732 = vmatpush1.bf16.msra.mxu0 0
    %733 = vmatprep.subr.bf16.mxu0 0
    %734 = vmatpush1.bf16.msra.mxu0 0
    %735 = vmatprep.subr.bf16.mxu0 0
    %736 = vmatpush1.bf16.msra.mxu0 0
    %737 = vmatprep.subr.bf16.mxu0 0
    %738 = vmatpush1.bf16.msra.mxu0 %v425
    %739 = vmatprep.subr.bf16.mxu0 0
    %740 = vmatpush2.bf16.msra.mxu0 0
    %741 = vmatprep.subr.bf16.mxu0 0
    %742 = vmatpush2.bf16.msra.mxu0 0
    %743 = vmatprep.subr.bf16.mxu0 0
    %744 = vmatpush2.bf16.msra.mxu0 0
    %745 = vmatprep.subr.bf16.mxu0 0
    %746 = vmatpush2.bf16.msra.mxu0 0
    %747 = vmatprep.subr.bf16.mxu0 0
    %748 = vmatpush2.bf16.msra.mxu0 0
    %749 = vmatprep.subr.bf16.mxu0 0
    %750 = vmatpush2.bf16.msra.mxu0 0
    %751 = vmatprep.subr.bf16.mxu0 0
    %752 = vmatpush2.bf16.msra.mxu0 0
    %753 = vmatprep.subr.bf16.mxu0 0
    %754 = vmatpush2.bf16.msra.mxu0 0
    %755 = vmatprep.mubr.bf16.mxu0 0
    %756 = vmatmul.mubr.bf16.gmra.mxu0 %v721
    %v757 = vpop.f32.mrf.mxu0
    %v758 = vadd.f32 0.0, %v757
    %v759 = vpop.f32.mrf.mxu0
    %v760 = vpop.f32.mrf.mxu0
    %v761 = vpop.f32.mrf.mxu0
    %762 = vdwg.mxu0
    %v763 = vadd.f32 %v401, %v758
    %v764 = vxor.u32 %v763, 2147483648
    %v765 = vmul.f32 %v764, 1.442695
    %v766 = vpow.pop %v765
    %v767 = vadd.f32 %v766, 1.0
    %v768 = vrcp.pop %v767
    %v769 = vmul.f32 1.0, %v768
    %v770 = vtanh.pop %v763
    %v771 = vmul.f32 %v769, %v633
    %773 = vrot.lane.b32.xlu0 %v770, 80
    %v774 = vpop.permute.xlu0 %773
    %v776 = vmul.f32 %v769, %v774
    %778 = vrot.lane.b32.xlu0 %v776, 16
    %v779 = vpop.permute.xlu0 %778
    %v781 = vadd.f32 %v771, %v779
    %v782 = vtanh.pop %v781
    %784 = vrot.lane.b32.xlu0 %v782, 16
    %v785 = vpop.permute.xlu0 %784
    %v787 = vmul.f32 %v769, %v785
    %v788 = vpack.c.bf16 %v715, %v715
    %790 = vrot.lane.b32.xlu0 %v788, 32
    %v791 = vpop.permute.xlu0 %790
    %v793 = vsel %vm426, %v791, 0
    %795 = vmatprep.subr.bf16.mxu0 0
    %796 = vmatpush1.bf16.msra.mxu0 0
    %797 = vmatprep.subr.bf16.mxu0 0
    %798 = vmatpush1.bf16.msra.mxu0 0
    %799 = vmatprep.subr.bf16.mxu0 0
    %800 = vmatpush1.bf16.msra.mxu0 0
    %801 = vmatprep.subr.bf16.mxu0 0
    %802 = vmatpush1.bf16.msra.mxu0 0
    %803 = vmatprep.subr.bf16.mxu0 0
    %804 = vmatpush1.bf16.msra.mxu0 0
    %805 = vmatprep.subr.bf16.mxu0 0
    %806 = vmatpush1.bf16.msra.mxu0 0
    %807 = vmatprep.subr.bf16.mxu0 0
    %808 = vmatpush1.bf16.msra.mxu0 0
    %809 = vmatprep.subr.bf16.mxu0 0
    %810 = vmatpush1.bf16.msra.mxu0 %v497
    %811 = vmatprep.subr.bf16.mxu0 0
    %812 = vmatpush2.bf16.msra.mxu0 0
    %813 = vmatprep.subr.bf16.mxu0 0
    %814 = vmatpush2.bf16.msra.mxu0 0
    %815 = vmatprep.subr.bf16.mxu0 0
    %816 = vmatpush2.bf16.msra.mxu0 0
    %817 = vmatprep.subr.bf16.mxu0 0
    %818 = vmatpush2.bf16.msra.mxu0 0
    %819 = vmatprep.subr.bf16.mxu0 0
    %820 = vmatpush2.bf16.msra.mxu0 0
    %821 = vmatprep.subr.bf16.mxu0 0
    %822 = vmatpush2.bf16.msra.mxu0 0
    %823 = vmatprep.subr.bf16.mxu0 0
    %824 = vmatpush2.bf16.msra.mxu0 0
    %825 = vmatprep.subr.bf16.mxu0 0
    %826 = vmatpush2.bf16.msra.mxu0 0
    %827 = vmatprep.mubr.bf16.mxu0 0
    %828 = vmatmul.mubr.bf16.gmra.mxu0 %v793
    %v829 = vpop.f32.mrf.mxu0
    %v830 = vadd.f32 0.0, %v829
    %v831 = vpop.f32.mrf.mxu0
    %v832 = vpop.f32.mrf.mxu0
    %v833 = vpop.f32.mrf.mxu0
    %834 = vdwg.mxu0
    %836 = vrot.lane.b32.xlu0 %v830, 64
    %v837 = vpop.permute.xlu0 %836
    %v839 = vadd.f32 %v412, %v837
    %v840 = vxor.u32 %v839, 2147483648
    %v841 = vmul.f32 %v840, 1.442695
    %v842 = vpow.pop %v841
    %v843 = vadd.f32 %v842, 1.0
    %v844 = vrcp.pop %v843
    %v845 = vmul.f32 1.0, %v844
    %v846 = vtanh.pop %v839
    %v847 = vmul.f32 %v845, %v709
    %849 = vrot.lane.b32.xlu0 %v846, 80
    %v850 = vpop.permute.xlu0 %849
    %v852 = vmul.f32 %v845, %v850
    %854 = vrot.lane.b32.xlu0 %v852, 16
    %v855 = vpop.permute.xlu0 %854
    %v857 = vadd.f32 %v847, %v855
    %v858 = vtanh.pop %v857
    %860 = vrot.lane.b32.xlu0 %v858, 16
    %v861 = vpop.permute.xlu0 %860
    %v863 = vmul.f32 %v845, %v861
    %v864 = vpack.c.bf16 %v787, %v787
    %866 = vrot.lane.b32.xlu0 %v864, 96
    %v867 = vpop.permute.xlu0 %866
    %v869 = vsel %vm426, %v867, 0
    %871 = vmatprep.subr.bf16.mxu0 0
    %872 = vmatpush1.bf16.msra.mxu0 0
    %873 = vmatprep.subr.bf16.mxu0 0
    %874 = vmatpush1.bf16.msra.mxu0 0
    %875 = vmatprep.subr.bf16.mxu0 0
    %876 = vmatpush1.bf16.msra.mxu0 0
    %877 = vmatprep.subr.bf16.mxu0 0
    %878 = vmatpush1.bf16.msra.mxu0 0
    %879 = vmatprep.subr.bf16.mxu0 0
    %880 = vmatpush1.bf16.msra.mxu0 0
    %881 = vmatprep.subr.bf16.mxu0 0
    %882 = vmatpush1.bf16.msra.mxu0 0
    %883 = vmatprep.subr.bf16.mxu0 0
    %884 = vmatpush1.bf16.msra.mxu0 0
    %885 = vmatprep.subr.bf16.mxu0 0
    %886 = vmatpush1.bf16.msra.mxu0 %v425
    %887 = vmatprep.subr.bf16.mxu0 0
    %888 = vmatpush2.bf16.msra.mxu0 0
    %889 = vmatprep.subr.bf16.mxu0 0
    %890 = vmatpush2.bf16.msra.mxu0 0
    %891 = vmatprep.subr.bf16.mxu0 0
    %892 = vmatpush2.bf16.msra.mxu0 0
    %893 = vmatprep.subr.bf16.mxu0 0
    %894 = vmatpush2.bf16.msra.mxu0 0
    %895 = vmatprep.subr.bf16.mxu0 0
    %896 = vmatpush2.bf16.msra.mxu0 0
    %897 = vmatprep.subr.bf16.mxu0 0
    %898 = vmatpush2.bf16.msra.mxu0 0
    %899 = vmatprep.subr.bf16.mxu0 0
    %900 = vmatpush2.bf16.msra.mxu0 0
    %901 = vmatprep.subr.bf16.mxu0 0
    %902 = vmatpush2.bf16.msra.mxu0 0
    %903 = vmatprep.mubr.bf16.mxu0 0
    %904 = vmatmul.mubr.bf16.gmra.mxu0 %v869
    %v905 = vpop.f32.mrf.mxu0
    %v906 = vadd.f32 0.0, %v905
    %v907 = vpop.f32.mrf.mxu0
    %v908 = vpop.f32.mrf.mxu0
    %v909 = vpop.f32.mrf.mxu0
    %910 = vdwg.mxu0
    %v911 = vadd.f32 %v404, %v906
    %v912 = vxor.u32 %v911, 2147483648
    %v913 = vmul.f32 %v912, 1.442695
    %v914 = vpow.pop %v913
    %v915 = vadd.f32 %v914, 1.0
    %v916 = vrcp.pop %v915
    %v917 = vmul.f32 1.0, %v916
    %v918 = vtanh.pop %v911
    %v919 = vmul.f32 %v917, %v781
    %921 = vrot.lane.b32.xlu0 %v918, 80
    %v922 = vpop.permute.xlu0 %921
    %v924 = vmul.f32 %v917, %v922
    %926 = vrot.lane.b32.xlu0 %v924, 16
    %v927 = vpop.permute.xlu0 %926
    %v929 = vadd.f32 %v919, %v927
    %v930 = vtanh.pop %v929
    %932 = vrot.lane.b32.xlu0 %v930, 16
    %v933 = vpop.permute.xlu0 %932
    %v935 = vmul.f32 %v917, %v933
    %v936 = vpack.c.bf16 %v863, %v863
    %938 = vrot.lane.b32.xlu0 %v936, 32
    %v939 = vpop.permute.xlu0 %938
    %v941 = vsel %vm426, %v939, 0
    %943 = vmatprep.subr.bf16.mxu0 0
    %944 = vmatpush1.bf16.msra.mxu0 0
    %945 = vmatprep.subr.bf16.mxu0 0
    %946 = vmatpush1.bf16.msra.mxu0 0
    %947 = vmatprep.subr.bf16.mxu0 0
    %948 = vmatpush1.bf16.msra.mxu0 0
    %949 = vmatprep.subr.bf16.mxu0 0
    %950 = vmatpush1.bf16.msra.mxu0 0
    %951 = vmatprep.subr.bf16.mxu0 0
    %952 = vmatpush1.bf16.msra.mxu0 0
    %953 = vmatprep.subr.bf16.mxu0 0
    %954 = vmatpush1.bf16.msra.mxu0 0
    %955 = vmatprep.subr.bf16.mxu0 0
    %956 = vmatpush1.bf16.msra.mxu0 0
    %957 = vmatprep.subr.bf16.mxu0 0
    %958 = vmatpush1.bf16.msra.mxu0 %v497
    %959 = vmatprep.subr.bf16.mxu0 0
    %960 = vmatpush2.bf16.msra.mxu0 0
    %961 = vmatprep.subr.bf16.mxu0 0
    %962 = vmatpush2.bf16.msra.mxu0 0
    %963 = vmatprep.subr.bf16.mxu0 0
    %964 = vmatpush2.bf16.msra.mxu0 0
    %965 = vmatprep.subr.bf16.mxu0 0
    %966 = vmatpush2.bf16.msra.mxu0 0
    %967 = vmatprep.subr.bf16.mxu0 0
    %968 = vmatpush2.bf16.msra.mxu0 0
    %969 = vmatprep.subr.bf16.mxu0 0
    %970 = vmatpush2.bf16.msra.mxu0 0
    %971 = vmatprep.subr.bf16.mxu0 0
    %972 = vmatpush2.bf16.msra.mxu0 0
    %973 = vmatprep.subr.bf16.mxu0 0
    %974 = vmatpush2.bf16.msra.mxu0 0
    %975 = vmatprep.mubr.bf16.mxu0 0
    %976 = vmatmul.mubr.bf16.gmra.mxu0 %v941
    %v977 = vpop.f32.mrf.mxu0
    %v978 = vadd.f32 0.0, %v977
    %v979 = vpop.f32.mrf.mxu0
    %v980 = vpop.f32.mrf.mxu0
    %v981 = vpop.f32.mrf.mxu0
    %982 = vdwg.mxu0
    %984 = vrot.lane.b32.xlu0 %v978, 64
    %v985 = vpop.permute.xlu0 %984
    %v987 = vadd.f32 %v409, %v985
    %v988 = vxor.u32 %v987, 2147483648
    %v989 = vmul.f32 %v988, 1.442695
    %v990 = vpow.pop %v989
    %v991 = vadd.f32 %v990, 1.0
    %v992 = vrcp.pop %v991
    %v993 = vmul.f32 1.0, %v992
    %v994 = vtanh.pop %v987
    %v995 = vmul.f32 %v993, %v857
    %997 = vrot.lane.b32.xlu0 %v994, 80
    %v998 = vpop.permute.xlu0 %997
    %v1000 = vmul.f32 %v993, %v998
    %1002 = vrot.lane.b32.xlu0 %v1000, 16
    %v1003 = vpop.permute.xlu0 %1002
    %v1005 = vadd.f32 %v995, %v1003
    %v1006 = vtanh.pop %v1005
    %1008 = vrot.lane.b32.xlu0 %v1006, 16
    %v1009 = vpop.permute.xlu0 %1008
    %v1011 = vmul.f32 %v993, %v1009
    %v1012 = vpack.c.bf16 %v935, %v935
    %1014 = vrot.lane.b32.xlu0 %v1012, 96
    %v1015 = vpop.permute.xlu0 %1014
    %v1017 = vsel %vm426, %v1015, 0
    %1019 = vmatprep.subr.bf16.mxu0 0
    %1020 = vmatpush1.bf16.msra.mxu0 0
    %1021 = vmatprep.subr.bf16.mxu0 0
    %1022 = vmatpush1.bf16.msra.mxu0 0
    %1023 = vmatprep.subr.bf16.mxu0 0
    %1024 = vmatpush1.bf16.msra.mxu0 0
    %1025 = vmatprep.subr.bf16.mxu0 0
    %1026 = vmatpush1.bf16.msra.mxu0 0
    %1027 = vmatprep.subr.bf16.mxu0 0
    %1028 = vmatpush1.bf16.msra.mxu0 0
    %1029 = vmatprep.subr.bf16.mxu0 0
    %1030 = vmatpush1.bf16.msra.mxu0 0
    %1031 = vmatprep.subr.bf16.mxu0 0
    %1032 = vmatpush1.bf16.msra.mxu0 0
    %1033 = vmatprep.subr.bf16.mxu0 0
    %1034 = vmatpush1.bf16.msra.mxu0 %v425
    %1035 = vmatprep.subr.bf16.mxu0 0
    %1036 = vmatpush2.bf16.msra.mxu0 0
    %1037 = vmatprep.subr.bf16.mxu0 0
    %1038 = vmatpush2.bf16.msra.mxu0 0
    %1039 = vmatprep.subr.bf16.mxu0 0
    %1040 = vmatpush2.bf16.msra.mxu0 0
    %1041 = vmatprep.subr.bf16.mxu0 0
    %1042 = vmatpush2.bf16.msra.mxu0 0
    %1043 = vmatprep.subr.bf16.mxu0 0
    %1044 = vmatpush2.bf16.msra.mxu0 0
    %1045 = vmatprep.subr.bf16.mxu0 0
    %1046 = vmatpush2.bf16.msra.mxu0 0
    %1047 = vmatprep.subr.bf16.mxu0 0
    %1048 = vmatpush2.bf16.msra.mxu0 0
    %1049 = vmatprep.subr.bf16.mxu0 0
    %1050 = vmatpush2.bf16.msra.mxu0 0
    %1051 = vmatprep.mubr.bf16.mxu0 0
    %1052 = vmatmul.mubr.bf16.gmra.mxu0 %v1017
    %v1053 = vpop.f32.mrf.mxu0
    %v1054 = vadd.f32 0.0, %v1053
    %v1055 = vpop.f32.mrf.mxu0
    %v1056 = vpop.f32.mrf.mxu0
    %v1057 = vpop.f32.mrf.mxu0
    %1058 = vdwg.mxu0
    %v1059 = vadd.f32 %v409, %v1054
    %v1060 = vxor.u32 %v1059, 2147483648
    %v1061 = vmul.f32 %v1060, 1.442695
    %v1062 = vpow.pop %v1061
    %v1063 = vadd.f32 %v1062, 1.0
    %v1064 = vrcp.pop %v1063
    %v1065 = vmul.f32 1.0, %v1064
    %v1066 = vtanh.pop %v1059
    %v1067 = vmul.f32 %v1065, %v929
    %1069 = vrot.lane.b32.xlu0 %v1066, 80
    %v1070 = vpop.permute.xlu0 %1069
    %v1072 = vmul.f32 %v1065, %v1070
    %1074 = vrot.lane.b32.xlu0 %v1072, 16
    %v1075 = vpop.permute.xlu0 %1074
    %v1077 = vadd.f32 %v1067, %v1075
    %v1078 = vtanh.pop %v1077
    %1080 = vrot.lane.b32.xlu0 %v1078, 16
    %v1081 = vpop.permute.xlu0 %1080
    %v1083 = vmul.f32 %v1065, %v1081
    %v1084 = vpack.c.bf16 %v1011, %v1011
    %1086 = vrot.lane.b32.xlu0 %v1084, 32
    %v1087 = vpop.permute.xlu0 %1086
    %v1089 = vsel %vm426, %v1087, 0
    %1091 = vmatprep.subr.bf16.mxu0 0
    %1092 = vmatpush1.bf16.msra.mxu0 0
    %1093 = vmatprep.subr.bf16.mxu0 0
    %1094 = vmatpush1.bf16.msra.mxu0 0
    %1095 = vmatprep.subr.bf16.mxu0 0
    %1096 = vmatpush1.bf16.msra.mxu0 0
    %1097 = vmatprep.subr.bf16.mxu0 0
    %1098 = vmatpush1.bf16.msra.mxu0 0
    %1099 = vmatprep.subr.bf16.mxu0 0
    %1100 = vmatpush1.bf16.msra.mxu0 0
    %1101 = vmatprep.subr.bf16.mxu0 0
    %1102 = vmatpush1.bf16.msra.mxu0 0
    %1103 = vmatprep.subr.bf16.mxu0 0
    %1104 = vmatpush1.bf16.msra.mxu0 0
    %1105 = vmatprep.subr.bf16.mxu0 0
    %1106 = vmatpush1.bf16.msra.mxu0 %v497
    %1107 = vmatprep.subr.bf16.mxu0 0
    %1108 = vmatpush2.bf16.msra.mxu0 0
    %1109 = vmatprep.subr.bf16.mxu0 0
    %1110 = vmatpush2.bf16.msra.mxu0 0
    %1111 = vmatprep.subr.bf16.mxu0 0
    %1112 = vmatpush2.bf16.msra.mxu0 0
    %1113 = vmatprep.subr.bf16.mxu0 0
    %1114 = vmatpush2.bf16.msra.mxu0 0
    %1115 = vmatprep.subr.bf16.mxu0 0
    %1116 = vmatpush2.bf16.msra.mxu0 0
    %1117 = vmatprep.subr.bf16.mxu0 0
    %1118 = vmatpush2.bf16.msra.mxu0 0
    %1119 = vmatprep.subr.bf16.mxu0 0
    %1120 = vmatpush2.bf16.msra.mxu0 0
    %1121 = vmatprep.subr.bf16.mxu0 0
    %1122 = vmatpush2.bf16.msra.mxu0 0
    %1123 = vmatprep.mubr.bf16.mxu0 0
    %1124 = vmatmul.mubr.bf16.gmra.mxu0 %v1089
    %v1125 = vpop.f32.mrf.mxu0
    %v1126 = vadd.f32 0.0, %v1125
    %v1127 = vpop.f32.mrf.mxu0
    %v1128 = vpop.f32.mrf.mxu0
    %v1129 = vpop.f32.mrf.mxu0
    %1130 = vdwg.mxu0
    %1132 = vrot.lane.b32.xlu0 %v1126, 64
    %v1133 = vpop.permute.xlu0 %1132
    %v1135 = vadd.f32 %v404, %v1133
    %v1136 = vxor.u32 %v1135, 2147483648
    %v1137 = vmul.f32 %v1136, 1.442695
    %v1138 = vpow.pop %v1137
    %v1139 = vadd.f32 %v1138, 1.0
    %v1140 = vrcp.pop %v1139
    %v1141 = vmul.f32 1.0, %v1140
    %v1142 = vtanh.pop %v1135
    %v1143 = vmul.f32 %v1141, %v1005
    %1145 = vrot.lane.b32.xlu0 %v1142, 80
    %v1146 = vpop.permute.xlu0 %1145
    %v1148 = vmul.f32 %v1141, %v1146
    %1150 = vrot.lane.b32.xlu0 %v1148, 16
    %v1151 = vpop.permute.xlu0 %1150
    %v1153 = vadd.f32 %v1143, %v1151
    %v1154 = vtanh.pop %v1153
    %1156 = vrot.lane.b32.xlu0 %v1154, 16
    %v1157 = vpop.permute.xlu0 %1156
    %v1159 = vmul.f32 %v1141, %v1157
    %v1160 = vpack.c.bf16 %v1083, %v1083
    %1162 = vrot.lane.b32.xlu0 %v1160, 96
    %v1163 = vpop.permute.xlu0 %1162
    %v1165 = vsel %vm426, %v1163, 0
    %1167 = vmatprep.subr.bf16.mxu0 0
    %1168 = vmatpush1.bf16.msra.mxu0 0
    %1169 = vmatprep.subr.bf16.mxu0 0
    %1170 = vmatpush1.bf16.msra.mxu0 0
    %1171 = vmatprep.subr.bf16.mxu0 0
    %1172 = vmatpush1.bf16.msra.mxu0 0
    %1173 = vmatprep.subr.bf16.mxu0 0
    %1174 = vmatpush1.bf16.msra.mxu0 0
    %1175 = vmatprep.subr.bf16.mxu0 0
    %1176 = vmatpush1.bf16.msra.mxu0 0
    %1177 = vmatprep.subr.bf16.mxu0 0
    %1178 = vmatpush1.bf16.msra.mxu0 0
    %1179 = vmatprep.subr.bf16.mxu0 0
    %1180 = vmatpush1.bf16.msra.mxu0 0
    %1181 = vmatprep.subr.bf16.mxu0 0
    %1182 = vmatpush1.bf16.msra.mxu0 %v425
    %1183 = vmatprep.subr.bf16.mxu0 0
    %1184 = vmatpush2.bf16.msra.mxu0 0
    %1185 = vmatprep.subr.bf16.mxu0 0
    %1186 = vmatpush2.bf16.msra.mxu0 0
    %1187 = vmatprep.subr.bf16.mxu0 0
    %1188 = vmatpush2.bf16.msra.mxu0 0
    %1189 = vmatprep.subr.bf16.mxu0 0
    %1190 = vmatpush2.bf16.msra.mxu0 0
    %1191 = vmatprep.subr.bf16.mxu0 0
    %1192 = vmatpush2.bf16.msra.mxu0 0
    %1193 = vmatprep.subr.bf16.mxu0 0
    %1194 = vmatpush2.bf16.msra.mxu0 0
    %1195 = vmatprep.subr.bf16.mxu0 0
    %1196 = vmatpush2.bf16.msra.mxu0 0
    %1197 = vmatprep.subr.bf16.mxu0 0
    %1198 = vmatpush2.bf16.msra.mxu0 0
    %1199 = vmatprep.mubr.bf16.mxu0 0
    %1200 = vmatmul.mubr.bf16.gmra.mxu0 %v1165
    %v1201 = vpop.f32.mrf.mxu0
    %v1202 = vadd.f32 0.0, %v1201
    %v1203 = vpop.f32.mrf.mxu0
    %v1204 = vpop.f32.mrf.mxu0
    %v1205 = vpop.f32.mrf.mxu0
    %1206 = vdwg.mxu0
    %v1207 = vadd.f32 %v412, %v1202
    %v1208 = vxor.u32 %v1207, 2147483648
    %v1209 = vmul.f32 %v1208, 1.442695
    %v1210 = vpow.pop %v1209
    %v1211 = vadd.f32 %v1210, 1.0
    %v1212 = vrcp.pop %v1211
    %v1213 = vmul.f32 1.0, %v1212
    %v1214 = vtanh.pop %v1207
    %v1215 = vmul.f32 %v1213, %v1077
    %1217 = vrot.lane.b32.xlu0 %v1214, 80
    %v1218 = vpop.permute.xlu0 %1217
    %v1220 = vmul.f32 %v1213, %v1218
    %1222 = vrot.lane.b32.xlu0 %v1220, 16
    %v1223 = vpop.permute.xlu0 %1222
    %v1225 = vadd.f32 %v1215, %v1223
    %v1226 = vtanh.pop %v1225
    %1228 = vrot.lane.b32.xlu0 %v1226, 16
    %v1229 = vpop.permute.xlu0 %1228
    %v1231 = vmul.f32 %v1213, %v1229
    %v1232 = vpack.c.bf16 %v1159, %v1159
    %1234 = vrot.lane.b32.xlu0 %v1232, 32
    %v1235 = vpop.permute.xlu0 %1234
    %v1237 = vsel %vm426, %v1235, 0
    %1239 = vmatprep.subr.bf16.mxu0 0
    %1240 = vmatpush1.bf16.msra.mxu0 0
    %1241 = vmatprep.subr.bf16.mxu0 0
    %1242 = vmatpush1.bf16.msra.mxu0 0
    %1243 = vmatprep.subr.bf16.mxu0 0
    %1244 = vmatpush1.bf16.msra.mxu0 0
    %1245 = vmatprep.subr.bf16.mxu0 0
    %1246 = vmatpush1.bf16.msra.mxu0 0
    %1247 = vmatprep.subr.bf16.mxu0 0
    %1248 = vmatpush1.bf16.msra.mxu0 0
    %1249 = vmatprep.subr.bf16.mxu0 0
    %1250 = vmatpush1.bf16.msra.mxu0 0
    %1251 = vmatprep.subr.bf16.mxu0 0
    %1252 = vmatpush1.bf16.msra.mxu0 0
    %1253 = vmatprep.subr.bf16.mxu0 0
    %1254 = vmatpush1.bf16.msra.mxu0 %v497
    %1255 = vmatprep.subr.bf16.mxu0 0
    %1256 = vmatpush2.bf16.msra.mxu0 0
    %1257 = vmatprep.subr.bf16.mxu0 0
    %1258 = vmatpush2.bf16.msra.mxu0 0
    %1259 = vmatprep.subr.bf16.mxu0 0
    %1260 = vmatpush2.bf16.msra.mxu0 0
    %1261 = vmatprep.subr.bf16.mxu0 0
    %1262 = vmatpush2.bf16.msra.mxu0 0
    %1263 = vmatprep.subr.bf16.mxu0 0
    %1264 = vmatpush2.bf16.msra.mxu0 0
    %1265 = vmatprep.subr.bf16.mxu0 0
    %1266 = vmatpush2.bf16.msra.mxu0 0
    %1267 = vmatprep.subr.bf16.mxu0 0
    %1268 = vmatpush2.bf16.msra.mxu0 0
    %1269 = vmatprep.subr.bf16.mxu0 0
    %1270 = vmatpush2.bf16.msra.mxu0 0
    %1271 = vmatprep.mubr.bf16.mxu0 0
    %1272 = vmatmul.mubr.bf16.gmra.mxu0 %v1237
    %v1273 = vpop.f32.mrf.mxu0
    %v1274 = vadd.f32 0.0, %v1273
    %v1275 = vpop.f32.mrf.mxu0
    %v1276 = vpop.f32.mrf.mxu0
    %v1277 = vpop.f32.mrf.mxu0
    %1278 = vdwg.mxu0
    %1280 = vrot.lane.b32.xlu0 %v1274, 64
    %v1281 = vpop.permute.xlu0 %1280
    %v1283 = vadd.f32 %v401, %v1281
    %v1284 = vxor.u32 %v1283, 2147483648
    %v1285 = vmul.f32 %v1284, 1.442695
    %v1286 = vpow.pop %v1285
    %v1287 = vadd.f32 %v1286, 1.0
    %v1288 = vrcp.pop %v1287
    %v1289 = vmul.f32 1.0, %v1288
    %v1290 = vtanh.pop %v1283
    %v1291 = vmul.f32 %v1289, %v1153
    %1293 = vrot.lane.b32.xlu0 %v1290, 80
    %v1294 = vpop.permute.xlu0 %1293
    %v1296 = vmul.f32 %v1289, %v1294
    %1298 = vrot.lane.b32.xlu0 %v1296, 16
    %v1299 = vpop.permute.xlu0 %1298
    %v1301 = vadd.f32 %v1291, %v1299
    %v1302 = vtanh.pop %v1301
    %1304 = vrot.lane.b32.xlu0 %v1302, 16
    %v1305 = vpop.permute.xlu0 %1304
    %v1307 = vmul.f32 %v1289, %v1305
    %v1308 = vpack.c.bf16 %v1231, %v1231
    %1310 = vrot.lane.b32.xlu0 %v1308, 96
    %v1311 = vpop.permute.xlu0 %1310
    %v1313 = vsel %vm426, %v1311, 0
    %1315 = vmatprep.subr.bf16.mxu0 0
    %1316 = vmatpush1.bf16.msra.mxu0 0
    %1317 = vmatprep.subr.bf16.mxu0 0
    %1318 = vmatpush1.bf16.msra.mxu0 0
    %1319 = vmatprep.subr.bf16.mxu0 0
    %1320 = vmatpush1.bf16.msra.mxu0 0
    %1321 = vmatprep.subr.bf16.mxu0 0
    %1322 = vmatpush1.bf16.msra.mxu0 0
    %1323 = vmatprep.subr.bf16.mxu0 0
    %1324 = vmatpush1.bf16.msra.mxu0 0
    %1325 = vmatprep.subr.bf16.mxu0 0
    %1326 = vmatpush1.bf16.msra.mxu0 0
    %1327 = vmatprep.subr.bf16.mxu0 0
    %1328 = vmatpush1.bf16.msra.mxu0 0
    %1329 = vmatprep.subr.bf16.mxu0 0
    %1330 = vmatpush1.bf16.msra.mxu0 %v425
    %1331 = vmatprep.subr.bf16.mxu0 0
    %1332 = vmatpush2.bf16.msra.mxu0 0
    %1333 = vmatprep.subr.bf16.mxu0 0
    %1334 = vmatpush2.bf16.msra.mxu0 0
    %1335 = vmatprep.subr.bf16.mxu0 0
    %1336 = vmatpush2.bf16.msra.mxu0 0
    %1337 = vmatprep.subr.bf16.mxu0 0
    %1338 = vmatpush2.bf16.msra.mxu0 0
    %1339 = vmatprep.subr.bf16.mxu0 0
    %1340 = vmatpush2.bf16.msra.mxu0 0
    %1341 = vmatprep.subr.bf16.mxu0 0
    %1342 = vmatpush2.bf16.msra.mxu0 0
    %1343 = vmatprep.subr.bf16.mxu0 0
    %1344 = vmatpush2.bf16.msra.mxu0 0
    %1345 = vmatprep.subr.bf16.mxu0 0
    %1346 = vmatpush2.bf16.msra.mxu0 0
    %1347 = vmatprep.mubr.bf16.mxu0 0
    %1348 = vmatmul.mubr.bf16.gmra.mxu0 %v1313
    %v1349 = vpop.f32.mrf.mxu0
    %v1350 = vadd.f32 0.0, %v1349
    %v1351 = vpop.f32.mrf.mxu0
    %v1352 = vpop.f32.mrf.mxu0
    %v1353 = vpop.f32.mrf.mxu0
    %1354 = vdwg.mxu0
    %v1355 = vadd.f32 %v417, %v1350
    %v1356 = vxor.u32 %v1355, 2147483648
    %v1357 = vmul.f32 %v1356, 1.442695
    %v1358 = vpow.pop %v1357
    %v1359 = vadd.f32 %v1358, 1.0
    %v1360 = vrcp.pop %v1359
    %v1361 = vmul.f32 1.0, %v1360
    %v1362 = vtanh.pop %v1355
    %v1363 = vmul.f32 %v1361, %v1225
    %1365 = vrot.lane.b32.xlu0 %v1362, 80
    %v1366 = vpop.permute.xlu0 %1365
    %v1368 = vmul.f32 %v1361, %v1366
    %1370 = vrot.lane.b32.xlu0 %v1368, 16
    %v1371 = vpop.permute.xlu0 %1370
    %v1373 = vadd.f32 %v1363, %v1371
    %v1374 = vtanh.pop %v1373
    %1376 = vrot.lane.b32.xlu0 %v1374, 16
    %v1377 = vpop.permute.xlu0 %1376
    %v1379 = vmul.f32 %v1361, %v1377
    %v1380 = vpack.c.bf16 %v1307, %v1307
    %1382 = vrot.lane.b32.xlu0 %v1380, 32
    %v1383 = vpop.permute.xlu0 %1382
    %v1385 = vsel %vm426, %v1383, 0
    %1387 = vmatprep.subr.bf16.mxu0 0
    %1388 = vmatpush1.bf16.msra.mxu0 0
    %1389 = vmatprep.subr.bf16.mxu0 0
    %1390 = vmatpush1.bf16.msra.mxu0 0
    %1391 = vmatprep.subr.bf16.mxu0 0
    %1392 = vmatpush1.bf16.msra.mxu0 0
    %1393 = vmatprep.subr.bf16.mxu0 0
    %1394 = vmatpush1.bf16.msra.mxu0 0
    %1395 = vmatprep.subr.bf16.mxu0 0
    %1396 = vmatpush1.bf16.msra.mxu0 0
    %1397 = vmatprep.subr.bf16.mxu0 0
    %1398 = vmatpush1.bf16.msra.mxu0 0
    %1399 = vmatprep.subr.bf16.mxu0 0
    %1400 = vmatpush1.bf16.msra.mxu0 0
    %1401 = vmatprep.subr.bf16.mxu0 0
    %1402 = vmatpush1.bf16.msra.mxu0 %v497
    %1403 = vmatprep.subr.bf16.mxu0 0
    %1404 = vmatpush2.bf16.msra.mxu0 0
    %1405 = vmatprep.subr.bf16.mxu0 0
    %1406 = vmatpush2.bf16.msra.mxu0 0
    %1407 = vmatprep.subr.bf16.mxu0 0
    %1408 = vmatpush2.bf16.msra.mxu0 0
    %1409 = vmatprep.subr.bf16.mxu0 0
    %1410 = vmatpush2.bf16.msra.mxu0 0
    %1411 = vmatprep.subr.bf16.mxu0 0
    %1412 = vmatpush2.bf16.msra.mxu0 0
    %1413 = vmatprep.subr.bf16.mxu0 0
    %1414 = vmatpush2.bf16.msra.mxu0 0
    %1415 = vmatprep.subr.bf16.mxu0 0
    %1416 = vmatpush2.bf16.msra.mxu0 0
    %1417 = vmatprep.subr.bf16.mxu0 0
    %1418 = vmatpush2.bf16.msra.mxu0 0
    %1419 = vmatprep.mubr.bf16.mxu0 0
    %1420 = vmatmul.mubr.bf16.gmra.mxu0 %v1385
    %v1421 = vpop.f32.mrf.mxu0
    %v1422 = vadd.f32 0.0, %v1421
    %v1423 = vpop.f32.mrf.mxu0
    %v1424 = vpop.f32.mrf.mxu0
    %v1425 = vpop.f32.mrf.mxu0
    %1426 = vdwg.mxu0
    %1428 = vrot.lane.b32.xlu0 %v1422, 64
    %v1429 = vpop.permute.xlu0 %1428
    %v1431 = vadd.f32 %v396, %v1429
    %v1432 = vxor.u32 %v1431, 2147483648
    %v1433 = vmul.f32 %v1432, 1.442695
    %v1434 = vpow.pop %v1433
    %v1435 = vadd.f32 %v1434, 1.0
    %v1436 = vrcp.pop %v1435
    %v1437 = vmul.f32 1.0, %v1436
    %v1438 = vtanh.pop %v1431
    %v1439 = vmul.f32 %v1437, %v1301
    %1441 = vrot.lane.b32.xlu0 %v1438, 80
    %v1442 = vpop.permute.xlu0 %1441
    %v1444 = vmul.f32 %v1437, %v1442
    %1446 = vrot.lane.b32.xlu0 %v1444, 16
    %v1447 = vpop.permute.xlu0 %1446
    %v1449 = vadd.f32 %v1439, %v1447
    %v1450 = vtanh.pop %v1449
    %1452 = vrot.lane.b32.xlu0 %v1450, 16
    %v1453 = vpop.permute.xlu0 %1452
    %v1455 = vmul.f32 %v1437, %v1453
    %v1456 = vpack.c.bf16 %v1379, %v1379
    %1458 = vrot.lane.b32.xlu0 %v1456, 96
    %v1459 = vpop.permute.xlu0 %1458
    %v1461 = vsel %vm426, %v1459, 0
    %1463 = vmatprep.subr.bf16.mxu0 0
    %1464 = vmatpush1.bf16.msra.mxu0 0
    %1465 = vmatprep.subr.bf16.mxu0 0
    %1466 = vmatpush1.bf16.msra.mxu0 0
    %1467 = vmatprep.subr.bf16.mxu0 0
    %1468 = vmatpush1.bf16.msra.mxu0 0
    %1469 = vmatprep.subr.bf16.mxu0 0
    %1470 = vmatpush1.bf16.msra.mxu0 0
    %1471 = vmatprep.subr.bf16.mxu0 0
    %1472 = vmatpush1.bf16.msra.mxu0 0
    %1473 = vmatprep.subr.bf16.mxu0 0
    %1474 = vmatpush1.bf16.msra.mxu0 0
    %1475 = vmatprep.subr.bf16.mxu0 0
    %1476 = vmatpush1.bf16.msra.mxu0 0
    %1477 = vmatprep.subr.bf16.mxu0 0
    %1478 = vmatpush1.bf16.msra.mxu0 %v425
    %1479 = vmatprep.subr.bf16.mxu0 0
    %1480 = vmatpush2.bf16.msra.mxu0 0
    %1481 = vmatprep.subr.bf16.mxu0 0
    %1482 = vmatpush2.bf16.msra.mxu0 0
    %1483 = vmatprep.subr.bf16.mxu0 0
    %1484 = vmatpush2.bf16.msra.mxu0 0
    %1485 = vmatprep.subr.bf16.mxu0 0
    %1486 = vmatpush2.bf16.msra.mxu0 0
    %1487 = vmatprep.subr.bf16.mxu0 0
    %1488 = vmatpush2.bf16.msra.mxu0 0
    %1489 = vmatprep.subr.bf16.mxu0 0
    %1490 = vmatpush2.bf16.msra.mxu0 0
    %1491 = vmatprep.subr.bf16.mxu0 0
    %1492 = vmatpush2.bf16.msra.mxu0 0
    %1493 = vmatprep.subr.bf16.mxu0 0
    %1494 = vmatpush2.bf16.msra.mxu0 0
    %1495 = vmatprep.mubr.bf16.mxu0 0
    %1496 = vmatmul.mubr.bf16.gmra.mxu0 %v1461
    %v1497 = vpop.f32.mrf.mxu0
    %v1498 = vadd.f32 0.0, %v1497
    %v1499 = vpop.f32.mrf.mxu0
    %v1500 = vpop.f32.mrf.mxu0
    %v1501 = vpop.f32.mrf.mxu0
    %1502 = vdwg.mxu0
    %v1503 = vadd.f32 %v420, %v1498
    %v1504 = vxor.u32 %v1503, 2147483648
    %v1505 = vmul.f32 %v1504, 1.442695
    %v1506 = vpow.pop %v1505
    %v1507 = vadd.f32 %v1506, 1.0
    %v1508 = vrcp.pop %v1507
    %v1509 = vmul.f32 1.0, %v1508
    %v1510 = vtanh.pop %v1503
    %v1511 = vmul.f32 %v1509, %v1373
    %1513 = vrot.lane.b32.xlu0 %v1510, 80
    %v1514 = vpop.permute.xlu0 %1513
    %v1516 = vmul.f32 %v1509, %v1514
    %1518 = vrot.lane.b32.xlu0 %v1516, 16
    %v1519 = vpop.permute.xlu0 %1518
    %v1521 = vadd.f32 %v1511, %v1519
    %v1522 = vtanh.pop %v1521
    %1524 = vrot.lane.b32.xlu0 %v1522, 16
    %v1525 = vpop.permute.xlu0 %1524
    %v1527 = vmul.f32 %v1509, %v1525
    %v1528 = vpack.c.bf16 %v1455, %v1455
    %1530 = vrot.lane.b32.xlu0 %v1528, 32
    %v1531 = vpop.permute.xlu0 %1530
    %v1533 = vsel %vm426, %v1531, 0
    %1535 = vmatprep.subr.bf16.mxu0 0
    %1536 = vmatpush1.bf16.msra.mxu0 0
    %1537 = vmatprep.subr.bf16.mxu0 0
    %1538 = vmatpush1.bf16.msra.mxu0 0
    %1539 = vmatprep.subr.bf16.mxu0 0
    %1540 = vmatpush1.bf16.msra.mxu0 0
    %1541 = vmatprep.subr.bf16.mxu0 0
    %1542 = vmatpush1.bf16.msra.mxu0 0
    %1543 = vmatprep.subr.bf16.mxu0 0
    %1544 = vmatpush1.bf16.msra.mxu0 0
    %1545 = vmatprep.subr.bf16.mxu0 0
    %1546 = vmatpush1.bf16.msra.mxu0 0
    %1547 = vmatprep.subr.bf16.mxu0 0
    %1548 = vmatpush1.bf16.msra.mxu0 0
    %1549 = vmatprep.subr.bf16.mxu0 0
    %1550 = vmatpush1.bf16.msra.mxu0 %v497
    %1551 = vmatprep.subr.bf16.mxu0 0
    %1552 = vmatpush2.bf16.msra.mxu0 0
    %1553 = vmatprep.subr.bf16.mxu0 0
    %1554 = vmatpush2.bf16.msra.mxu0 0
    %1555 = vmatprep.subr.bf16.mxu0 0
    %1556 = vmatpush2.bf16.msra.mxu0 0
    %1557 = vmatprep.subr.bf16.mxu0 0
    %1558 = vmatpush2.bf16.msra.mxu0 0
    %1559 = vmatprep.subr.bf16.mxu0 0
    %1560 = vmatpush2.bf16.msra.mxu0 0
    %1561 = vmatprep.subr.bf16.mxu0 0
    %1562 = vmatpush2.bf16.msra.mxu0 0
    %1563 = vmatprep.subr.bf16.mxu0 0
    %1564 = vmatpush2.bf16.msra.mxu0 0
    %1565 = vmatprep.subr.bf16.mxu0 0
    %1566 = vmatpush2.bf16.msra.mxu0 0
    %1567 = vmatprep.mubr.bf16.mxu0 0
    %1568 = vmatmul.mubr.bf16.gmra.mxu0 %v1533
    %v1569 = vpop.f32.mrf.mxu0
    %v1570 = vadd.f32 0.0, %v1569
    %v1571 = vpop.f32.mrf.mxu0
    %v1572 = vpop.f32.mrf.mxu0
    %v1573 = vpop.f32.mrf.mxu0
    %1574 = vdwg.mxu0
    %1576 = vrot.lane.b32.xlu0 %v1570, 64
    %v1577 = vpop.permute.xlu0 %1576
    %v1579 = vadd.f32 %v393, %v1577
    %v1580 = vxor.u32 %v1579, 2147483648
    %v1581 = vmul.f32 %v1580, 1.442695
    %v1582 = vpow.pop %v1581
    %v1583 = vadd.f32 %v1582, 1.0
    %v1584 = vrcp.pop %v1583
    %v1585 = vmul.f32 1.0, %v1584
    %v1586 = vtanh.pop %v1579
    %v1587 = vmul.f32 %v1585, %v1449
    %1589 = vrot.lane.b32.xlu0 %v1586, 80
    %v1590 = vpop.permute.xlu0 %1589
    %v1592 = vmul.f32 %v1585, %v1590
    %1594 = vrot.lane.b32.xlu0 %v1592, 16
    %v1595 = vpop.permute.xlu0 %1594
    %v1597 = vadd.f32 %v1587, %v1595
    %v1598 = vtanh.pop %v1597
    %1600 = vrot.lane.b32.xlu0 %v1598, 16
    %v1601 = vpop.permute.xlu0 %1600
    %v1603 = vmul.f32 %v1585, %v1601
    %v1604 = vld [vmem:[#allocation2 + $0x58] sm:$0xff]
    %v1605 = vld [vmem:[#allocation2 + $0x60] sm:$0xff]
    %v1606 = vld [vmem:[#allocation2 + $0x68] sm:$0xff]
    %v1607 = vld [vmem:[#allocation2 + $0x70] sm:$0xff]
    %v1608 = vpack.c.bf16 %v639, %v494
    %v1609 = vpack.c.bf16 %v935, %v787
    %v1610 = vpack.c.bf16 %v1231, %v1083
    %v1611 = vpack.c.bf16 %v1527, %v1379
    %v1612 = vpack.c.bf16 %v1605, %v1604
    %v1613 = vpack.c.bf16 %v1455, %v1603
    %v1614 = vpack.c.bf16 %v1159, %v1307
    %v1615 = vpack.c.bf16 %v863, %v1011
    %v1616 = vpack.c.bf16 %v567, %v715
    %v1617 = vpack.c.bf16 %v1607, %v1606
    %1622 = vrot.lane.b32.xlu0 %v1613, 32
    %v1623 = vpop.permute.xlu0 %1622
    %1624 = vrot.lane.b32.xlu0 %v1614, 32
    %v1625 = vpop.permute.xlu0 %1624
    %1626 = vrot.lane.b32.xlu0 %v1615, 32
    %v1627 = vpop.permute.xlu0 %1626
    %1628 = vrot.lane.b32.xlu0 %v1616, 32
    %v1629 = vpop.permute.xlu0 %1628
    %v1631 = vsel %vm426, %v1623, 0
    %v1634 = vsel %vm426, %v1625, 0
    %v1637 = vsel %vm426, %v1627, 0
    %v1640 = vsel %vm426, %v1629, 0
    %1642 = vmatprep.subr.bf16.mxu0 0
    %1643 = vmatpush1.bf16.msra.mxu0 0
    %1644 = vmatprep.subr.bf16.mxu0 0
    %1645 = vmatpush1.bf16.msra.mxu0 0
    %1646 = vmatprep.subr.bf16.mxu0 0
    %1647 = vmatpush1.bf16.msra.mxu0 0
    %1648 = vmatprep.subr.bf16.mxu0 0
    %1649 = vmatpush1.bf16.msra.mxu0 0
    %1650 = vmatprep.subr.bf16.mxu0 0
    %1651 = vmatpush1.bf16.msra.mxu0 0
    %1652 = vmatprep.subr.bf16.mxu0 0
    %1653 = vmatpush1.bf16.msra.mxu0 0
    %1654 = vmatprep.subr.bf16.mxu0 0
    %1655 = vmatpush1.bf16.msra.mxu0 0
    %1656 = vmatprep.subr.bf16.mxu0 0
    %1657 = vmatpush1.bf16.msra.mxu0 %v1617
    %1658 = vmatprep.subr.bf16.mxu0 0
    %1659 = vmatpush2.bf16.msra.mxu0 0
    %1660 = vmatprep.subr.bf16.mxu0 0
    %1661 = vmatpush2.bf16.msra.mxu0 0
    %1662 = vmatprep.subr.bf16.mxu0 0
    %1663 = vmatpush2.bf16.msra.mxu0 0
    %1664 = vmatprep.subr.bf16.mxu0 0
    %1665 = vmatpush2.bf16.msra.mxu0 0
    %1666 = vmatprep.subr.bf16.mxu0 0
    %1667 = vmatpush2.bf16.msra.mxu0 0
    %1668 = vmatprep.subr.bf16.mxu0 0
    %1669 = vmatpush2.bf16.msra.mxu0 0
    %1670 = vmatprep.subr.bf16.mxu0 0
    %1671 = vmatpush2.bf16.msra.mxu0 0
    %1672 = vmatprep.subr.bf16.mxu0 0
    %1673 = vmatpush2.bf16.msra.mxu0 0
    %1674 = vmatprep.mubr.bf16.mxu0 0
    %1675 = vmatmul.mubr.bf16.gmra.mxu0 %v1631
    %v1676 = vpop.f32.mrf.mxu0
    %v1677 = vadd.f32 0.0, %v1676
    %v1678 = vpop.f32.mrf.mxu0
    %v1679 = vpop.f32.mrf.mxu0
    %v1680 = vadd.f32 0.0, %v1679
    %v1681 = vpop.f32.mrf.mxu0
    %1682 = vmatprep.mubr.bf16.mxu0 0
    %1683 = vmatmul.mubr.bf16.gmra.mxu0 %v1634
    %v1684 = vpop.f32.mrf.mxu0
    %v1685 = vadd.f32 0.0, %v1684
    %v1686 = vpop.f32.mrf.mxu0
    %v1687 = vpop.f32.mrf.mxu0
    %v1688 = vadd.f32 0.0, %v1687
    %v1689 = vpop.f32.mrf.mxu0
    %1690 = vmatprep.mubr.bf16.mxu0 0
    %1691 = vmatmul.mubr.bf16.gmra.mxu0 %v1637
    %v1692 = vpop.f32.mrf.mxu0
    %v1693 = vadd.f32 0.0, %v1692
    %v1694 = vpop.f32.mrf.mxu0
    %v1695 = vpop.f32.mrf.mxu0
    %v1696 = vadd.f32 0.0, %v1695
    %v1697 = vpop.f32.mrf.mxu0
    %1698 = vmatprep.mubr.bf16.mxu0 0
    %1699 = vmatmul.mubr.bf16.gmra.mxu0 %v1640
    %v1700 = vpop.f32.mrf.mxu0
    %v1701 = vadd.f32 0.0, %v1700
    %v1702 = vpop.f32.mrf.mxu0
    %v1703 = vpop.f32.mrf.mxu0
    %v1704 = vadd.f32 0.0, %v1703
    %v1705 = vpop.f32.mrf.mxu0
    %1706 = vdwg.mxu0
    %1711 = vrot.lane.b32.xlu0 %v1608, 96
    %v1712 = vpop.permute.xlu0 %1711
    %1713 = vrot.lane.b32.xlu0 %v1609, 96
    %v1714 = vpop.permute.xlu0 %1713
    %1715 = vrot.lane.b32.xlu0 %v1610, 96
    %v1716 = vpop.permute.xlu0 %1715
    %1717 = vrot.lane.b32.xlu0 %v1611, 96
    %v1718 = vpop.permute.xlu0 %1717
    %v1720 = vsel %vm426, %v1712, 0
    %v1723 = vsel %vm426, %v1714, 0
    %v1726 = vsel %vm426, %v1716, 0
    %v1729 = vsel %vm426, %v1718, 0
    %1731 = vmatprep.subr.bf16.mxu0 0
    %1732 = vmatpush1.bf16.msra.mxu0 0
    %1733 = vmatprep.subr.bf16.mxu0 0
    %1734 = vmatpush1.bf16.msra.mxu0 0
    %1735 = vmatprep.subr.bf16.mxu0 0
    %1736 = vmatpush1.bf16.msra.mxu0 0
    %1737 = vmatprep.subr.bf16.mxu0 0
    %1738 = vmatpush1.bf16.msra.mxu0 0
    %1739 = vmatprep.subr.bf16.mxu0 0
    %1740 = vmatpush1.bf16.msra.mxu0 0
    %1741 = vmatprep.subr.bf16.mxu0 0
    %1742 = vmatpush1.bf16.msra.mxu0 0
    %1743 = vmatprep.subr.bf16.mxu0 0
    %1744 = vmatpush1.bf16.msra.mxu0 0
    %1745 = vmatprep.subr.bf16.mxu0 0
    %1746 = vmatpush1.bf16.msra.mxu0 %v1612
    %1747 = vmatprep.subr.bf16.mxu0 0
    %1748 = vmatpush2.bf16.msra.mxu0 0
    %1749 = vmatprep.subr.bf16.mxu0 0
    %1750 = vmatpush2.bf16.msra.mxu0 0
    %1751 = vmatprep.subr.bf16.mxu0 0
    %1752 = vmatpush2.bf16.msra.mxu0 0
    %1753 = vmatprep.subr.bf16.mxu0 0
    %1754 = vmatpush2.bf16.msra.mxu0 0
    %1755 = vmatprep.subr.bf16.mxu0 0
    %1756 = vmatpush2.bf16.msra.mxu0 0
    %1757 = vmatprep.subr.bf16.mxu0 0
    %1758 = vmatpush2.bf16.msra.mxu0 0
    %1759 = vmatprep.subr.bf16.mxu0 0
    %1760 = vmatpush2.bf16.msra.mxu0 0
    %1761 = vmatprep.subr.bf16.mxu0 0
    %1762 = vmatpush2.bf16.msra.mxu0 0
    %1763 = vmatprep.mubr.bf16.mxu0 0
    %1764 = vmatmul.mubr.bf16.gmra.mxu0 %v1720
    %v1765 = vpop.f32.mrf.mxu0
    %v1766 = vadd.f32 %v1677, %v1765
    %v1767 = vpop.f32.mrf.mxu0
    %v1768 = vpop.f32.mrf.mxu0
    %v1769 = vadd.f32 %v1680, %v1768
    %v1770 = vpop.f32.mrf.mxu0
    %1771 = vmatprep.mubr.bf16.mxu0 0
    %1772 = vmatmul.mubr.bf16.gmra.mxu0 %v1723
    %v1773 = vpop.f32.mrf.mxu0
    %v1774 = vadd.f32 %v1685, %v1773
    %v1775 = vpop.f32.mrf.mxu0
    %v1776 = vpop.f32.mrf.mxu0
    %v1777 = vadd.f32 %v1688, %v1776
    %v1778 = vpop.f32.mrf.mxu0
    %1779 = vmatprep.mubr.bf16.mxu0 0
    %1780 = vmatmul.mubr.bf16.gmra.mxu0 %v1726
    %v1781 = vpop.f32.mrf.mxu0
    %v1782 = vadd.f32 %v1693, %v1781
    %v1783 = vpop.f32.mrf.mxu0
    %v1784 = vpop.f32.mrf.mxu0
    %v1785 = vadd.f32 %v1696, %v1784
    %v1786 = vpop.f32.mrf.mxu0
    %1787 = vmatprep.mubr.bf16.mxu0 0
    %1788 = vmatmul.mubr.bf16.gmra.mxu0 %v1729
    %v1789 = vpop.f32.mrf.mxu0
    %v1790 = vadd.f32 %v1701, %v1789
    %v1791 = vpop.f32.mrf.mxu0
    %v1792 = vpop.f32.mrf.mxu0
    %v1793 = vadd.f32 %v1704, %v1792
    %v1794 = vpop.f32.mrf.mxu0
    %1795 = vdwg.mxu0
    %v1796 = vld [vmem:[#allocation2 + $0x78] sm:$0x1]
    %v1797 = vlaneseq
    %v1798 = vshrl.u32 %v1797, 7
    %v1799 = vsub.s32 0, %v1798
    %v1800 = vrot.slane %v1796, %v1799
    %v1801 = vadd.f32 %v1766, %v1800
    %v1802 = vadd.f32 %v1769, %v1800
    %v1803 = vadd.f32 %v1774, %v1800
    %v1804 = vadd.f32 %v1777, %v1800
    %v1805 = vadd.f32 %v1782, %v1800
    %v1806 = vadd.f32 %v1785, %v1800
    %v1807 = vadd.f32 %v1790, %v1800
    %v1808 = vadd.f32 %v1793, %v1800
    %v1809 = vld [vmem:[#allocation2 + $0x80] sm:$0xff]
    %v1810 = vpack.c.bf16 %v1809, %v1809
    %vm1811 = vcmask 64512
    %v1812 = vsel %vm1811, 0, 0
    %vm1814 = vcmask 1043456
    %v1816 = vsel %vm1814, %v1810, 0
    %1818 = vmatprep.subr.bf16.mxu0 0
    %1819 = vmatpush1.bf16.msra.mxu0 0
    %1820 = vmatprep.subr.bf16.mxu0 0
    %1821 = vmatpush1.bf16.msra.mxu0 0
    %1822 = vmatprep.subr.bf16.mxu0 0
    %1823 = vmatpush1.bf16.msra.mxu0 0
    %1824 = vmatprep.subr.bf16.mxu0 0
    %1825 = vmatpush1.bf16.msra.mxu0 0
    %1826 = vmatprep.subr.bf16.mxu0 0
    %1827 = vmatpush1.bf16.msra.mxu0 0
    %1828 = vmatprep.subr.bf16.mxu0 0
    %1829 = vmatpush1.bf16.msra.mxu0 0
    %1830 = vmatprep.subr.bf16.mxu0 0
    %1831 = vmatpush1.bf16.msra.mxu0 0
    %1832 = vmatprep.subr.bf16.mxu0 0
    %1833 = vmatpush1.bf16.msra.mxu0 %v1816
    %1834 = vmatprep.subr.bf16.mxu0 0
    %1835 = vmatpush2.bf16.msra.mxu0 0
    %1836 = vmatprep.subr.bf16.mxu0 0
    %1837 = vmatpush2.bf16.msra.mxu0 0
    %1838 = vmatprep.subr.bf16.mxu0 0
    %1839 = vmatpush2.bf16.msra.mxu0 0
    %1840 = vmatprep.subr.bf16.mxu0 0
    %1841 = vmatpush2.bf16.msra.mxu0 0
    %1842 = vmatprep.subr.bf16.mxu0 0
    %1843 = vmatpush2.bf16.msra.mxu0 0
    %1844 = vmatprep.subr.bf16.mxu0 0
    %1845 = vmatpush2.bf16.msra.mxu0 0
    %1846 = vmatprep.subr.bf16.mxu0 0
    %1847 = vmatpush2.bf16.msra.mxu0 0
    %1848 = vmatprep.subr.bf16.mxu0 0
    %1849 = vmatpush2.bf16.msra.mxu0 0
    %1850 = vmatprep.mubr.bf16.mxu0 0
    %1851 = vmatmul.mubr.bf16.gmra.mxu0 %v1812
    %v1852 = vpop.f32.mrf.mxu0
    %v1853 = vadd.f32 0.0, %v1852
    %v1854 = vpop.f32.mrf.mxu0
    %v1855 = vpop.f32.mrf.mxu0
    %v1856 = vpop.f32.mrf.mxu0
    %1857 = vdwg.mxu0
    %v1858 = vadd.f32 %v1801, %v1853
    %v1859 = vxor.u32 %v1858, 2147483648
    %v1860 = vmul.f32 %v1859, 1.442695
    %v1861 = vpow.pop %v1860
    %v1862 = vadd.f32 %v1861, 1.0
    %v1863 = vrcp.pop %v1862
    %v1864 = vmul.f32 1.0, %v1863
    %v1865 = vtanh.pop %v1858
    %v1866 = vmul.f32 %v1864, 0.0
    %1868 = vrot.lane.b32.xlu0 %v1865, 104
    %v1869 = vpop.permute.xlu0 %1868
    %v1871 = vmul.f32 %v1864, %v1869
    %1873 = vrot.lane.b32.xlu0 %v1871, 8
    %v1874 = vpop.permute.xlu0 %1873
    %v1876 = vadd.f32 %v1866, %v1874
    %v1877 = vtanh.pop %v1876
    %1879 = vrot.lane.b32.xlu0 %v1877, 8
    %v1880 = vpop.permute.xlu0 %1879
    %v1882 = vmul.f32 %v1864, %v1880
    %1884 = vrot.lane.b32.xlu0 %v1810, 96
    %v1885 = vpop.permute.xlu0 %1884
    %v1887 = vsel %vm1814, %v1885, 0
    %1889 = vmatprep.subr.bf16.mxu0 0
    %1890 = vmatpush1.bf16.msra.mxu0 0
    %1891 = vmatprep.subr.bf16.mxu0 0
    %1892 = vmatpush1.bf16.msra.mxu0 0
    %1893 = vmatprep.subr.bf16.mxu0 0
    %1894 = vmatpush1.bf16.msra.mxu0 0
    %1895 = vmatprep.subr.bf16.mxu0 0
    %1896 = vmatpush1.bf16.msra.mxu0 0
    %1897 = vmatprep.subr.bf16.mxu0 0
    %1898 = vmatpush1.bf16.msra.mxu0 0
    %1899 = vmatprep.subr.bf16.mxu0 0
    %1900 = vmatpush1.bf16.msra.mxu0 0
    %1901 = vmatprep.subr.bf16.mxu0 0
    %1902 = vmatpush1.bf16.msra.mxu0 0
    %1903 = vmatprep.subr.bf16.mxu0 0
    %1904 = vmatpush1.bf16.msra.mxu0 %v1887
    %1905 = vmatprep.subr.bf16.mxu0 0
    %1906 = vmatpush2.bf16.msra.mxu0 0
    %1907 = vmatprep.subr.bf16.mxu0 0
    %1908 = vmatpush2.bf16.msra.mxu0 0
    %1909 = vmatprep.subr.bf16.mxu0 0
    %1910 = vmatpush2.bf16.msra.mxu0 0
    %1911 = vmatprep.subr.bf16.mxu0 0
    %1912 = vmatpush2.bf16.msra.mxu0 0
    %1913 = vmatprep.subr.bf16.mxu0 0
    %1914 = vmatpush2.bf16.msra.mxu0 0
    %1915 = vmatprep.subr.bf16.mxu0 0
    %1916 = vmatpush2.bf16.msra.mxu0 0
    %1917 = vmatprep.subr.bf16.mxu0 0
    %1918 = vmatpush2.bf16.msra.mxu0 0
    %1919 = vmatprep.subr.bf16.mxu0 0
    %1920 = vmatpush2.bf16.msra.mxu0 0
    %1921 = vmatprep.mubr.bf16.mxu0 0
    %1922 = vmatmul.mubr.bf16.gmra.mxu0 %v1812
    %v1923 = vpop.f32.mrf.mxu0
    %v1924 = vadd.f32 0.0, %v1923
    %v1925 = vpop.f32.mrf.mxu0
    %v1926 = vpop.f32.mrf.mxu0
    %v1927 = vpop.f32.mrf.mxu0
    %1928 = vdwg.mxu0
    %1930 = vrot.lane.b32.xlu0 %v1924, 32
    %v1931 = vpop.permute.xlu0 %1930
    %v1933 = vadd.f32 %v1808, %v1931
    %v1934 = vxor.u32 %v1933, 2147483648
    %v1935 = vmul.f32 %v1934, 1.442695
    %v1936 = vpow.pop %v1935
    %v1937 = vadd.f32 %v1936, 1.0
    %v1938 = vrcp.pop %v1937
    %v1939 = vmul.f32 1.0, %v1938
    %v1940 = vtanh.pop %v1933
    %v1941 = vmul.f32 %v1939, 0.0
    %1943 = vrot.lane.b32.xlu0 %v1940, 104
    %v1944 = vpop.permute.xlu0 %1943
    %v1946 = vmul.f32 %v1939, %v1944
    %1948 = vrot.lane.b32.xlu0 %v1946, 8
    %v1949 = vpop.permute.xlu0 %1948
    %v1951 = vadd.f32 %v1941, %v1949
    %v1952 = vtanh.pop %v1951
    %1954 = vrot.lane.b32.xlu0 %v1952, 8
    %v1955 = vpop.permute.xlu0 %1954
    %v1957 = vmul.f32 %v1939, %v1955
    %v1958 = vpack.c.bf16 %v1882, %v1882
    %1960 = vrot.lane.b32.xlu0 %v1958, 112
    %v1961 = vpop.permute.xlu0 %1960
    %v1963 = vsel %vm1811, %v1961, 0
    %1965 = vmatprep.subr.bf16.mxu0 0
    %1966 = vmatpush1.bf16.msra.mxu0 0
    %1967 = vmatprep.subr.bf16.mxu0 0
    %1968 = vmatpush1.bf16.msra.mxu0 0
    %1969 = vmatprep.subr.bf16.mxu0 0
    %1970 = vmatpush1.bf16.msra.mxu0 0
    %1971 = vmatprep.subr.bf16.mxu0 0
    %1972 = vmatpush1.bf16.msra.mxu0 0
    %1973 = vmatprep.subr.bf16.mxu0 0
    %1974 = vmatpush1.bf16.msra.mxu0 0
    %1975 = vmatprep.subr.bf16.mxu0 0
    %1976 = vmatpush1.bf16.msra.mxu0 0
    %1977 = vmatprep.subr.bf16.mxu0 0
    %1978 = vmatpush1.bf16.msra.mxu0 0
    %1979 = vmatprep.subr.bf16.mxu0 0
    %1980 = vmatpush1.bf16.msra.mxu0 %v1816
    %1981 = vmatprep.subr.bf16.mxu0 0
    %1982 = vmatpush2.bf16.msra.mxu0 0
    %1983 = vmatprep.subr.bf16.mxu0 0
    %1984 = vmatpush2.bf16.msra.mxu0 0
    %1985 = vmatprep.subr.bf16.mxu0 0
    %1986 = vmatpush2.bf16.msra.mxu0 0
    %1987 = vmatprep.subr.bf16.mxu0 0
    %1988 = vmatpush2.bf16.msra.mxu0 0
    %1989 = vmatprep.subr.bf16.mxu0 0
    %1990 = vmatpush2.bf16.msra.mxu0 0
    %1991 = vmatprep.subr.bf16.mxu0 0
    %1992 = vmatpush2.bf16.msra.mxu0 0
    %1993 = vmatprep.subr.bf16.mxu0 0
    %1994 = vmatpush2.bf16.msra.mxu0 0
    %1995 = vmatprep.subr.bf16.mxu0 0
    %1996 = vmatpush2.bf16.msra.mxu0 0
    %1997 = vmatprep.mubr.bf16.mxu0 0
    %1998 = vmatmul.mubr.bf16.gmra.mxu0 %v1963
    %v1999 = vpop.f32.mrf.mxu0
    %v2000 = vadd.f32 0.0, %v1999
    %v2001 = vpop.f32.mrf.mxu0
    %v2002 = vpop.f32.mrf.mxu0
    %v2003 = vpop.f32.mrf.mxu0
    %2004 = vdwg.mxu0
    %v2005 = vadd.f32 %v1802, %v2000
    %v2006 = vxor.u32 %v2005, 2147483648
    %v2007 = vmul.f32 %v2006, 1.442695
    %v2008 = vpow.pop %v2007
    %v2009 = vadd.f32 %v2008, 1.0
    %v2010 = vrcp.pop %v2009
    %v2011 = vmul.f32 1.0, %v2010
    %v2012 = vtanh.pop %v2005
    %v2013 = vmul.f32 %v2011, %v1876
    %2015 = vrot.lane.b32.xlu0 %v2012, 104
    %v2016 = vpop.permute.xlu0 %2015
    %v2018 = vmul.f32 %v2011, %v2016
    %2020 = vrot.lane.b32.xlu0 %v2018, 8
    %v2021 = vpop.permute.xlu0 %2020
    %v2023 = vadd.f32 %v2013, %v2021
    %v2024 = vtanh.pop %v2023
    %2026 = vrot.lane.b32.xlu0 %v2024, 8
    %v2027 = vpop.permute.xlu0 %2026
    %v2029 = vmul.f32 %v2011, %v2027
    %v2030 = vpack.c.bf16 %v1957, %v1957
    %2032 = vrot.lane.b32.xlu0 %v2030, 80
    %v2033 = vpop.permute.xlu0 %2032
    %v2035 = vsel %vm1811, %v2033, 0
    %2037 = vmatprep.subr.bf16.mxu0 0
    %2038 = vmatpush1.bf16.msra.mxu0 0
    %2039 = vmatprep.subr.bf16.mxu0 0
    %2040 = vmatpush1.bf16.msra.mxu0 0
    %2041 = vmatprep.subr.bf16.mxu0 0
    %2042 = vmatpush1.bf16.msra.mxu0 0
    %2043 = vmatprep.subr.bf16.mxu0 0
    %2044 = vmatpush1.bf16.msra.mxu0 0
    %2045 = vmatprep.subr.bf16.mxu0 0
    %2046 = vmatpush1.bf16.msra.mxu0 0
    %2047 = vmatprep.subr.bf16.mxu0 0
    %2048 = vmatpush1.bf16.msra.mxu0 0
    %2049 = vmatprep.subr.bf16.mxu0 0
    %2050 = vmatpush1.bf16.msra.mxu0 0
    %2051 = vmatprep.subr.bf16.mxu0 0
    %2052 = vmatpush1.bf16.msra.mxu0 %v1887
    %2053 = vmatprep.subr.bf16.mxu0 0
    %2054 = vmatpush2.bf16.msra.mxu0 0
    %2055 = vmatprep.subr.bf16.mxu0 0
    %2056 = vmatpush2.bf16.msra.mxu0 0
    %2057 = vmatprep.subr.bf16.mxu0 0
    %2058 = vmatpush2.bf16.msra.mxu0 0
    %2059 = vmatprep.subr.bf16.mxu0 0
    %2060 = vmatpush2.bf16.msra.mxu0 0
    %2061 = vmatprep.subr.bf16.mxu0 0
    %2062 = vmatpush2.bf16.msra.mxu0 0
    %2063 = vmatprep.subr.bf16.mxu0 0
    %2064 = vmatpush2.bf16.msra.mxu0 0
    %2065 = vmatprep.subr.bf16.mxu0 0
    %2066 = vmatpush2.bf16.msra.mxu0 0
    %2067 = vmatprep.subr.bf16.mxu0 0
    %2068 = vmatpush2.bf16.msra.mxu0 0
    %2069 = vmatprep.mubr.bf16.mxu0 0
    %2070 = vmatmul.mubr.bf16.gmra.mxu0 %v2035
    %v2071 = vpop.f32.mrf.mxu0
    %v2072 = vadd.f32 0.0, %v2071
    %v2073 = vpop.f32.mrf.mxu0
    %v2074 = vpop.f32.mrf.mxu0
    %v2075 = vpop.f32.mrf.mxu0
    %2076 = vdwg.mxu0
    %2078 = vrot.lane.b32.xlu0 %v2072, 32
    %v2079 = vpop.permute.xlu0 %2078
    %v2081 = vadd.f32 %v1807, %v2079
    %v2082 = vxor.u32 %v2081, 2147483648
    %v2083 = vmul.f32 %v2082, 1.442695
    %v2084 = vpow.pop %v2083
    %v2085 = vadd.f32 %v2084, 1.0
    %v2086 = vrcp.pop %v2085
    %v2087 = vmul.f32 1.0, %v2086
    %v2088 = vtanh.pop %v2081
    %v2089 = vmul.f32 %v2087, %v1951
    %2091 = vrot.lane.b32.xlu0 %v2088, 104
    %v2092 = vpop.permute.xlu0 %2091
    %v2094 = vmul.f32 %v2087, %v2092
    %2096 = vrot.lane.b32.xlu0 %v2094, 8
    %v2097 = vpop.permute.xlu0 %2096
    %v2099 = vadd.f32 %v2089, %v2097
    %v2100 = vtanh.pop %v2099
    %2102 = vrot.lane.b32.xlu0 %v2100, 8
    %v2103 = vpop.permute.xlu0 %2102
    %v2105 = vmul.f32 %v2087, %v2103
    %v2106 = vpack.c.bf16 %v2029, %v2029
    %2108 = vrot.lane.b32.xlu0 %v2106, 112
    %v2109 = vpop.permute.xlu0 %2108
    %v2111 = vsel %vm1811, %v2109, 0
    %2113 = vmatprep.subr.bf16.mxu0 0
    %2114 = vmatpush1.bf16.msra.mxu0 0
    %2115 = vmatprep.subr.bf16.mxu0 0
    %2116 = vmatpush1.bf16.msra.mxu0 0
    %2117 = vmatprep.subr.bf16.mxu0 0
    %2118 = vmatpush1.bf16.msra.mxu0 0
    %2119 = vmatprep.subr.bf16.mxu0 0
    %2120 = vmatpush1.bf16.msra.mxu0 0
    %2121 = vmatprep.subr.bf16.mxu0 0
    %2122 = vmatpush1.bf16.msra.mxu0 0
    %2123 = vmatprep.subr.bf16.mxu0 0
    %2124 = vmatpush1.bf16.msra.mxu0 0
    %2125 = vmatprep.subr.bf16.mxu0 0
    %2126 = vmatpush1.bf16.msra.mxu0 0
    %2127 = vmatprep.subr.bf16.mxu0 0
    %2128 = vmatpush1.bf16.msra.mxu0 %v1816
    %2129 = vmatprep.subr.bf16.mxu0 0
    %2130 = vmatpush2.bf16.msra.mxu0 0
    %2131 = vmatprep.subr.bf16.mxu0 0
    %2132 = vmatpush2.bf16.msra.mxu0 0
    %2133 = vmatprep.subr.bf16.mxu0 0
    %2134 = vmatpush2.bf16.msra.mxu0 0
    %2135 = vmatprep.subr.bf16.mxu0 0
    %2136 = vmatpush2.bf16.msra.mxu0 0
    %2137 = vmatprep.subr.bf16.mxu0 0
    %2138 = vmatpush2.bf16.msra.mxu0 0
    %2139 = vmatprep.subr.bf16.mxu0 0
    %2140 = vmatpush2.bf16.msra.mxu0 0
    %2141 = vmatprep.subr.bf16.mxu0 0
    %2142 = vmatpush2.bf16.msra.mxu0 0
    %2143 = vmatprep.subr.bf16.mxu0 0
    %2144 = vmatpush2.bf16.msra.mxu0 0
    %2145 = vmatprep.mubr.bf16.mxu0 0
    %2146 = vmatmul.mubr.bf16.gmra.mxu0 %v2111
    %v2147 = vpop.f32.mrf.mxu0
    %v2148 = vadd.f32 0.0, %v2147
    %v2149 = vpop.f32.mrf.mxu0
    %v2150 = vpop.f32.mrf.mxu0
    %v2151 = vpop.f32.mrf.mxu0
    %2152 = vdwg.mxu0
    %v2153 = vadd.f32 %v1803, %v2148
    %v2154 = vxor.u32 %v2153, 2147483648
    %v2155 = vmul.f32 %v2154, 1.442695
    %v2156 = vpow.pop %v2155
    %v2157 = vadd.f32 %v2156, 1.0
    %v2158 = vrcp.pop %v2157
    %v2159 = vmul.f32 1.0, %v2158
    %v2160 = vtanh.pop %v2153
    %v2161 = vmul.f32 %v2159, %v2023
    %2163 = vrot.lane.b32.xlu0 %v2160, 104
    %v2164 = vpop.permute.xlu0 %2163
    %v2166 = vmul.f32 %v2159, %v2164
    %2168 = vrot.lane.b32.xlu0 %v2166, 8
    %v2169 = vpop.permute.xlu0 %2168
    %v2171 = vadd.f32 %v2161, %v2169
    %v2172 = vtanh.pop %v2171
    %2174 = vrot.lane.b32.xlu0 %v2172, 8
    %v2175 = vpop.permute.xlu0 %2174
    %v2177 = vmul.f32 %v2159, %v2175
    %v2178 = vpack.c.bf16 %v2105, %v2105
    %2180 = vrot.lane.b32.xlu0 %v2178, 80
    %v2181 = vpop.permute.xlu0 %2180
    %v2183 = vsel %vm1811, %v2181, 0
    %2185 = vmatprep.subr.bf16.mxu0 0
    %2186 = vmatpush1.bf16.msra.mxu0 0
    %2187 = vmatprep.subr.bf16.mxu0 0
    %2188 = vmatpush1.bf16.msra.mxu0 0
    %2189 = vmatprep.subr.bf16.mxu0 0
    %2190 = vmatpush1.bf16.msra.mxu0 0
    %2191 = vmatprep.subr.bf16.mxu0 0
    %2192 = vmatpush1.bf16.msra.mxu0 0
    %2193 = vmatprep.subr.bf16.mxu0 0
    %2194 = vmatpush1.bf16.msra.mxu0 0
    %2195 = vmatprep.subr.bf16.mxu0 0
    %2196 = vmatpush1.bf16.msra.mxu0 0
    %2197 = vmatprep.subr.bf16.mxu0 0
    %2198 = vmatpush1.bf16.msra.mxu0 0
    %2199 = vmatprep.subr.bf16.mxu0 0
    %2200 = vmatpush1.bf16.msra.mxu0 %v1887
    %2201 = vmatprep.subr.bf16.mxu0 0
    %2202 = vmatpush2.bf16.msra.mxu0 0
    %2203 = vmatprep.subr.bf16.mxu0 0
    %2204 = vmatpush2.bf16.msra.mxu0 0
    %2205 = vmatprep.subr.bf16.mxu0 0
    %2206 = vmatpush2.bf16.msra.mxu0 0
    %2207 = vmatprep.subr.bf16.mxu0 0
    %2208 = vmatpush2.bf16.msra.mxu0 0
    %2209 = vmatprep.subr.bf16.mxu0 0
    %2210 = vmatpush2.bf16.msra.mxu0 0
    %2211 = vmatprep.subr.bf16.mxu0 0
    %2212 = vmatpush2.bf16.msra.mxu0 0
    %2213 = vmatprep.subr.bf16.mxu0 0
    %2214 = vmatpush2.bf16.msra.mxu0 0
    %2215 = vmatprep.subr.bf16.mxu0 0
    %2216 = vmatpush2.bf16.msra.mxu0 0
    %2217 = vmatprep.mubr.bf16.mxu0 0
    %2218 = vmatmul.mubr.bf16.gmra.mxu0 %v2183
    %v2219 = vpop.f32.mrf.mxu0
    %v2220 = vadd.f32 0.0, %v2219
    %v2221 = vpop.f32.mrf.mxu0
    %v2222 = vpop.f32.mrf.mxu0
    %v2223 = vpop.f32.mrf.mxu0
    %2224 = vdwg.mxu0
    %2226 = vrot.lane.b32.xlu0 %v2220, 32
    %v2227 = vpop.permute.xlu0 %2226
    %v2229 = vadd.f32 %v1806, %v2227
    %v2230 = vxor.u32 %v2229, 2147483648
    %v2231 = vmul.f32 %v2230, 1.442695
    %v2232 = vpow.pop %v2231
    %v2233 = vadd.f32 %v2232, 1.0
    %v2234 = vrcp.pop %v2233
    %v2235 = vmul.f32 1.0, %v2234
    %v2236 = vtanh.pop %v2229
    %v2237 = vmul.f32 %v2235, %v2099
    %2239 = vrot.lane.b32.xlu0 %v2236, 104
    %v2240 = vpop.permute.xlu0 %2239
    %v2242 = vmul.f32 %v2235, %v2240
    %2244 = vrot.lane.b32.xlu0 %v2242, 8
    %v2245 = vpop.permute.xlu0 %2244
    %v2247 = vadd.f32 %v2237, %v2245
    %v2248 = vtanh.pop %v2247
    %2250 = vrot.lane.b32.xlu0 %v2248, 8
    %v2251 = vpop.permute.xlu0 %2250
    %v2253 = vmul.f32 %v2235, %v2251
    %v2254 = vpack.c.bf16 %v2177, %v2177
    %2256 = vrot.lane.b32.xlu0 %v2254, 112
    %v2257 = vpop.permute.xlu0 %2256
    %v2259 = vsel %vm1811, %v2257, 0
    %2261 = vmatprep.subr.bf16.mxu0 0
    %2262 = vmatpush1.bf16.msra.mxu0 0
    %2263 = vmatprep.subr.bf16.mxu0 0
    %2264 = vmatpush1.bf16.msra.mxu0 0
    %2265 = vmatprep.subr.bf16.mxu0 0
    %2266 = vmatpush1.bf16.msra.mxu0 0
    %2267 = vmatprep.subr.bf16.mxu0 0
    %2268 = vmatpush1.bf16.msra.mxu0 0
    %2269 = vmatprep.subr.bf16.mxu0 0
    %2270 = vmatpush1.bf16.msra.mxu0 0
    %2271 = vmatprep.subr.bf16.mxu0 0
    %2272 = vmatpush1.bf16.msra.mxu0 0
    %2273 = vmatprep.subr.bf16.mxu0 0
    %2274 = vmatpush1.bf16.msra.mxu0 0
    %2275 = vmatprep.subr.bf16.mxu0 0
    %2276 = vmatpush1.bf16.msra.mxu0 %v1816
    %2277 = vmatprep.subr.bf16.mxu0 0
    %2278 = vmatpush2.bf16.msra.mxu0 0
    %2279 = vmatprep.subr.bf16.mxu0 0
    %2280 = vmatpush2.bf16.msra.mxu0 0
    %2281 = vmatprep.subr.bf16.mxu0 0
    %2282 = vmatpush2.bf16.msra.mxu0 0
    %2283 = vmatprep.subr.bf16.mxu0 0
    %2284 = vmatpush2.bf16.msra.mxu0 0
    %2285 = vmatprep.subr.bf16.mxu0 0
    %2286 = vmatpush2.bf16.msra.mxu0 0
    %2287 = vmatprep.subr.bf16.mxu0 0
    %2288 = vmatpush2.bf16.msra.mxu0 0
    %2289 = vmatprep.subr.bf16.mxu0 0
    %2290 = vmatpush2.bf16.msra.mxu0 0
    %2291 = vmatprep.subr.bf16.mxu0 0
    %2292 = vmatpush2.bf16.msra.mxu0 0
    %2293 = vmatprep.mubr.bf16.mxu0 0
    %2294 = vmatmul.mubr.bf16.gmra.mxu0 %v2259
    %v2295 = vpop.f32.mrf.mxu0
    %v2296 = vadd.f32 0.0, %v2295
    %v2297 = vpop.f32.mrf.mxu0
    %v2298 = vpop.f32.mrf.mxu0
    %v2299 = vpop.f32.mrf.mxu0
    %2300 = vdwg.mxu0
    %v2301 = vadd.f32 %v1804, %v2296
    %v2302 = vxor.u32 %v2301, 2147483648
    %v2303 = vmul.f32 %v2302, 1.442695
    %v2304 = vpow.pop %v2303
    %v2305 = vadd.f32 %v2304, 1.0
    %v2306 = vrcp.pop %v2305
    %v2307 = vmul.f32 1.0, %v2306
    %v2308 = vtanh.pop %v2301
    %v2309 = vmul.f32 %v2307, %v2171
    %2311 = vrot.lane.b32.xlu0 %v2308, 104
    %v2312 = vpop.permute.xlu0 %2311
    %v2314 = vmul.f32 %v2307, %v2312
    %2316 = vrot.lane.b32.xlu0 %v2314, 8
    %v2317 = vpop.permute.xlu0 %2316
    %v2319 = vadd.f32 %v2309, %v2317
    %v2320 = vtanh.pop %v2319
    %2322 = vrot.lane.b32.xlu0 %v2320, 8
    %v2323 = vpop.permute.xlu0 %2322
    %v2325 = vmul.f32 %v2307, %v2323
    %v2326 = vpack.c.bf16 %v2253, %v2253
    %2328 = vrot.lane.b32.xlu0 %v2326, 80
    %v2329 = vpop.permute.xlu0 %2328
    %v2331 = vsel %vm1811, %v2329, 0
    %2333 = vmatprep.subr.bf16.mxu0 0
    %2334 = vmatpush1.bf16.msra.mxu0 0
    %2335 = vmatprep.subr.bf16.mxu0 0
    %2336 = vmatpush1.bf16.msra.mxu0 0
    %2337 = vmatprep.subr.bf16.mxu0 0
    %2338 = vmatpush1.bf16.msra.mxu0 0
    %2339 = vmatprep.subr.bf16.mxu0 0
    %2340 = vmatpush1.bf16.msra.mxu0 0
    %2341 = vmatprep.subr.bf16.mxu0 0
    %2342 = vmatpush1.bf16.msra.mxu0 0
    %2343 = vmatprep.subr.bf16.mxu0 0
    %2344 = vmatpush1.bf16.msra.mxu0 0
    %2345 = vmatprep.subr.bf16.mxu0 0
    %2346 = vmatpush1.bf16.msra.mxu0 0
    %2347 = vmatprep.subr.bf16.mxu0 0
    %2348 = vmatpush1.bf16.msra.mxu0 %v1887
    %2349 = vmatprep.subr.bf16.mxu0 0
    %2350 = vmatpush2.bf16.msra.mxu0 0
    %2351 = vmatprep.subr.bf16.mxu0 0
    %2352 = vmatpush2.bf16.msra.mxu0 0
    %2353 = vmatprep.subr.bf16.mxu0 0
    %2354 = vmatpush2.bf16.msra.mxu0 0
    %2355 = vmatprep.subr.bf16.mxu0 0
    %2356 = vmatpush2.bf16.msra.mxu0 0
    %2357 = vmatprep.subr.bf16.mxu0 0
    %2358 = vmatpush2.bf16.msra.mxu0 0
    %2359 = vmatprep.subr.bf16.mxu0 0
    %2360 = vmatpush2.bf16.msra.mxu0 0
    %2361 = vmatprep.subr.bf16.mxu0 0
    %2362 = vmatpush2.bf16.msra.mxu0 0
    %2363 = vmatprep.subr.bf16.mxu0 0
    %2364 = vmatpush2.bf16.msra.mxu0 0
    %2365 = vmatprep.mubr.bf16.mxu0 0
    %2366 = vmatmul.mubr.bf16.gmra.mxu0 %v2331
    %v2367 = vpop.f32.mrf.mxu0
    %v2368 = vadd.f32 0.0, %v2367
    %v2369 = vpop.f32.mrf.mxu0
    %v2370 = vpop.f32.mrf.mxu0
    %v2371 = vpop.f32.mrf.mxu0
    %2372 = vdwg.mxu0
    %2374 = vrot.lane.b32.xlu0 %v2368, 32
    %v2375 = vpop.permute.xlu0 %2374
    %v2377 = vadd.f32 %v1805, %v2375
    %v2378 = vxor.u32 %v2377, 2147483648
    %v2379 = vmul.f32 %v2378, 1.442695
    %v2380 = vpow.pop %v2379
    %v2381 = vadd.f32 %v2380, 1.0
    %v2382 = vrcp.pop %v2381
    %v2383 = vmul.f32 1.0, %v2382
    %v2384 = vtanh.pop %v2377
    %v2385 = vmul.f32 %v2383, %v2247
    %2387 = vrot.lane.b32.xlu0 %v2384, 104
    %v2388 = vpop.permute.xlu0 %2387
    %v2390 = vmul.f32 %v2383, %v2388
    %2392 = vrot.lane.b32.xlu0 %v2390, 8
    %v2393 = vpop.permute.xlu0 %2392
    %v2395 = vadd.f32 %v2385, %v2393
    %v2396 = vtanh.pop %v2395
    %2398 = vrot.lane.b32.xlu0 %v2396, 8
    %v2399 = vpop.permute.xlu0 %2398
    %v2401 = vmul.f32 %v2383, %v2399
    %v2402 = vpack.c.bf16 %v2325, %v2325
    %2404 = vrot.lane.b32.xlu0 %v2402, 112
    %v2405 = vpop.permute.xlu0 %2404
    %v2407 = vsel %vm1811, %v2405, 0
    %2409 = vmatprep.subr.bf16.mxu0 0
    %2410 = vmatpush1.bf16.msra.mxu0 0
    %2411 = vmatprep.subr.bf16.mxu0 0
    %2412 = vmatpush1.bf16.msra.mxu0 0
    %2413 = vmatprep.subr.bf16.mxu0 0
    %2414 = vmatpush1.bf16.msra.mxu0 0
    %2415 = vmatprep.subr.bf16.mxu0 0
    %2416 = vmatpush1.bf16.msra.mxu0 0
    %2417 = vmatprep.subr.bf16.mxu0 0
    %2418 = vmatpush1.bf16.msra.mxu0 0
    %2419 = vmatprep.subr.bf16.mxu0 0
    %2420 = vmatpush1.bf16.msra.mxu0 0
    %2421 = vmatprep.subr.bf16.mxu0 0
    %2422 = vmatpush1.bf16.msra.mxu0 0
    %2423 = vmatprep.subr.bf16.mxu0 0
    %2424 = vmatpush1.bf16.msra.mxu0 %v1816
    %2425 = vmatprep.subr.bf16.mxu0 0
    %2426 = vmatpush2.bf16.msra.mxu0 0
    %2427 = vmatprep.subr.bf16.mxu0 0
    %2428 = vmatpush2.bf16.msra.mxu0 0
    %2429 = vmatprep.subr.bf16.mxu0 0
    %2430 = vmatpush2.bf16.msra.mxu0 0
    %2431 = vmatprep.subr.bf16.mxu0 0
    %2432 = vmatpush2.bf16.msra.mxu0 0
    %2433 = vmatprep.subr.bf16.mxu0 0
    %2434 = vmatpush2.bf16.msra.mxu0 0
    %2435 = vmatprep.subr.bf16.mxu0 0
    %2436 = vmatpush2.bf16.msra.mxu0 0
    %2437 = vmatprep.subr.bf16.mxu0 0
    %2438 = vmatpush2.bf16.msra.mxu0 0
    %2439 = vmatprep.subr.bf16.mxu0 0
    %2440 = vmatpush2.bf16.msra.mxu0 0
    %2441 = vmatprep.mubr.bf16.mxu0 0
    %2442 = vmatmul.mubr.bf16.gmra.mxu0 %v2407
    %v2443 = vpop.f32.mrf.mxu0
    %v2444 = vadd.f32 0.0, %v2443
    %v2445 = vpop.f32.mrf.mxu0
    %v2446 = vpop.f32.mrf.mxu0
    %v2447 = vpop.f32.mrf.mxu0
    %2448 = vdwg.mxu0
    %v2449 = vadd.f32 %v1805, %v2444
    %v2450 = vxor.u32 %v2449, 2147483648
    %v2451 = vmul.f32 %v2450, 1.442695
    %v2452 = vpow.pop %v2451
    %v2453 = vadd.f32 %v2452, 1.0
    %v2454 = vrcp.pop %v2453
    %v2455 = vmul.f32 1.0, %v2454
    %v2456 = vtanh.pop %v2449
    %v2457 = vmul.f32 %v2455, %v2319
    %2459 = vrot.lane.b32.xlu0 %v2456, 104
    %v2460 = vpop.permute.xlu0 %2459
    %v2462 = vmul.f32 %v2455, %v2460
    %2464 = vrot.lane.b32.xlu0 %v2462, 8
    %v2465 = vpop.permute.xlu0 %2464
    %v2467 = vadd.f32 %v2457, %v2465
    %v2468 = vtanh.pop %v2467
    %2470 = vrot.lane.b32.xlu0 %v2468, 8
    %v2471 = vpop.permute.xlu0 %2470
    %v2473 = vmul.f32 %v2455, %v2471
    %v2474 = vpack.c.bf16 %v2401, %v2401
    %2476 = vrot.lane.b32.xlu0 %v2474, 80
    %v2477 = vpop.permute.xlu0 %2476
    %v2479 = vsel %vm1811, %v2477, 0
    %2481 = vmatprep.subr.bf16.mxu0 0
    %2482 = vmatpush1.bf16.msra.mxu0 0
    %2483 = vmatprep.subr.bf16.mxu0 0
    %2484 = vmatpush1.bf16.msra.mxu0 0
    %2485 = vmatprep.subr.bf16.mxu0 0
    %2486 = vmatpush1.bf16.msra.mxu0 0
    %2487 = vmatprep.subr.bf16.mxu0 0
    %2488 = vmatpush1.bf16.msra.mxu0 0
    %2489 = vmatprep.subr.bf16.mxu0 0
    %2490 = vmatpush1.bf16.msra.mxu0 0
    %2491 = vmatprep.subr.bf16.mxu0 0
    %2492 = vmatpush1.bf16.msra.mxu0 0
    %2493 = vmatprep.subr.bf16.mxu0 0
    %2494 = vmatpush1.bf16.msra.mxu0 0
    %2495 = vmatprep.subr.bf16.mxu0 0
    %2496 = vmatpush1.bf16.msra.mxu0 %v1887
    %2497 = vmatprep.subr.bf16.mxu0 0
    %2498 = vmatpush2.bf16.msra.mxu0 0
    %2499 = vmatprep.subr.bf16.mxu0 0
    %2500 = vmatpush2.bf16.msra.mxu0 0
    %2501 = vmatprep.subr.bf16.mxu0 0
    %2502 = vmatpush2.bf16.msra.mxu0 0
    %2503 = vmatprep.subr.bf16.mxu0 0
    %2504 = vmatpush2.bf16.msra.mxu0 0
    %2505 = vmatprep.subr.bf16.mxu0 0
    %2506 = vmatpush2.bf16.msra.mxu0 0
    %2507 = vmatprep.subr.bf16.mxu0 0
    %2508 = vmatpush2.bf16.msra.mxu0 0
    %2509 = vmatprep.subr.bf16.mxu0 0
    %2510 = vmatpush2.bf16.msra.mxu0 0
    %2511 = vmatprep.subr.bf16.mxu0 0
    %2512 = vmatpush2.bf16.msra.mxu0 0
    %2513 = vmatprep.mubr.bf16.mxu0 0
    %2514 = vmatmul.mubr.bf16.gmra.mxu0 %v2479
    %v2515 = vpop.f32.mrf.mxu0
    %v2516 = vadd.f32 0.0, %v2515
    %v2517 = vpop.f32.mrf.mxu0
    %v2518 = vpop.f32.mrf.mxu0
    %v2519 = vpop.f32.mrf.mxu0
    %2520 = vdwg.mxu0
    %2522 = vrot.lane.b32.xlu0 %v2516, 32
    %v2523 = vpop.permute.xlu0 %2522
    %v2525 = vadd.f32 %v1804, %v2523
    %v2526 = vxor.u32 %v2525, 2147483648
    %v2527 = vmul.f32 %v2526, 1.442695
    %v2528 = vpow.pop %v2527
    %v2529 = vadd.f32 %v2528, 1.0
    %v2530 = vrcp.pop %v2529
    %v2531 = vmul.f32 1.0, %v2530
    %v2532 = vtanh.pop %v2525
    %v2533 = vmul.f32 %v2531, %v2395
    %2535 = vrot.lane.b32.xlu0 %v2532, 104
    %v2536 = vpop.permute.xlu0 %2535
    %v2538 = vmul.f32 %v2531, %v2536
    %2540 = vrot.lane.b32.xlu0 %v2538, 8
    %v2541 = vpop.permute.xlu0 %2540
    %v2543 = vadd.f32 %v2533, %v2541
    %v2544 = vtanh.pop %v2543
    %2546 = vrot.lane.b32.xlu0 %v2544, 8
    %v2547 = vpop.permute.xlu0 %2546
    %v2549 = vmul.f32 %v2531, %v2547
    %v2550 = vpack.c.bf16 %v2473, %v2473
    %2552 = vrot.lane.b32.xlu0 %v2550, 112
    %v2553 = vpop.permute.xlu0 %2552
    %v2555 = vsel %vm1811, %v2553, 0
    %2557 = vmatprep.subr.bf16.mxu0 0
    %2558 = vmatpush1.bf16.msra.mxu0 0
    %2559 = vmatprep.subr.bf16.mxu0 0
    %2560 = vmatpush1.bf16.msra.mxu0 0
    %2561 = vmatprep.subr.bf16.mxu0 0
    %2562 = vmatpush1.bf16.msra.mxu0 0
    %2563 = vmatprep.subr.bf16.mxu0 0
    %2564 = vmatpush1.bf16.msra.mxu0 0
    %2565 = vmatprep.subr.bf16.mxu0 0
    %2566 = vmatpush1.bf16.msra.mxu0 0
    %2567 = vmatprep.subr.bf16.mxu0 0
    %2568 = vmatpush1.bf16.msra.mxu0 0
    %2569 = vmatprep.subr.bf16.mxu0 0
    %2570 = vmatpush1.bf16.msra.mxu0 0
    %2571 = vmatprep.subr.bf16.mxu0 0
    %2572 = vmatpush1.bf16.msra.mxu0 %v1816
    %2573 = vmatprep.subr.bf16.mxu0 0
    %2574 = vmatpush2.bf16.msra.mxu0 0
    %2575 = vmatprep.subr.bf16.mxu0 0
    %2576 = vmatpush2.bf16.msra.mxu0 0
    %2577 = vmatprep.subr.bf16.mxu0 0
    %2578 = vmatpush2.bf16.msra.mxu0 0
    %2579 = vmatprep.subr.bf16.mxu0 0
    %2580 = vmatpush2.bf16.msra.mxu0 0
    %2581 = vmatprep.subr.bf16.mxu0 0
    %2582 = vmatpush2.bf16.msra.mxu0 0
    %2583 = vmatprep.subr.bf16.mxu0 0
    %2584 = vmatpush2.bf16.msra.mxu0 0
    %2585 = vmatprep.subr.bf16.mxu0 0
    %2586 = vmatpush2.bf16.msra.mxu0 0
    %2587 = vmatprep.subr.bf16.mxu0 0
    %2588 = vmatpush2.bf16.msra.mxu0 0
    %2589 = vmatprep.mubr.bf16.mxu0 0
    %2590 = vmatmul.mubr.bf16.gmra.mxu0 %v2555
    %v2591 = vpop.f32.mrf.mxu0
    %v2592 = vadd.f32 0.0, %v2591
    %v2593 = vpop.f32.mrf.mxu0
    %v2594 = vpop.f32.mrf.mxu0
    %v2595 = vpop.f32.mrf.mxu0
    %2596 = vdwg.mxu0
    %v2597 = vadd.f32 %v1806, %v2592
    %v2598 = vxor.u32 %v2597, 2147483648
    %v2599 = vmul.f32 %v2598, 1.442695
    %v2600 = vpow.pop %v2599
    %v2601 = vadd.f32 %v2600, 1.0
    %v2602 = vrcp.pop %v2601
    %v2603 = vmul.f32 1.0, %v2602
    %v2604 = vtanh.pop %v2597
    %v2605 = vmul.f32 %v2603, %v2467
    %2607 = vrot.lane.b32.xlu0 %v2604, 104
    %v2608 = vpop.permute.xlu0 %2607
    %v2610 = vmul.f32 %v2603, %v2608
    %2612 = vrot.lane.b32.xlu0 %v2610, 8
    %v2613 = vpop.permute.xlu0 %2612
    %v2615 = vadd.f32 %v2605, %v2613
    %v2616 = vtanh.pop %v2615
    %2618 = vrot.lane.b32.xlu0 %v2616, 8
    %v2619 = vpop.permute.xlu0 %2618
    %v2621 = vmul.f32 %v2603, %v2619
    %v2622 = vpack.c.bf16 %v2549, %v2549
    %2624 = vrot.lane.b32.xlu0 %v2622, 80
    %v2625 = vpop.permute.xlu0 %2624
    %v2627 = vsel %vm1811, %v2625, 0
    %2629 = vmatprep.subr.bf16.mxu0 0
    %2630 = vmatpush1.bf16.msra.mxu0 0
    %2631 = vmatprep.subr.bf16.mxu0 0
    %2632 = vmatpush1.bf16.msra.mxu0 0
    %2633 = vmatprep.subr.bf16.mxu0 0
    %2634 = vmatpush1.bf16.msra.mxu0 0
    %2635 = vmatprep.subr.bf16.mxu0 0
    %2636 = vmatpush1.bf16.msra.mxu0 0
    %2637 = vmatprep.subr.bf16.mxu0 0
    %2638 = vmatpush1.bf16.msra.mxu0 0
    %2639 = vmatprep.subr.bf16.mxu0 0
    %2640 = vmatpush1.bf16.msra.mxu0 0
    %2641 = vmatprep.subr.bf16.mxu0 0
    %2642 = vmatpush1.bf16.msra.mxu0 0
    %2643 = vmatprep.subr.bf16.mxu0 0
    %2644 = vmatpush1.bf16.msra.mxu0 %v1887
    %2645 = vmatprep.subr.bf16.mxu0 0
    %2646 = vmatpush2.bf16.msra.mxu0 0
    %2647 = vmatprep.subr.bf16.mxu0 0
    %2648 = vmatpush2.bf16.msra.mxu0 0
    %2649 = vmatprep.subr.bf16.mxu0 0
    %2650 = vmatpush2.bf16.msra.mxu0 0
    %2651 = vmatprep.subr.bf16.mxu0 0
    %2652 = vmatpush2.bf16.msra.mxu0 0
    %2653 = vmatprep.subr.bf16.mxu0 0
    %2654 = vmatpush2.bf16.msra.mxu0 0
    %2655 = vmatprep.subr.bf16.mxu0 0
    %2656 = vmatpush2.bf16.msra.mxu0 0
    %2657 = vmatprep.subr.bf16.mxu0 0
    %2658 = vmatpush2.bf16.msra.mxu0 0
    %2659 = vmatprep.subr.bf16.mxu0 0
    %2660 = vmatpush2.bf16.msra.mxu0 0
    %2661 = vmatprep.mubr.bf16.mxu0 0
    %2662 = vmatmul.mubr.bf16.gmra.mxu0 %v2627
    %v2663 = vpop.f32.mrf.mxu0
    %v2664 = vadd.f32 0.0, %v2663
    %v2665 = vpop.f32.mrf.mxu0
    %v2666 = vpop.f32.mrf.mxu0
    %v2667 = vpop.f32.mrf.mxu0
    %2668 = vdwg.mxu0
    %2670 = vrot.lane.b32.xlu0 %v2664, 32
    %v2671 = vpop.permute.xlu0 %2670
    %v2673 = vadd.f32 %v1803, %v2671
    %v2674 = vxor.u32 %v2673, 2147483648
    %v2675 = vmul.f32 %v2674, 1.442695
    %v2676 = vpow.pop %v2675
    %v2677 = vadd.f32 %v2676, 1.0
    %v2678 = vrcp.pop %v2677
    %v2679 = vmul.f32 1.0, %v2678
    %v2680 = vtanh.pop %v2673
    %v2681 = vmul.f32 %v2679, %v2543
    %2683 = vrot.lane.b32.xlu0 %v2680, 104
    %v2684 = vpop.permute.xlu0 %2683
    %v2686 = vmul.f32 %v2679, %v2684
    %2688 = vrot.lane.b32.xlu0 %v2686, 8
    %v2689 = vpop.permute.xlu0 %2688
    %v2691 = vadd.f32 %v2681, %v2689
    %v2692 = vtanh.pop %v2691
    %2694 = vrot.lane.b32.xlu0 %v2692, 8
    %v2695 = vpop.permute.xlu0 %2694
    %v2697 = vmul.f32 %v2679, %v2695
    %v2698 = vpack.c.bf16 %v2621, %v2621
    %2700 = vrot.lane.b32.xlu0 %v2698, 112
    %v2701 = vpop.permute.xlu0 %2700
    %v2703 = vsel %vm1811, %v2701, 0
    %2705 = vmatprep.subr.bf16.mxu0 0
    %2706 = vmatpush1.bf16.msra.mxu0 0
    %2707 = vmatprep.subr.bf16.mxu0 0
    %2708 = vmatpush1.bf16.msra.mxu0 0
    %2709 = vmatprep.subr.bf16.mxu0 0
    %2710 = vmatpush1.bf16.msra.mxu0 0
    %2711 = vmatprep.subr.bf16.mxu0 0
    %2712 = vmatpush1.bf16.msra.mxu0 0
    %2713 = vmatprep.subr.bf16.mxu0 0
    %2714 = vmatpush1.bf16.msra.mxu0 0
    %2715 = vmatprep.subr.bf16.mxu0 0
    %2716 = vmatpush1.bf16.msra.mxu0 0
    %2717 = vmatprep.subr.bf16.mxu0 0
    %2718 = vmatpush1.bf16.msra.mxu0 0
    %2719 = vmatprep.subr.bf16.mxu0 0
    %2720 = vmatpush1.bf16.msra.mxu0 %v1816
    %2721 = vmatprep.subr.bf16.mxu0 0
    %2722 = vmatpush2.bf16.msra.mxu0 0
    %2723 = vmatprep.subr.bf16.mxu0 0
    %2724 = vmatpush2.bf16.msra.mxu0 0
    %2725 = vmatprep.subr.bf16.mxu0 0
    %2726 = vmatpush2.bf16.msra.mxu0 0
    %2727 = vmatprep.subr.bf16.mxu0 0
    %2728 = vmatpush2.bf16.msra.mxu0 0
    %2729 = vmatprep.subr.bf16.mxu0 0
    %2730 = vmatpush2.bf16.msra.mxu0 0
    %2731 = vmatprep.subr.bf16.mxu0 0
    %2732 = vmatpush2.bf16.msra.mxu0 0
    %2733 = vmatprep.subr.bf16.mxu0 0
    %2734 = vmatpush2.bf16.msra.mxu0 0
    %2735 = vmatprep.subr.bf16.mxu0 0
    %2736 = vmatpush2.bf16.msra.mxu0 0
    %2737 = vmatprep.mubr.bf16.mxu0 0
    %2738 = vmatmul.mubr.bf16.gmra.mxu0 %v2703
    %v2739 = vpop.f32.mrf.mxu0
    %v2740 = vadd.f32 0.0, %v2739
    %v2741 = vpop.f32.mrf.mxu0
    %v2742 = vpop.f32.mrf.mxu0
    %v2743 = vpop.f32.mrf.mxu0
    %2744 = vdwg.mxu0
    %v2745 = vadd.f32 %v1807, %v2740
    %v2746 = vxor.u32 %v2745, 2147483648
    %v2747 = vmul.f32 %v2746, 1.442695
    %v2748 = vpow.pop %v2747
    %v2749 = vadd.f32 %v2748, 1.0
    %v2750 = vrcp.pop %v2749
    %v2751 = vmul.f32 1.0, %v2750
    %v2752 = vtanh.pop %v2745
    %v2753 = vmul.f32 %v2751, %v2615
    %2755 = vrot.lane.b32.xlu0 %v2752, 104
    %v2756 = vpop.permute.xlu0 %2755
    %v2758 = vmul.f32 %v2751, %v2756
    %2760 = vrot.lane.b32.xlu0 %v2758, 8
    %v2761 = vpop.permute.xlu0 %2760
    %v2763 = vadd.f32 %v2753, %v2761
    %v2764 = vtanh.pop %v2763
    %2766 = vrot.lane.b32.xlu0 %v2764, 8
    %v2767 = vpop.permute.xlu0 %2766
    %v2769 = vmul.f32 %v2751, %v2767
    %v2770 = vpack.c.bf16 %v2697, %v2697
    %2772 = vrot.lane.b32.xlu0 %v2770, 80
    %v2773 = vpop.permute.xlu0 %2772
    %v2775 = vsel %vm1811, %v2773, 0
    %2777 = vmatprep.subr.bf16.mxu0 0
    %2778 = vmatpush1.bf16.msra.mxu0 0
    %2779 = vmatprep.subr.bf16.mxu0 0
    %2780 = vmatpush1.bf16.msra.mxu0 0
    %2781 = vmatprep.subr.bf16.mxu0 0
    %2782 = vmatpush1.bf16.msra.mxu0 0
    %2783 = vmatprep.subr.bf16.mxu0 0
    %2784 = vmatpush1.bf16.msra.mxu0 0
    %2785 = vmatprep.subr.bf16.mxu0 0
    %2786 = vmatpush1.bf16.msra.mxu0 0
    %2787 = vmatprep.subr.bf16.mxu0 0
    %2788 = vmatpush1.bf16.msra.mxu0 0
    %2789 = vmatprep.subr.bf16.mxu0 0
    %2790 = vmatpush1.bf16.msra.mxu0 0
    %2791 = vmatprep.subr.bf16.mxu0 0
    %2792 = vmatpush1.bf16.msra.mxu0 %v1887
    %2793 = vmatprep.subr.bf16.mxu0 0
    %2794 = vmatpush2.bf16.msra.mxu0 0
    %2795 = vmatprep.subr.bf16.mxu0 0
    %2796 = vmatpush2.bf16.msra.mxu0 0
    %2797 = vmatprep.subr.bf16.mxu0 0
    %2798 = vmatpush2.bf16.msra.mxu0 0
    %2799 = vmatprep.subr.bf16.mxu0 0
    %2800 = vmatpush2.bf16.msra.mxu0 0
    %2801 = vmatprep.subr.bf16.mxu0 0
    %2802 = vmatpush2.bf16.msra.mxu0 0
    %2803 = vmatprep.subr.bf16.mxu0 0
    %2804 = vmatpush2.bf16.msra.mxu0 0
    %2805 = vmatprep.subr.bf16.mxu0 0
    %2806 = vmatpush2.bf16.msra.mxu0 0
    %2807 = vmatprep.subr.bf16.mxu0 0
    %2808 = vmatpush2.bf16.msra.mxu0 0
    %2809 = vmatprep.mubr.bf16.mxu0 0
    %2810 = vmatmul.mubr.bf16.gmra.mxu0 %v2775
    %v2811 = vpop.f32.mrf.mxu0
    %v2812 = vadd.f32 0.0, %v2811
    %v2813 = vpop.f32.mrf.mxu0
    %v2814 = vpop.f32.mrf.mxu0
    %v2815 = vpop.f32.mrf.mxu0
    %2816 = vdwg.mxu0
    %2818 = vrot.lane.b32.xlu0 %v2812, 32
    %v2819 = vpop.permute.xlu0 %2818
    %v2821 = vadd.f32 %v1802, %v2819
    %v2822 = vxor.u32 %v2821, 2147483648
    %v2823 = vmul.f32 %v2822, 1.442695
    %v2824 = vpow.pop %v2823
    %v2825 = vadd.f32 %v2824, 1.0
    %v2826 = vrcp.pop %v2825
    %v2827 = vmul.f32 1.0, %v2826
    %v2828 = vtanh.pop %v2821
    %v2829 = vmul.f32 %v2827, %v2691
    %2831 = vrot.lane.b32.xlu0 %v2828, 104
    %v2832 = vpop.permute.xlu0 %2831
    %v2834 = vmul.f32 %v2827, %v2832
    %2836 = vrot.lane.b32.xlu0 %v2834, 8
    %v2837 = vpop.permute.xlu0 %2836
    %v2839 = vadd.f32 %v2829, %v2837
    %v2840 = vtanh.pop %v2839
    %2842 = vrot.lane.b32.xlu0 %v2840, 8
    %v2843 = vpop.permute.xlu0 %2842
    %v2845 = vmul.f32 %v2827, %v2843
    %v2846 = vpack.c.bf16 %v2769, %v2769
    %2848 = vrot.lane.b32.xlu0 %v2846, 112
    %v2849 = vpop.permute.xlu0 %2848
    %v2851 = vsel %vm1811, %v2849, 0
    %2853 = vmatprep.subr.bf16.mxu0 0
    %2854 = vmatpush1.bf16.msra.mxu0 0
    %2855 = vmatprep.subr.bf16.mxu0 0
    %2856 = vmatpush1.bf16.msra.mxu0 0
    %2857 = vmatprep.subr.bf16.mxu0 0
    %2858 = vmatpush1.bf16.msra.mxu0 0
    %2859 = vmatprep.subr.bf16.mxu0 0
    %2860 = vmatpush1.bf16.msra.mxu0 0
    %2861 = vmatprep.subr.bf16.mxu0 0
    %2862 = vmatpush1.bf16.msra.mxu0 0
    %2863 = vmatprep.subr.bf16.mxu0 0
    %2864 = vmatpush1.bf16.msra.mxu0 0
    %2865 = vmatprep.subr.bf16.mxu0 0
    %2866 = vmatpush1.bf16.msra.mxu0 0
    %2867 = vmatprep.subr.bf16.mxu0 0
    %2868 = vmatpush1.bf16.msra.mxu0 %v1816
    %2869 = vmatprep.subr.bf16.mxu0 0
    %2870 = vmatpush2.bf16.msra.mxu0 0
    %2871 = vmatprep.subr.bf16.mxu0 0
    %2872 = vmatpush2.bf16.msra.mxu0 0
    %2873 = vmatprep.subr.bf16.mxu0 0
    %2874 = vmatpush2.bf16.msra.mxu0 0
    %2875 = vmatprep.subr.bf16.mxu0 0
    %2876 = vmatpush2.bf16.msra.mxu0 0
    %2877 = vmatprep.subr.bf16.mxu0 0
    %2878 = vmatpush2.bf16.msra.mxu0 0
    %2879 = vmatprep.subr.bf16.mxu0 0
    %2880 = vmatpush2.bf16.msra.mxu0 0
    %2881 = vmatprep.subr.bf16.mxu0 0
    %2882 = vmatpush2.bf16.msra.mxu0 0
    %2883 = vmatprep.subr.bf16.mxu0 0
    %2884 = vmatpush2.bf16.msra.mxu0 0
    %2885 = vmatprep.mubr.bf16.mxu0 0
    %2886 = vmatmul.mubr.bf16.gmra.mxu0 %v2851
    %v2887 = vpop.f32.mrf.mxu0
    %v2888 = vadd.f32 0.0, %v2887
    %v2889 = vpop.f32.mrf.mxu0
    %v2890 = vpop.f32.mrf.mxu0
    %v2891 = vpop.f32.mrf.mxu0
    %2892 = vdwg.mxu0
    %v2893 = vadd.f32 %v1808, %v2888
    %v2894 = vxor.u32 %v2893, 2147483648
    %v2895 = vmul.f32 %v2894, 1.442695
    %v2896 = vpow.pop %v2895
    %v2897 = vadd.f32 %v2896, 1.0
    %v2898 = vrcp.pop %v2897
    %v2899 = vmul.f32 1.0, %v2898
    %v2900 = vtanh.pop %v2893
    %v2901 = vmul.f32 %v2899, %v2763
    %2903 = vrot.lane.b32.xlu0 %v2900, 104
    %v2904 = vpop.permute.xlu0 %2903
    %v2906 = vmul.f32 %v2899, %v2904
    %2908 = vrot.lane.b32.xlu0 %v2906, 8
    %v2909 = vpop.permute.xlu0 %2908
    %v2911 = vadd.f32 %v2901, %v2909
    %v2912 = vtanh.pop %v2911
    %2914 = vrot.lane.b32.xlu0 %v2912, 8
    %v2915 = vpop.permute.xlu0 %2914
    %v2917 = vmul.f32 %v2899, %v2915
    %v2918 = vpack.c.bf16 %v2845, %v2845
    %2920 = vrot.lane.b32.xlu0 %v2918, 80
    %v2921 = vpop.permute.xlu0 %2920
    %v2923 = vsel %vm1811, %v2921, 0
    %2925 = vmatprep.subr.bf16.mxu0 0
    %2926 = vmatpush1.bf16.msra.mxu0 0
    %2927 = vmatprep.subr.bf16.mxu0 0
    %2928 = vmatpush1.bf16.msra.mxu0 0
    %2929 = vmatprep.subr.bf16.mxu0 0
    %2930 = vmatpush1.bf16.msra.mxu0 0
    %2931 = vmatprep.subr.bf16.mxu0 0
    %2932 = vmatpush1.bf16.msra.mxu0 0
    %2933 = vmatprep.subr.bf16.mxu0 0
    %2934 = vmatpush1.bf16.msra.mxu0 0
    %2935 = vmatprep.subr.bf16.mxu0 0
    %2936 = vmatpush1.bf16.msra.mxu0 0
    %2937 = vmatprep.subr.bf16.mxu0 0
    %2938 = vmatpush1.bf16.msra.mxu0 0
    %2939 = vmatprep.subr.bf16.mxu0 0
    %2940 = vmatpush1.bf16.msra.mxu0 %v1887
    %2941 = vmatprep.subr.bf16.mxu0 0
    %2942 = vmatpush2.bf16.msra.mxu0 0
    %2943 = vmatprep.subr.bf16.mxu0 0
    %2944 = vmatpush2.bf16.msra.mxu0 0
    %2945 = vmatprep.subr.bf16.mxu0 0
    %2946 = vmatpush2.bf16.msra.mxu0 0
    %2947 = vmatprep.subr.bf16.mxu0 0
    %2948 = vmatpush2.bf16.msra.mxu0 0
    %2949 = vmatprep.subr.bf16.mxu0 0
    %2950 = vmatpush2.bf16.msra.mxu0 0
    %2951 = vmatprep.subr.bf16.mxu0 0
    %2952 = vmatpush2.bf16.msra.mxu0 0
    %2953 = vmatprep.subr.bf16.mxu0 0
    %2954 = vmatpush2.bf16.msra.mxu0 0
    %2955 = vmatprep.subr.bf16.mxu0 0
    %2956 = vmatpush2.bf16.msra.mxu0 0
    %2957 = vmatprep.mubr.bf16.mxu0 0
    %2958 = vmatmul.mubr.bf16.gmra.mxu0 %v2923
    %v2959 = vpop.f32.mrf.mxu0
    %v2960 = vadd.f32 0.0, %v2959
    %v2961 = vpop.f32.mrf.mxu0
    %v2962 = vpop.f32.mrf.mxu0
    %v2963 = vpop.f32.mrf.mxu0
    %2964 = vdwg.mxu0
    %2966 = vrot.lane.b32.xlu0 %v2960, 32
    %v2967 = vpop.permute.xlu0 %2966
    %v2969 = vadd.f32 %v1801, %v2967
    %v2970 = vxor.u32 %v2969, 2147483648
    %v2971 = vmul.f32 %v2970, 1.442695
    %v2972 = vpow.pop %v2971
    %v2973 = vadd.f32 %v2972, 1.0
    %v2974 = vrcp.pop %v2973
    %v2975 = vmul.f32 1.0, %v2974
    %v2976 = vtanh.pop %v2969
    %v2977 = vmul.f32 %v2975, %v2839
    %2979 = vrot.lane.b32.xlu0 %v2976, 104
    %v2980 = vpop.permute.xlu0 %2979
    %v2982 = vmul.f32 %v2975, %v2980
    %2984 = vrot.lane.b32.xlu0 %v2982, 8
    %v2985 = vpop.permute.xlu0 %2984
    %v2987 = vadd.f32 %v2977, %v2985
    %v2988 = vtanh.pop %v2987
    %2990 = vrot.lane.b32.xlu0 %v2988, 8
    %v2991 = vpop.permute.xlu0 %2990
    %v2993 = vmul.f32 %v2975, %v2991
    %v2994 = vld [vmem:[#allocation2 + $0x88] sm:$0xff]
    %v2995 = vld [vmem:[#allocation2 + $0x90] sm:$0xff]
    %v2996 = vpack.c.bf16 %v2029, %v1882
    %v2997 = vpack.c.bf16 %v2325, %v2177
    %v2998 = vpack.c.bf16 %v2621, %v2473
    %v2999 = vpack.c.bf16 %v2917, %v2769
    %v3000 = vpack.c.bf16 %v2994, %v2994
    %v3001 = vpack.c.bf16 %v2845, %v2993
    %v3002 = vpack.c.bf16 %v2549, %v2697
    %v3003 = vpack.c.bf16 %v2253, %v2401
    %v3004 = vpack.c.bf16 %v1957, %v2105
    %v3005 = vpack.c.bf16 %v2995, %v2995
    %3010 = vrot.lane.b32.xlu0 %v3001, 80
    %v3011 = vpop.permute.xlu0 %3010
    %3012 = vrot.lane.b32.xlu0 %v3002, 80
    %v3013 = vpop.permute.xlu0 %3012
    %3014 = vrot.lane.b32.xlu0 %v3003, 80
    %v3015 = vpop.permute.xlu0 %3014
    %3016 = vrot.lane.b32.xlu0 %v3004, 80
    %v3017 = vpop.permute.xlu0 %3016
    %v3019 = vsel %vm1811, %v3011, 0
    %v3022 = vsel %vm1811, %v3013, 0
    %v3025 = vsel %vm1811, %v3015, 0
    %v3028 = vsel %vm1811, %v3017, 0
    %v3031 = vsel %vm1814, %v3005, 0
    %3033 = vmatprep.subr.bf16.mxu0 0
    %3034 = vmatpush1.bf16.msra.mxu0 0
    %3035 = vmatprep.subr.bf16.mxu0 0
    %3036 = vmatpush1.bf16.msra.mxu0 0
    %3037 = vmatprep.subr.bf16.mxu0 0
    %3038 = vmatpush1.bf16.msra.mxu0 0
    %3039 = vmatprep.subr.bf16.mxu0 0
    %3040 = vmatpush1.bf16.msra.mxu0 0
    %3041 = vmatprep.subr.bf16.mxu0 0
    %3042 = vmatpush1.bf16.msra.mxu0 0
    %3043 = vmatprep.subr.bf16.mxu0 0
    %3044 = vmatpush1.bf16.msra.mxu0 0
    %3045 = vmatprep.subr.bf16.mxu0 0
    %3046 = vmatpush1.bf16.msra.mxu0 0
    %3047 = vmatprep.subr.bf16.mxu0 0
    %3048 = vmatpush1.bf16.msra.mxu0 %v3031
    %3049 = vmatprep.subr.bf16.mxu0 0
    %3050 = vmatpush2.bf16.msra.mxu0 0
    %3051 = vmatprep.subr.bf16.mxu0 0
    %3052 = vmatpush2.bf16.msra.mxu0 0
    %3053 = vmatprep.subr.bf16.mxu0 0
    %3054 = vmatpush2.bf16.msra.mxu0 0
    %3055 = vmatprep.subr.bf16.mxu0 0
    %3056 = vmatpush2.bf16.msra.mxu0 0
    %3057 = vmatprep.subr.bf16.mxu0 0
    %3058 = vmatpush2.bf16.msra.mxu0 0
    %3059 = vmatprep.subr.bf16.mxu0 0
    %3060 = vmatpush2.bf16.msra.mxu0 0
    %3061 = vmatprep.subr.bf16.mxu0 0
    %3062 = vmatpush2.bf16.msra.mxu0 0
    %3063 = vmatprep.subr.bf16.mxu0 0
    %3064 = vmatpush2.bf16.msra.mxu0 0
    %3065 = vmatprep.mubr.bf16.mxu0 0
    %3066 = vmatmul.mubr.bf16.gmra.mxu0 %v3019
    %v3067 = vpop.f32.mrf.mxu0
    %v3068 = vadd.f32 0.0, %v3067
    %v3069 = vpop.f32.mrf.mxu0
    %v3070 = vpop.f32.mrf.mxu0
    %v3071 = vadd.f32 0.0, %v3070
    %v3072 = vpop.f32.mrf.mxu0
    %3073 = vmatprep.mubr.bf16.mxu0 0
    %3074 = vmatmul.mubr.bf16.gmra.mxu0 %v3022
    %v3075 = vpop.f32.mrf.mxu0
    %v3076 = vadd.f32 0.0, %v3075
    %v3077 = vpop.f32.mrf.mxu0
    %v3078 = vpop.f32.mrf.mxu0
    %v3079 = vadd.f32 0.0, %v3078
    %v3080 = vpop.f32.mrf.mxu0
    %3081 = vmatprep.mubr.bf16.mxu0 0
    %3082 = vmatmul.mubr.bf16.gmra.mxu0 %v3025
    %v3083 = vpop.f32.mrf.mxu0
    %v3084 = vadd.f32 0.0, %v3083
    %v3085 = vpop.f32.mrf.mxu0
    %v3086 = vpop.f32.mrf.mxu0
    %v3087 = vadd.f32 0.0, %v3086
    %v3088 = vpop.f32.mrf.mxu0
    %3089 = vmatprep.mubr.bf16.mxu0 0
    %3090 = vmatmul.mubr.bf16.gmra.mxu0 %v3028
    %v3091 = vpop.f32.mrf.mxu0
    %v3092 = vadd.f32 0.0, %v3091
    %v3093 = vpop.f32.mrf.mxu0
    %v3094 = vpop.f32.mrf.mxu0
    %v3095 = vadd.f32 0.0, %v3094
    %v3096 = vpop.f32.mrf.mxu0
    %3097 = vdwg.mxu0
    %3102 = vrot.lane.b32.xlu0 %v2996, 112
    %v3103 = vpop.permute.xlu0 %3102
    %3104 = vrot.lane.b32.xlu0 %v2997, 112
    %v3105 = vpop.permute.xlu0 %3104
    %3106 = vrot.lane.b32.xlu0 %v2998, 112
    %v3107 = vpop.permute.xlu0 %3106
    %3108 = vrot.lane.b32.xlu0 %v2999, 112
    %v3109 = vpop.permute.xlu0 %3108
    %v3111 = vsel %vm1811, %v3103, 0
    %v3114 = vsel %vm1811, %v3105, 0
    %v3117 = vsel %vm1811, %v3107, 0
    %v3120 = vsel %vm1811, %v3109, 0
    %v3123 = vsel %vm1814, %v3000, 0
    %3125 = vmatprep.subr.bf16.mxu0 0
    %3126 = vmatpush1.bf16.msra.mxu0 0
    %3127 = vmatprep.subr.bf16.mxu0 0
    %3128 = vmatpush1.bf16.msra.mxu0 0
    %3129 = vmatprep.subr.bf16.mxu0 0
    %3130 = vmatpush1.bf16.msra.mxu0 0
    %3131 = vmatprep.subr.bf16.mxu0 0
    %3132 = vmatpush1.bf16.msra.mxu0 0
    %3133 = vmatprep.subr.bf16.mxu0 0
    %3134 = vmatpush1.bf16.msra.mxu0 0
    %3135 = vmatprep.subr.bf16.mxu0 0
    %3136 = vmatpush1.bf16.msra.mxu0 0
    %3137 = vmatprep.subr.bf16.mxu0 0
    %3138 = vmatpush1.bf16.msra.mxu0 0
    %3139 = vmatprep.subr.bf16.mxu0 0
    %3140 = vmatpush1.bf16.msra.mxu0 %v3123
    %3141 = vmatprep.subr.bf16.mxu0 0
    %3142 = vmatpush2.bf16.msra.mxu0 0
    %3143 = vmatprep.subr.bf16.mxu0 0
    %3144 = vmatpush2.bf16.msra.mxu0 0
    %3145 = vmatprep.subr.bf16.mxu0 0
    %3146 = vmatpush2.bf16.msra.mxu0 0
    %3147 = vmatprep.subr.bf16.mxu0 0
    %3148 = vmatpush2.bf16.msra.mxu0 0
    %3149 = vmatprep.subr.bf16.mxu0 0
    %3150 = vmatpush2.bf16.msra.mxu0 0
    %3151 = vmatprep.subr.bf16.mxu0 0
    %3152 = vmatpush2.bf16.msra.mxu0 0
    %3153 = vmatprep.subr.bf16.mxu0 0
    %3154 = vmatpush2.bf16.msra.mxu0 0
    %3155 = vmatprep.subr.bf16.mxu0 0
    %3156 = vmatpush2.bf16.msra.mxu0 0
    %3157 = vmatprep.mubr.bf16.mxu0 0
    %3158 = vmatmul.mubr.bf16.gmra.mxu0 %v3111
    %v3159 = vpop.f32.mrf.mxu0
    %v3160 = vadd.f32 %v3068, %v3159
    %v3161 = vpop.f32.mrf.mxu0
    %v3162 = vpop.f32.mrf.mxu0
    %v3163 = vadd.f32 %v3071, %v3162
    %v3164 = vpop.f32.mrf.mxu0
    %3165 = vmatprep.mubr.bf16.mxu0 0
    %3166 = vmatmul.mubr.bf16.gmra.mxu0 %v3114
    %v3167 = vpop.f32.mrf.mxu0
    %v3168 = vadd.f32 %v3076, %v3167
    %v3169 = vpop.f32.mrf.mxu0
    %v3170 = vpop.f32.mrf.mxu0
    %v3171 = vadd.f32 %v3079, %v3170
    %v3172 = vpop.f32.mrf.mxu0
    %3173 = vmatprep.mubr.bf16.mxu0 0
    %3174 = vmatmul.mubr.bf16.gmra.mxu0 %v3117
    %v3175 = vpop.f32.mrf.mxu0
    %v3176 = vadd.f32 %v3084, %v3175
    %v3177 = vpop.f32.mrf.mxu0
    %v3178 = vpop.f32.mrf.mxu0
    %v3179 = vadd.f32 %v3087, %v3178
    %v3180 = vpop.f32.mrf.mxu0
    %3181 = vmatprep.mubr.bf16.mxu0 0
    %3182 = vmatmul.mubr.bf16.gmra.mxu0 %v3120
    %v3183 = vpop.f32.mrf.mxu0
    %v3184 = vadd.f32 %v3092, %v3183
    %v3185 = vpop.f32.mrf.mxu0
    %v3186 = vpop.f32.mrf.mxu0
    %v3187 = vadd.f32 %v3095, %v3186
    %v3188 = vpop.f32.mrf.mxu0
    %3189 = vdwg.mxu0
    %v3190 = vld [vmem:[#allocation2 + $0x98] sm:$0x1]
    %v3191 = vlaneseq
    %v3192 = vshrl.u32 %v3191, 7
    %v3193 = vsub.s32 0, %v3192
    %v3194 = vrot.slane %v3190, %v3193
    %v3195 = vadd.f32 %v3160, %v3194
    %v3196 = vadd.f32 %v3163, %v3194
    %v3197 = vadd.f32 %v3168, %v3194
    %v3198 = vadd.f32 %v3171, %v3194
    %v3199 = vadd.f32 %v3176, %v3194
    %v3200 = vadd.f32 %v3179, %v3194
    %v3201 = vadd.f32 %v3184, %v3194
    %v3202 = vadd.f32 %v3187, %v3194
    %v3203 = vld [vmem:[#allocation2 + $0xa0] sm:$0xf]
    %v3204 = vpack.c.bf16 %v3203, %v3203
    %vm3205 = vcmask 31744
    %v3206 = vsel %vm3205, 0, 0
    %vm3208 = vcmask 1041408
    %v3210 = vsel %vm3208, %v3204, 0
    %3212 = vmatprep.subr.bf16.mxu0 0
    %3213 = vmatpush1.bf16.msra.mxu0 0
    %3214 = vmatprep.subr.bf16.mxu0 0
    %3215 = vmatpush1.bf16.msra.mxu0 0
    %3216 = vmatprep.subr.bf16.mxu0 0
    %3217 = vmatpush1.bf16.msra.mxu0 0
    %3218 = vmatprep.subr.bf16.mxu0 0
    %3219 = vmatpush1.bf16.msra.mxu0 0
    %3220 = vmatprep.subr.bf16.mxu0 0
    %3221 = vmatpush1.bf16.msra.mxu0 0
    %3222 = vmatprep.subr.bf16.mxu0 0
    %3223 = vmatpush1.bf16.msra.mxu0 0
    %3224 = vmatprep.subr.bf16.mxu0 0
    %3225 = vmatpush1.bf16.msra.mxu0 0
    %3226 = vmatprep.subr.bf16.mxu0 0
    %3227 = vmatpush1.bf16.msra.mxu0 %v3210
    %3228 = vmatprep.subr.bf16.mxu0 0
    %3229 = vmatpush2.bf16.msra.mxu0 0
    %3230 = vmatprep.subr.bf16.mxu0 0
    %3231 = vmatpush2.bf16.msra.mxu0 0
    %3232 = vmatprep.subr.bf16.mxu0 0
    %3233 = vmatpush2.bf16.msra.mxu0 0
    %3234 = vmatprep.subr.bf16.mxu0 0
    %3235 = vmatpush2.bf16.msra.mxu0 0
    %3236 = vmatprep.subr.bf16.mxu0 0
    %3237 = vmatpush2.bf16.msra.mxu0 0
    %3238 = vmatprep.subr.bf16.mxu0 0
    %3239 = vmatpush2.bf16.msra.mxu0 0
    %3240 = vmatprep.subr.bf16.mxu0 0
    %3241 = vmatpush2.bf16.msra.mxu0 0
    %3242 = vmatprep.subr.bf16.mxu0 0
    %3243 = vmatpush2.bf16.msra.mxu0 0
    %3244 = vmatprep.mubr.bf16.mxu0 0
    %3245 = vmatmul.mubr.bf16.gmra.mxu0 %v3206
    %v3246 = vpop.f32.mrf.mxu0
    %v3247 = vadd.f32 0.0, %v3246
    %v3248 = vpop.f32.mrf.mxu0
    %v3249 = vpop.f32.mrf.mxu0
    %v3250 = vpop.f32.mrf.mxu0
    %3251 = vdwg.mxu0
    %v3252 = vadd.f32 %v3195, %v3247
    %v3253 = vxor.u32 %v3252, 2147483648
    %v3254 = vmul.f32 %v3253, 1.442695
    %v3255 = vpow.pop %v3254
    %v3256 = vadd.f32 %v3255, 1.0
    %v3257 = vrcp.pop %v3256
    %v3258 = vmul.f32 1.0, %v3257
    %v3259 = vtanh.pop %v3252
    %v3260 = vmul.f32 %v3258, 0.0
    %3262 = vrot.lane.b32.xlu0 %v3259, 116
    %v3263 = vpop.permute.xlu0 %3262
    %v3265 = vmul.f32 %v3258, %v3263
    %3267 = vrot.lane.b32.xlu0 %v3265, 4
    %v3268 = vpop.permute.xlu0 %3267
    %v3270 = vadd.f32 %v3260, %v3268
    %v3271 = vtanh.pop %v3270
    %3273 = vrot.lane.b32.xlu0 %v3271, 4
    %v3274 = vpop.permute.xlu0 %3273
    %v3276 = vmul.f32 %v3258, %v3274
    %3278 = vrot.lane.b32.xlu0 %v3204, 112
    %v3279 = vpop.permute.xlu0 %3278
    %v3281 = vsel %vm3208, %v3279, 0
    %3283 = vmatprep.subr.bf16.mxu0 0
    %3284 = vmatpush1.bf16.msra.mxu0 0
    %3285 = vmatprep.subr.bf16.mxu0 0
    %3286 = vmatpush1.bf16.msra.mxu0 0
    %3287 = vmatprep.subr.bf16.mxu0 0
    %3288 = vmatpush1.bf16.msra.mxu0 0
    %3289 = vmatprep.subr.bf16.mxu0 0
    %3290 = vmatpush1.bf16.msra.mxu0 0
    %3291 = vmatprep.subr.bf16.mxu0 0
    %3292 = vmatpush1.bf16.msra.mxu0 0
    %3293 = vmatprep.subr.bf16.mxu0 0
    %3294 = vmatpush1.bf16.msra.mxu0 0
    %3295 = vmatprep.subr.bf16.mxu0 0
    %3296 = vmatpush1.bf16.msra.mxu0 0
    %3297 = vmatprep.subr.bf16.mxu0 0
    %3298 = vmatpush1.bf16.msra.mxu0 %v3281
    %3299 = vmatprep.subr.bf16.mxu0 0
    %3300 = vmatpush2.bf16.msra.mxu0 0
    %3301 = vmatprep.subr.bf16.mxu0 0
    %3302 = vmatpush2.bf16.msra.mxu0 0
    %3303 = vmatprep.subr.bf16.mxu0 0
    %3304 = vmatpush2.bf16.msra.mxu0 0
    %3305 = vmatprep.subr.bf16.mxu0 0
    %3306 = vmatpush2.bf16.msra.mxu0 0
    %3307 = vmatprep.subr.bf16.mxu0 0
    %3308 = vmatpush2.bf16.msra.mxu0 0
    %3309 = vmatprep.subr.bf16.mxu0 0
    %3310 = vmatpush2.bf16.msra.mxu0 0
    %3311 = vmatprep.subr.bf16.mxu0 0
    %3312 = vmatpush2.bf16.msra.mxu0 0
    %3313 = vmatprep.subr.bf16.mxu0 0
    %3314 = vmatpush2.bf16.msra.mxu0 0
    %3315 = vmatprep.mubr.bf16.mxu0 0
    %3316 = vmatmul.mubr.bf16.gmra.mxu0 %v3206
    %v3317 = vpop.f32.mrf.mxu0
    %v3318 = vadd.f32 0.0, %v3317
    %v3319 = vpop.f32.mrf.mxu0
    %v3320 = vpop.f32.mrf.mxu0
    %v3321 = vpop.f32.mrf.mxu0
    %3322 = vdwg.mxu0
    %3324 = vrot.lane.b32.xlu0 %v3318, 16
    %v3325 = vpop.permute.xlu0 %3324
    %v3327 = vadd.f32 %v3202, %v3325
    %v3328 = vxor.u32 %v3327, 2147483648
    %v3329 = vmul.f32 %v3328, 1.442695
    %v3330 = vpow.pop %v3329
    %v3331 = vadd.f32 %v3330, 1.0
    %v3332 = vrcp.pop %v3331
    %v3333 = vmul.f32 1.0, %v3332
    %v3334 = vtanh.pop %v3327
    %v3335 = vmul.f32 %v3333, 0.0
    %3337 = vrot.lane.b32.xlu0 %v3334, 116
    %v3338 = vpop.permute.xlu0 %3337
    %v3340 = vmul.f32 %v3333, %v3338
    %3342 = vrot.lane.b32.xlu0 %v3340, 4
    %v3343 = vpop.permute.xlu0 %3342
    %v3345 = vadd.f32 %v3335, %v3343
    %v3346 = vtanh.pop %v3345
    %3348 = vrot.lane.b32.xlu0 %v3346, 4
    %v3349 = vpop.permute.xlu0 %3348
    %v3351 = vmul.f32 %v3333, %v3349
    %v3352 = vpack.c.bf16 %v3276, %v3276
    %3354 = vrot.lane.b32.xlu0 %v3352, 120
    %v3355 = vpop.permute.xlu0 %3354
    %v3357 = vsel %vm3205, %v3355, 0
    %3359 = vmatprep.subr.bf16.mxu0 0
    %3360 = vmatpush1.bf16.msra.mxu0 0
    %3361 = vmatprep.subr.bf16.mxu0 0
    %3362 = vmatpush1.bf16.msra.mxu0 0
    %3363 = vmatprep.subr.bf16.mxu0 0
    %3364 = vmatpush1.bf16.msra.mxu0 0
    %3365 = vmatprep.subr.bf16.mxu0 0
    %3366 = vmatpush1.bf16.msra.mxu0 0
    %3367 = vmatprep.subr.bf16.mxu0 0
    %3368 = vmatpush1.bf16.msra.mxu0 0
    %3369 = vmatprep.subr.bf16.mxu0 0
    %3370 = vmatpush1.bf16.msra.mxu0 0
    %3371 = vmatprep.subr.bf16.mxu0 0
    %3372 = vmatpush1.bf16.msra.mxu0 0
    %3373 = vmatprep.subr.bf16.mxu0 0
    %3374 = vmatpush1.bf16.msra.mxu0 %v3210
    %3375 = vmatprep.subr.bf16.mxu0 0
    %3376 = vmatpush2.bf16.msra.mxu0 0
    %3377 = vmatprep.subr.bf16.mxu0 0
    %3378 = vmatpush2.bf16.msra.mxu0 0
    %3379 = vmatprep.subr.bf16.mxu0 0
    %3380 = vmatpush2.bf16.msra.mxu0 0
    %3381 = vmatprep.subr.bf16.mxu0 0
    %3382 = vmatpush2.bf16.msra.mxu0 0
    %3383 = vmatprep.subr.bf16.mxu0 0
    %3384 = vmatpush2.bf16.msra.mxu0 0
    %3385 = vmatprep.subr.bf16.mxu0 0
    %3386 = vmatpush2.bf16.msra.mxu0 0
    %3387 = vmatprep.subr.bf16.mxu0 0
    %3388 = vmatpush2.bf16.msra.mxu0 0
    %3389 = vmatprep.subr.bf16.mxu0 0
    %3390 = vmatpush2.bf16.msra.mxu0 0
    %3391 = vmatprep.mubr.bf16.mxu0 0
    %3392 = vmatmul.mubr.bf16.gmra.mxu0 %v3357
    %v3393 = vpop.f32.mrf.mxu0
    %v3394 = vadd.f32 0.0, %v3393
    %v3395 = vpop.f32.mrf.mxu0
    %v3396 = vpop.f32.mrf.mxu0
    %v3397 = vpop.f32.mrf.mxu0
    %3398 = vdwg.mxu0
    %v3399 = vadd.f32 %v3196, %v3394
    %v3400 = vxor.u32 %v3399, 2147483648
    %v3401 = vmul.f32 %v3400, 1.442695
    %v3402 = vpow.pop %v3401
    %v3403 = vadd.f32 %v3402, 1.0
    %v3404 = vrcp.pop %v3403
    %v3405 = vmul.f32 1.0, %v3404
    %v3406 = vtanh.pop %v3399
    %v3407 = vmul.f32 %v3405, %v3270
    %3409 = vrot.lane.b32.xlu0 %v3406, 116
    %v3410 = vpop.permute.xlu0 %3409
    %v3412 = vmul.f32 %v3405, %v3410
    %3414 = vrot.lane.b32.xlu0 %v3412, 4
    %v3415 = vpop.permute.xlu0 %3414
    %v3417 = vadd.f32 %v3407, %v3415
    %v3418 = vtanh.pop %v3417
    %3420 = vrot.lane.b32.xlu0 %v3418, 4
    %v3421 = vpop.permute.xlu0 %3420
    %v3423 = vmul.f32 %v3405, %v3421
    %v3424 = vpack.c.bf16 %v3351, %v3351
    %3426 = vrot.lane.b32.xlu0 %v3424, 104
    %v3427 = vpop.permute.xlu0 %3426
    %v3429 = vsel %vm3205, %v3427, 0
    %3431 = vmatprep.subr.bf16.mxu0 0
    %3432 = vmatpush1.bf16.msra.mxu0 0
    %3433 = vmatprep.subr.bf16.mxu0 0
    %3434 = vmatpush1.bf16.msra.mxu0 0
    %3435 = vmatprep.subr.bf16.mxu0 0
    %3436 = vmatpush1.bf16.msra.mxu0 0
    %3437 = vmatprep.subr.bf16.mxu0 0
    %3438 = vmatpush1.bf16.msra.mxu0 0
    %3439 = vmatprep.subr.bf16.mxu0 0
    %3440 = vmatpush1.bf16.msra.mxu0 0
    %3441 = vmatprep.subr.bf16.mxu0 0
    %3442 = vmatpush1.bf16.msra.mxu0 0
    %3443 = vmatprep.subr.bf16.mxu0 0
    %3444 = vmatpush1.bf16.msra.mxu0 0
    %3445 = vmatprep.subr.bf16.mxu0 0
    %3446 = vmatpush1.bf16.msra.mxu0 %v3281
    %3447 = vmatprep.subr.bf16.mxu0 0
    %3448 = vmatpush2.bf16.msra.mxu0 0
    %3449 = vmatprep.subr.bf16.mxu0 0
    %3450 = vmatpush2.bf16.msra.mxu0 0
    %3451 = vmatprep.subr.bf16.mxu0 0
    %3452 = vmatpush2.bf16.msra.mxu0 0
    %3453 = vmatprep.subr.bf16.mxu0 0
    %3454 = vmatpush2.bf16.msra.mxu0 0
    %3455 = vmatprep.subr.bf16.mxu0 0
    %3456 = vmatpush2.bf16.msra.mxu0 0
    %3457 = vmatprep.subr.bf16.mxu0 0
    %3458 = vmatpush2.bf16.msra.mxu0 0
    %3459 = vmatprep.subr.bf16.mxu0 0
    %3460 = vmatpush2.bf16.msra.mxu0 0
    %3461 = vmatprep.subr.bf16.mxu0 0
    %3462 = vmatpush2.bf16.msra.mxu0 0
    %3463 = vmatprep.mubr.bf16.mxu0 0
    %3464 = vmatmul.mubr.bf16.gmra.mxu0 %v3429
    %v3465 = vpop.f32.mrf.mxu0
    %v3466 = vadd.f32 0.0, %v3465
    %v3467 = vpop.f32.mrf.mxu0
    %v3468 = vpop.f32.mrf.mxu0
    %v3469 = vpop.f32.mrf.mxu0
    %3470 = vdwg.mxu0
    %3472 = vrot.lane.b32.xlu0 %v3466, 16
    %v3473 = vpop.permute.xlu0 %3472
    %v3475 = vadd.f32 %v3201, %v3473
    %v3476 = vxor.u32 %v3475, 2147483648
    %v3477 = vmul.f32 %v3476, 1.442695
    %v3478 = vpow.pop %v3477
    %v3479 = vadd.f32 %v3478, 1.0
    %v3480 = vrcp.pop %v3479
    %v3481 = vmul.f32 1.0, %v3480
    %v3482 = vtanh.pop %v3475
    %v3483 = vmul.f32 %v3481, %v3345
    %3485 = vrot.lane.b32.xlu0 %v3482, 116
    %v3486 = vpop.permute.xlu0 %3485
    %v3488 = vmul.f32 %v3481, %v3486
    %3490 = vrot.lane.b32.xlu0 %v3488, 4
    %v3491 = vpop.permute.xlu0 %3490
    %v3493 = vadd.f32 %v3483, %v3491
    %v3494 = vtanh.pop %v3493
    %3496 = vrot.lane.b32.xlu0 %v3494, 4
    %v3497 = vpop.permute.xlu0 %3496
    %v3499 = vmul.f32 %v3481, %v3497
    %v3500 = vpack.c.bf16 %v3423, %v3423
    %3502 = vrot.lane.b32.xlu0 %v3500, 120
    %v3503 = vpop.permute.xlu0 %3502
    %v3505 = vsel %vm3205, %v3503, 0
    %3507 = vmatprep.subr.bf16.mxu0 0
    %3508 = vmatpush1.bf16.msra.mxu0 0
    %3509 = vmatprep.subr.bf16.mxu0 0
    %3510 = vmatpush1.bf16.msra.mxu0 0
    %3511 = vmatprep.subr.bf16.mxu0 0
    %3512 = vmatpush1.bf16.msra.mxu0 0
    %3513 = vmatprep.subr.bf16.mxu0 0
    %3514 = vmatpush1.bf16.msra.mxu0 0
    %3515 = vmatprep.subr.bf16.mxu0 0
    %3516 = vmatpush1.bf16.msra.mxu0 0
    %3517 = vmatprep.subr.bf16.mxu0 0
    %3518 = vmatpush1.bf16.msra.mxu0 0
    %3519 = vmatprep.subr.bf16.mxu0 0
    %3520 = vmatpush1.bf16.msra.mxu0 0
    %3521 = vmatprep.subr.bf16.mxu0 0
    %3522 = vmatpush1.bf16.msra.mxu0 %v3210
    %3523 = vmatprep.subr.bf16.mxu0 0
    %3524 = vmatpush2.bf16.msra.mxu0 0
    %3525 = vmatprep.subr.bf16.mxu0 0
    %3526 = vmatpush2.bf16.msra.mxu0 0
    %3527 = vmatprep.subr.bf16.mxu0 0
    %3528 = vmatpush2.bf16.msra.mxu0 0
    %3529 = vmatprep.subr.bf16.mxu0 0
    %3530 = vmatpush2.bf16.msra.mxu0 0
    %3531 = vmatprep.subr.bf16.mxu0 0
    %3532 = vmatpush2.bf16.msra.mxu0 0
    %3533 = vmatprep.subr.bf16.mxu0 0
    %3534 = vmatpush2.bf16.msra.mxu0 0
    %3535 = vmatprep.subr.bf16.mxu0 0
    %3536 = vmatpush2.bf16.msra.mxu0 0
    %3537 = vmatprep.subr.bf16.mxu0 0
    %3538 = vmatpush2.bf16.msra.mxu0 0
    %3539 = vmatprep.mubr.bf16.mxu0 0
    %3540 = vmatmul.mubr.bf16.gmra.mxu0 %v3505
    %v3541 = vpop.f32.mrf.mxu0
    %v3542 = vadd.f32 0.0, %v3541
    %v3543 = vpop.f32.mrf.mxu0
    %v3544 = vpop.f32.mrf.mxu0
    %v3545 = vpop.f32.mrf.mxu0
    %3546 = vdwg.mxu0
    %v3547 = vadd.f32 %v3197, %v3542
    %v3548 = vxor.u32 %v3547, 2147483648
    %v3549 = vmul.f32 %v3548, 1.442695
    %v3550 = vpow.pop %v3549
    %v3551 = vadd.f32 %v3550, 1.0
    %v3552 = vrcp.pop %v3551
    %v3553 = vmul.f32 1.0, %v3552
    %v3554 = vtanh.pop %v3547
    %v3555 = vmul.f32 %v3553, %v3417
    %3557 = vrot.lane.b32.xlu0 %v3554, 116
    %v3558 = vpop.permute.xlu0 %3557
    %v3560 = vmul.f32 %v3553, %v3558
    %3562 = vrot.lane.b32.xlu0 %v3560, 4
    %v3563 = vpop.permute.xlu0 %3562
    %v3565 = vadd.f32 %v3555, %v3563
    %v3566 = vtanh.pop %v3565
    %3568 = vrot.lane.b32.xlu0 %v3566, 4
    %v3569 = vpop.permute.xlu0 %3568
    %v3571 = vmul.f32 %v3553, %v3569
    %v3572 = vpack.c.bf16 %v3499, %v3499
    %3574 = vrot.lane.b32.xlu0 %v3572, 104
    %v3575 = vpop.permute.xlu0 %3574
    %v3577 = vsel %vm3205, %v3575, 0
    %3579 = vmatprep.subr.bf16.mxu0 0
    %3580 = vmatpush1.bf16.msra.mxu0 0
    %3581 = vmatprep.subr.bf16.mxu0 0
    %3582 = vmatpush1.bf16.msra.mxu0 0
    %3583 = vmatprep.subr.bf16.mxu0 0
    %3584 = vmatpush1.bf16.msra.mxu0 0
    %3585 = vmatprep.subr.bf16.mxu0 0
    %3586 = vmatpush1.bf16.msra.mxu0 0
    %3587 = vmatprep.subr.bf16.mxu0 0
    %3588 = vmatpush1.bf16.msra.mxu0 0
    %3589 = vmatprep.subr.bf16.mxu0 0
    %3590 = vmatpush1.bf16.msra.mxu0 0
    %3591 = vmatprep.subr.bf16.mxu0 0
    %3592 = vmatpush1.bf16.msra.mxu0 0
    %3593 = vmatprep.subr.bf16.mxu0 0
    %3594 = vmatpush1.bf16.msra.mxu0 %v3281
    %3595 = vmatprep.subr.bf16.mxu0 0
    %3596 = vmatpush2.bf16.msra.mxu0 0
    %3597 = vmatprep.subr.bf16.mxu0 0
    %3598 = vmatpush2.bf16.msra.mxu0 0
    %3599 = vmatprep.subr.bf16.mxu0 0
    %3600 = vmatpush2.bf16.msra.mxu0 0
    %3601 = vmatprep.subr.bf16.mxu0 0
    %3602 = vmatpush2.bf16.msra.mxu0 0
    %3603 = vmatprep.subr.bf16.mxu0 0
    %3604 = vmatpush2.bf16.msra.mxu0 0
    %3605 = vmatprep.subr.bf16.mxu0 0
    %3606 = vmatpush2.bf16.msra.mxu0 0
    %3607 = vmatprep.subr.bf16.mxu0 0
    %3608 = vmatpush2.bf16.msra.mxu0 0
    %3609 = vmatprep.subr.bf16.mxu0 0
    %3610 = vmatpush2.bf16.msra.mxu0 0
    %3611 = vmatprep.mubr.bf16.mxu0 0
    %3612 = vmatmul.mubr.bf16.gmra.mxu0 %v3577
    %v3613 = vpop.f32.mrf.mxu0
    %v3614 = vadd.f32 0.0, %v3613
    %v3615 = vpop.f32.mrf.mxu0
    %v3616 = vpop.f32.mrf.mxu0
    %v3617 = vpop.f32.mrf.mxu0
    %3618 = vdwg.mxu0
    %3620 = vrot.lane.b32.xlu0 %v3614, 16
    %v3621 = vpop.permute.xlu0 %3620
    %v3623 = vadd.f32 %v3200, %v3621
    %v3624 = vxor.u32 %v3623, 2147483648
    %v3625 = vmul.f32 %v3624, 1.442695
    %v3626 = vpow.pop %v3625
    %v3627 = vadd.f32 %v3626, 1.0
    %v3628 = vrcp.pop %v3627
    %v3629 = vmul.f32 1.0, %v3628
    %v3630 = vtanh.pop %v3623
    %v3631 = vmul.f32 %v3629, %v3493
    %3633 = vrot.lane.b32.xlu0 %v3630, 116
    %v3634 = vpop.permute.xlu0 %3633
    %v3636 = vmul.f32 %v3629, %v3634
    %3638 = vrot.lane.b32.xlu0 %v3636, 4
    %v3639 = vpop.permute.xlu0 %3638
    %v3641 = vadd.f32 %v3631, %v3639
    %v3642 = vtanh.pop %v3641
    %3644 = vrot.lane.b32.xlu0 %v3642, 4
    %v3645 = vpop.permute.xlu0 %3644
    %v3647 = vmul.f32 %v3629, %v3645
    %v3648 = vpack.c.bf16 %v3571, %v3571
    %3650 = vrot.lane.b32.xlu0 %v3648, 120
    %v3651 = vpop.permute.xlu0 %3650
    %v3653 = vsel %vm3205, %v3651, 0
    %3655 = vmatprep.subr.bf16.mxu0 0
    %3656 = vmatpush1.bf16.msra.mxu0 0
    %3657 = vmatprep.subr.bf16.mxu0 0
    %3658 = vmatpush1.bf16.msra.mxu0 0
    %3659 = vmatprep.subr.bf16.mxu0 0
    %3660 = vmatpush1.bf16.msra.mxu0 0
    %3661 = vmatprep.subr.bf16.mxu0 0
    %3662 = vmatpush1.bf16.msra.mxu0 0
    %3663 = vmatprep.subr.bf16.mxu0 0
    %3664 = vmatpush1.bf16.msra.mxu0 0
    %3665 = vmatprep.subr.bf16.mxu0 0
    %3666 = vmatpush1.bf16.msra.mxu0 0
    %3667 = vmatprep.subr.bf16.mxu0 0
    %3668 = vmatpush1.bf16.msra.mxu0 0
    %3669 = vmatprep.subr.bf16.mxu0 0
    %3670 = vmatpush1.bf16.msra.mxu0 %v3210
    %3671 = vmatprep.subr.bf16.mxu0 0
    %3672 = vmatpush2.bf16.msra.mxu0 0
    %3673 = vmatprep.subr.bf16.mxu0 0
    %3674 = vmatpush2.bf16.msra.mxu0 0
    %3675 = vmatprep.subr.bf16.mxu0 0
    %3676 = vmatpush2.bf16.msra.mxu0 0
    %3677 = vmatprep.subr.bf16.mxu0 0
    %3678 = vmatpush2.bf16.msra.mxu0 0
    %3679 = vmatprep.subr.bf16.mxu0 0
    %3680 = vmatpush2.bf16.msra.mxu0 0
    %3681 = vmatprep.subr.bf16.mxu0 0
    %3682 = vmatpush2.bf16.msra.mxu0 0
    %3683 = vmatprep.subr.bf16.mxu0 0
    %3684 = vmatpush2.bf16.msra.mxu0 0
    %3685 = vmatprep.subr.bf16.mxu0 0
    %3686 = vmatpush2.bf16.msra.mxu0 0
    %3687 = vmatprep.mubr.bf16.mxu0 0
    %3688 = vmatmul.mubr.bf16.gmra.mxu0 %v3653
    %v3689 = vpop.f32.mrf.mxu0
    %v3690 = vadd.f32 0.0, %v3689
    %v3691 = vpop.f32.mrf.mxu0
    %v3692 = vpop.f32.mrf.mxu0
    %v3693 = vpop.f32.mrf.mxu0
    %3694 = vdwg.mxu0
    %v3695 = vadd.f32 %v3198, %v3690
    %v3696 = vxor.u32 %v3695, 2147483648
    %v3697 = vmul.f32 %v3696, 1.442695
    %v3698 = vpow.pop %v3697
    %v3699 = vadd.f32 %v3698, 1.0
    %v3700 = vrcp.pop %v3699
    %v3701 = vmul.f32 1.0, %v3700
    %v3702 = vtanh.pop %v3695
    %v3703 = vmul.f32 %v3701, %v3565
    %3705 = vrot.lane.b32.xlu0 %v3702, 116
    %v3706 = vpop.permute.xlu0 %3705
    %v3708 = vmul.f32 %v3701, %v3706
    %3710 = vrot.lane.b32.xlu0 %v3708, 4
    %v3711 = vpop.permute.xlu0 %3710
    %v3713 = vadd.f32 %v3703, %v3711
    %v3714 = vtanh.pop %v3713
    %3716 = vrot.lane.b32.xlu0 %v3714, 4
    %v3717 = vpop.permute.xlu0 %3716
    %v3719 = vmul.f32 %v3701, %v3717
    %v3720 = vpack.c.bf16 %v3647, %v3647
    %3722 = vrot.lane.b32.xlu0 %v3720, 104
    %v3723 = vpop.permute.xlu0 %3722
    %v3725 = vsel %vm3205, %v3723, 0
    %3727 = vmatprep.subr.bf16.mxu0 0
    %3728 = vmatpush1.bf16.msra.mxu0 0
    %3729 = vmatprep.subr.bf16.mxu0 0
    %3730 = vmatpush1.bf16.msra.mxu0 0
    %3731 = vmatprep.subr.bf16.mxu0 0
    %3732 = vmatpush1.bf16.msra.mxu0 0
    %3733 = vmatprep.subr.bf16.mxu0 0
    %3734 = vmatpush1.bf16.msra.mxu0 0
    %3735 = vmatprep.subr.bf16.mxu0 0
    %3736 = vmatpush1.bf16.msra.mxu0 0
    %3737 = vmatprep.subr.bf16.mxu0 0
    %3738 = vmatpush1.bf16.msra.mxu0 0
    %3739 = vmatprep.subr.bf16.mxu0 0
    %3740 = vmatpush1.bf16.msra.mxu0 0
    %3741 = vmatprep.subr.bf16.mxu0 0
    %3742 = vmatpush1.bf16.msra.mxu0 %v3281
    %3743 = vmatprep.subr.bf16.mxu0 0
    %3744 = vmatpush2.bf16.msra.mxu0 0
    %3745 = vmatprep.subr.bf16.mxu0 0
    %3746 = vmatpush2.bf16.msra.mxu0 0
    %3747 = vmatprep.subr.bf16.mxu0 0
    %3748 = vmatpush2.bf16.msra.mxu0 0
    %3749 = vmatprep.subr.bf16.mxu0 0
    %3750 = vmatpush2.bf16.msra.mxu0 0
    %3751 = vmatprep.subr.bf16.mxu0 0
    %3752 = vmatpush2.bf16.msra.mxu0 0
    %3753 = vmatprep.subr.bf16.mxu0 0
    %3754 = vmatpush2.bf16.msra.mxu0 0
    %3755 = vmatprep.subr.bf16.mxu0 0
    %3756 = vmatpush2.bf16.msra.mxu0 0
    %3757 = vmatprep.subr.bf16.mxu0 0
    %3758 = vmatpush2.bf16.msra.mxu0 0
    %3759 = vmatprep.mubr.bf16.mxu0 0
    %3760 = vmatmul.mubr.bf16.gmra.mxu0 %v3725
    %v3761 = vpop.f32.mrf.mxu0
    %v3762 = vadd.f32 0.0, %v3761
    %v3763 = vpop.f32.mrf.mxu0
    %v3764 = vpop.f32.mrf.mxu0
    %v3765 = vpop.f32.mrf.mxu0
    %3766 = vdwg.mxu0
    %3768 = vrot.lane.b32.xlu0 %v3762, 16
    %v3769 = vpop.permute.xlu0 %3768
    %v3771 = vadd.f32 %v3199, %v3769
    %v3772 = vxor.u32 %v3771, 2147483648
    %v3773 = vmul.f32 %v3772, 1.442695
    %v3774 = vpow.pop %v3773
    %v3775 = vadd.f32 %v3774, 1.0
    %v3776 = vrcp.pop %v3775
    %v3777 = vmul.f32 1.0, %v3776
    %v3778 = vtanh.pop %v3771
    %v3779 = vmul.f32 %v3777, %v3641
    %3781 = vrot.lane.b32.xlu0 %v3778, 116
    %v3782 = vpop.permute.xlu0 %3781
    %v3784 = vmul.f32 %v3777, %v3782
    %3786 = vrot.lane.b32.xlu0 %v3784, 4
    %v3787 = vpop.permute.xlu0 %3786
    %v3789 = vadd.f32 %v3779, %v3787
    %v3790 = vtanh.pop %v3789
    %3792 = vrot.lane.b32.xlu0 %v3790, 4
    %v3793 = vpop.permute.xlu0 %3792
    %v3795 = vmul.f32 %v3777, %v3793
    %v3796 = vpack.c.bf16 %v3719, %v3719
    %3798 = vrot.lane.b32.xlu0 %v3796, 120
    %v3799 = vpop.permute.xlu0 %3798
    %v3801 = vsel %vm3205, %v3799, 0
    %3803 = vmatprep.subr.bf16.mxu0 0
    %3804 = vmatpush1.bf16.msra.mxu0 0
    %3805 = vmatprep.subr.bf16.mxu0 0
    %3806 = vmatpush1.bf16.msra.mxu0 0
    %3807 = vmatprep.subr.bf16.mxu0 0
    %3808 = vmatpush1.bf16.msra.mxu0 0
    %3809 = vmatprep.subr.bf16.mxu0 0
    %3810 = vmatpush1.bf16.msra.mxu0 0
    %3811 = vmatprep.subr.bf16.mxu0 0
    %3812 = vmatpush1.bf16.msra.mxu0 0
    %3813 = vmatprep.subr.bf16.mxu0 0
    %3814 = vmatpush1.bf16.msra.mxu0 0
    %3815 = vmatprep.subr.bf16.mxu0 0
    %3816 = vmatpush1.bf16.msra.mxu0 0
    %3817 = vmatprep.subr.bf16.mxu0 0
    %3818 = vmatpush1.bf16.msra.mxu0 %v3210
    %3819 = vmatprep.subr.bf16.mxu0 0
    %3820 = vmatpush2.bf16.msra.mxu0 0
    %3821 = vmatprep.subr.bf16.mxu0 0
    %3822 = vmatpush2.bf16.msra.mxu0 0
    %3823 = vmatprep.subr.bf16.mxu0 0
    %3824 = vmatpush2.bf16.msra.mxu0 0
    %3825 = vmatprep.subr.bf16.mxu0 0
    %3826 = vmatpush2.bf16.msra.mxu0 0
    %3827 = vmatprep.subr.bf16.mxu0 0
    %3828 = vmatpush2.bf16.msra.mxu0 0
    %3829 = vmatprep.subr.bf16.mxu0 0
    %3830 = vmatpush2.bf16.msra.mxu0 0
    %3831 = vmatprep.subr.bf16.mxu0 0
    %3832 = vmatpush2.bf16.msra.mxu0 0
    %3833 = vmatprep.subr.bf16.mxu0 0
    %3834 = vmatpush2.bf16.msra.mxu0 0
    %3835 = vmatprep.mubr.bf16.mxu0 0
    %3836 = vmatmul.mubr.bf16.gmra.mxu0 %v3801
    %v3837 = vpop.f32.mrf.mxu0
    %v3838 = vadd.f32 0.0, %v3837
    %v3839 = vpop.f32.mrf.mxu0
    %v3840 = vpop.f32.mrf.mxu0
    %v3841 = vpop.f32.mrf.mxu0
    %3842 = vdwg.mxu0
    %v3843 = vadd.f32 %v3199, %v3838
    %v3844 = vxor.u32 %v3843, 2147483648
    %v3845 = vmul.f32 %v3844, 1.442695
    %v3846 = vpow.pop %v3845
    %v3847 = vadd.f32 %v3846, 1.0
    %v3848 = vrcp.pop %v3847
    %v3849 = vmul.f32 1.0, %v3848
    %v3850 = vtanh.pop %v3843
    %v3851 = vmul.f32 %v3849, %v3713
    %3853 = vrot.lane.b32.xlu0 %v3850, 116
    %v3854 = vpop.permute.xlu0 %3853
    %v3856 = vmul.f32 %v3849, %v3854
    %3858 = vrot.lane.b32.xlu0 %v3856, 4
    %v3859 = vpop.permute.xlu0 %3858
    %v3861 = vadd.f32 %v3851, %v3859
    %v3862 = vtanh.pop %v3861
    %3864 = vrot.lane.b32.xlu0 %v3862, 4
    %v3865 = vpop.permute.xlu0 %3864
    %v3867 = vmul.f32 %v3849, %v3865
    %v3868 = vpack.c.bf16 %v3795, %v3795
    %3870 = vrot.lane.b32.xlu0 %v3868, 104
    %v3871 = vpop.permute.xlu0 %3870
    %v3873 = vsel %vm3205, %v3871, 0
    %3875 = vmatprep.subr.bf16.mxu0 0
    %3876 = vmatpush1.bf16.msra.mxu0 0
    %3877 = vmatprep.subr.bf16.mxu0 0
    %3878 = vmatpush1.bf16.msra.mxu0 0
    %3879 = vmatprep.subr.bf16.mxu0 0
    %3880 = vmatpush1.bf16.msra.mxu0 0
    %3881 = vmatprep.subr.bf16.mxu0 0
    %3882 = vmatpush1.bf16.msra.mxu0 0
    %3883 = vmatprep.subr.bf16.mxu0 0
    %3884 = vmatpush1.bf16.msra.mxu0 0
    %3885 = vmatprep.subr.bf16.mxu0 0
    %3886 = vmatpush1.bf16.msra.mxu0 0
    %3887 = vmatprep.subr.bf16.mxu0 0
    %3888 = vmatpush1.bf16.msra.mxu0 0
    %3889 = vmatprep.subr.bf16.mxu0 0
    %3890 = vmatpush1.bf16.msra.mxu0 %v3281
    %3891 = vmatprep.subr.bf16.mxu0 0
    %3892 = vmatpush2.bf16.msra.mxu0 0
    %3893 = vmatprep.subr.bf16.mxu0 0
    %3894 = vmatpush2.bf16.msra.mxu0 0
    %3895 = vmatprep.subr.bf16.mxu0 0
    %3896 = vmatpush2.bf16.msra.mxu0 0
    %3897 = vmatprep.subr.bf16.mxu0 0
    %3898 = vmatpush2.bf16.msra.mxu0 0
    %3899 = vmatprep.subr.bf16.mxu0 0
    %3900 = vmatpush2.bf16.msra.mxu0 0
    %3901 = vmatprep.subr.bf16.mxu0 0
    %3902 = vmatpush2.bf16.msra.mxu0 0
    %3903 = vmatprep.subr.bf16.mxu0 0
    %3904 = vmatpush2.bf16.msra.mxu0 0
    %3905 = vmatprep.subr.bf16.mxu0 0
    %3906 = vmatpush2.bf16.msra.mxu0 0
    %3907 = vmatprep.mubr.bf16.mxu0 0
    %3908 = vmatmul.mubr.bf16.gmra.mxu0 %v3873
    %v3909 = vpop.f32.mrf.mxu0
    %v3910 = vadd.f32 0.0, %v3909
    %v3911 = vpop.f32.mrf.mxu0
    %v3912 = vpop.f32.mrf.mxu0
    %v3913 = vpop.f32.mrf.mxu0
    %3914 = vdwg.mxu0
    %3916 = vrot.lane.b32.xlu0 %v3910, 16
    %v3917 = vpop.permute.xlu0 %3916
    %v3919 = vadd.f32 %v3198, %v3917
    %v3920 = vxor.u32 %v3919, 2147483648
    %v3921 = vmul.f32 %v3920, 1.442695
    %v3922 = vpow.pop %v3921
    %v3923 = vadd.f32 %v3922, 1.0
    %v3924 = vrcp.pop %v3923
    %v3925 = vmul.f32 1.0, %v3924
    %v3926 = vtanh.pop %v3919
    %v3927 = vmul.f32 %v3925, %v3789
    %3929 = vrot.lane.b32.xlu0 %v3926, 116
    %v3930 = vpop.permute.xlu0 %3929
    %v3932 = vmul.f32 %v3925, %v3930
    %3934 = vrot.lane.b32.xlu0 %v3932, 4
    %v3935 = vpop.permute.xlu0 %3934
    %v3937 = vadd.f32 %v3927, %v3935
    %v3938 = vtanh.pop %v3937
    %3940 = vrot.lane.b32.xlu0 %v3938, 4
    %v3941 = vpop.permute.xlu0 %3940
    %v3943 = vmul.f32 %v3925, %v3941
    %v3944 = vpack.c.bf16 %v3867, %v3867
    %3946 = vrot.lane.b32.xlu0 %v3944, 120
    %v3947 = vpop.permute.xlu0 %3946
    %v3949 = vsel %vm3205, %v3947, 0
    %3951 = vmatprep.subr.bf16.mxu0 0
    %3952 = vmatpush1.bf16.msra.mxu0 0
    %3953 = vmatprep.subr.bf16.mxu0 0
    %3954 = vmatpush1.bf16.msra.mxu0 0
    %3955 = vmatprep.subr.bf16.mxu0 0
    %3956 = vmatpush1.bf16.msra.mxu0 0
    %3957 = vmatprep.subr.bf16.mxu0 0
    %3958 = vmatpush1.bf16.msra.mxu0 0
    %3959 = vmatprep.subr.bf16.mxu0 0
    %3960 = vmatpush1.bf16.msra.mxu0 0
    %3961 = vmatprep.subr.bf16.mxu0 0
    %3962 = vmatpush1.bf16.msra.mxu0 0
    %3963 = vmatprep.subr.bf16.mxu0 0
    %3964 = vmatpush1.bf16.msra.mxu0 0
    %3965 = vmatprep.subr.bf16.mxu0 0
    %3966 = vmatpush1.bf16.msra.mxu0 %v3210
    %3967 = vmatprep.subr.bf16.mxu0 0
    %3968 = vmatpush2.bf16.msra.mxu0 0
    %3969 = vmatprep.subr.bf16.mxu0 0
    %3970 = vmatpush2.bf16.msra.mxu0 0
    %3971 = vmatprep.subr.bf16.mxu0 0
    %3972 = vmatpush2.bf16.msra.mxu0 0
    %3973 = vmatprep.subr.bf16.mxu0 0
    %3974 = vmatpush2.bf16.msra.mxu0 0
    %3975 = vmatprep.subr.bf16.mxu0 0
    %3976 = vmatpush2.bf16.msra.mxu0 0
    %3977 = vmatprep.subr.bf16.mxu0 0
    %3978 = vmatpush2.bf16.msra.mxu0 0
    %3979 = vmatprep.subr.bf16.mxu0 0
    %3980 = vmatpush2.bf16.msra.mxu0 0
    %3981 = vmatprep.subr.bf16.mxu0 0
    %3982 = vmatpush2.bf16.msra.mxu0 0
    %3983 = vmatprep.mubr.bf16.mxu0 0
    %3984 = vmatmul.mubr.bf16.gmra.mxu0 %v3949
    %v3985 = vpop.f32.mrf.mxu0
    %v3986 = vadd.f32 0.0, %v3985
    %v3987 = vpop.f32.mrf.mxu0
    %v3988 = vpop.f32.mrf.mxu0
    %v3989 = vpop.f32.mrf.mxu0
    %3990 = vdwg.mxu0
    %v3991 = vadd.f32 %v3200, %v3986
    %v3992 = vxor.u32 %v3991, 2147483648
    %v3993 = vmul.f32 %v3992, 1.442695
    %v3994 = vpow.pop %v3993
    %v3995 = vadd.f32 %v3994, 1.0
    %v3996 = vrcp.pop %v3995
    %v3997 = vmul.f32 1.0, %v3996
    %v3998 = vtanh.pop %v3991
    %v3999 = vmul.f32 %v3997, %v3861
    %4001 = vrot.lane.b32.xlu0 %v3998, 116
    %v4002 = vpop.permute.xlu0 %4001
    %v4004 = vmul.f32 %v3997, %v4002
    %4006 = vrot.lane.b32.xlu0 %v4004, 4
    %v4007 = vpop.permute.xlu0 %4006
    %v4009 = vadd.f32 %v3999, %v4007
    %v4010 = vtanh.pop %v4009
    %4012 = vrot.lane.b32.xlu0 %v4010, 4
    %v4013 = vpop.permute.xlu0 %4012
    %v4015 = vmul.f32 %v3997, %v4013
    %v4016 = vpack.c.bf16 %v3943, %v3943
    %4018 = vrot.lane.b32.xlu0 %v4016, 104
    %v4019 = vpop.permute.xlu0 %4018
    %v4021 = vsel %vm3205, %v4019, 0
    %4023 = vmatprep.subr.bf16.mxu0 0
    %4024 = vmatpush1.bf16.msra.mxu0 0
    %4025 = vmatprep.subr.bf16.mxu0 0
    %4026 = vmatpush1.bf16.msra.mxu0 0
    %4027 = vmatprep.subr.bf16.mxu0 0
    %4028 = vmatpush1.bf16.msra.mxu0 0
    %4029 = vmatprep.subr.bf16.mxu0 0
    %4030 = vmatpush1.bf16.msra.mxu0 0
    %4031 = vmatprep.subr.bf16.mxu0 0
    %4032 = vmatpush1.bf16.msra.mxu0 0
    %4033 = vmatprep.subr.bf16.mxu0 0
    %4034 = vmatpush1.bf16.msra.mxu0 0
    %4035 = vmatprep.subr.bf16.mxu0 0
    %4036 = vmatpush1.bf16.msra.mxu0 0
    %4037 = vmatprep.subr.bf16.mxu0 0
    %4038 = vmatpush1.bf16.msra.mxu0 %v3281
    %4039 = vmatprep.subr.bf16.mxu0 0
    %4040 = vmatpush2.bf16.msra.mxu0 0
    %4041 = vmatprep.subr.bf16.mxu0 0
    %4042 = vmatpush2.bf16.msra.mxu0 0
    %4043 = vmatprep.subr.bf16.mxu0 0
    %4044 = vmatpush2.bf16.msra.mxu0 0
    %4045 = vmatprep.subr.bf16.mxu0 0
    %4046 = vmatpush2.bf16.msra.mxu0 0
    %4047 = vmatprep.subr.bf16.mxu0 0
    %4048 = vmatpush2.bf16.msra.mxu0 0
    %4049 = vmatprep.subr.bf16.mxu0 0
    %4050 = vmatpush2.bf16.msra.mxu0 0
    %4051 = vmatprep.subr.bf16.mxu0 0
    %4052 = vmatpush2.bf16.msra.mxu0 0
    %4053 = vmatprep.subr.bf16.mxu0 0
    %4054 = vmatpush2.bf16.msra.mxu0 0
    %4055 = vmatprep.mubr.bf16.mxu0 0
    %4056 = vmatmul.mubr.bf16.gmra.mxu0 %v4021
    %v4057 = vpop.f32.mrf.mxu0
    %v4058 = vadd.f32 0.0, %v4057
    %v4059 = vpop.f32.mrf.mxu0
    %v4060 = vpop.f32.mrf.mxu0
    %v4061 = vpop.f32.mrf.mxu0
    %4062 = vdwg.mxu0
    %4064 = vrot.lane.b32.xlu0 %v4058, 16
    %v4065 = vpop.permute.xlu0 %4064
    %v4067 = vadd.f32 %v3197, %v4065
    %v4068 = vxor.u32 %v4067, 2147483648
    %v4069 = vmul.f32 %v4068, 1.442695
    %v4070 = vpow.pop %v4069
    %v4071 = vadd.f32 %v4070, 1.0
    %v4072 = vrcp.pop %v4071
    %v4073 = vmul.f32 1.0, %v4072
    %v4074 = vtanh.pop %v4067
    %v4075 = vmul.f32 %v4073, %v3937
    %4077 = vrot.lane.b32.xlu0 %v4074, 116
    %v4078 = vpop.permute.xlu0 %4077
    %v4080 = vmul.f32 %v4073, %v4078
    %4082 = vrot.lane.b32.xlu0 %v4080, 4
    %v4083 = vpop.permute.xlu0 %4082
    %v4085 = vadd.f32 %v4075, %v4083
    %v4086 = vtanh.pop %v4085
    %4088 = vrot.lane.b32.xlu0 %v4086, 4
    %v4089 = vpop.permute.xlu0 %4088
    %v4091 = vmul.f32 %v4073, %v4089
    %v4092 = vpack.c.bf16 %v4015, %v4015
    %4094 = vrot.lane.b32.xlu0 %v4092, 120
    %v4095 = vpop.permute.xlu0 %4094
    %v4097 = vsel %vm3205, %v4095, 0
    %4099 = vmatprep.subr.bf16.mxu0 0
    %4100 = vmatpush1.bf16.msra.mxu0 0
    %4101 = vmatprep.subr.bf16.mxu0 0
    %4102 = vmatpush1.bf16.msra.mxu0 0
    %4103 = vmatprep.subr.bf16.mxu0 0
    %4104 = vmatpush1.bf16.msra.mxu0 0
    %4105 = vmatprep.subr.bf16.mxu0 0
    %4106 = vmatpush1.bf16.msra.mxu0 0
    %4107 = vmatprep.subr.bf16.mxu0 0
    %4108 = vmatpush1.bf16.msra.mxu0 0
    %4109 = vmatprep.subr.bf16.mxu0 0
    %4110 = vmatpush1.bf16.msra.mxu0 0
    %4111 = vmatprep.subr.bf16.mxu0 0
    %4112 = vmatpush1.bf16.msra.mxu0 0
    %4113 = vmatprep.subr.bf16.mxu0 0
    %4114 = vmatpush1.bf16.msra.mxu0 %v3210
    %4115 = vmatprep.subr.bf16.mxu0 0
    %4116 = vmatpush2.bf16.msra.mxu0 0
    %4117 = vmatprep.subr.bf16.mxu0 0
    %4118 = vmatpush2.bf16.msra.mxu0 0
    %4119 = vmatprep.subr.bf16.mxu0 0
    %4120 = vmatpush2.bf16.msra.mxu0 0
    %4121 = vmatprep.subr.bf16.mxu0 0
    %4122 = vmatpush2.bf16.msra.mxu0 0
    %4123 = vmatprep.subr.bf16.mxu0 0
    %4124 = vmatpush2.bf16.msra.mxu0 0
    %4125 = vmatprep.subr.bf16.mxu0 0
    %4126 = vmatpush2.bf16.msra.mxu0 0
    %4127 = vmatprep.subr.bf16.mxu0 0
    %4128 = vmatpush2.bf16.msra.mxu0 0
    %4129 = vmatprep.subr.bf16.mxu0 0
    %4130 = vmatpush2.bf16.msra.mxu0 0
    %4131 = vmatprep.mubr.bf16.mxu0 0
    %4132 = vmatmul.mubr.bf16.gmra.mxu0 %v4097
    %v4133 = vpop.f32.mrf.mxu0
    %v4134 = vadd.f32 0.0, %v4133
    %v4135 = vpop.f32.mrf.mxu0
    %v4136 = vpop.f32.mrf.mxu0
    %v4137 = vpop.f32.mrf.mxu0
    %4138 = vdwg.mxu0
    %v4139 = vadd.f32 %v3201, %v4134
    %v4140 = vxor.u32 %v4139, 2147483648
    %v4141 = vmul.f32 %v4140, 1.442695
    %v4142 = vpow.pop %v4141
    %v4143 = vadd.f32 %v4142, 1.0
    %v4144 = vrcp.pop %v4143
    %v4145 = vmul.f32 1.0, %v4144
    %v4146 = vtanh.pop %v4139
    %v4147 = vmul.f32 %v4145, %v4009
    %4149 = vrot.lane.b32.xlu0 %v4146, 116
    %v4150 = vpop.permute.xlu0 %4149
    %v4152 = vmul.f32 %v4145, %v4150
    %4154 = vrot.lane.b32.xlu0 %v4152, 4
    %v4155 = vpop.permute.xlu0 %4154
    %v4157 = vadd.f32 %v4147, %v4155
    %v4158 = vtanh.pop %v4157
    %4160 = vrot.lane.b32.xlu0 %v4158, 4
    %v4161 = vpop.permute.xlu0 %4160
    %v4163 = vmul.f32 %v4145, %v4161
    %v4164 = vpack.c.bf16 %v4091, %v4091
    %4166 = vrot.lane.b32.xlu0 %v4164, 104
    %v4167 = vpop.permute.xlu0 %4166
    %v4169 = vsel %vm3205, %v4167, 0
    %4171 = vmatprep.subr.bf16.mxu0 0
    %4172 = vmatpush1.bf16.msra.mxu0 0
    %4173 = vmatprep.subr.bf16.mxu0 0
    %4174 = vmatpush1.bf16.msra.mxu0 0
    %4175 = vmatprep.subr.bf16.mxu0 0
    %4176 = vmatpush1.bf16.msra.mxu0 0
    %4177 = vmatprep.subr.bf16.mxu0 0
    %4178 = vmatpush1.bf16.msra.mxu0 0
    %4179 = vmatprep.subr.bf16.mxu0 0
    %4180 = vmatpush1.bf16.msra.mxu0 0
    %4181 = vmatprep.subr.bf16.mxu0 0
    %4182 = vmatpush1.bf16.msra.mxu0 0
    %4183 = vmatprep.subr.bf16.mxu0 0
    %4184 = vmatpush1.bf16.msra.mxu0 0
    %4185 = vmatprep.subr.bf16.mxu0 0
    %4186 = vmatpush1.bf16.msra.mxu0 %v3281
    %4187 = vmatprep.subr.bf16.mxu0 0
    %4188 = vmatpush2.bf16.msra.mxu0 0
    %4189 = vmatprep.subr.bf16.mxu0 0
    %4190 = vmatpush2.bf16.msra.mxu0 0
    %4191 = vmatprep.subr.bf16.mxu0 0
    %4192 = vmatpush2.bf16.msra.mxu0 0
    %4193 = vmatprep.subr.bf16.mxu0 0
    %4194 = vmatpush2.bf16.msra.mxu0 0
    %4195 = vmatprep.subr.bf16.mxu0 0
    %4196 = vmatpush2.bf16.msra.mxu0 0
    %4197 = vmatprep.subr.bf16.mxu0 0
    %4198 = vmatpush2.bf16.msra.mxu0 0
    %4199 = vmatprep.subr.bf16.mxu0 0
    %4200 = vmatpush2.bf16.msra.mxu0 0
    %4201 = vmatprep.subr.bf16.mxu0 0
    %4202 = vmatpush2.bf16.msra.mxu0 0
    %4203 = vmatprep.mubr.bf16.mxu0 0
    %4204 = vmatmul.mubr.bf16.gmra.mxu0 %v4169
    %v4205 = vpop.f32.mrf.mxu0
    %v4206 = vadd.f32 0.0, %v4205
    %v4207 = vpop.f32.mrf.mxu0
    %v4208 = vpop.f32.mrf.mxu0
    %v4209 = vpop.f32.mrf.mxu0
    %4210 = vdwg.mxu0
    %4212 = vrot.lane.b32.xlu0 %v4206, 16
    %v4213 = vpop.permute.xlu0 %4212
    %v4215 = vadd.f32 %v3196, %v4213
    %v4216 = vxor.u32 %v4215, 2147483648
    %v4217 = vmul.f32 %v4216, 1.442695
    %v4218 = vpow.pop %v4217
    %v4219 = vadd.f32 %v4218, 1.0
    %v4220 = vrcp.pop %v4219
    %v4221 = vmul.f32 1.0, %v4220
    %v4222 = vtanh.pop %v4215
    %v4223 = vmul.f32 %v4221, %v4085
    %4225 = vrot.lane.b32.xlu0 %v4222, 116
    %v4226 = vpop.permute.xlu0 %4225
    %v4228 = vmul.f32 %v4221, %v4226
    %4230 = vrot.lane.b32.xlu0 %v4228, 4
    %v4231 = vpop.permute.xlu0 %4230
    %v4233 = vadd.f32 %v4223, %v4231
    %v4234 = vtanh.pop %v4233
    %4236 = vrot.lane.b32.xlu0 %v4234, 4
    %v4237 = vpop.permute.xlu0 %4236
    %v4239 = vmul.f32 %v4221, %v4237
    %v4240 = vpack.c.bf16 %v4163, %v4163
    %4242 = vrot.lane.b32.xlu0 %v4240, 120
    %v4243 = vpop.permute.xlu0 %4242
    %v4245 = vsel %vm3205, %v4243, 0
    %4247 = vmatprep.subr.bf16.mxu0 0
    %4248 = vmatpush1.bf16.msra.mxu0 0
    %4249 = vmatprep.subr.bf16.mxu0 0
    %4250 = vmatpush1.bf16.msra.mxu0 0
    %4251 = vmatprep.subr.bf16.mxu0 0
    %4252 = vmatpush1.bf16.msra.mxu0 0
    %4253 = vmatprep.subr.bf16.mxu0 0
    %4254 = vmatpush1.bf16.msra.mxu0 0
    %4255 = vmatprep.subr.bf16.mxu0 0
    %4256 = vmatpush1.bf16.msra.mxu0 0
    %4257 = vmatprep.subr.bf16.mxu0 0
    %4258 = vmatpush1.bf16.msra.mxu0 0
    %4259 = vmatprep.subr.bf16.mxu0 0
    %4260 = vmatpush1.bf16.msra.mxu0 0
    %4261 = vmatprep.subr.bf16.mxu0 0
    %4262 = vmatpush1.bf16.msra.mxu0 %v3210
    %4263 = vmatprep.subr.bf16.mxu0 0
    %4264 = vmatpush2.bf16.msra.mxu0 0
    %4265 = vmatprep.subr.bf16.mxu0 0
    %4266 = vmatpush2.bf16.msra.mxu0 0
    %4267 = vmatprep.subr.bf16.mxu0 0
    %4268 = vmatpush2.bf16.msra.mxu0 0
    %4269 = vmatprep.subr.bf16.mxu0 0
    %4270 = vmatpush2.bf16.msra.mxu0 0
    %4271 = vmatprep.subr.bf16.mxu0 0
    %4272 = vmatpush2.bf16.msra.mxu0 0
    %4273 = vmatprep.subr.bf16.mxu0 0
    %4274 = vmatpush2.bf16.msra.mxu0 0
    %4275 = vmatprep.subr.bf16.mxu0 0
    %4276 = vmatpush2.bf16.msra.mxu0 0
    %4277 = vmatprep.subr.bf16.mxu0 0
    %4278 = vmatpush2.bf16.msra.mxu0 0
    %4279 = vmatprep.mubr.bf16.mxu0 0
    %4280 = vmatmul.mubr.bf16.gmra.mxu0 %v4245
    %v4281 = vpop.f32.mrf.mxu0
    %v4282 = vadd.f32 0.0, %v4281
    %v4283 = vpop.f32.mrf.mxu0
    %v4284 = vpop.f32.mrf.mxu0
    %v4285 = vpop.f32.mrf.mxu0
    %4286 = vdwg.mxu0
    %v4287 = vadd.f32 %v3202, %v4282
    %v4288 = vxor.u32 %v4287, 2147483648
    %v4289 = vmul.f32 %v4288, 1.442695
    %v4290 = vpow.pop %v4289
    %v4291 = vadd.f32 %v4290, 1.0
    %v4292 = vrcp.pop %v4291
    %v4293 = vmul.f32 1.0, %v4292
    %v4294 = vtanh.pop %v4287
    %v4295 = vmul.f32 %v4293, %v4157
    %4297 = vrot.lane.b32.xlu0 %v4294, 116
    %v4298 = vpop.permute.xlu0 %4297
    %v4300 = vmul.f32 %v4293, %v4298
    %4302 = vrot.lane.b32.xlu0 %v4300, 4
    %v4303 = vpop.permute.xlu0 %4302
    %v4305 = vadd.f32 %v4295, %v4303
    %v4306 = vtanh.pop %v4305
    %4308 = vrot.lane.b32.xlu0 %v4306, 4
    %v4309 = vpop.permute.xlu0 %4308
    %v4311 = vmul.f32 %v4293, %v4309
    %v4312 = vpack.c.bf16 %v4239, %v4239
    %4314 = vrot.lane.b32.xlu0 %v4312, 104
    %v4315 = vpop.permute.xlu0 %4314
    %v4317 = vsel %vm3205, %v4315, 0
    %4319 = vmatprep.subr.bf16.mxu0 0
    %4320 = vmatpush1.bf16.msra.mxu0 0
    %4321 = vmatprep.subr.bf16.mxu0 0
    %4322 = vmatpush1.bf16.msra.mxu0 0
    %4323 = vmatprep.subr.bf16.mxu0 0
    %4324 = vmatpush1.bf16.msra.mxu0 0
    %4325 = vmatprep.subr.bf16.mxu0 0
    %4326 = vmatpush1.bf16.msra.mxu0 0
    %4327 = vmatprep.subr.bf16.mxu0 0
    %4328 = vmatpush1.bf16.msra.mxu0 0
    %4329 = vmatprep.subr.bf16.mxu0 0
    %4330 = vmatpush1.bf16.msra.mxu0 0
    %4331 = vmatprep.subr.bf16.mxu0 0
    %4332 = vmatpush1.bf16.msra.mxu0 0
    %4333 = vmatprep.subr.bf16.mxu0 0
    %4334 = vmatpush1.bf16.msra.mxu0 %v3281
    %4335 = vmatprep.subr.bf16.mxu0 0
    %4336 = vmatpush2.bf16.msra.mxu0 0
    %4337 = vmatprep.subr.bf16.mxu0 0
    %4338 = vmatpush2.bf16.msra.mxu0 0
    %4339 = vmatprep.subr.bf16.mxu0 0
    %4340 = vmatpush2.bf16.msra.mxu0 0
    %4341 = vmatprep.subr.bf16.mxu0 0
    %4342 = vmatpush2.bf16.msra.mxu0 0
    %4343 = vmatprep.subr.bf16.mxu0 0
    %4344 = vmatpush2.bf16.msra.mxu0 0
    %4345 = vmatprep.subr.bf16.mxu0 0
    %4346 = vmatpush2.bf16.msra.mxu0 0
    %4347 = vmatprep.subr.bf16.mxu0 0
    %4348 = vmatpush2.bf16.msra.mxu0 0
    %4349 = vmatprep.subr.bf16.mxu0 0
    %4350 = vmatpush2.bf16.msra.mxu0 0
    %4351 = vmatprep.mubr.bf16.mxu0 0
    %4352 = vmatmul.mubr.bf16.gmra.mxu0 %v4317
    %v4353 = vpop.f32.mrf.mxu0
    %v4354 = vadd.f32 0.0, %v4353
    %v4355 = vpop.f32.mrf.mxu0
    %v4356 = vpop.f32.mrf.mxu0
    %v4357 = vpop.f32.mrf.mxu0
    %4358 = vdwg.mxu0
    %4360 = vrot.lane.b32.xlu0 %v4354, 16
    %v4361 = vpop.permute.xlu0 %4360
    %v4363 = vadd.f32 %v3195, %v4361
    %v4364 = vxor.u32 %v4363, 2147483648
    %v4365 = vmul.f32 %v4364, 1.442695
    %v4366 = vpow.pop %v4365
    %v4367 = vadd.f32 %v4366, 1.0
    %v4368 = vrcp.pop %v4367
    %v4369 = vmul.f32 1.0, %v4368
    %v4370 = vtanh.pop %v4363
    %v4371 = vmul.f32 %v4369, %v4233
    %4373 = vrot.lane.b32.xlu0 %v4370, 116
    %v4374 = vpop.permute.xlu0 %4373
    %v4376 = vmul.f32 %v4369, %v4374
    %4378 = vrot.lane.b32.xlu0 %v4376, 4
    %v4379 = vpop.permute.xlu0 %4378
    %v4381 = vadd.f32 %v4371, %v4379
    %v4382 = vtanh.pop %v4381
    %4384 = vrot.lane.b32.xlu0 %v4382, 4
    %v4385 = vpop.permute.xlu0 %4384
    %v4387 = vmul.f32 %v4369, %v4385
    %4396 = vrot.lane.b32.xlu0 %v3276, 120
    %v4397 = vpop.permute.xlu0 %4396
    %4398 = vrot.lane.b32.xlu0 %v3423, 120
    %v4399 = vpop.permute.xlu0 %4398
    %4400 = vrot.lane.b32.xlu0 %v3571, 120
    %v4401 = vpop.permute.xlu0 %4400
    %4402 = vrot.lane.b32.xlu0 %v3719, 120
    %v4403 = vpop.permute.xlu0 %4402
    %4404 = vrot.lane.b32.xlu0 %v3867, 120
    %v4405 = vpop.permute.xlu0 %4404
    %4406 = vrot.lane.b32.xlu0 %v4015, 120
    %v4407 = vpop.permute.xlu0 %4406
    %4408 = vrot.lane.b32.xlu0 %v4163, 120
    %v4409 = vpop.permute.xlu0 %4408
    %4410 = vrot.lane.b32.xlu0 %v4311, 120
    %v4411 = vpop.permute.xlu0 %4410
    %v4420 = vsel %vm3205, %v4397, 0.0
    %4421 = vadd.xlane.f32.xlu0 %v4420
    %v4422 = vpop.xlane.xlu0 %4421
    %v4423 = vsel %vm3205, %v4399, 0.0
    %4424 = vadd.xlane.f32.xlu0 %v4423
    %v4425 = vpop.xlane.xlu0 %4424
    %v4426 = vsel %vm3205, %v4401, 0.0
    %4427 = vadd.xlane.f32.xlu0 %v4426
    %v4428 = vpop.xlane.xlu0 %4427
    %v4429 = vsel %vm3205, %v4403, 0.0
    %4430 = vadd.xlane.f32.xlu0 %v4429
    %v4431 = vpop.xlane.xlu0 %4430
    %v4432 = vsel %vm3205, %v4405, 0.0
    %4433 = vadd.xlane.f32.xlu0 %v4432
    %v4434 = vpop.xlane.xlu0 %4433
    %v4435 = vsel %vm3205, %v4407, 0.0
    %4436 = vadd.xlane.f32.xlu0 %v4435
    %v4437 = vpop.xlane.xlu0 %4436
    %v4438 = vsel %vm3205, %v4409, 0.0
    %4439 = vadd.xlane.f32.xlu0 %v4438
    %v4440 = vpop.xlane.xlu0 %4439
    %v4441 = vsel %vm3205, %v4411, 0.0
    %4442 = vadd.xlane.f32.xlu0 %v4441
    %v4443 = vpop.xlane.xlu0 %4442
    %4452 = vrot.lane.b32.xlu0 %v4387, 104
    %v4453 = vpop.permute.xlu0 %4452
    %4454 = vrot.lane.b32.xlu0 %v4239, 104
    %v4455 = vpop.permute.xlu0 %4454
    %4456 = vrot.lane.b32.xlu0 %v4091, 104
    %v4457 = vpop.permute.xlu0 %4456
    %4458 = vrot.lane.b32.xlu0 %v3943, 104
    %v4459 = vpop.permute.xlu0 %4458
    %4460 = vrot.lane.b32.xlu0 %v3795, 104
    %v4461 = vpop.permute.xlu0 %4460
    %4462 = vrot.lane.b32.xlu0 %v3647, 104
    %v4463 = vpop.permute.xlu0 %4462
    %4464 = vrot.lane.b32.xlu0 %v3499, 104
    %v4465 = vpop.permute.xlu0 %4464
    %4466 = vrot.lane.b32.xlu0 %v3351, 104
    %v4467 = vpop.permute.xlu0 %4466
    %v4476 = vsel %vm3205, %v4453, 0.0
    %4477 = vadd.xlane.f32.xlu0 %v4476
    %v4478 = vpop.xlane.xlu0 %4477
    %v4479 = vsel %vm3205, %v4455, 0.0
    %4480 = vadd.xlane.f32.xlu0 %v4479
    %v4481 = vpop.xlane.xlu0 %4480
    %v4482 = vsel %vm3205, %v4457, 0.0
    %4483 = vadd.xlane.f32.xlu0 %v4482
    %v4484 = vpop.xlane.xlu0 %4483
    %v4485 = vsel %vm3205, %v4459, 0.0
    %4486 = vadd.xlane.f32.xlu0 %v4485
    %v4487 = vpop.xlane.xlu0 %4486
    %v4488 = vsel %vm3205, %v4461, 0.0
    %4489 = vadd.xlane.f32.xlu0 %v4488
    %v4490 = vpop.xlane.xlu0 %4489
    %v4491 = vsel %vm3205, %v4463, 0.0
    %4492 = vadd.xlane.f32.xlu0 %v4491
    %v4493 = vpop.xlane.xlu0 %4492
    %v4494 = vsel %vm3205, %v4465, 0.0
    %4495 = vadd.xlane.f32.xlu0 %v4494
    %v4496 = vpop.xlane.xlu0 %4495
    %v4497 = vsel %vm3205, %v4467, 0.0
    %4498 = vadd.xlane.f32.xlu0 %v4497
    %v4499 = vpop.xlane.xlu0 %4498
    %v4500 = vadd.f32 %v4422, %v4478
    %v4501 = vadd.f32 %v4425, %v4481
    %v4502 = vadd.f32 %v4428, %v4484
    %v4503 = vadd.f32 %v4431, %v4487
    %v4504 = vadd.f32 %v4434, %v4490
    %v4505 = vadd.f32 %v4437, %v4493
    %v4506 = vadd.f32 %v4440, %v4496
    %v4507 = vadd.f32 %v4443, %v4499
    %v4508 = vrcp.pop 8.0
    %v4509 = vmul.f32 %v4500, %v4508
    %v4510 = vmul.f32 %v4501, %v4508
    %v4511 = vmul.f32 %v4502, %v4508
    %v4512 = vmul.f32 %v4503, %v4508
    %v4513 = vmul.f32 %v4504, %v4508
    %v4514 = vmul.f32 %v4505, %v4508
    %v4515 = vmul.f32 %v4506, %v4508
    %v4516 = vmul.f32 %v4507, %v4508
    %v4517 = vsub.f32 %v3276, %v4509
    %v4518 = vsub.f32 %v3423, %v4510
    %v4519 = vsub.f32 %v3571, %v4511
    %v4520 = vsub.f32 %v3719, %v4512
    %v4521 = vsub.f32 %v3867, %v4513
    %v4522 = vsub.f32 %v4015, %v4514
    %v4523 = vsub.f32 %v4163, %v4515
    %v4524 = vsub.f32 %v4311, %v4516
    %v4525 = vmul.f32 %v4517, %v4517
    %v4526 = vmul.f32 %v4518, %v4518
    %v4527 = vmul.f32 %v4519, %v4519
    %v4528 = vmul.f32 %v4520, %v4520
    %v4529 = vmul.f32 %v4521, %v4521
    %v4530 = vmul.f32 %v4522, %v4522
    %v4531 = vmul.f32 %v4523, %v4523
    %v4532 = vmul.f32 %v4524, %v4524
    %4541 = vrot.lane.b32.xlu0 %v4525, 120
    %v4542 = vpop.permute.xlu0 %4541
    %4543 = vrot.lane.b32.xlu0 %v4526, 120
    %v4544 = vpop.permute.xlu0 %4543
    %4545 = vrot.lane.b32.xlu0 %v4527, 120
    %v4546 = vpop.permute.xlu0 %4545
    %4547 = vrot.lane.b32.xlu0 %v4528, 120
    %v4548 = vpop.permute.xlu0 %4547
    %4549 = vrot.lane.b32.xlu0 %v4529, 120
    %v4550 = vpop.permute.xlu0 %4549
    %4551 = vrot.lane.b32.xlu0 %v4530, 120
    %v4552 = vpop.permute.xlu0 %4551
    %4553 = vrot.lane.b32.xlu0 %v4531, 120
    %v4554 = vpop.permute.xlu0 %4553
    %4555 = vrot.lane.b32.xlu0 %v4532, 120
    %v4556 = vpop.permute.xlu0 %4555
    %v4565 = vsel %vm3205, %v4542, 0.0
    %4566 = vadd.xlane.f32.xlu0 %v4565
    %v4567 = vpop.xlane.xlu0 %4566
    %v4568 = vsel %vm3205, %v4544, 0.0
    %4569 = vadd.xlane.f32.xlu0 %v4568
    %v4570 = vpop.xlane.xlu0 %4569
    %v4571 = vsel %vm3205, %v4546, 0.0
    %4572 = vadd.xlane.f32.xlu0 %v4571
    %v4573 = vpop.xlane.xlu0 %4572
    %v4574 = vsel %vm3205, %v4548, 0.0
    %4575 = vadd.xlane.f32.xlu0 %v4574
    %v4576 = vpop.xlane.xlu0 %4575
    %v4577 = vsel %vm3205, %v4550, 0.0
    %4578 = vadd.xlane.f32.xlu0 %v4577
    %v4579 = vpop.xlane.xlu0 %4578
    %v4580 = vsel %vm3205, %v4552, 0.0
    %4581 = vadd.xlane.f32.xlu0 %v4580
    %v4582 = vpop.xlane.xlu0 %4581
    %v4583 = vsel %vm3205, %v4554, 0.0
    %4584 = vadd.xlane.f32.xlu0 %v4583
    %v4585 = vpop.xlane.xlu0 %4584
    %v4586 = vsel %vm3205, %v4556, 0.0
    %4587 = vadd.xlane.f32.xlu0 %v4586
    %v4588 = vpop.xlane.xlu0 %4587
    %v4589 = vsub.f32 %v4387, %v4509
    %v4590 = vsub.f32 %v4239, %v4510
    %v4591 = vsub.f32 %v4091, %v4511
    %v4592 = vsub.f32 %v3943, %v4512
    %v4593 = vsub.f32 %v3795, %v4513
    %v4594 = vsub.f32 %v3647, %v4514
    %v4595 = vsub.f32 %v3499, %v4515
    %v4596 = vsub.f32 %v3351, %v4516
    %v4597 = vmul.f32 %v4589, %v4589
    %v4598 = vmul.f32 %v4590, %v4590
    %v4599 = vmul.f32 %v4591, %v4591
    %v4600 = vmul.f32 %v4592, %v4592
    %v4601 = vmul.f32 %v4593, %v4593
    %v4602 = vmul.f32 %v4594, %v4594
    %v4603 = vmul.f32 %v4595, %v4595
    %v4604 = vmul.f32 %v4596, %v4596
    %4613 = vrot.lane.b32.xlu0 %v4597, 104
    %v4614 = vpop.permute.xlu0 %4613
    %4615 = vrot.lane.b32.xlu0 %v4598, 104
    %v4616 = vpop.permute.xlu0 %4615
    %4617 = vrot.lane.b32.xlu0 %v4599, 104
    %v4618 = vpop.permute.xlu0 %4617
    %4619 = vrot.lane.b32.xlu0 %v4600, 104
    %v4620 = vpop.permute.xlu0 %4619
    %4621 = vrot.lane.b32.xlu0 %v4601, 104
    %v4622 = vpop.permute.xlu0 %4621
    %4623 = vrot.lane.b32.xlu0 %v4602, 104
    %v4624 = vpop.permute.xlu0 %4623
    %4625 = vrot.lane.b32.xlu0 %v4603, 104
    %v4626 = vpop.permute.xlu0 %4625
    %4627 = vrot.lane.b32.xlu0 %v4604, 104
    %v4628 = vpop.permute.xlu0 %4627
    %v4637 = vsel %vm3205, %v4614, 0.0
    %4638 = vadd.xlane.f32.xlu0 %v4637
    %v4639 = vpop.xlane.xlu0 %4638
    %v4640 = vsel %vm3205, %v4616, 0.0
    %4641 = vadd.xlane.f32.xlu0 %v4640
    %v4642 = vpop.xlane.xlu0 %4641
    %v4643 = vsel %vm3205, %v4618, 0.0
    %4644 = vadd.xlane.f32.xlu0 %v4643
    %v4645 = vpop.xlane.xlu0 %4644
    %v4646 = vsel %vm3205, %v4620, 0.0
    %4647 = vadd.xlane.f32.xlu0 %v4646
    %v4648 = vpop.xlane.xlu0 %4647
    %v4649 = vsel %vm3205, %v4622, 0.0
    %4650 = vadd.xlane.f32.xlu0 %v4649
    %v4651 = vpop.xlane.xlu0 %4650
    %v4652 = vsel %vm3205, %v4624, 0.0
    %4653 = vadd.xlane.f32.xlu0 %v4652
    %v4654 = vpop.xlane.xlu0 %4653
    %v4655 = vsel %vm3205, %v4626, 0.0
    %4656 = vadd.xlane.f32.xlu0 %v4655
    %v4657 = vpop.xlane.xlu0 %4656
    %v4658 = vsel %vm3205, %v4628, 0.0
    %4659 = vadd.xlane.f32.xlu0 %v4658
    %v4660 = vpop.xlane.xlu0 %4659
    %v4661 = vadd.f32 %v4567, %v4639
    %v4662 = vadd.f32 %v4570, %v4642
    %v4663 = vadd.f32 %v4573, %v4645
    %v4664 = vadd.f32 %v4576, %v4648
    %v4665 = vadd.f32 %v4579, %v4651
    %v4666 = vadd.f32 %v4582, %v4654
    %v4667 = vadd.f32 %v4585, %v4657
    %v4668 = vadd.f32 %v4588, %v4660
    %v4669 = vmul.f32 %v4661, %v4508
    %v4670 = vmul.f32 %v4662, %v4508
    %v4671 = vmul.f32 %v4663, %v4508
    %v4672 = vmul.f32 %v4664, %v4508
    %v4673 = vmul.f32 %v4665, %v4508
    %v4674 = vmul.f32 %v4666, %v4508
    %v4675 = vmul.f32 %v4667, %v4508
    %v4676 = vmul.f32 %v4668, %v4508
    %v4677 = vadd.f32 %v4669, 1e-05
    %v4678 = vadd.f32 %v4670, 1e-05
    %v4679 = vadd.f32 %v4671, 1e-05
    %v4680 = vadd.f32 %v4672, 1e-05
    %v4681 = vadd.f32 %v4673, 1e-05
    %v4682 = vadd.f32 %v4674, 1e-05
    %v4683 = vadd.f32 %v4675, 1e-05
    %v4684 = vadd.f32 %v4676, 1e-05
    %v4685 = vrsqrt.pop %v4677
    %v4686 = vrsqrt.pop %v4678
    %v4687 = vrsqrt.pop %v4679
    %v4688 = vrsqrt.pop %v4680
    %v4689 = vrsqrt.pop %v4681
    %v4690 = vrsqrt.pop %v4682
    %v4691 = vrsqrt.pop %v4683
    %v4692 = vrsqrt.pop %v4684
    %v4693 = vld [vmem:[#allocation2 + $0xa8] sm:$0x1]
    %v4694 = vld [vmem:[#allocation2 + $0xb0] sm:$0x1]
    %v4695 = vld [vmem:[#allocation2 + $0xb8] sm:$0x1]
    %v4696 = vmul.f32 %v4517, %v4685
    %v4697 = vmul.f32 %v4518, %v4686
    %v4698 = vmul.f32 %v4519, %v4687
    %v4699 = vmul.f32 %v4520, %v4688
    %v4700 = vmul.f32 %v4521, %v4689
    %v4701 = vmul.f32 %v4522, %v4690
    %v4702 = vmul.f32 %v4523, %v4691
    %v4703 = vmul.f32 %v4524, %v4692
    %v4704 = vlaneseq
    %v4705 = vshrl.u32 %v4704, 7
    %v4706 = vsub.s32 0, %v4705
    %v4707 = vrot.slane %v4693, %v4706
    %4709 = vrot.lane.b32.xlu0 %v4707, 8
    %v4710 = vpop.permute.xlu0 %4709
    %v4712 = vmul.f32 %v4696, %v4710
    %v4713 = vmul.f32 %v4697, %v4710
    %v4714 = vmul.f32 %v4698, %v4710
    %v4715 = vmul.f32 %v4699, %v4710
    %v4716 = vmul.f32 %v4700, %v4710
    %v4717 = vmul.f32 %v4701, %v4710
    %v4718 = vmul.f32 %v4702, %v4710
    %v4719 = vmul.f32 %v4703, %v4710
    %v4720 = vlaneseq
    %v4721 = vshrl.u32 %v4720, 7
    %v4722 = vsub.s32 0, %v4721
    %v4723 = vrot.slane %v4694, %v4722
    %4725 = vrot.lane.b32.xlu0 %v4723, 8
    %v4726 = vpop.permute.xlu0 %4725
    %v4728 = vadd.f32 %v4712, %v4726
    %v4729 = vadd.f32 %v4713, %v4726
    %v4730 = vadd.f32 %v4714, %v4726
    %v4731 = vadd.f32 %v4715, %v4726
    %v4732 = vadd.f32 %v4716, %v4726
    %v4733 = vadd.f32 %v4717, %v4726
    %v4734 = vadd.f32 %v4718, %v4726
    %v4735 = vadd.f32 %v4719, %v4726
    %v4736 = vmul.f32 %v4728, %v4728
    %v4737 = vmul.f32 %v4729, %v4729
    %v4738 = vmul.f32 %v4730, %v4730
    %v4739 = vmul.f32 %v4731, %v4731
    %v4740 = vmul.f32 %v4732, %v4732
    %v4741 = vmul.f32 %v4733, %v4733
    %v4742 = vmul.f32 %v4734, %v4734
    %v4743 = vmul.f32 %v4735, %v4735
    %v4744 = vmul.f32 %v4728, %v4736
    %v4745 = vmul.f32 %v4729, %v4737
    %v4746 = vmul.f32 %v4730, %v4738
    %v4747 = vmul.f32 %v4731, %v4739
    %v4748 = vmul.f32 %v4732, %v4740
    %v4749 = vmul.f32 %v4733, %v4741
    %v4750 = vmul.f32 %v4734, %v4742
    %v4751 = vmul.f32 %v4735, %v4743
    %v4752 = vmul.f32 %v4744, 0.044715
    %v4753 = vmul.f32 %v4745, 0.044715
    %v4754 = vmul.f32 %v4746, 0.044715
    %v4755 = vmul.f32 %v4747, 0.044715
    %v4756 = vmul.f32 %v4748, 0.044715
    %v4757 = vmul.f32 %v4749, 0.044715
    %v4758 = vmul.f32 %v4750, 0.044715
    %v4759 = vmul.f32 %v4751, 0.044715
    %v4760 = vadd.f32 %v4728, %v4752
    %v4761 = vadd.f32 %v4729, %v4753
    %v4762 = vadd.f32 %v4730, %v4754
    %v4763 = vadd.f32 %v4731, %v4755
    %v4764 = vadd.f32 %v4732, %v4756
    %v4765 = vadd.f32 %v4733, %v4757
    %v4766 = vadd.f32 %v4734, %v4758
    %v4767 = vadd.f32 %v4735, %v4759
    %v4768 = vmul.f32 %v4760, 0.7978846
    %v4769 = vmul.f32 %v4761, 0.7978846
    %v4770 = vmul.f32 %v4762, 0.7978846
    %v4771 = vmul.f32 %v4763, 0.7978846
    %v4772 = vmul.f32 %v4764, 0.7978846
    %v4773 = vmul.f32 %v4765, 0.7978846
    %v4774 = vmul.f32 %v4766, 0.7978846
    %v4775 = vmul.f32 %v4767, 0.7978846
    %v4776 = vtanh.pop %v4768
    %v4777 = vtanh.pop %v4769
    %v4778 = vtanh.pop %v4770
    %v4779 = vtanh.pop %v4771
    %v4780 = vtanh.pop %v4772
    %v4781 = vtanh.pop %v4773
    %v4782 = vtanh.pop %v4774
    %v4783 = vtanh.pop %v4775
    %v4784 = vadd.f32 %v4776, 1.0
    %v4785 = vadd.f32 %v4777, 1.0
    %v4786 = vadd.f32 %v4778, 1.0
    %v4787 = vadd.f32 %v4779, 1.0
    %v4788 = vadd.f32 %v4780, 1.0
    %v4789 = vadd.f32 %v4781, 1.0
    %v4790 = vadd.f32 %v4782, 1.0
    %v4791 = vadd.f32 %v4783, 1.0
    %v4792 = vmul.f32 %v4784, 0.5
    %v4793 = vmul.f32 %v4785, 0.5
    %v4794 = vmul.f32 %v4786, 0.5
    %v4795 = vmul.f32 %v4787, 0.5
    %v4796 = vmul.f32 %v4788, 0.5
    %v4797 = vmul.f32 %v4789, 0.5
    %v4798 = vmul.f32 %v4790, 0.5
    %v4799 = vmul.f32 %v4791, 0.5
    %v4800 = vmul.f32 %v4728, %v4792
    %v4801 = vmul.f32 %v4729, %v4793
    %v4802 = vmul.f32 %v4730, %v4794
    %v4803 = vmul.f32 %v4731, %v4795
    %v4804 = vmul.f32 %v4732, %v4796
    %v4805 = vmul.f32 %v4733, %v4797
    %v4806 = vmul.f32 %v4734, %v4798
    %v4807 = vmul.f32 %v4735, %v4799
    %v4808 = vmul.f32 %v4589, %v4685
    %v4809 = vmul.f32 %v4590, %v4686
    %v4810 = vmul.f32 %v4591, %v4687
    %v4811 = vmul.f32 %v4592, %v4688
    %v4812 = vmul.f32 %v4593, %v4689
    %v4813 = vmul.f32 %v4594, %v4690
    %v4814 = vmul.f32 %v4595, %v4691
    %v4815 = vmul.f32 %v4596, %v4692
    %4816 = vrot.lane.b32.xlu0 %v4707, 20
    %v4817 = vpop.permute.xlu0 %4816
    %v4819 = vmul.f32 %v4808, %v4817
    %v4820 = vmul.f32 %v4809, %v4817
    %v4821 = vmul.f32 %v4810, %v4817
    %v4822 = vmul.f32 %v4811, %v4817
    %v4823 = vmul.f32 %v4812, %v4817
    %v4824 = vmul.f32 %v4813, %v4817
    %v4825 = vmul.f32 %v4814, %v4817
    %v4826 = vmul.f32 %v4815, %v4817
    %4827 = vrot.lane.b32.xlu0 %v4723, 20
    %v4828 = vpop.permute.xlu0 %4827
    %v4830 = vadd.f32 %v4819, %v4828
    %v4831 = vadd.f32 %v4820, %v4828
    %v4832 = vadd.f32 %v4821, %v4828
    %v4833 = vadd.f32 %v4822, %v4828
    %v4834 = vadd.f32 %v4823, %v4828
    %v4835 = vadd.f32 %v4824, %v4828
    %v4836 = vadd.f32 %v4825, %v4828
    %v4837 = vadd.f32 %v4826, %v4828
    %v4838 = vmul.f32 %v4830, %v4830
    %v4839 = vmul.f32 %v4831, %v4831
    %v4840 = vmul.f32 %v4832, %v4832
    %v4841 = vmul.f32 %v4833, %v4833
    %v4842 = vmul.f32 %v4834, %v4834
    %v4843 = vmul.f32 %v4835, %v4835
    %v4844 = vmul.f32 %v4836, %v4836
    %v4845 = vmul.f32 %v4837, %v4837
    %v4846 = vmul.f32 %v4830, %v4838
    %v4847 = vmul.f32 %v4831, %v4839
    %v4848 = vmul.f32 %v4832, %v4840
    %v4849 = vmul.f32 %v4833, %v4841
    %v4850 = vmul.f32 %v4834, %v4842
    %v4851 = vmul.f32 %v4835, %v4843
    %v4852 = vmul.f32 %v4836, %v4844
    %v4853 = vmul.f32 %v4837, %v4845
    %v4854 = vmul.f32 %v4846, 0.044715
    %v4855 = vmul.f32 %v4847, 0.044715
    %v4856 = vmul.f32 %v4848, 0.044715
    %v4857 = vmul.f32 %v4849, 0.044715
    %v4858 = vmul.f32 %v4850, 0.044715
    %v4859 = vmul.f32 %v4851, 0.044715
    %v4860 = vmul.f32 %v4852, 0.044715
    %v4861 = vmul.f32 %v4853, 0.044715
    %v4862 = vadd.f32 %v4830, %v4854
    %v4863 = vadd.f32 %v4831, %v4855
    %v4864 = vadd.f32 %v4832, %v4856
    %v4865 = vadd.f32 %v4833, %v4857
    %v4866 = vadd.f32 %v4834, %v4858
    %v4867 = vadd.f32 %v4835, %v4859
    %v4868 = vadd.f32 %v4836, %v4860
    %v4869 = vadd.f32 %v4837, %v4861
    %v4870 = vmul.f32 %v4862, 0.7978846
    %v4871 = vmul.f32 %v4863, 0.7978846
    %v4872 = vmul.f32 %v4864, 0.7978846
    %v4873 = vmul.f32 %v4865, 0.7978846
    %v4874 = vmul.f32 %v4866, 0.7978846
    %v4875 = vmul.f32 %v4867, 0.7978846
    %v4876 = vmul.f32 %v4868, 0.7978846
    %v4877 = vmul.f32 %v4869, 0.7978846
    %v4878 = vtanh.pop %v4870
    %v4879 = vtanh.pop %v4871
    %v4880 = vtanh.pop %v4872
    %v4881 = vtanh.pop %v4873
    %v4882 = vtanh.pop %v4874
    %v4883 = vtanh.pop %v4875
    %v4884 = vtanh.pop %v4876
    %v4885 = vtanh.pop %v4877
    %v4886 = vadd.f32 %v4878, 1.0
    %v4887 = vadd.f32 %v4879, 1.0
    %v4888 = vadd.f32 %v4880, 1.0
    %v4889 = vadd.f32 %v4881, 1.0
    %v4890 = vadd.f32 %v4882, 1.0
    %v4891 = vadd.f32 %v4883, 1.0
    %v4892 = vadd.f32 %v4884, 1.0
    %v4893 = vadd.f32 %v4885, 1.0
    %v4894 = vmul.f32 %v4886, 0.5
    %v4895 = vmul.f32 %v4887, 0.5
    %v4896 = vmul.f32 %v4888, 0.5
    %v4897 = vmul.f32 %v4889, 0.5
    %v4898 = vmul.f32 %v4890, 0.5
    %v4899 = vmul.f32 %v4891, 0.5
    %v4900 = vmul.f32 %v4892, 0.5
    %v4901 = vmul.f32 %v4893, 0.5
    %v4902 = vmul.f32 %v4830, %v4894
    %v4903 = vmul.f32 %v4831, %v4895
    %v4904 = vmul.f32 %v4832, %v4896
    %v4905 = vmul.f32 %v4833, %v4897
    %v4906 = vmul.f32 %v4834, %v4898
    %v4907 = vmul.f32 %v4835, %v4899
    %v4908 = vmul.f32 %v4836, %v4900
    %v4909 = vmul.f32 %v4837, %v4901
    %v4910 = vlaneseq
    %v4911 = vshrl.u32 %v4910, 7
    %v4912 = vsub.s32 0, %v4911
    %v4913 = vrot.slane %v4695, %v4912
    %4915 = vrot.lane.b32.xlu0 %v4913, 8
    %v4916 = vpop.permute.xlu0 %4915
    %v4918 = vmul.f32 %v4800, %v4916
    %v4919 = vmul.f32 %v4801, %v4916
    %v4920 = vmul.f32 %v4802, %v4916
    %v4921 = vmul.f32 %v4803, %v4916
    %v4922 = vmul.f32 %v4804, %v4916
    %v4923 = vmul.f32 %v4805, %v4916
    %v4924 = vmul.f32 %v4806, %v4916
    %v4925 = vmul.f32 %v4807, %v4916
    %4934 = vrot.lane.b32.xlu0 %v4918, 120
    %v4935 = vpop.permute.xlu0 %4934
    %4936 = vrot.lane.b32.xlu0 %v4919, 120
    %v4937 = vpop.permute.xlu0 %4936
    %4938 = vrot.lane.b32.xlu0 %v4920, 120
    %v4939 = vpop.permute.xlu0 %4938
    %4940 = vrot.lane.b32.xlu0 %v4921, 120
    %v4941 = vpop.permute.xlu0 %4940
    %4942 = vrot.lane.b32.xlu0 %v4922, 120
    %v4943 = vpop.permute.xlu0 %4942
    %4944 = vrot.lane.b32.xlu0 %v4923, 120
    %v4945 = vpop.permute.xlu0 %4944
    %4946 = vrot.lane.b32.xlu0 %v4924, 120
    %v4947 = vpop.permute.xlu0 %4946
    %4948 = vrot.lane.b32.xlu0 %v4925, 120
    %v4949 = vpop.permute.xlu0 %4948
    %v4958 = vsel %vm3205, %v4935, 0.0
    %4959 = vadd.xlane.f32.xlu0 %v4958
    %v4960 = vpop.xlane.xlu0 %4959
    %v4961 = vsel %vm3205, %v4937, 0.0
    %4962 = vadd.xlane.f32.xlu0 %v4961
    %v4963 = vpop.xlane.xlu0 %4962
    %v4964 = vsel %vm3205, %v4939, 0.0
    %4965 = vadd.xlane.f32.xlu0 %v4964
    %v4966 = vpop.xlane.xlu0 %4965
    %v4967 = vsel %vm3205, %v4941, 0.0
    %4968 = vadd.xlane.f32.xlu0 %v4967
    %v4969 = vpop.xlane.xlu0 %4968
    %v4970 = vsel %vm3205, %v4943, 0.0
    %4971 = vadd.xlane.f32.xlu0 %v4970
    %v4972 = vpop.xlane.xlu0 %4971
    %v4973 = vsel %vm3205, %v4945, 0.0
    %4974 = vadd.xlane.f32.xlu0 %v4973
    %v4975 = vpop.xlane.xlu0 %4974
    %v4976 = vsel %vm3205, %v4947, 0.0
    %4977 = vadd.xlane.f32.xlu0 %v4976
    %v4978 = vpop.xlane.xlu0 %4977
    %v4979 = vsel %vm3205, %v4949, 0.0
    %4980 = vadd.xlane.f32.xlu0 %v4979
    %v4981 = vpop.xlane.xlu0 %4980
    %4982 = vrot.lane.b32.xlu0 %v4913, 20
    %v4983 = vpop.permute.xlu0 %4982
    %v4985 = vmul.f32 %v4902, %v4983
    %v4986 = vmul.f32 %v4903, %v4983
    %v4987 = vmul.f32 %v4904, %v4983
    %v4988 = vmul.f32 %v4905, %v4983
    %v4989 = vmul.f32 %v4906, %v4983
    %v4990 = vmul.f32 %v4907, %v4983
    %v4991 = vmul.f32 %v4908, %v4983
    %v4992 = vmul.f32 %v4909, %v4983
    %5001 = vrot.lane.b32.xlu0 %v4985, 104
    %v5002 = vpop.permute.xlu0 %5001
    %5003 = vrot.lane.b32.xlu0 %v4986, 104
    %v5004 = vpop.permute.xlu0 %5003
    %5005 = vrot.lane.b32.xlu0 %v4987, 104
    %v5006 = vpop.permute.xlu0 %5005
    %5007 = vrot.lane.b32.xlu0 %v4988, 104
    %v5008 = vpop.permute.xlu0 %5007
    %5009 = vrot.lane.b32.xlu0 %v4989, 104
    %v5010 = vpop.permute.xlu0 %5009
    %5011 = vrot.lane.b32.xlu0 %v4990, 104
    %v5012 = vpop.permute.xlu0 %5011
    %5013 = vrot.lane.b32.xlu0 %v4991, 104
    %v5014 = vpop.permute.xlu0 %5013
    %5015 = vrot.lane.b32.xlu0 %v4992, 104
    %v5016 = vpop.permute.xlu0 %5015
    %v5025 = vsel %vm3205, %v5002, 0.0
    %5026 = vadd.xlane.f32.xlu0 %v5025
    %v5027 = vpop.xlane.xlu0 %5026
    %v5028 = vsel %vm3205, %v5004, 0.0
    %5029 = vadd.xlane.f32.xlu0 %v5028
    %v5030 = vpop.xlane.xlu0 %5029
    %v5031 = vsel %vm3205, %v5006, 0.0
    %5032 = vadd.xlane.f32.xlu0 %v5031
    %v5033 = vpop.xlane.xlu0 %5032
    %v5034 = vsel %vm3205, %v5008, 0.0
    %5035 = vadd.xlane.f32.xlu0 %v5034
    %v5036 = vpop.xlane.xlu0 %5035
    %v5037 = vsel %vm3205, %v5010, 0.0
    %5038 = vadd.xlane.f32.xlu0 %v5037
    %v5039 = vpop.xlane.xlu0 %5038
    %v5040 = vsel %vm3205, %v5012, 0.0
    %5041 = vadd.xlane.f32.xlu0 %v5040
    %v5042 = vpop.xlane.xlu0 %5041
    %v5043 = vsel %vm3205, %v5014, 0.0
    %5044 = vadd.xlane.f32.xlu0 %v5043
    %v5045 = vpop.xlane.xlu0 %5044
    %v5046 = vsel %vm3205, %v5016, 0.0
    %5047 = vadd.xlane.f32.xlu0 %v5046
    %v5048 = vpop.xlane.xlu0 %5047
    %v5049 = vadd.f32 %v4960, %v5027
    %v5050 = vadd.f32 %v4963, %v5030
    %v5051 = vadd.f32 %v4966, %v5033
    %v5052 = vadd.f32 %v4969, %v5036
    %v5053 = vadd.f32 %v4972, %v5039
    %v5054 = vadd.f32 %v4975, %v5042
    %v5055 = vadd.f32 %v4978, %v5045
    %v5056 = vadd.f32 %v4981, %v5048
    %v5057 = vld [vmem:[#allocation2 + $0xc0] sm:$0x1]
    %v5058 = vlaneseq
    %v5059 = vshrl.u32 %v5058, 7
    %v5060 = vsub.s32 0, %v5059
    %v5061 = vrot.slane %v5057, %v5060
    %v5062 = vadd.f32 %v5049, %v5061
    %v5063 = vadd.f32 %v5050, %v5061
    %v5064 = vadd.f32 %v5051, %v5061
    %v5065 = vadd.f32 %v5052, %v5061
    %v5066 = vadd.f32 %v5053, %v5061
    %v5067 = vadd.f32 %v5054, %v5061
    %v5068 = vadd.f32 %v5055, %v5061
    %v5069 = vadd.f32 %v5056, %v5061
    %vm5070 = vcmask 7168
    %5071 = vst.msk [vmem:[%s2] sm:$0xff] %vm5070, %v5062
    %5072 = vst.msk [vmem:[%s2 + $0x8] sm:$0xff] %vm5070, %v5063
    %5073 = vst.msk [vmem:[%s2 + $0x10] sm:$0xff] %vm5070, %v5064
    %5074 = vst.msk [vmem:[%s2 + $0x18] sm:$0xff] %vm5070, %v5065
    %5075 = vst.msk [vmem:[%s2 + $0x20] sm:$0xff] %vm5070, %v5066
    %5076 = vst.msk [vmem:[%s2 + $0x28] sm:$0xff] %vm5070, %v5067
    %5077 = vst.msk [vmem:[%s2 + $0x30] sm:$0xff] %vm5070, %v5068
    %5078 = vst.msk [vmem:[%s2 + $0x38] sm:$0xff] %vm5070, %v5069
    // Predicated region
    $region14: #{model_forward.1} parent=1 // pred_check
      _
    $region15: #{model_forward.1} parent=1 // pred_check_branch
      %5080 = sbr.rel (0) target = $region17
    $region16: #{model_forward.1} parent=1 // pred_region
      _
    $region17: #{model_forward.1} parent=1 // pred_fallthru
      _
    // Predicated region
    $region18: #{model_forward.1} parent=1 // pred_check
      _
    $region19: #{model_forward.1} parent=1 // pred_check_branch
      %5082 = sbr.rel (0) target = $region21
    $region20: #{model_forward.1} parent=1 // pred_region
      _
    $region21: #{model_forward.1} parent=1 // pred_fallthru
      _
    %5083 = vsyncpa [#allocation3], 1

</llo_original>
